<compile_context>
chip_gen: v7x
topology: tpu7x:2x2x1
jax: 0.10.0
libtpu: 0.0.40
codegen_flags: <defaults>
</compile_context>

<pallas_src>
import functools

import jax
import jax.numpy as jnp
from jax.experimental import pallas as pl
from jax.experimental.pallas import tpu as pltpu


def _attention_kernel(x_ref, wqkv_ref, bqkv_ref, rpb_ref, mask_ref, wp_ref, bp_ref,
                      o_ref, *, bblk, num_heads, scale):
    """One grid step == `bblk` batch elements, rows pre-flattened to (bblk*N, C)."""
    R, C = x_ref.shape                      # R = bblk * N
    N = R // bblk
    H = num_heads

    xb = x_ref[...]                         # (R, C) bf16 (pre-cast in the wrapper)

    # ---- Fused QKV projection: one (R, C) @ (C, 3C) MXU matmul + one bias add. ----
    qkv = jnp.dot(xb, wqkv_ref[...], preferred_element_type=jnp.float32)
    qkv = (qkv + bqkv_ref[...]).astype(jnp.bfloat16)            # (R, 3C), bf16 temps

    qkv3 = qkv.reshape(bblk, N, 3 * C)
    q3 = qkv3[:, :, :C]                     # (bblk, N, C)
    k3 = qkv3[:, :, C:2 * C]
    v3 = qkv3[:, :, 2 * C:]

    # ---- Head separation via channel masks (no width-D lane slices / concats). ----
    # mask_ref: (H, 1, 1, C) bf16 with 1.0 on head h's D channels.  Stacking the H
    # masked copies along the batch dim turns per-head attention into two 3-D
    # batched dot_generals over z = h * bblk + b.
    mask = mask_ref[...]                                                # (H, 1, 1, C)
    q_st = jnp.broadcast_to(q3[None], (H, bblk, N, C)).reshape(H * bblk, N, C)
    k_st = (k3[None] * mask).reshape(H * bblk, N, C)
    v_st = (v3[None] * mask).reshape(H * bblk, N, C)

    # Scores: contraction over the full C lanes; out-of-head lanes are exact zeros.
    s = jnp.einsum('znc,zmc->znm', q_st, k_st,
                   preferred_element_type=jnp.float32)                  # (H*bblk,N,N)
    s = s.reshape(H, bblk, N, N) * scale + rpb_ref[...]                 # + rel-pos bias

    # Numerically stable softmax in f32 (exact reciprocal; cost negligible at N=16).
    m = jnp.max(s, axis=-1, keepdims=True)
    e = jnp.exp(s - m)
    p = (e / jnp.sum(e, axis=-1, keepdims=True)).astype(jnp.bfloat16)
    p = p.reshape(H * bblk, N, N)

    # PV product per stacked head; summing over heads folds every head's output back
    # into its own C positions (the masked-out lanes of v_st are zero).
    o_st = jnp.einsum('znm,zmc->znc', p, v_st,
                      preferred_element_type=jnp.float32)               # (H*bblk,N,C)
    out = jnp.sum(o_st.reshape(H, bblk, N, C), axis=0)                  # (bblk, N, C)
    out = out.reshape(R, C).astype(jnp.bfloat16)

    # ---- Output projection: (R, C) @ (C, C), bf16 in, f32 accumulate. ----
    out = jnp.dot(out, wp_ref[...], preferred_element_type=jnp.float32) + bp_ref[...]
    # TODO(synk): on v5e, benchmark a lane-dense (bblk, N*C) output layout against
    # this (R, C=32) masked-store layout and keep whichever wins.
    o_ref[...] = out.astype(o_ref.dtype)


def _choose_block_batch(B_, N, C, H):
    """Prefer a single grid step (this kernel is latency-bound); only split the batch
    if the per-step working set would become large."""
    per_batch = (N * C * (2 + 4)              # x in (bf16) + out (f32)
                 + 3 * N * C * (4 + 2)        # fused qkv f32 + bf16 copies
                 + 3 * H * N * C * 2          # head-stacked q/k/v (bf16)
                 + 2 * H * N * N * 4)         # scores + probs (f32)
    budget = 8 * 1024 * 1024                  # conservative share of scoped VMEM
    bblk = B_
    while bblk > 1 and bblk * per_batch > budget:
        bblk -= 1
        while B_ % bblk:
            bblk -= 1
    return bblk


def attention_pallas(x, w_qkv, b_qkv, rel_pos_bias, w_proj, b_proj, num_heads):
    """x: (B_, N, C); w_qkv: (C, 3C); b_qkv: (1, 3C); rel_pos_bias: (H, N, N)."""
    B_, N, C = x.shape
    H = num_heads
    D = C // H
    scale = D ** (-0.5)

    bblk = _choose_block_batch(B_, N, C, H)
    grid = (B_ // bblk,)
    R = bblk * N

    # Free layout / dtype work at trace time (XLA side): flatten rows, bf16-cast the
    # activations and weights once (accumulation stays f32 inside the kernel).
    x2 = x.reshape(B_ * N, C).astype(jnp.bfloat16)
    wqkv = w_qkv.astype(jnp.bfloat16)
    wp = w_proj.astype(jnp.bfloat16)
    rpb4 = rel_pos_bias.reshape(H, 1, N, N)
    # Per-head channel mask (1.0 on head h's D channels), pre-shaped for broadcast.
    head_mask = (jnp.arange(C)[None, :] // D == jnp.arange(H)[:, None])
    head_mask = head_mask.astype(jnp.bfloat16).reshape(H, 1, 1, C)
    # TODO(synk): if this window attention is scaled up (large N), tile rel_pos_bias
    # and the kv axis with their own BlockSpecs (re-derive VMEM budget for v7x 64MiB).

    kernel = functools.partial(_attention_kernel, bblk=bblk, num_heads=H, scale=scale)

    flops = (2 * B_ * N * C * 3 * C            # fused QKV projection
             + 4 * B_ * H * N * N * C          # scores + PV (full-C masked contraction)
             + 2 * B_ * N * C * C)             # output projection
    transcendentals = B_ * H * N * N
    bytes_accessed = (B_ * N * C * 2 + B_ * N * C * 4
                      + (3 * C * C + C * C) * 2
                      + (3 * C + C) * 4 + H * N * N * 4 + H * C * 2)
    cost = pl.CostEstimate(flops=flops, transcendentals=transcendentals,
                           bytes_accessed=bytes_accessed)

    out2 = pl.pallas_call(
        kernel,
        out_shape=jax.ShapeDtypeStruct((B_ * N, C), x.dtype),
        grid_spec=pltpu.PrefetchScalarGridSpec(
            num_scalar_prefetch=0,
            grid=grid,
            in_specs=[
                pl.BlockSpec((R, C), lambda b: (b, 0)),               # x rows (bf16)
                pl.BlockSpec((C, 3 * C), lambda b: (0, 0)),           # fused W_qkv
                pl.BlockSpec((1, 3 * C), lambda b: (0, 0)),           # fused b_qkv
                pl.BlockSpec((H, 1, N, N), lambda b: (0, 0, 0, 0)),   # rel-pos bias
                pl.BlockSpec((H, 1, 1, C), lambda b: (0, 0, 0, 0)),   # per-head mask
                pl.BlockSpec((C, C), lambda b: (0, 0)),               # W_proj (bf16)
                pl.BlockSpec((1, C), lambda b: (0, 0)),               # b_proj
            ],
            out_specs=pl.BlockSpec((R, C), lambda b: (b, 0)),
        ),
        compiler_params=pltpu.CompilerParams(
            # Single step in the common case; if the batch ever splits, shard the
            # steps across TensorCores (v7x) instead.
            dimension_semantics=("arbitrary",) if grid[0] == 1 else ("parallel",)),
        cost_estimate=cost,
    )(x2, wqkv, b_qkv, rpb4, head_mask, wp, b_proj)

    return out2.reshape(B_, N, C)


def make_relative_position_index(patch_size):
    """Same construction as the PyTorch module (int index, shape (N, N))."""
    ph, pw = patch_size
    coords_h = jnp.arange(ph)
    coords_w = jnp.arange(pw)
    coords = jnp.stack(jnp.meshgrid(coords_h, coords_w, indexing="ij"))  # (2, ph, pw)
    coords_flatten = coords.reshape(2, -1)                               # (2, N)
    rel = coords_flatten[:, :, None] - coords_flatten[:, None, :]        # (2, N, N)
    rel = rel.transpose(1, 2, 0)                                         # (N, N, 2)
    r0 = (rel[..., 0] + ph - 1) * (2 * pw - 1)
    r1 = rel[..., 1] + pw - 1
    return r0 + r1                                                       # (N, N)


def reference_attention(x, w_qkv, b_qkv, rel_pos_bias, w_proj, b_proj, num_heads):
    """Pure-JAX f32 reference mirroring the PyTorch forward."""
    B_, N, C = x.shape
    D = C // num_heads
    scale = D ** (-0.5)
    qkv = x @ w_qkv + b_qkv[0]                        # (B_, N, 3C)
    qkv = qkv.reshape(B_, N, 3, num_heads, D).transpose(2, 0, 3, 1, 4)
    q, k, v = qkv[0], qkv[1], qkv[2]                  # (B_, H, N, D)
    attn = (q * scale) @ jnp.swapaxes(k, -2, -1)      # (B_, H, N, N)
    attn = attn + rel_pos_bias[None]                  # rpe
    attn = jax.nn.softmax(attn, axis=-1)
    out = (attn @ v).transpose(0, 2, 1, 3).reshape(B_, N, C)
    return out @ w_proj + b_proj[0]


if __name__ == "__main__":
    # Small, module-consistent shapes: dim=32, patch 4x4 -> N=16 tokens,
    # B_ = num_patches * batch = 8 * 2 = 16.
    dim = 32
    patch_size = (4, 4)
    num_heads = 4
    N = patch_size[0] * patch_size[1]
    B_ = 16

    key = jax.random.PRNGKey(0)
    k_x, k_wqkv, k_bqkv, k_tbl, k_wproj, k_bproj = jax.random.split(key, 6)

    x = jax.random.normal(k_x, (B_, N, dim), dtype=jnp.float32)

    # Deterministic synthetic parameters (no checkpoint load).
    w_qkv = jax.random.normal(k_wqkv, (dim, 3 * dim), dtype=jnp.float32) * 0.02
    b_qkv = jax.random.normal(k_bqkv, (1, 3 * dim), dtype=jnp.float32) * 0.02
    w_proj = jax.random.normal(k_wproj, (dim, dim), dtype=jnp.float32) * 0.02
    b_proj = jax.random.normal(k_bproj, (1, dim), dtype=jnp.float32) * 0.02

    # Relative position bias table ~ trunc_normal(std=0.02) -> plain normal here.
    table_len = (2 * patch_size[0] - 1) * (2 * patch_size[1] - 1)
    rpb_table = jax.random.normal(k_tbl, (table_len, num_heads), dtype=jnp.float32) * 0.02

    # Glue: gather the bias table into (H, N, N) outside the kernel (XLA-side).
    rel_idx = make_relative_position_index(patch_size)                  # (N, N)
    rel_pos_bias = rpb_table[rel_idx.reshape(-1)].reshape(N, N, num_heads)
    rel_pos_bias = jnp.transpose(rel_pos_bias, (2, 0, 1))               # (H, N, N)

    out = attention_pallas(x, w_qkv, b_qkv, rel_pos_bias, w_proj, b_proj, num_heads)
    out = jax.block_until_ready(out)

    ref = reference_attention(x, w_qkv, b_qkv, rel_pos_bias, w_proj, b_proj, num_heads)
    assert out.shape == (B_, N, dim)
    # bf16 matmul inputs -> slightly looser tolerance than pure f32.
    assert jnp.allclose(out, ref, rtol=2e-2, atol=3e-3), "mismatch vs JAX reference"

    print("KERNEL_OK")
</pallas_src>

<mosaic_0001>
module attributes {stable_mosaic.version = 11 : i64} {
  func.func @_attention_kernel(%arg0: i32, %arg1: memref<256x32xbf16, #tpu.memory_space<vmem>>, %arg2: memref<32x96xbf16, #tpu.memory_space<vmem>>, %arg3: memref<1x96xf32, #tpu.memory_space<vmem>>, %arg4: memref<4x1x16x16xf32, #tpu.memory_space<vmem>>, %arg5: memref<4x1x1x32xbf16, #tpu.memory_space<vmem>>, %arg6: memref<32x32xbf16, #tpu.memory_space<vmem>>, %arg7: memref<1x32xf32, #tpu.memory_space<vmem>>, %arg8: memref<256x32xf32, #tpu.memory_space<vmem>>) attributes {dimension_semantics = [#tpu.dimension_semantics<arbitrary>], iteration_bounds = array<i64: 1>, scalar_prefetch = 0 : i64, scratch_operands = 0 : i64, tpu.core_type = #tpu.core_type<tc>, window_params = [{transform_indices = @transform_0, window_bounds = array<i64: 256, 32>}, {pipeline_mode = #tpu.pipeline_mode<synchronous>, transform_indices = @transform_1, window_bounds = array<i64: 32, 96>}, {pipeline_mode = #tpu.pipeline_mode<synchronous>, transform_indices = @transform_2, window_bounds = array<i64: 1, 96>}, {pipeline_mode = #tpu.pipeline_mode<synchronous>, transform_indices = @transform_3, window_bounds = array<i64: 4, 1, 16, 16>}, {pipeline_mode = #tpu.pipeline_mode<synchronous>, transform_indices = @transform_4, window_bounds = array<i64: 4, 1, 1, 32>}, {pipeline_mode = #tpu.pipeline_mode<synchronous>, transform_indices = @transform_5, window_bounds = array<i64: 32, 32>}, {pipeline_mode = #tpu.pipeline_mode<synchronous>, transform_indices = @transform_6, window_bounds = array<i64: 1, 32>}, {transform_indices = @transform_7, window_bounds = array<i64: 256, 32>}]} {
    %c0 = arith.constant 0 : index
    %c0_0 = arith.constant 0 : index
    %0 = vector.load %arg1[%c0, %c0_0] : memref<256x32xbf16, #tpu.memory_space<vmem>>, vector<256x32xbf16>
    %c0_1 = arith.constant 0 : index
    %c0_2 = arith.constant 0 : index
    %1 = vector.load %arg2[%c0_1, %c0_2] : memref<32x96xbf16, #tpu.memory_space<vmem>>, vector<32x96xbf16>
    %cst = arith.constant dense<0.000000e+00> : vector<256x96xf32>
    %2 = tpu.matmul %0, %1, %cst {dimension_numbers = #tpu.dot_dimension_numbers<[1], [0], [0], [1], [0, 0, 1, 1], [], []>} : vector<256x32xbf16>, vector<32x96xbf16>, vector<256x96xf32> -> vector<256x96xf32>
    %c0_3 = arith.constant 0 : index
    %c0_4 = arith.constant 0 : index
    %3 = vector.load %arg3[%c0_3, %c0_4] : memref<1x96xf32, #tpu.memory_space<vmem>>, vector<1x96xf32>
    %4 = vector.broadcast %3 : vector<1x96xf32> to vector<256x96xf32>
    %5 = arith.addf %2, %4 : vector<256x96xf32>
    %6 = arith.truncf %5 : vector<256x96xf32> to vector<256x96xbf16>
    %7 = vector.shape_cast %6 : vector<256x96xbf16> to vector<16x16x96xbf16>
    %8 = vector.extract_strided_slice %7 {offsets = [0, 0, 0], sizes = [16, 16, 32], strides = [1, 1, 1]} : vector<16x16x96xbf16> to vector<16x16x32xbf16>
    %9 = vector.extract_strided_slice %7 {offsets = [0, 0, 32], sizes = [16, 16, 32], strides = [1, 1, 1]} : vector<16x16x96xbf16> to vector<16x16x32xbf16>
    %10 = vector.extract_strided_slice %7 {offsets = [0, 0, 64], sizes = [16, 16, 32], strides = [1, 1, 1]} : vector<16x16x96xbf16> to vector<16x16x32xbf16>
    %c0_5 = arith.constant 0 : index
    %c0_6 = arith.constant 0 : index
    %c0_7 = arith.constant 0 : index
    %c0_8 = arith.constant 0 : index
    %11 = vector.load %arg5[%c0_5, %c0_6, %c0_7, %c0_8] : memref<4x1x1x32xbf16, #tpu.memory_space<vmem>>, vector<4x1x1x32xbf16>
    %12 = vector.shape_cast %8 : vector<16x16x32xbf16> to vector<1x16x16x32xbf16>
    %13 = vector.shape_cast %12 : vector<1x16x16x32xbf16> to vector<1x16x16x32xbf16>
    %14 = vector.broadcast %13 : vector<1x16x16x32xbf16> to vector<4x16x16x32xbf16>
    %15 = vector.shape_cast %14 : vector<4x16x16x32xbf16> to vector<64x16x32xbf16>
    %16 = vector.shape_cast %9 : vector<16x16x32xbf16> to vector<1x16x16x32xbf16>
    %17 = vector.broadcast %16 : vector<1x16x16x32xbf16> to vector<4x16x16x32xbf16>
    %18 = vector.broadcast %11 : vector<4x1x1x32xbf16> to vector<4x16x16x32xbf16>
    %19 = arith.mulf %17, %18 : vector<4x16x16x32xbf16>
    %20 = vector.shape_cast %19 : vector<4x16x16x32xbf16> to vector<64x16x32xbf16>
    %21 = vector.shape_cast %10 : vector<16x16x32xbf16> to vector<1x16x16x32xbf16>
    %22 = vector.broadcast %21 : vector<1x16x16x32xbf16> to vector<4x16x16x32xbf16>
    %23 = vector.broadcast %11 : vector<4x1x1x32xbf16> to vector<4x16x16x32xbf16>
    %24 = arith.mulf %22, %23 : vector<4x16x16x32xbf16>
    %25 = vector.shape_cast %24 : vector<4x16x16x32xbf16> to vector<64x16x32xbf16>
    "tpu.trace_start"() <{level = 10 : i32, message = "znc,zmc->znm"}> : () -> ()
    %cst_9 = arith.constant dense<0.000000e+00> : vector<64x16x16xf32>
    %26 = tpu.matmul %15, %20, %cst_9 {dimension_numbers = #tpu.dot_dimension_numbers<[2], [2], [1], [1], [0, 0, 0, 1, 1, 1], [0], [0]>} : vector<64x16x32xbf16>, vector<64x16x32xbf16>, vector<64x16x16xf32> -> vector<64x16x16xf32>
    "tpu.trace_stop"() : () -> ()
    %27 = vector.shape_cast %26 : vector<64x16x16xf32> to vector<4x16x16x16xf32>
    %cst_10 = arith.constant 0.353553385 : f32
    %28 = vector.broadcast %cst_10 : f32 to vector<4x16x16x16xf32>
    %29 = arith.mulf %27, %28 : vector<4x16x16x16xf32>
    %c0_11 = arith.constant 0 : index
    %c0_12 = arith.constant 0 : index
    %c0_13 = arith.constant 0 : index
    %c0_14 = arith.constant 0 : index
    %30 = vector.load %arg4[%c0_11, %c0_12, %c0_13, %c0_14] : memref<4x1x16x16xf32, #tpu.memory_space<vmem>>, vector<4x1x16x16xf32>
    %31 = vector.broadcast %30 : vector<4x1x16x16xf32> to vector<4x16x16x16xf32>
    %32 = arith.addf %29, %31 : vector<4x16x16x16xf32>
    %cst_15 = arith.constant dense<0xFF800000> : vector<4x16x16xf32>
    %33 = vector.multi_reduction <maximumf>, %32, %cst_15 [3] : vector<4x16x16x16xf32> to vector<4x16x16xf32>
    %34 = vector.shape_cast %33 : vector<4x16x16xf32> to vector<4x16x16x1xf32>
    %35 = vector.broadcast %34 : vector<4x16x16x1xf32> to vector<4x16x16x16xf32>
    %36 = arith.subf %32, %35 : vector<4x16x16x16xf32>
    %37 = math.exp %36 : vector<4x16x16x16xf32>
    %cst_16 = arith.constant dense<0.000000e+00> : vector<4x16x16xf32>
    %38 = vector.multi_reduction <add>, %37, %cst_16 [3] : vector<4x16x16x16xf32> to vector<4x16x16xf32>
    %39 = vector.shape_cast %38 : vector<4x16x16xf32> to vector<4x16x16x1xf32>
    %40 = vector.broadcast %39 : vector<4x16x16x1xf32> to vector<4x16x16x16xf32>
    %41 = arith.divf %37, %40 : vector<4x16x16x16xf32>
    %42 = arith.truncf %41 : vector<4x16x16x16xf32> to vector<4x16x16x16xbf16>
    %43 = vector.shape_cast %42 : vector<4x16x16x16xbf16> to vector<64x16x16xbf16>
    "tpu.trace_start"() <{level = 10 : i32, message = "znm,zmc->znc"}> : () -> ()
    %cst_17 = arith.constant dense<0.000000e+00> : vector<64x16x32xf32>
    %44 = tpu.matmul %43, %25, %cst_17 {dimension_numbers = #tpu.dot_dimension_numbers<[2], [1], [1], [2], [0, 0, 0, 1, 1, 2], [0], [0]>} : vector<64x16x16xbf16>, vector<64x16x32xbf16>, vector<64x16x32xf32> -> vector<64x16x32xf32>
    "tpu.trace_stop"() : () -> ()
    %45 = vector.shape_cast %44 : vector<64x16x32xf32> to vector<4x16x16x32xf32>
    %cst_18 = arith.constant dense<0.000000e+00> : vector<16x16x32xf32>
    %46 = vector.multi_reduction <add>, %45, %cst_18 [0] : vector<4x16x16x32xf32> to vector<16x16x32xf32>
    %47 = vector.shape_cast %46 : vector<16x16x32xf32> to vector<256x32xf32>
    %48 = arith.truncf %47 : vector<256x32xf32> to vector<256x32xbf16>
    %c0_19 = arith.constant 0 : index
    %c0_20 = arith.constant 0 : index
    %49 = vector.load %arg6[%c0_19, %c0_20] : memref<32x32xbf16, #tpu.memory_space<vmem>>, vector<32x32xbf16>
    %cst_21 = arith.constant dense<0.000000e+00> : vector<256x32xf32>
    %50 = tpu.matmul %48, %49, %cst_21 {dimension_numbers = #tpu.dot_dimension_numbers<[1], [0], [0], [1], [0, 0, 1, 1], [], []>} : vector<256x32xbf16>, vector<32x32xbf16>, vector<256x32xf32> -> vector<256x32xf32>
    %c0_22 = arith.constant 0 : index
    %c0_23 = arith.constant 0 : index
    %51 = vector.load %arg7[%c0_22, %c0_23] : memref<1x32xf32, #tpu.memory_space<vmem>>, vector<1x32xf32>
    %52 = vector.broadcast %51 : vector<1x32xf32> to vector<256x32xf32>
    %53 = arith.addf %50, %52 : vector<256x32xf32>
    %c0_24 = arith.constant 0 : index
    %c0_25 = arith.constant 0 : index
    %54 = vector.load %arg8[%c0_24, %c0_25] : memref<256x32xf32, #tpu.memory_space<vmem>>, vector<256x32xf32>
    tpu.vector_store %arg8[%c0_24, %c0_25], %53 {strides = array<i32>} : memref<256x32xf32, #tpu.memory_space<vmem>>, vector<256x32xf32>,
    return
  }
  func.func @transform_0(%arg0: i32) -> (i32, i32) {
    %c0_i32 = arith.constant 0 : i32
    %c0_i32_0 = arith.constant 0 : i32
    return %arg0, %c0_i32 : i32, i32
  }
  func.func @transform_1(%arg0: i32) -> (i32, i32) {
    %c0_i32 = arith.constant 0 : i32
    %c0_i32_0 = arith.constant 0 : i32
    %c0_i32_1 = arith.constant 0 : i32
    return %c0_i32, %c0_i32_0 : i32, i32
  }
  func.func @transform_2(%arg0: i32) -> (i32, i32) {
    %c0_i32 = arith.constant 0 : i32
    %c0_i32_0 = arith.constant 0 : i32
    %c0_i32_1 = arith.constant 0 : i32
    return %c0_i32, %c0_i32_0 : i32, i32
  }
  func.func @transform_3(%arg0: i32) -> (i32, i32, i32, i32) {
    %c0_i32 = arith.constant 0 : i32
    %c0_i32_0 = arith.constant 0 : i32
    %c0_i32_1 = arith.constant 0 : i32
    %c0_i32_2 = arith.constant 0 : i32
    %c0_i32_3 = arith.constant 0 : i32
    return %c0_i32, %c0_i32_0, %c0_i32_1, %c0_i32_2 : i32, i32, i32, i32
  }
  func.func @transform_4(%arg0: i32) -> (i32, i32, i32, i32) {
    %c0_i32 = arith.constant 0 : i32
    %c0_i32_0 = arith.constant 0 : i32
    %c0_i32_1 = arith.constant 0 : i32
    %c0_i32_2 = arith.constant 0 : i32
    %c0_i32_3 = arith.constant 0 : i32
    return %c0_i32, %c0_i32_0, %c0_i32_1, %c0_i32_2 : i32, i32, i32, i32
  }
  func.func @transform_5(%arg0: i32) -> (i32, i32) {
    %c0_i32 = arith.constant 0 : i32
    %c0_i32_0 = arith.constant 0 : i32
    %c0_i32_1 = arith.constant 0 : i32
    return %c0_i32, %c0_i32_0 : i32, i32
  }
  func.func @transform_6(%arg0: i32) -> (i32, i32) {
    %c0_i32 = arith.constant 0 : i32
    %c0_i32_0 = arith.constant 0 : i32
    %c0_i32_1 = arith.constant 0 : i32
    return %c0_i32, %c0_i32_0 : i32, i32
  }
  func.func @transform_7(%arg0: i32) -> (i32, i32) {
    %c0_i32 = arith.constant 0 : i32
    %c0_i32_0 = arith.constant 0 : i32
    return %arg0, %c0_i32 : i32, i32
  }
}

</mosaic_0001>

<llo_original>
// kernel: tpu_custom_call.1
$region0: #{tpu_custom_call.1}
  #allocation0 [shape = 'u32[]', space=smem, size = 0x4, offset = 0x4, fixed_abs, tag = 'smem constant byte address 0x4 - core index']
  #allocation1 [shape = 'u32[144,128]{1,0:T(1,128)}', space=vmem, size = 0x12000, scoped, tag = 'internal scratch']
  %s0 = inlined_call_operand.vmem [shape: bf16[256,32], index: 0, kind: input, shape index: {}]
  %s1 = inlined_call_operand.vmem [shape: bf16[32,96], index: 1, kind: input, shape index: {}]
  %s2 = inlined_call_operand.vmem [shape: f32[1,96], index: 2, kind: input, shape index: {}]
  %s3 = inlined_call_operand.vmem [shape: f32[4,1,16,16], index: 3, kind: input, shape index: {}]
  %s4 = inlined_call_operand.vmem [shape: bf16[4,1,1,32], index: 4, kind: input, shape index: {}]
  %s5 = inlined_call_operand.vmem [shape: bf16[32,32], index: 5, kind: input, shape index: {}]
  %s6 = inlined_call_operand.vmem [shape: f32[1,32], index: 6, kind: input, shape index: {}]
  %s7 = inlined_call_operand.vmem [shape: f32[256,32], index: 7, kind: output, shape index: {}]
  %s8 = sld [smem:[#allocation0]]
  $region38: #{tpu_custom_call.1} parent=0
    _
  %s10 = ssub.s32 1, %s8
  %s11 = scalar_select 0, %s10, %s8
  // Predicated region
  $region2: #{tpu_custom_call.1} parent=0 // pred_check
    _
  $region3: #{tpu_custom_call.1} parent=0 // pred_check_branch
    %13 = sbr.rel (0) target = $region5
  $region4: #{tpu_custom_call.1} parent=0 // pred_region
    _
  $region5: #{tpu_custom_call.1} parent=0 // pred_fallthru
    _
  // Predicated region
  $region6: #{tpu_custom_call.1} parent=0 // pred_check
    _
  $region7: #{tpu_custom_call.1} parent=0 // pred_check_branch
    %15 = sbr.rel (0) target = $region9
  $region8: #{tpu_custom_call.1} parent=0 // pred_region
    _
  $region9: #{tpu_custom_call.1} parent=0 // pred_fallthru
    _
  // Predicated region
  $region10: #{tpu_custom_call.1} parent=0 // pred_check
    _
  $region11: #{tpu_custom_call.1} parent=0 // pred_check_branch
    %17 = sbr.rel (0) target = $region13
  $region12: #{tpu_custom_call.1} parent=0 // pred_region
    _
  $region13: #{tpu_custom_call.1} parent=0 // pred_fallthru
    _
  // Predicated region
  $region14: #{tpu_custom_call.1} parent=0 // pred_check
    _
  $region15: #{tpu_custom_call.1} parent=0 // pred_check_branch
    %19 = sbr.rel (0) target = $region17
  $region16: #{tpu_custom_call.1} parent=0 // pred_region
    _
  $region17: #{tpu_custom_call.1} parent=0 // pred_fallthru
    _
  // Predicated region
  $region18: #{tpu_custom_call.1} parent=0 // pred_check
    _
  $region19: #{tpu_custom_call.1} parent=0 // pred_check_branch
    %21 = sbr.rel (0) target = $region21
  $region20: #{tpu_custom_call.1} parent=0 // pred_region
    _
  $region21: #{tpu_custom_call.1} parent=0 // pred_fallthru
    _
  // Predicated region
  $region22: #{tpu_custom_call.1} parent=0 // pred_check
    _
  $region23: #{tpu_custom_call.1} parent=0 // pred_check_branch
    %23 = sbr.rel (0) target = $region25
  $region24: #{tpu_custom_call.1} parent=0 // pred_region
    _
  $region25: #{tpu_custom_call.1} parent=0 // pred_fallthru
    _
  // Predicated region
  $region26: #{tpu_custom_call.1} parent=0 // pred_check
    _
  $region27: #{tpu_custom_call.1} parent=0 // pred_check_branch
    %25 = sbr.rel (0) target = $region29
  $region28: #{tpu_custom_call.1} parent=0 // pred_region
    _
  $region29: #{tpu_custom_call.1} parent=0 // pred_fallthru
    _
  %v27 = vld [vmem:[%s0] sm:$0xf]
  %v28 = vld [vmem:[%s0 + $0x4] sm:$0xf]
  %v29 = vld [vmem:[%s0 + $0x8] sm:$0xf]
  %v30 = vld [vmem:[%s0 + $0xc] sm:$0xf]
  %v31 = vld [vmem:[%s0 + $0x10] sm:$0xf]
  %v32 = vld [vmem:[%s0 + $0x14] sm:$0xf]
  %v33 = vld [vmem:[%s0 + $0x18] sm:$0xf]
  %v34 = vld [vmem:[%s0 + $0x1c] sm:$0xf]
  %v35 = vld [vmem:[%s0 + $0x20] sm:$0xf]
  %v36 = vld [vmem:[%s0 + $0x24] sm:$0xf]
  %v37 = vld [vmem:[%s0 + $0x28] sm:$0xf]
  %v38 = vld [vmem:[%s0 + $0x2c] sm:$0xf]
  %v39 = vld [vmem:[%s0 + $0x30] sm:$0xf]
  %v40 = vld [vmem:[%s0 + $0x34] sm:$0xf]
  %v41 = vld [vmem:[%s0 + $0x38] sm:$0xf]
  %v42 = vld [vmem:[%s0 + $0x3c] sm:$0xf]
  %v43 = vld [vmem:[%s0 + $0x40] sm:$0xf]
  %v44 = vld [vmem:[%s0 + $0x44] sm:$0xf]
  %v45 = vld [vmem:[%s0 + $0x48] sm:$0xf]
  %v46 = vld [vmem:[%s0 + $0x4c] sm:$0xf]
  %v47 = vld [vmem:[%s0 + $0x50] sm:$0xf]
  %v48 = vld [vmem:[%s0 + $0x54] sm:$0xf]
  %v49 = vld [vmem:[%s0 + $0x58] sm:$0xf]
  %v50 = vld [vmem:[%s0 + $0x5c] sm:$0xf]
  %v51 = vld [vmem:[%s0 + $0x60] sm:$0xf]
  %v52 = vld [vmem:[%s0 + $0x64] sm:$0xf]
  %v53 = vld [vmem:[%s0 + $0x68] sm:$0xf]
  %v54 = vld [vmem:[%s0 + $0x6c] sm:$0xf]
  %v55 = vld [vmem:[%s0 + $0x70] sm:$0xf]
  %v56 = vld [vmem:[%s0 + $0x74] sm:$0xf]
  %v57 = vld [vmem:[%s0 + $0x78] sm:$0xf]
  %v58 = vld [vmem:[%s0 + $0x7c] sm:$0xf]
  %v59 = vld [vmem:[%s1] sm:$0xf]
  %v60 = vld [vmem:[%s1 + $0x4] sm:$0xf]
  %v61 = vld [vmem:[%s1 + $0x8] sm:$0xf]
  %v62 = vld [vmem:[%s1 + $0xc] sm:$0xf]
  %v63 = vld [vmem:[%s2] sm:$0x1]
  %v65 = vlaneseq
  %v66 = vshrl.u32 %v65, 7
  %v67 = vsub.s32 0, %v66
  %v68 = vrot.slane %v63, %v67
  %v102 = vunpack.c.l.b16 %v27
  %v103 = vunpack.c.l.b16 %v28
  %v104 = vunpack.c.l.b16 %v29
  %v105 = vunpack.c.l.b16 %v30
  %v106 = vunpack.c.l.b16 %v31
  %v107 = vunpack.c.l.b16 %v32
  %v108 = vunpack.c.l.b16 %v33
  %v109 = vunpack.c.l.b16 %v34
  %v110 = vunpack.c.l.b16 %v35
  %v111 = vunpack.c.l.b16 %v36
  %v112 = vunpack.c.l.b16 %v37
  %v113 = vunpack.c.l.b16 %v38
  %v114 = vunpack.c.l.b16 %v39
  %v115 = vunpack.c.l.b16 %v40
  %v116 = vunpack.c.l.b16 %v41
  %v117 = vunpack.c.l.b16 %v42
  %v118 = vunpack.c.l.b16 %v43
  %v119 = vunpack.c.l.b16 %v44
  %v120 = vunpack.c.l.b16 %v45
  %v121 = vunpack.c.l.b16 %v46
  %v122 = vunpack.c.l.b16 %v47
  %v123 = vunpack.c.l.b16 %v48
  %v124 = vunpack.c.l.b16 %v49
  %v125 = vunpack.c.l.b16 %v50
  %v126 = vunpack.c.l.b16 %v51
  %v127 = vunpack.c.l.b16 %v52
  %v128 = vunpack.c.l.b16 %v53
  %v129 = vunpack.c.l.b16 %v54
  %v130 = vunpack.c.l.b16 %v55
  %v131 = vunpack.c.l.b16 %v56
  %v132 = vunpack.c.l.b16 %v57
  %v133 = vunpack.c.l.b16 %v58
  %v134 = vpack.c.b16 %v103, %v102
  %v135 = vpack.c.b16 %v105, %v104
  %v136 = vpack.c.b16 %v107, %v106
  %v137 = vpack.c.b16 %v109, %v108
  %v138 = vpack.c.b16 %v111, %v110
  %v139 = vpack.c.b16 %v113, %v112
  %v140 = vpack.c.b16 %v115, %v114
  %v141 = vpack.c.b16 %v117, %v116
  %v142 = vpack.c.b16 %v119, %v118
  %v143 = vpack.c.b16 %v121, %v120
  %v144 = vpack.c.b16 %v123, %v122
  %v145 = vpack.c.b16 %v125, %v124
  %v146 = vpack.c.b16 %v127, %v126
  %v147 = vpack.c.b16 %v129, %v128
  %v148 = vpack.c.b16 %v131, %v130
  %v149 = vpack.c.b16 %v133, %v132
  %v154 = vunpack.c.l.b16 %v59
  %v155 = vunpack.c.l.b16 %v60
  %v156 = vunpack.c.l.b16 %v61
  %v157 = vunpack.c.l.b16 %v62
  %v158 = vpack.c.b16 %v155, %v154
  %v159 = vpack.c.b16 %v157, %v156
  %vm162 = vcmask 261120
  %v164 = vsel %vm162, %v134, 0
  %v167 = vsel %vm162, %v135, 0
  %v170 = vsel %vm162, %v136, 0
  %v173 = vsel %vm162, %v137, 0
  %v176 = vsel %vm162, %v138, 0
  %v179 = vsel %vm162, %v139, 0
  %v182 = vsel %vm162, %v140, 0
  %v185 = vsel %vm162, %v141, 0
  %v188 = vsel %vm162, %v142, 0
  %v191 = vsel %vm162, %v143, 0
  %v194 = vsel %vm162, %v144, 0
  %v197 = vsel %vm162, %v145, 0
  %v200 = vsel %vm162, %v146, 0
  %v203 = vsel %vm162, %v147, 0
  %v206 = vsel %vm162, %v148, 0
  %v209 = vsel %vm162, %v149, 0
  %211 = vmatprep.subr.bf16.mxu0 0
  %212 = vmatpush1.bf16.msra.mxu0 %v158
  %213 = vmatprep.subr.bf16.mxu0 0
  %214 = vmatpush1.bf16.msra.mxu0 %v159
  %215 = vmatprep.subr.bf16.mxu0 0
  %216 = vmatpush1.bf16.msra.mxu0 0
  %217 = vmatprep.subr.bf16.mxu0 0
  %218 = vmatpush1.bf16.msra.mxu0 0
  %219 = vmatprep.subr.bf16.mxu0 0
  %220 = vmatpush1.bf16.msra.mxu0 0
  %221 = vmatprep.subr.bf16.mxu0 0
  %222 = vmatpush1.bf16.msra.mxu0 0
  %223 = vmatprep.subr.bf16.mxu0 0
  %224 = vmatpush1.bf16.msra.mxu0 0
  %225 = vmatprep.subr.bf16.mxu0 0
  %226 = vmatpush1.bf16.msra.mxu0 0
  %227 = vmatprep.subr.bf16.mxu0 0
  %228 = vmatpush1.bf16.msra.mxu0 0
  %229 = vmatprep.subr.bf16.mxu0 0
  %230 = vmatpush1.bf16.msra.mxu0 0
  %231 = vmatprep.subr.bf16.mxu0 0
  %232 = vmatpush1.bf16.msra.mxu0 0
  %233 = vmatprep.subr.bf16.mxu0 0
  %234 = vmatpush1.bf16.msra.mxu0 0
  %235 = vmatprep.subr.bf16.mxu0 0
  %236 = vmatpush1.bf16.msra.mxu0 0
  %237 = vmatprep.subr.bf16.mxu0 0
  %238 = vmatpush1.bf16.msra.mxu0 0
  %239 = vmatprep.subr.bf16.mxu0 0
  %240 = vmatpush1.bf16.msra.mxu0 0
  %241 = vmatprep.subr.bf16.mxu0 0
  %242 = vmatpush1.bf16.msra.mxu0 0
  %243 = vmatprep.mubr.bf16.mxu0 0
  %244 = vmatmul.mubr.bf16.gmra.mrb[0].mxu0 %v164
  %v245 = vpop.f32.mrb[0].mxu0
  %v246 = vadd.f32 %v68, %v245
  %v247 = vpop.f32.mrb[0].mxu0
  %v248 = vpop.f32.mrb[0].mxu0
  %v249 = vadd.f32 %v68, %v248
  %v250 = vpop.f32.mrb[0].mxu0
  %251 = vmatprep.mubr.bf16.mxu0 0
  %252 = vmatmul.mubr.bf16.gmra.mrb[0].mxu0 %v167
  %v253 = vpop.f32.mrb[0].mxu0
  %v254 = vadd.f32 %v68, %v253
  %v255 = vpop.f32.mrb[0].mxu0
  %v256 = vpop.f32.mrb[0].mxu0
  %v257 = vadd.f32 %v68, %v256
  %v258 = vpop.f32.mrb[0].mxu0
  %259 = vmatprep.mubr.bf16.mxu0 0
  %260 = vmatmul.mubr.bf16.gmra.mrb[0].mxu0 %v170
  %v261 = vpop.f32.mrb[0].mxu0
  %v262 = vadd.f32 %v68, %v261
  %v263 = vpop.f32.mrb[0].mxu0
  %v264 = vpop.f32.mrb[0].mxu0
  %v265 = vadd.f32 %v68, %v264
  %v266 = vpop.f32.mrb[0].mxu0
  %267 = vmatprep.mubr.bf16.mxu0 0
  %268 = vmatmul.mubr.bf16.gmra.mrb[0].mxu0 %v173
  %v269 = vpop.f32.mrb[0].mxu0
  %v270 = vadd.f32 %v68, %v269
  %v271 = vpop.f32.mrb[0].mxu0
  %v272 = vpop.f32.mrb[0].mxu0
  %v273 = vadd.f32 %v68, %v272
  %v274 = vpop.f32.mrb[0].mxu0
  %275 = vmatprep.mubr.bf16.mxu0 0
  %276 = vmatmul.mubr.bf16.gmra.mrb[0].mxu0 %v176
  %v277 = vpop.f32.mrb[0].mxu0
  %v278 = vadd.f32 %v68, %v277
  %v279 = vpop.f32.mrb[0].mxu0
  %v280 = vpop.f32.mrb[0].mxu0
  %v281 = vadd.f32 %v68, %v280
  %v282 = vpop.f32.mrb[0].mxu0
  %283 = vmatprep.mubr.bf16.mxu0 0
  %284 = vmatmul.mubr.bf16.gmra.mrb[0].mxu0 %v179
  %v285 = vpop.f32.mrb[0].mxu0
  %v286 = vadd.f32 %v68, %v285
  %v287 = vpop.f32.mrb[0].mxu0
  %v288 = vpop.f32.mrb[0].mxu0
  %v289 = vadd.f32 %v68, %v288
  %v290 = vpop.f32.mrb[0].mxu0
  %291 = vmatprep.mubr.bf16.mxu0 0
  %292 = vmatmul.mubr.bf16.gmra.mrb[0].mxu0 %v182
  %v293 = vpop.f32.mrb[0].mxu0
  %v294 = vadd.f32 %v68, %v293
  %v295 = vpop.f32.mrb[0].mxu0
  %v296 = vpop.f32.mrb[0].mxu0
  %v297 = vadd.f32 %v68, %v296
  %v298 = vpop.f32.mrb[0].mxu0
  %299 = vmatprep.mubr.bf16.mxu0 0
  %300 = vmatmul.mubr.bf16.gmra.mrb[0].mxu0 %v185
  %v301 = vpop.f32.mrb[0].mxu0
  %v302 = vadd.f32 %v68, %v301
  %v303 = vpop.f32.mrb[0].mxu0
  %v304 = vpop.f32.mrb[0].mxu0
  %v305 = vadd.f32 %v68, %v304
  %v306 = vpop.f32.mrb[0].mxu0
  %307 = vmatprep.mubr.bf16.mxu0 0
  %308 = vmatmul.mubr.bf16.gmra.mrb[0].mxu0 %v188
  %v309 = vpop.f32.mrb[0].mxu0
  %v310 = vadd.f32 %v68, %v309
  %v311 = vpop.f32.mrb[0].mxu0
  %v312 = vpop.f32.mrb[0].mxu0
  %v313 = vadd.f32 %v68, %v312
  %v314 = vpop.f32.mrb[0].mxu0
  %315 = vmatprep.mubr.bf16.mxu0 0
  %316 = vmatmul.mubr.bf16.gmra.mrb[0].mxu0 %v191
  %v317 = vpop.f32.mrb[0].mxu0
  %v318 = vadd.f32 %v68, %v317
  %v319 = vpop.f32.mrb[0].mxu0
  %v320 = vpop.f32.mrb[0].mxu0
  %v321 = vadd.f32 %v68, %v320
  %v322 = vpop.f32.mrb[0].mxu0
  %323 = vmatprep.mubr.bf16.mxu0 0
  %324 = vmatmul.mubr.bf16.gmra.mrb[0].mxu0 %v194
  %v325 = vpop.f32.mrb[0].mxu0
  %v326 = vadd.f32 %v68, %v325
  %v327 = vpop.f32.mrb[0].mxu0
  %v328 = vpop.f32.mrb[0].mxu0
  %v329 = vadd.f32 %v68, %v328
  %v330 = vpop.f32.mrb[0].mxu0
  %331 = vmatprep.mubr.bf16.mxu0 0
  %332 = vmatmul.mubr.bf16.gmra.mrb[0].mxu0 %v197
  %v333 = vpop.f32.mrb[0].mxu0
  %v334 = vadd.f32 %v68, %v333
  %v335 = vpop.f32.mrb[0].mxu0
  %v336 = vpop.f32.mrb[0].mxu0
  %v337 = vadd.f32 %v68, %v336
  %v338 = vpop.f32.mrb[0].mxu0
  %339 = vmatprep.mubr.bf16.mxu0 0
  %340 = vmatmul.mubr.bf16.gmra.mrb[0].mxu0 %v200
  %v341 = vpop.f32.mrb[0].mxu0
  %v342 = vadd.f32 %v68, %v341
  %v343 = vpop.f32.mrb[0].mxu0
  %v344 = vpop.f32.mrb[0].mxu0
  %v345 = vadd.f32 %v68, %v344
  %v346 = vpop.f32.mrb[0].mxu0
  %347 = vmatprep.mubr.bf16.mxu0 0
  %348 = vmatmul.mubr.bf16.gmra.mrb[0].mxu0 %v203
  %v349 = vpop.f32.mrb[0].mxu0
  %v350 = vadd.f32 %v68, %v349
  %v351 = vpop.f32.mrb[0].mxu0
  %v352 = vpop.f32.mrb[0].mxu0
  %v353 = vadd.f32 %v68, %v352
  %v354 = vpop.f32.mrb[0].mxu0
  %355 = vmatprep.mubr.bf16.mxu0 0
  %356 = vmatmul.mubr.bf16.gmra.mrb[0].mxu0 %v206
  %v357 = vpop.f32.mrb[0].mxu0
  %v358 = vadd.f32 %v68, %v357
  %v359 = vpop.f32.mrb[0].mxu0
  %v360 = vpop.f32.mrb[0].mxu0
  %v361 = vadd.f32 %v68, %v360
  %v362 = vpop.f32.mrb[0].mxu0
  %363 = vmatprep.mubr.bf16.mxu0 0
  %364 = vmatmul.mubr.bf16.gmra.mrb[0].mxu0 %v209
  %v365 = vpop.f32.mrb[0].mxu0
  %v366 = vadd.f32 %v68, %v365
  %v367 = vpop.f32.mrb[0].mxu0
  %v368 = vpop.f32.mrb[0].mxu0
  %v369 = vadd.f32 %v68, %v368
  %v370 = vpop.f32.mrb[0].mxu0
  %371 = vdwg.mxu0
  %v372 = vpack.c.bf16 %v249, %v246
  %v373 = vpack.c.bf16 %v257, %v254
  %v374 = vpack.c.bf16 %v265, %v262
  %v375 = vpack.c.bf16 %v273, %v270
  %v376 = vpack.c.bf16 %v281, %v278
  %v377 = vpack.c.bf16 %v289, %v286
  %v378 = vpack.c.bf16 %v297, %v294
  %v379 = vpack.c.bf16 %v305, %v302
  %v380 = vpack.c.bf16 %v313, %v310
  %v381 = vpack.c.bf16 %v321, %v318
  %v382 = vpack.c.bf16 %v329, %v326
  %v383 = vpack.c.bf16 %v337, %v334
  %v384 = vpack.c.bf16 %v345, %v342
  %v385 = vpack.c.bf16 %v353, %v350
  %v386 = vpack.c.bf16 %v361, %v358
  %v387 = vpack.c.bf16 %v369, %v366
  %v388 = vld [vmem:[%s4] sm:$0x1]
  %v389 = vld [vmem:[%s4 + $0x1] sm:$0x1]
  %v390 = vld [vmem:[%s4 + $0x2] sm:$0x1]
  %v391 = vld [vmem:[%s4 + $0x3] sm:$0x1]
  %v393 = vpack.i.b16 %v388, %v388
  %v395 = vlaneseq
  %v396 = vshrl.u32 %v395, 7
  %v397 = vsub.s32 0, %v396
  %v398 = vrot.slane %v393, %v397
  %v400 = vpack.i.b16 %v389, %v389
  %v402 = vlaneseq
  %v403 = vshrl.u32 %v402, 7
  %v404 = vsub.s32 0, %v403
  %v405 = vrot.slane %v400, %v404
  %v407 = vpack.i.b16 %v390, %v390
  %v409 = vlaneseq
  %v410 = vshrl.u32 %v409, 7
  %v411 = vsub.s32 0, %v410
  %v412 = vrot.slane %v407, %v411
  %v414 = vpack.i.b16 %v391, %v391
  %v416 = vlaneseq
  %v417 = vshrl.u32 %v416, 7
  %v418 = vsub.s32 0, %v417
  %v419 = vrot.slane %v414, %v418
  %424 = vrot.lane.b32.xlu0 %v398, 32
  %v425 = vpop.permute.xlu0 %424
  %426 = vrot.lane.b32.xlu0 %v405, 32
  %v427 = vpop.permute.xlu0 %426
  %428 = vrot.lane.b32.xlu0 %v412, 32
  %v429 = vpop.permute.xlu0 %428
  %430 = vrot.lane.b32.xlu0 %v419, 32
  %v431 = vpop.permute.xlu0 %430
  %v436 = vmul.bf16 %v372, %v425
  %v437 = vmul.bf16 %v373, %v425
  %v438 = vmul.bf16 %v374, %v425
  %v439 = vmul.bf16 %v375, %v425
  %v440 = vmul.bf16 %v376, %v425
  %v441 = vmul.bf16 %v377, %v425
  %v442 = vmul.bf16 %v378, %v425
  %v443 = vmul.bf16 %v379, %v425
  %v444 = vmul.bf16 %v380, %v425
  %v445 = vmul.bf16 %v381, %v425
  %v446 = vmul.bf16 %v382, %v425
  %v447 = vmul.bf16 %v383, %v425
  %v448 = vmul.bf16 %v384, %v425
  %v449 = vmul.bf16 %v385, %v425
  %v450 = vmul.bf16 %v386, %v425
  %v451 = vmul.bf16 %v387, %v425
  %v452 = vmul.bf16 %v372, %v427
  %v453 = vmul.bf16 %v373, %v427
  %v454 = vmul.bf16 %v374, %v427
  %v455 = vmul.bf16 %v375, %v427
  %v456 = vmul.bf16 %v376, %v427
  %v457 = vmul.bf16 %v377, %v427
  %v458 = vmul.bf16 %v378, %v427
  %v459 = vmul.bf16 %v379, %v427
  %v460 = vmul.bf16 %v380, %v427
  %v461 = vmul.bf16 %v381, %v427
  %v462 = vmul.bf16 %v382, %v427
  %v463 = vmul.bf16 %v383, %v427
  %v464 = vmul.bf16 %v384, %v427
  %v465 = vmul.bf16 %v385, %v427
  %v466 = vmul.bf16 %v386, %v427
  %v467 = vmul.bf16 %v387, %v427
  %v468 = vmul.bf16 %v372, %v429
  %v469 = vmul.bf16 %v373, %v429
  %v470 = vmul.bf16 %v374, %v429
  %v471 = vmul.bf16 %v375, %v429
  %v472 = vmul.bf16 %v376, %v429
  %v473 = vmul.bf16 %v377, %v429
  %v474 = vmul.bf16 %v378, %v429
  %v475 = vmul.bf16 %v379, %v429
  %v476 = vmul.bf16 %v380, %v429
  %v477 = vmul.bf16 %v381, %v429
  %v478 = vmul.bf16 %v382, %v429
  %v479 = vmul.bf16 %v383, %v429
  %v480 = vmul.bf16 %v384, %v429
  %v481 = vmul.bf16 %v385, %v429
  %v482 = vmul.bf16 %v386, %v429
  %v483 = vmul.bf16 %v387, %v429
  %v484 = vmul.bf16 %v372, %v431
  %v485 = vmul.bf16 %v373, %v431
  %v486 = vmul.bf16 %v374, %v431
  %v487 = vmul.bf16 %v375, %v431
  %v488 = vmul.bf16 %v376, %v431
  %v489 = vmul.bf16 %v377, %v431
  %v490 = vmul.bf16 %v378, %v431
  %v491 = vmul.bf16 %v379, %v431
  %v492 = vmul.bf16 %v380, %v431
  %v493 = vmul.bf16 %v381, %v431
  %v494 = vmul.bf16 %v382, %v431
  %v495 = vmul.bf16 %v383, %v431
  %v496 = vmul.bf16 %v384, %v431
  %v497 = vmul.bf16 %v385, %v431
  %v498 = vmul.bf16 %v386, %v431
  %v499 = vmul.bf16 %v387, %v431
  %500 = vrot.lane.b32.xlu0 %v398, 64
  %v501 = vpop.permute.xlu0 %500
  %502 = vrot.lane.b32.xlu0 %v405, 64
  %v503 = vpop.permute.xlu0 %502
  %504 = vrot.lane.b32.xlu0 %v412, 64
  %v505 = vpop.permute.xlu0 %504
  %506 = vrot.lane.b32.xlu0 %v419, 64
  %v507 = vpop.permute.xlu0 %506
  %v512 = vmul.bf16 %v372, %v501
  %v513 = vmul.bf16 %v373, %v501
  %v514 = vmul.bf16 %v374, %v501
  %v515 = vmul.bf16 %v375, %v501
  %v516 = vmul.bf16 %v376, %v501
  %v517 = vmul.bf16 %v377, %v501
  %v518 = vmul.bf16 %v378, %v501
  %v519 = vmul.bf16 %v379, %v501
  %v520 = vmul.bf16 %v380, %v501
  %v521 = vmul.bf16 %v381, %v501
  %v522 = vmul.bf16 %v382, %v501
  %v523 = vmul.bf16 %v383, %v501
  %v524 = vmul.bf16 %v384, %v501
  %v525 = vmul.bf16 %v385, %v501
  %v526 = vmul.bf16 %v386, %v501
  %v527 = vmul.bf16 %v387, %v501
  %v528 = vmul.bf16 %v372, %v503
  %v529 = vmul.bf16 %v373, %v503
  %v530 = vmul.bf16 %v374, %v503
  %v531 = vmul.bf16 %v375, %v503
  %v532 = vmul.bf16 %v376, %v503
  %v533 = vmul.bf16 %v377, %v503
  %v534 = vmul.bf16 %v378, %v503
  %v535 = vmul.bf16 %v379, %v503
  %v536 = vmul.bf16 %v380, %v503
  %v537 = vmul.bf16 %v381, %v503
  %v538 = vmul.bf16 %v382, %v503
  %v539 = vmul.bf16 %v383, %v503
  %v540 = vmul.bf16 %v384, %v503
  %v541 = vmul.bf16 %v385, %v503
  %v542 = vmul.bf16 %v386, %v503
  %v543 = vmul.bf16 %v387, %v503
  %v544 = vmul.bf16 %v372, %v505
  %v545 = vmul.bf16 %v373, %v505
  %v546 = vmul.bf16 %v374, %v505
  %v547 = vmul.bf16 %v375, %v505
  %v548 = vmul.bf16 %v376, %v505
  %v549 = vmul.bf16 %v377, %v505
  %v550 = vmul.bf16 %v378, %v505
  %v551 = vmul.bf16 %v379, %v505
  %v552 = vmul.bf16 %v380, %v505
  %v553 = vmul.bf16 %v381, %v505
  %v554 = vmul.bf16 %v382, %v505
  %v555 = vmul.bf16 %v383, %v505
  %v556 = vmul.bf16 %v384, %v505
  %v557 = vmul.bf16 %v385, %v505
  %v558 = vmul.bf16 %v386, %v505
  %v559 = vmul.bf16 %v387, %v505
  %v560 = vmul.bf16 %v372, %v507
  %v561 = vmul.bf16 %v373, %v507
  %v562 = vmul.bf16 %v374, %v507
  %v563 = vmul.bf16 %v375, %v507
  %v564 = vmul.bf16 %v376, %v507
  %v565 = vmul.bf16 %v377, %v507
  %v566 = vmul.bf16 %v378, %v507
  %v567 = vmul.bf16 %v379, %v507
  %v568 = vmul.bf16 %v380, %v507
  %v569 = vmul.bf16 %v381, %v507
  %v570 = vmul.bf16 %v382, %v507
  %v571 = vmul.bf16 %v383, %v507
  %v572 = vmul.bf16 %v384, %v507
  %v573 = vmul.bf16 %v385, %v507
  %v574 = vmul.bf16 %v386, %v507
  %v575 = vmul.bf16 %v387, %v507
  %577 = vrot.lane.b32.xlu0 %v436, 96
  %v578 = vpop.permute.xlu0 %577
  %v580 = vsel %vm162, %v372, 0
  %v583 = vsel %vm162, %v578, 0
  %585 = vmatprep.subr.bf16.mxu0 0
  %586 = vmatpush1.bf16.xpose.msra.mxu0 %v583
  %587 = vmatprep.subr.bf16.mxu0 0
  %588 = vmatpush1.bf16.xpose.msra.mxu0 0
  %589 = vmatprep.subr.bf16.mxu0 0
  %590 = vmatpush1.bf16.xpose.msra.mxu0 0
  %591 = vmatprep.subr.bf16.mxu0 0
  %592 = vmatpush1.bf16.xpose.msra.mxu0 0
  %593 = vmatprep.subr.bf16.mxu0 0
  %594 = vmatpush1.bf16.xpose.msra.mxu0 0
  %595 = vmatprep.subr.bf16.mxu0 0
  %596 = vmatpush1.bf16.xpose.msra.mxu0 0
  %597 = vmatprep.subr.bf16.mxu0 0
  %598 = vmatpush1.bf16.xpose.msra.mxu0 0
  %599 = vmatprep.subr.bf16.mxu0 0
  %600 = vmatpush1.bf16.xpose.msra.mxu0 0
  %601 = vmatprep.subr.bf16.mxu0 0
  %602 = vmatpush1.bf16.xpose.msra.mxu0 0
  %603 = vmatprep.subr.bf16.mxu0 0
  %604 = vmatpush1.bf16.xpose.msra.mxu0 0
  %605 = vmatprep.subr.bf16.mxu0 0
  %606 = vmatpush1.bf16.xpose.msra.mxu0 0
  %607 = vmatprep.subr.bf16.mxu0 0
  %608 = vmatpush1.bf16.xpose.msra.mxu0 0
  %609 = vmatprep.subr.bf16.mxu0 0
  %610 = vmatpush1.bf16.xpose.msra.mxu0 0
  %611 = vmatprep.subr.bf16.mxu0 0
  %612 = vmatpush1.bf16.xpose.msra.mxu0 0
  %613 = vmatprep.subr.bf16.mxu0 0
  %614 = vmatpush1.bf16.xpose.msra.mxu0 0
  %615 = vmatprep.subr.bf16.mxu0 0
  %616 = vmatpush1.bf16.xpose.msra.mxu0 0
  %617 = vmatprep.mubr.bf16.mxu0 0
  %618 = vmatmul.mubr.bf16.gmra.mrb[0].mxu0 %v580
  %v619 = vpop.f32.mrb[0].mxu0
  %v620 = vadd.f32 0.0, %v619
  %v621 = vpop.f32.mrb[0].mxu0
  %v622 = vpop.f32.mrb[0].mxu0
  %v623 = vadd.f32 0.0, %v622
  %v624 = vpop.f32.mrb[0].mxu0
  %625 = vdwg.mxu0
  %627 = vrot.lane.b32.xlu0 %v437, 96
  %v628 = vpop.permute.xlu0 %627
  %v630 = vsel %vm162, %v373, 0
  %v633 = vsel %vm162, %v628, 0
  %635 = vmatprep.subr.bf16.mxu0 0
  %636 = vmatpush1.bf16.xpose.msra.mxu0 %v633
  %637 = vmatprep.subr.bf16.mxu0 0
  %638 = vmatpush1.bf16.xpose.msra.mxu0 0
  %639 = vmatprep.subr.bf16.mxu0 0
  %640 = vmatpush1.bf16.xpose.msra.mxu0 0
  %641 = vmatprep.subr.bf16.mxu0 0
  %642 = vmatpush1.bf16.xpose.msra.mxu0 0
  %643 = vmatprep.subr.bf16.mxu0 0
  %644 = vmatpush1.bf16.xpose.msra.mxu0 0
  %645 = vmatprep.subr.bf16.mxu0 0
  %646 = vmatpush1.bf16.xpose.msra.mxu0 0
  %647 = vmatprep.subr.bf16.mxu0 0
  %648 = vmatpush1.bf16.xpose.msra.mxu0 0
  %649 = vmatprep.subr.bf16.mxu0 0
  %650 = vmatpush1.bf16.xpose.msra.mxu0 0
  %651 = vmatprep.subr.bf16.mxu0 0
  %652 = vmatpush1.bf16.xpose.msra.mxu0 0
  %653 = vmatprep.subr.bf16.mxu0 0
  %654 = vmatpush1.bf16.xpose.msra.mxu0 0
  %655 = vmatprep.subr.bf16.mxu0 0
  %656 = vmatpush1.bf16.xpose.msra.mxu0 0
  %657 = vmatprep.subr.bf16.mxu0 0
  %658 = vmatpush1.bf16.xpose.msra.mxu0 0
  %659 = vmatprep.subr.bf16.mxu0 0
  %660 = vmatpush1.bf16.xpose.msra.mxu0 0
  %661 = vmatprep.subr.bf16.mxu0 0
  %662 = vmatpush1.bf16.xpose.msra.mxu0 0
  %663 = vmatprep.subr.bf16.mxu0 0
  %664 = vmatpush1.bf16.xpose.msra.mxu0 0
  %665 = vmatprep.subr.bf16.mxu0 0
  %666 = vmatpush1.bf16.xpose.msra.mxu0 0
  %667 = vmatprep.mubr.bf16.mxu0 0
  %668 = vmatmul.mubr.bf16.gmra.mrb[0].mxu0 %v630
  %v669 = vpop.f32.mrb[0].mxu0
  %v670 = vadd.f32 0.0, %v669
  %v671 = vpop.f32.mrb[0].mxu0
  %v672 = vpop.f32.mrb[0].mxu0
  %v673 = vadd.f32 0.0, %v672
  %v674 = vpop.f32.mrb[0].mxu0
  %675 = vdwg.mxu0
  %677 = vrot.lane.b32.xlu0 %v438, 96
  %v678 = vpop.permute.xlu0 %677
  %v680 = vsel %vm162, %v374, 0
  %v683 = vsel %vm162, %v678, 0
  %685 = vmatprep.subr.bf16.mxu0 0
  %686 = vmatpush1.bf16.xpose.msra.mxu0 %v683
  %687 = vmatprep.subr.bf16.mxu0 0
  %688 = vmatpush1.bf16.xpose.msra.mxu0 0
  %689 = vmatprep.subr.bf16.mxu0 0
  %690 = vmatpush1.bf16.xpose.msra.mxu0 0
  %691 = vmatprep.subr.bf16.mxu0 0
  %692 = vmatpush1.bf16.xpose.msra.mxu0 0
  %693 = vmatprep.subr.bf16.mxu0 0
  %694 = vmatpush1.bf16.xpose.msra.mxu0 0
  %695 = vmatprep.subr.bf16.mxu0 0
  %696 = vmatpush1.bf16.xpose.msra.mxu0 0
  %697 = vmatprep.subr.bf16.mxu0 0
  %698 = vmatpush1.bf16.xpose.msra.mxu0 0
  %699 = vmatprep.subr.bf16.mxu0 0
  %700 = vmatpush1.bf16.xpose.msra.mxu0 0
  %701 = vmatprep.subr.bf16.mxu0 0
  %702 = vmatpush1.bf16.xpose.msra.mxu0 0
  %703 = vmatprep.subr.bf16.mxu0 0
  %704 = vmatpush1.bf16.xpose.msra.mxu0 0
  %705 = vmatprep.subr.bf16.mxu0 0
  %706 = vmatpush1.bf16.xpose.msra.mxu0 0
  %707 = vmatprep.subr.bf16.mxu0 0
  %708 = vmatpush1.bf16.xpose.msra.mxu0 0
  %709 = vmatprep.subr.bf16.mxu0 0
  %710 = vmatpush1.bf16.xpose.msra.mxu0 0
  %711 = vmatprep.subr.bf16.mxu0 0
  %712 = vmatpush1.bf16.xpose.msra.mxu0 0
  %713 = vmatprep.subr.bf16.mxu0 0
  %714 = vmatpush1.bf16.xpose.msra.mxu0 0
  %715 = vmatprep.subr.bf16.mxu0 0
  %716 = vmatpush1.bf16.xpose.msra.mxu0 0
  %717 = vmatprep.mubr.bf16.mxu0 0
  %718 = vmatmul.mubr.bf16.gmra.mrb[0].mxu0 %v680
  %v719 = vpop.f32.mrb[0].mxu0
  %v720 = vadd.f32 0.0, %v719
  %v721 = vpop.f32.mrb[0].mxu0
  %v722 = vpop.f32.mrb[0].mxu0
  %v723 = vadd.f32 0.0, %v722
  %v724 = vpop.f32.mrb[0].mxu0
  %725 = vdwg.mxu0
  %727 = vrot.lane.b32.xlu0 %v439, 96
  %v728 = vpop.permute.xlu0 %727
  %v730 = vsel %vm162, %v375, 0
  %v733 = vsel %vm162, %v728, 0
  %735 = vmatprep.subr.bf16.mxu0 0
  %736 = vmatpush1.bf16.xpose.msra.mxu0 %v733
  %737 = vmatprep.subr.bf16.mxu0 0
  %738 = vmatpush1.bf16.xpose.msra.mxu0 0
  %739 = vmatprep.subr.bf16.mxu0 0
  %740 = vmatpush1.bf16.xpose.msra.mxu0 0
  %741 = vmatprep.subr.bf16.mxu0 0
  %742 = vmatpush1.bf16.xpose.msra.mxu0 0
  %743 = vmatprep.subr.bf16.mxu0 0
  %744 = vmatpush1.bf16.xpose.msra.mxu0 0
  %745 = vmatprep.subr.bf16.mxu0 0
  %746 = vmatpush1.bf16.xpose.msra.mxu0 0
  %747 = vmatprep.subr.bf16.mxu0 0
  %748 = vmatpush1.bf16.xpose.msra.mxu0 0
  %749 = vmatprep.subr.bf16.mxu0 0
  %750 = vmatpush1.bf16.xpose.msra.mxu0 0
  %751 = vmatprep.subr.bf16.mxu0 0
  %752 = vmatpush1.bf16.xpose.msra.mxu0 0
  %753 = vmatprep.subr.bf16.mxu0 0
  %754 = vmatpush1.bf16.xpose.msra.mxu0 0
  %755 = vmatprep.subr.bf16.mxu0 0
  %756 = vmatpush1.bf16.xpose.msra.mxu0 0
  %757 = vmatprep.subr.bf16.mxu0 0
  %758 = vmatpush1.bf16.xpose.msra.mxu0 0
  %759 = vmatprep.subr.bf16.mxu0 0
  %760 = vmatpush1.bf16.xpose.msra.mxu0 0
  %761 = vmatprep.subr.bf16.mxu0 0
  %762 = vmatpush1.bf16.xpose.msra.mxu0 0
  %763 = vmatprep.subr.bf16.mxu0 0
  %764 = vmatpush1.bf16.xpose.msra.mxu0 0
  %765 = vmatprep.subr.bf16.mxu0 0
  %766 = vmatpush1.bf16.xpose.msra.mxu0 0
  %767 = vmatprep.mubr.bf16.mxu0 0
  %768 = vmatmul.mubr.bf16.gmra.mrb[0].mxu0 %v730
  %v769 = vpop.f32.mrb[0].mxu0
  %v770 = vadd.f32 0.0, %v769
  %v771 = vpop.f32.mrb[0].mxu0
  %v772 = vpop.f32.mrb[0].mxu0
  %v773 = vadd.f32 0.0, %v772
  %v774 = vpop.f32.mrb[0].mxu0
  %775 = vdwg.mxu0
  %777 = vrot.lane.b32.xlu0 %v440, 96
  %v778 = vpop.permute.xlu0 %777
  %v780 = vsel %vm162, %v376, 0
  %v783 = vsel %vm162, %v778, 0
  %785 = vmatprep.subr.bf16.mxu0 0
  %786 = vmatpush1.bf16.xpose.msra.mxu0 %v783
  %787 = vmatprep.subr.bf16.mxu0 0
  %788 = vmatpush1.bf16.xpose.msra.mxu0 0
  %789 = vmatprep.subr.bf16.mxu0 0
  %790 = vmatpush1.bf16.xpose.msra.mxu0 0
  %791 = vmatprep.subr.bf16.mxu0 0
  %792 = vmatpush1.bf16.xpose.msra.mxu0 0
  %793 = vmatprep.subr.bf16.mxu0 0
  %794 = vmatpush1.bf16.xpose.msra.mxu0 0
  %795 = vmatprep.subr.bf16.mxu0 0
  %796 = vmatpush1.bf16.xpose.msra.mxu0 0
  %797 = vmatprep.subr.bf16.mxu0 0
  %798 = vmatpush1.bf16.xpose.msra.mxu0 0
  %799 = vmatprep.subr.bf16.mxu0 0
  %800 = vmatpush1.bf16.xpose.msra.mxu0 0
  %801 = vmatprep.subr.bf16.mxu0 0
  %802 = vmatpush1.bf16.xpose.msra.mxu0 0
  %803 = vmatprep.subr.bf16.mxu0 0
  %804 = vmatpush1.bf16.xpose.msra.mxu0 0
  %805 = vmatprep.subr.bf16.mxu0 0
  %806 = vmatpush1.bf16.xpose.msra.mxu0 0
  %807 = vmatprep.subr.bf16.mxu0 0
  %808 = vmatpush1.bf16.xpose.msra.mxu0 0
  %809 = vmatprep.subr.bf16.mxu0 0
  %810 = vmatpush1.bf16.xpose.msra.mxu0 0
  %811 = vmatprep.subr.bf16.mxu0 0
  %812 = vmatpush1.bf16.xpose.msra.mxu0 0
  %813 = vmatprep.subr.bf16.mxu0 0
  %814 = vmatpush1.bf16.xpose.msra.mxu0 0
  %815 = vmatprep.subr.bf16.mxu0 0
  %816 = vmatpush1.bf16.xpose.msra.mxu0 0
  %817 = vmatprep.mubr.bf16.mxu0 0
  %818 = vmatmul.mubr.bf16.gmra.mrb[0].mxu0 %v780
  %v819 = vpop.f32.mrb[0].mxu0
  %v820 = vadd.f32 0.0, %v819
  %v821 = vpop.f32.mrb[0].mxu0
  %v822 = vpop.f32.mrb[0].mxu0
  %v823 = vadd.f32 0.0, %v822
  %v824 = vpop.f32.mrb[0].mxu0
  %825 = vdwg.mxu0
  %827 = vrot.lane.b32.xlu0 %v441, 96
  %v828 = vpop.permute.xlu0 %827
  %v830 = vsel %vm162, %v377, 0
  %v833 = vsel %vm162, %v828, 0
  %835 = vmatprep.subr.bf16.mxu0 0
  %836 = vmatpush1.bf16.xpose.msra.mxu0 %v833
  %837 = vmatprep.subr.bf16.mxu0 0
  %838 = vmatpush1.bf16.xpose.msra.mxu0 0
  %839 = vmatprep.subr.bf16.mxu0 0
  %840 = vmatpush1.bf16.xpose.msra.mxu0 0
  %841 = vmatprep.subr.bf16.mxu0 0
  %842 = vmatpush1.bf16.xpose.msra.mxu0 0
  %843 = vmatprep.subr.bf16.mxu0 0
  %844 = vmatpush1.bf16.xpose.msra.mxu0 0
  %845 = vmatprep.subr.bf16.mxu0 0
  %846 = vmatpush1.bf16.xpose.msra.mxu0 0
  %847 = vmatprep.subr.bf16.mxu0 0
  %848 = vmatpush1.bf16.xpose.msra.mxu0 0
  %849 = vmatprep.subr.bf16.mxu0 0
  %850 = vmatpush1.bf16.xpose.msra.mxu0 0
  %851 = vmatprep.subr.bf16.mxu0 0
  %852 = vmatpush1.bf16.xpose.msra.mxu0 0
  %853 = vmatprep.subr.bf16.mxu0 0
  %854 = vmatpush1.bf16.xpose.msra.mxu0 0
  %855 = vmatprep.subr.bf16.mxu0 0
  %856 = vmatpush1.bf16.xpose.msra.mxu0 0
  %857 = vmatprep.subr.bf16.mxu0 0
  %858 = vmatpush1.bf16.xpose.msra.mxu0 0
  %859 = vmatprep.subr.bf16.mxu0 0
  %860 = vmatpush1.bf16.xpose.msra.mxu0 0
  %861 = vmatprep.subr.bf16.mxu0 0
  %862 = vmatpush1.bf16.xpose.msra.mxu0 0
  %863 = vmatprep.subr.bf16.mxu0 0
  %864 = vmatpush1.bf16.xpose.msra.mxu0 0
  %865 = vmatprep.subr.bf16.mxu0 0
  %866 = vmatpush1.bf16.xpose.msra.mxu0 0
  %867 = vmatprep.mubr.bf16.mxu0 0
  %868 = vmatmul.mubr.bf16.gmra.mrb[0].mxu0 %v830
  %v869 = vpop.f32.mrb[0].mxu0
  %v870 = vadd.f32 0.0, %v869
  %v871 = vpop.f32.mrb[0].mxu0
  %v872 = vpop.f32.mrb[0].mxu0
  %v873 = vadd.f32 0.0, %v872
  %v874 = vpop.f32.mrb[0].mxu0
  %875 = vdwg.mxu0
  %877 = vrot.lane.b32.xlu0 %v442, 96
  %v878 = vpop.permute.xlu0 %877
  %v880 = vsel %vm162, %v378, 0
  %v883 = vsel %vm162, %v878, 0
  %885 = vmatprep.subr.bf16.mxu0 0
  %886 = vmatpush1.bf16.xpose.msra.mxu0 %v883
  %887 = vmatprep.subr.bf16.mxu0 0
  %888 = vmatpush1.bf16.xpose.msra.mxu0 0
  %889 = vmatprep.subr.bf16.mxu0 0
  %890 = vmatpush1.bf16.xpose.msra.mxu0 0
  %891 = vmatprep.subr.bf16.mxu0 0
  %892 = vmatpush1.bf16.xpose.msra.mxu0 0
  %893 = vmatprep.subr.bf16.mxu0 0
  %894 = vmatpush1.bf16.xpose.msra.mxu0 0
  %895 = vmatprep.subr.bf16.mxu0 0
  %896 = vmatpush1.bf16.xpose.msra.mxu0 0
  %897 = vmatprep.subr.bf16.mxu0 0
  %898 = vmatpush1.bf16.xpose.msra.mxu0 0
  %899 = vmatprep.subr.bf16.mxu0 0
  %900 = vmatpush1.bf16.xpose.msra.mxu0 0
  %901 = vmatprep.subr.bf16.mxu0 0
  %902 = vmatpush1.bf16.xpose.msra.mxu0 0
  %903 = vmatprep.subr.bf16.mxu0 0
  %904 = vmatpush1.bf16.xpose.msra.mxu0 0
  %905 = vmatprep.subr.bf16.mxu0 0
  %906 = vmatpush1.bf16.xpose.msra.mxu0 0
  %907 = vmatprep.subr.bf16.mxu0 0
  %908 = vmatpush1.bf16.xpose.msra.mxu0 0
  %909 = vmatprep.subr.bf16.mxu0 0
  %910 = vmatpush1.bf16.xpose.msra.mxu0 0
  %911 = vmatprep.subr.bf16.mxu0 0
  %912 = vmatpush1.bf16.xpose.msra.mxu0 0
  %913 = vmatprep.subr.bf16.mxu0 0
  %914 = vmatpush1.bf16.xpose.msra.mxu0 0
  %915 = vmatprep.subr.bf16.mxu0 0
  %916 = vmatpush1.bf16.xpose.msra.mxu0 0
  %917 = vmatprep.mubr.bf16.mxu0 0
  %918 = vmatmul.mubr.bf16.gmra.mrb[0].mxu0 %v880
  %v919 = vpop.f32.mrb[0].mxu0
  %v920 = vadd.f32 0.0, %v919
  %v921 = vpop.f32.mrb[0].mxu0
  %v922 = vpop.f32.mrb[0].mxu0
  %v923 = vadd.f32 0.0, %v922
  %v924 = vpop.f32.mrb[0].mxu0
  %925 = vdwg.mxu0
  %927 = vrot.lane.b32.xlu0 %v443, 96
  %v928 = vpop.permute.xlu0 %927
  %v930 = vsel %vm162, %v379, 0
  %v933 = vsel %vm162, %v928, 0
  %935 = vmatprep.subr.bf16.mxu0 0
  %936 = vmatpush1.bf16.xpose.msra.mxu0 %v933
  %937 = vmatprep.subr.bf16.mxu0 0
  %938 = vmatpush1.bf16.xpose.msra.mxu0 0
  %939 = vmatprep.subr.bf16.mxu0 0
  %940 = vmatpush1.bf16.xpose.msra.mxu0 0
  %941 = vmatprep.subr.bf16.mxu0 0
  %942 = vmatpush1.bf16.xpose.msra.mxu0 0
  %943 = vmatprep.subr.bf16.mxu0 0
  %944 = vmatpush1.bf16.xpose.msra.mxu0 0
  %945 = vmatprep.subr.bf16.mxu0 0
  %946 = vmatpush1.bf16.xpose.msra.mxu0 0
  %947 = vmatprep.subr.bf16.mxu0 0
  %948 = vmatpush1.bf16.xpose.msra.mxu0 0
  %949 = vmatprep.subr.bf16.mxu0 0
  %950 = vmatpush1.bf16.xpose.msra.mxu0 0
  %951 = vmatprep.subr.bf16.mxu0 0
  %952 = vmatpush1.bf16.xpose.msra.mxu0 0
  %953 = vmatprep.subr.bf16.mxu0 0
  %954 = vmatpush1.bf16.xpose.msra.mxu0 0
  %955 = vmatprep.subr.bf16.mxu0 0
  %956 = vmatpush1.bf16.xpose.msra.mxu0 0
  %957 = vmatprep.subr.bf16.mxu0 0
  %958 = vmatpush1.bf16.xpose.msra.mxu0 0
  %959 = vmatprep.subr.bf16.mxu0 0
  %960 = vmatpush1.bf16.xpose.msra.mxu0 0
  %961 = vmatprep.subr.bf16.mxu0 0
  %962 = vmatpush1.bf16.xpose.msra.mxu0 0
  %963 = vmatprep.subr.bf16.mxu0 0
  %964 = vmatpush1.bf16.xpose.msra.mxu0 0
  %965 = vmatprep.subr.bf16.mxu0 0
  %966 = vmatpush1.bf16.xpose.msra.mxu0 0
  %967 = vmatprep.mubr.bf16.mxu0 0
  %968 = vmatmul.mubr.bf16.gmra.mrb[0].mxu0 %v930
  %v969 = vpop.f32.mrb[0].mxu0
  %v970 = vadd.f32 0.0, %v969
  %v971 = vpop.f32.mrb[0].mxu0
  %v972 = vpop.f32.mrb[0].mxu0
  %v973 = vadd.f32 0.0, %v972
  %v974 = vpop.f32.mrb[0].mxu0
  %975 = vdwg.mxu0
  %977 = vrot.lane.b32.xlu0 %v444, 96
  %v978 = vpop.permute.xlu0 %977
  %v980 = vsel %vm162, %v380, 0
  %v983 = vsel %vm162, %v978, 0
  %985 = vmatprep.subr.bf16.mxu0 0
  %986 = vmatpush1.bf16.xpose.msra.mxu0 %v983
  %987 = vmatprep.subr.bf16.mxu0 0
  %988 = vmatpush1.bf16.xpose.msra.mxu0 0
  %989 = vmatprep.subr.bf16.mxu0 0
  %990 = vmatpush1.bf16.xpose.msra.mxu0 0
  %991 = vmatprep.subr.bf16.mxu0 0
  %992 = vmatpush1.bf16.xpose.msra.mxu0 0
  %993 = vmatprep.subr.bf16.mxu0 0
  %994 = vmatpush1.bf16.xpose.msra.mxu0 0
  %995 = vmatprep.subr.bf16.mxu0 0
  %996 = vmatpush1.bf16.xpose.msra.mxu0 0
  %997 = vmatprep.subr.bf16.mxu0 0
  %998 = vmatpush1.bf16.xpose.msra.mxu0 0
  %999 = vmatprep.subr.bf16.mxu0 0
  %1000 = vmatpush1.bf16.xpose.msra.mxu0 0
  %1001 = vmatprep.subr.bf16.mxu0 0
  %1002 = vmatpush1.bf16.xpose.msra.mxu0 0
  %1003 = vmatprep.subr.bf16.mxu0 0
  %1004 = vmatpush1.bf16.xpose.msra.mxu0 0
  %1005 = vmatprep.subr.bf16.mxu0 0
  %1006 = vmatpush1.bf16.xpose.msra.mxu0 0
  %1007 = vmatprep.subr.bf16.mxu0 0
  %1008 = vmatpush1.bf16.xpose.msra.mxu0 0
  %1009 = vmatprep.subr.bf16.mxu0 0
  %1010 = vmatpush1.bf16.xpose.msra.mxu0 0
  %1011 = vmatprep.subr.bf16.mxu0 0
  %1012 = vmatpush1.bf16.xpose.msra.mxu0 0
  %1013 = vmatprep.subr.bf16.mxu0 0
  %1014 = vmatpush1.bf16.xpose.msra.mxu0 0
  %1015 = vmatprep.subr.bf16.mxu0 0
  %1016 = vmatpush1.bf16.xpose.msra.mxu0 0
  %1017 = vmatprep.mubr.bf16.mxu0 0
  %1018 = vmatmul.mubr.bf16.gmra.mrb[0].mxu0 %v980
  %v1019 = vpop.f32.mrb[0].mxu0
  %v1020 = vadd.f32 0.0, %v1019
  %v1021 = vpop.f32.mrb[0].mxu0
  %v1022 = vpop.f32.mrb[0].mxu0
  %v1023 = vadd.f32 0.0, %v1022
  %v1024 = vpop.f32.mrb[0].mxu0
  %1025 = vdwg.mxu0
  %1027 = vrot.lane.b32.xlu0 %v445, 96
  %v1028 = vpop.permute.xlu0 %1027
  %v1030 = vsel %vm162, %v381, 0
  %v1033 = vsel %vm162, %v1028, 0
  %1035 = vmatprep.subr.bf16.mxu0 0
  %1036 = vmatpush1.bf16.xpose.msra.mxu0 %v1033
  %1037 = vmatprep.subr.bf16.mxu0 0
  %1038 = vmatpush1.bf16.xpose.msra.mxu0 0
  %1039 = vmatprep.subr.bf16.mxu0 0
  %1040 = vmatpush1.bf16.xpose.msra.mxu0 0
  %1041 = vmatprep.subr.bf16.mxu0 0
  %1042 = vmatpush1.bf16.xpose.msra.mxu0 0
  %1043 = vmatprep.subr.bf16.mxu0 0
  %1044 = vmatpush1.bf16.xpose.msra.mxu0 0
  %1045 = vmatprep.subr.bf16.mxu0 0
  %1046 = vmatpush1.bf16.xpose.msra.mxu0 0
  %1047 = vmatprep.subr.bf16.mxu0 0
  %1048 = vmatpush1.bf16.xpose.msra.mxu0 0
  %1049 = vmatprep.subr.bf16.mxu0 0
  %1050 = vmatpush1.bf16.xpose.msra.mxu0 0
  %1051 = vmatprep.subr.bf16.mxu0 0
  %1052 = vmatpush1.bf16.xpose.msra.mxu0 0
  %1053 = vmatprep.subr.bf16.mxu0 0
  %1054 = vmatpush1.bf16.xpose.msra.mxu0 0
  %1055 = vmatprep.subr.bf16.mxu0 0
  %1056 = vmatpush1.bf16.xpose.msra.mxu0 0
  %1057 = vmatprep.subr.bf16.mxu0 0
  %1058 = vmatpush1.bf16.xpose.msra.mxu0 0
  %1059 = vmatprep.subr.bf16.mxu0 0
  %1060 = vmatpush1.bf16.xpose.msra.mxu0 0
  %1061 = vmatprep.subr.bf16.mxu0 0
  %1062 = vmatpush1.bf16.xpose.msra.mxu0 0
  %1063 = vmatprep.subr.bf16.mxu0 0
  %1064 = vmatpush1.bf16.xpose.msra.mxu0 0
  %1065 = vmatprep.subr.bf16.mxu0 0
  %1066 = vmatpush1.bf16.xpose.msra.mxu0 0
  %1067 = vmatprep.mubr.bf16.mxu0 0
  %1068 = vmatmul.mubr.bf16.gmra.mrb[0].mxu0 %v1030
  %v1069 = vpop.f32.mrb[0].mxu0
  %v1070 = vadd.f32 0.0, %v1069
  %v1071 = vpop.f32.mrb[0].mxu0
  %v1072 = vpop.f32.mrb[0].mxu0
  %v1073 = vadd.f32 0.0, %v1072
  %v1074 = vpop.f32.mrb[0].mxu0
  %1075 = vdwg.mxu0
  %1077 = vrot.lane.b32.xlu0 %v446, 96
  %v1078 = vpop.permute.xlu0 %1077
  %v1080 = vsel %vm162, %v382, 0
  %v1083 = vsel %vm162, %v1078, 0
  %1085 = vmatprep.subr.bf16.mxu0 0
  %1086 = vmatpush1.bf16.xpose.msra.mxu0 %v1083
  %1087 = vmatprep.subr.bf16.mxu0 0
  %1088 = vmatpush1.bf16.xpose.msra.mxu0 0
  %1089 = vmatprep.subr.bf16.mxu0 0
  %1090 = vmatpush1.bf16.xpose.msra.mxu0 0
  %1091 = vmatprep.subr.bf16.mxu0 0
  %1092 = vmatpush1.bf16.xpose.msra.mxu0 0
  %1093 = vmatprep.subr.bf16.mxu0 0
  %1094 = vmatpush1.bf16.xpose.msra.mxu0 0
  %1095 = vmatprep.subr.bf16.mxu0 0
  %1096 = vmatpush1.bf16.xpose.msra.mxu0 0
  %1097 = vmatprep.subr.bf16.mxu0 0
  %1098 = vmatpush1.bf16.xpose.msra.mxu0 0
  %1099 = vmatprep.subr.bf16.mxu0 0
  %1100 = vmatpush1.bf16.xpose.msra.mxu0 0
  %1101 = vmatprep.subr.bf16.mxu0 0
  %1102 = vmatpush1.bf16.xpose.msra.mxu0 0
  %1103 = vmatprep.subr.bf16.mxu0 0
  %1104 = vmatpush1.bf16.xpose.msra.mxu0 0
  %1105 = vmatprep.subr.bf16.mxu0 0
  %1106 = vmatpush1.bf16.xpose.msra.mxu0 0
  %1107 = vmatprep.subr.bf16.mxu0 0
  %1108 = vmatpush1.bf16.xpose.msra.mxu0 0
  %1109 = vmatprep.subr.bf16.mxu0 0
  %1110 = vmatpush1.bf16.xpose.msra.mxu0 0
  %1111 = vmatprep.subr.bf16.mxu0 0
  %1112 = vmatpush1.bf16.xpose.msra.mxu0 0
  %1113 = vmatprep.subr.bf16.mxu0 0
  %1114 = vmatpush1.bf16.xpose.msra.mxu0 0
  %1115 = vmatprep.subr.bf16.mxu0 0
  %1116 = vmatpush1.bf16.xpose.msra.mxu0 0
  %1117 = vmatprep.mubr.bf16.mxu0 0
  %1118 = vmatmul.mubr.bf16.gmra.mrb[0].mxu0 %v1080
  %v1119 = vpop.f32.mrb[0].mxu0
  %v1120 = vadd.f32 0.0, %v1119
  %v1121 = vpop.f32.mrb[0].mxu0
  %v1122 = vpop.f32.mrb[0].mxu0
  %v1123 = vadd.f32 0.0, %v1122
  %v1124 = vpop.f32.mrb[0].mxu0
  %1125 = vdwg.mxu0
  %1127 = vrot.lane.b32.xlu0 %v447, 96
  %v1128 = vpop.permute.xlu0 %1127
  %v1130 = vsel %vm162, %v383, 0
  %v1133 = vsel %vm162, %v1128, 0
  %1135 = vmatprep.subr.bf16.mxu0 0
  %1136 = vmatpush1.bf16.xpose.msra.mxu0 %v1133
  %1137 = vmatprep.subr.bf16.mxu0 0
  %1138 = vmatpush1.bf16.xpose.msra.mxu0 0
  %1139 = vmatprep.subr.bf16.mxu0 0
  %1140 = vmatpush1.bf16.xpose.msra.mxu0 0
  %1141 = vmatprep.subr.bf16.mxu0 0
  %1142 = vmatpush1.bf16.xpose.msra.mxu0 0
  %1143 = vmatprep.subr.bf16.mxu0 0
  %1144 = vmatpush1.bf16.xpose.msra.mxu0 0
  %1145 = vmatprep.subr.bf16.mxu0 0
  %1146 = vmatpush1.bf16.xpose.msra.mxu0 0
  %1147 = vmatprep.subr.bf16.mxu0 0
  %1148 = vmatpush1.bf16.xpose.msra.mxu0 0
  %1149 = vmatprep.subr.bf16.mxu0 0
  %1150 = vmatpush1.bf16.xpose.msra.mxu0 0
  %1151 = vmatprep.subr.bf16.mxu0 0
  %1152 = vmatpush1.bf16.xpose.msra.mxu0 0
  %1153 = vmatprep.subr.bf16.mxu0 0
  %1154 = vmatpush1.bf16.xpose.msra.mxu0 0
  %1155 = vmatprep.subr.bf16.mxu0 0
  %1156 = vmatpush1.bf16.xpose.msra.mxu0 0
  %1157 = vmatprep.subr.bf16.mxu0 0
  %1158 = vmatpush1.bf16.xpose.msra.mxu0 0
  %1159 = vmatprep.subr.bf16.mxu0 0
  %1160 = vmatpush1.bf16.xpose.msra.mxu0 0
  %1161 = vmatprep.subr.bf16.mxu0 0
  %1162 = vmatpush1.bf16.xpose.msra.mxu0 0
  %1163 = vmatprep.subr.bf16.mxu0 0
  %1164 = vmatpush1.bf16.xpose.msra.mxu0 0
  %1165 = vmatprep.subr.bf16.mxu0 0
  %1166 = vmatpush1.bf16.xpose.msra.mxu0 0
  %1167 = vmatprep.mubr.bf16.mxu0 0
  %1168 = vmatmul.mubr.bf16.gmra.mrb[0].mxu0 %v1130
  %v1169 = vpop.f32.mrb[0].mxu0
  %v1170 = vadd.f32 0.0, %v1169
  %v1171 = vpop.f32.mrb[0].mxu0
  %v1172 = vpop.f32.mrb[0].mxu0
  %v1173 = vadd.f32 0.0, %v1172
  %v1174 = vpop.f32.mrb[0].mxu0
  %1175 = vdwg.mxu0
  %1177 = vrot.lane.b32.xlu0 %v448, 96
  %v1178 = vpop.permute.xlu0 %1177
  %v1180 = vsel %vm162, %v384, 0
  %v1183 = vsel %vm162, %v1178, 0
  %1185 = vmatprep.subr.bf16.mxu0 0
  %1186 = vmatpush1.bf16.xpose.msra.mxu0 %v1183
  %1187 = vmatprep.subr.bf16.mxu0 0
  %1188 = vmatpush1.bf16.xpose.msra.mxu0 0
  %1189 = vmatprep.subr.bf16.mxu0 0
  %1190 = vmatpush1.bf16.xpose.msra.mxu0 0
  %1191 = vmatprep.subr.bf16.mxu0 0
  %1192 = vmatpush1.bf16.xpose.msra.mxu0 0
  %1193 = vmatprep.subr.bf16.mxu0 0
  %1194 = vmatpush1.bf16.xpose.msra.mxu0 0
  %1195 = vmatprep.subr.bf16.mxu0 0
  %1196 = vmatpush1.bf16.xpose.msra.mxu0 0
  %1197 = vmatprep.subr.bf16.mxu0 0
  %1198 = vmatpush1.bf16.xpose.msra.mxu0 0
  %1199 = vmatprep.subr.bf16.mxu0 0
  %1200 = vmatpush1.bf16.xpose.msra.mxu0 0
  %1201 = vmatprep.subr.bf16.mxu0 0
  %1202 = vmatpush1.bf16.xpose.msra.mxu0 0
  %1203 = vmatprep.subr.bf16.mxu0 0
  %1204 = vmatpush1.bf16.xpose.msra.mxu0 0
  %1205 = vmatprep.subr.bf16.mxu0 0
  %1206 = vmatpush1.bf16.xpose.msra.mxu0 0
  %1207 = vmatprep.subr.bf16.mxu0 0
  %1208 = vmatpush1.bf16.xpose.msra.mxu0 0
  %1209 = vmatprep.subr.bf16.mxu0 0
  %1210 = vmatpush1.bf16.xpose.msra.mxu0 0
  %1211 = vmatprep.subr.bf16.mxu0 0
  %1212 = vmatpush1.bf16.xpose.msra.mxu0 0
  %1213 = vmatprep.subr.bf16.mxu0 0
  %1214 = vmatpush1.bf16.xpose.msra.mxu0 0
  %1215 = vmatprep.subr.bf16.mxu0 0
  %1216 = vmatpush1.bf16.xpose.msra.mxu0 0
  %1217 = vmatprep.mubr.bf16.mxu0 0
  %1218 = vmatmul.mubr.bf16.gmra.mrb[0].mxu0 %v1180
  %v1219 = vpop.f32.mrb[0].mxu0
  %v1220 = vadd.f32 0.0, %v1219
  %v1221 = vpop.f32.mrb[0].mxu0
  %v1222 = vpop.f32.mrb[0].mxu0
  %v1223 = vadd.f32 0.0, %v1222
  %v1224 = vpop.f32.mrb[0].mxu0
  %1225 = vdwg.mxu0
  %1227 = vrot.lane.b32.xlu0 %v449, 96
  %v1228 = vpop.permute.xlu0 %1227
  %v1230 = vsel %vm162, %v385, 0
  %v1233 = vsel %vm162, %v1228, 0
  %1235 = vmatprep.subr.bf16.mxu0 0
  %1236 = vmatpush1.bf16.xpose.msra.mxu0 %v1233
  %1237 = vmatprep.subr.bf16.mxu0 0
  %1238 = vmatpush1.bf16.xpose.msra.mxu0 0
  %1239 = vmatprep.subr.bf16.mxu0 0
  %1240 = vmatpush1.bf16.xpose.msra.mxu0 0
  %1241 = vmatprep.subr.bf16.mxu0 0
  %1242 = vmatpush1.bf16.xpose.msra.mxu0 0
  %1243 = vmatprep.subr.bf16.mxu0 0
  %1244 = vmatpush1.bf16.xpose.msra.mxu0 0
  %1245 = vmatprep.subr.bf16.mxu0 0
  %1246 = vmatpush1.bf16.xpose.msra.mxu0 0
  %1247 = vmatprep.subr.bf16.mxu0 0
  %1248 = vmatpush1.bf16.xpose.msra.mxu0 0
  %1249 = vmatprep.subr.bf16.mxu0 0
  %1250 = vmatpush1.bf16.xpose.msra.mxu0 0
  %1251 = vmatprep.subr.bf16.mxu0 0
  %1252 = vmatpush1.bf16.xpose.msra.mxu0 0
  %1253 = vmatprep.subr.bf16.mxu0 0
  %1254 = vmatpush1.bf16.xpose.msra.mxu0 0
  %1255 = vmatprep.subr.bf16.mxu0 0
  %1256 = vmatpush1.bf16.xpose.msra.mxu0 0
  %1257 = vmatprep.subr.bf16.mxu0 0
  %1258 = vmatpush1.bf16.xpose.msra.mxu0 0
  %1259 = vmatprep.subr.bf16.mxu0 0
  %1260 = vmatpush1.bf16.xpose.msra.mxu0 0
  %1261 = vmatprep.subr.bf16.mxu0 0
  %1262 = vmatpush1.bf16.xpose.msra.mxu0 0
  %1263 = vmatprep.subr.bf16.mxu0 0
  %1264 = vmatpush1.bf16.xpose.msra.mxu0 0
  %1265 = vmatprep.subr.bf16.mxu0 0
  %1266 = vmatpush1.bf16.xpose.msra.mxu0 0
  %1267 = vmatprep.mubr.bf16.mxu0 0
  %1268 = vmatmul.mubr.bf16.gmra.mrb[0].mxu0 %v1230
  %v1269 = vpop.f32.mrb[0].mxu0
  %v1270 = vadd.f32 0.0, %v1269
  %v1271 = vpop.f32.mrb[0].mxu0
  %v1272 = vpop.f32.mrb[0].mxu0
  %v1273 = vadd.f32 0.0, %v1272
  %v1274 = vpop.f32.mrb[0].mxu0
  %1275 = vdwg.mxu0
  %1277 = vrot.lane.b32.xlu0 %v450, 96
  %v1278 = vpop.permute.xlu0 %1277
  %v1280 = vsel %vm162, %v386, 0
  %v1283 = vsel %vm162, %v1278, 0
  %1285 = vmatprep.subr.bf16.mxu0 0
  %1286 = vmatpush1.bf16.xpose.msra.mxu0 %v1283
  %1287 = vmatprep.subr.bf16.mxu0 0
  %1288 = vmatpush1.bf16.xpose.msra.mxu0 0
  %1289 = vmatprep.subr.bf16.mxu0 0
  %1290 = vmatpush1.bf16.xpose.msra.mxu0 0
  %1291 = vmatprep.subr.bf16.mxu0 0
  %1292 = vmatpush1.bf16.xpose.msra.mxu0 0
  %1293 = vmatprep.subr.bf16.mxu0 0
  %1294 = vmatpush1.bf16.xpose.msra.mxu0 0
  %1295 = vmatprep.subr.bf16.mxu0 0
  %1296 = vmatpush1.bf16.xpose.msra.mxu0 0
  %1297 = vmatprep.subr.bf16.mxu0 0
  %1298 = vmatpush1.bf16.xpose.msra.mxu0 0
  %1299 = vmatprep.subr.bf16.mxu0 0
  %1300 = vmatpush1.bf16.xpose.msra.mxu0 0
  %1301 = vmatprep.subr.bf16.mxu0 0
  %1302 = vmatpush1.bf16.xpose.msra.mxu0 0
  %1303 = vmatprep.subr.bf16.mxu0 0
  %1304 = vmatpush1.bf16.xpose.msra.mxu0 0
  %1305 = vmatprep.subr.bf16.mxu0 0
  %1306 = vmatpush1.bf16.xpose.msra.mxu0 0
  %1307 = vmatprep.subr.bf16.mxu0 0
  %1308 = vmatpush1.bf16.xpose.msra.mxu0 0
  %1309 = vmatprep.subr.bf16.mxu0 0
  %1310 = vmatpush1.bf16.xpose.msra.mxu0 0
  %1311 = vmatprep.subr.bf16.mxu0 0
  %1312 = vmatpush1.bf16.xpose.msra.mxu0 0
  %1313 = vmatprep.subr.bf16.mxu0 0
  %1314 = vmatpush1.bf16.xpose.msra.mxu0 0
  %1315 = vmatprep.subr.bf16.mxu0 0
  %1316 = vmatpush1.bf16.xpose.msra.mxu0 0
  %1317 = vmatprep.mubr.bf16.mxu0 0
  %1318 = vmatmul.mubr.bf16.gmra.mrb[0].mxu0 %v1280
  %v1319 = vpop.f32.mrb[0].mxu0
  %v1320 = vadd.f32 0.0, %v1319
  %v1321 = vpop.f32.mrb[0].mxu0
  %v1322 = vpop.f32.mrb[0].mxu0
  %v1323 = vadd.f32 0.0, %v1322
  %v1324 = vpop.f32.mrb[0].mxu0
  %1325 = vdwg.mxu0
  %1327 = vrot.lane.b32.xlu0 %v451, 96
  %v1328 = vpop.permute.xlu0 %1327
  %v1330 = vsel %vm162, %v387, 0
  %v1333 = vsel %vm162, %v1328, 0
  %1335 = vmatprep.subr.bf16.mxu0 0
  %1336 = vmatpush1.bf16.xpose.msra.mxu0 %v1333
  %1337 = vmatprep.subr.bf16.mxu0 0
  %1338 = vmatpush1.bf16.xpose.msra.mxu0 0
  %1339 = vmatprep.subr.bf16.mxu0 0
  %1340 = vmatpush1.bf16.xpose.msra.mxu0 0
  %1341 = vmatprep.subr.bf16.mxu0 0
  %1342 = vmatpush1.bf16.xpose.msra.mxu0 0
  %1343 = vmatprep.subr.bf16.mxu0 0
  %1344 = vmatpush1.bf16.xpose.msra.mxu0 0
  %1345 = vmatprep.subr.bf16.mxu0 0
  %1346 = vmatpush1.bf16.xpose.msra.mxu0 0
  %1347 = vmatprep.subr.bf16.mxu0 0
  %1348 = vmatpush1.bf16.xpose.msra.mxu0 0
  %1349 = vmatprep.subr.bf16.mxu0 0
  %1350 = vmatpush1.bf16.xpose.msra.mxu0 0
  %1351 = vmatprep.subr.bf16.mxu0 0
  %1352 = vmatpush1.bf16.xpose.msra.mxu0 0
  %1353 = vmatprep.subr.bf16.mxu0 0
  %1354 = vmatpush1.bf16.xpose.msra.mxu0 0
  %1355 = vmatprep.subr.bf16.mxu0 0
  %1356 = vmatpush1.bf16.xpose.msra.mxu0 0
  %1357 = vmatprep.subr.bf16.mxu0 0
  %1358 = vmatpush1.bf16.xpose.msra.mxu0 0
  %1359 = vmatprep.subr.bf16.mxu0 0
  %1360 = vmatpush1.bf16.xpose.msra.mxu0 0
  %1361 = vmatprep.subr.bf16.mxu0 0
  %1362 = vmatpush1.bf16.xpose.msra.mxu0 0
  %1363 = vmatprep.subr.bf16.mxu0 0
  %1364 = vmatpush1.bf16.xpose.msra.mxu0 0
  %1365 = vmatprep.subr.bf16.mxu0 0
  %1366 = vmatpush1.bf16.xpose.msra.mxu0 0
  %1367 = vmatprep.mubr.bf16.mxu0 0
  %1368 = vmatmul.mubr.bf16.gmra.mrb[0].mxu0 %v1330
  %v1369 = vpop.f32.mrb[0].mxu0
  %v1370 = vadd.f32 0.0, %v1369
  %v1371 = vpop.f32.mrb[0].mxu0
  %v1372 = vpop.f32.mrb[0].mxu0
  %v1373 = vadd.f32 0.0, %v1372
  %v1374 = vpop.f32.mrb[0].mxu0
  %1375 = vdwg.mxu0
  %1377 = vrot.lane.b32.xlu0 %v452, 96
  %v1378 = vpop.permute.xlu0 %1377
  %v1380 = vsel %vm162, %v1378, 0
  %1382 = vmatprep.subr.bf16.mxu0 0
  %1383 = vmatpush1.bf16.xpose.msra.mxu0 %v1380
  %1384 = vmatprep.subr.bf16.mxu0 0
  %1385 = vmatpush1.bf16.xpose.msra.mxu0 0
  %1386 = vmatprep.subr.bf16.mxu0 0
  %1387 = vmatpush1.bf16.xpose.msra.mxu0 0
  %1388 = vmatprep.subr.bf16.mxu0 0
  %1389 = vmatpush1.bf16.xpose.msra.mxu0 0
  %1390 = vmatprep.subr.bf16.mxu0 0
  %1391 = vmatpush1.bf16.xpose.msra.mxu0 0
  %1392 = vmatprep.subr.bf16.mxu0 0
  %1393 = vmatpush1.bf16.xpose.msra.mxu0 0
  %1394 = vmatprep.subr.bf16.mxu0 0
  %1395 = vmatpush1.bf16.xpose.msra.mxu0 0
  %1396 = vmatprep.subr.bf16.mxu0 0
  %1397 = vmatpush1.bf16.xpose.msra.mxu0 0
  %1398 = vmatprep.subr.bf16.mxu0 0
  %1399 = vmatpush1.bf16.xpose.msra.mxu0 0
  %1400 = vmatprep.subr.bf16.mxu0 0
  %1401 = vmatpush1.bf16.xpose.msra.mxu0 0
  %1402 = vmatprep.subr.bf16.mxu0 0
  %1403 = vmatpush1.bf16.xpose.msra.mxu0 0
  %1404 = vmatprep.subr.bf16.mxu0 0
  %1405 = vmatpush1.bf16.xpose.msra.mxu0 0
  %1406 = vmatprep.subr.bf16.mxu0 0
  %1407 = vmatpush1.bf16.xpose.msra.mxu0 0
  %1408 = vmatprep.subr.bf16.mxu0 0
  %1409 = vmatpush1.bf16.xpose.msra.mxu0 0
  %1410 = vmatprep.subr.bf16.mxu0 0
  %1411 = vmatpush1.bf16.xpose.msra.mxu0 0
  %1412 = vmatprep.subr.bf16.mxu0 0
  %1413 = vmatpush1.bf16.xpose.msra.mxu0 0
  %1414 = vmatprep.mubr.bf16.mxu0 0
  %1415 = vmatmul.mubr.bf16.gmra.mrb[0].mxu0 %v580
  %v1416 = vpop.f32.mrb[0].mxu0
  %v1417 = vadd.f32 0.0, %v1416
  %v1418 = vpop.f32.mrb[0].mxu0
  %v1419 = vpop.f32.mrb[0].mxu0
  %v1420 = vadd.f32 0.0, %v1419
  %v1421 = vpop.f32.mrb[0].mxu0
  %1422 = vdwg.mxu0
  %1424 = vrot.lane.b32.xlu0 %v453, 96
  %v1425 = vpop.permute.xlu0 %1424
  %v1427 = vsel %vm162, %v1425, 0
  %1429 = vmatprep.subr.bf16.mxu0 0
  %1430 = vmatpush1.bf16.xpose.msra.mxu0 %v1427
  %1431 = vmatprep.subr.bf16.mxu0 0
  %1432 = vmatpush1.bf16.xpose.msra.mxu0 0
  %1433 = vmatprep.subr.bf16.mxu0 0
  %1434 = vmatpush1.bf16.xpose.msra.mxu0 0
  %1435 = vmatprep.subr.bf16.mxu0 0
  %1436 = vmatpush1.bf16.xpose.msra.mxu0 0
  %1437 = vmatprep.subr.bf16.mxu0 0
  %1438 = vmatpush1.bf16.xpose.msra.mxu0 0
  %1439 = vmatprep.subr.bf16.mxu0 0
  %1440 = vmatpush1.bf16.xpose.msra.mxu0 0
  %1441 = vmatprep.subr.bf16.mxu0 0
  %1442 = vmatpush1.bf16.xpose.msra.mxu0 0
  %1443 = vmatprep.subr.bf16.mxu0 0
  %1444 = vmatpush1.bf16.xpose.msra.mxu0 0
  %1445 = vmatprep.subr.bf16.mxu0 0
  %1446 = vmatpush1.bf16.xpose.msra.mxu0 0
  %1447 = vmatprep.subr.bf16.mxu0 0
  %1448 = vmatpush1.bf16.xpose.msra.mxu0 0
  %1449 = vmatprep.subr.bf16.mxu0 0
  %1450 = vmatpush1.bf16.xpose.msra.mxu0 0
  %1451 = vmatprep.subr.bf16.mxu0 0
  %1452 = vmatpush1.bf16.xpose.msra.mxu0 0
  %1453 = vmatprep.subr.bf16.mxu0 0
  %1454 = vmatpush1.bf16.xpose.msra.mxu0 0
  %1455 = vmatprep.subr.bf16.mxu0 0
  %1456 = vmatpush1.bf16.xpose.msra.mxu0 0
  %1457 = vmatprep.subr.bf16.mxu0 0
  %1458 = vmatpush1.bf16.xpose.msra.mxu0 0
  %1459 = vmatprep.subr.bf16.mxu0 0
  %1460 = vmatpush1.bf16.xpose.msra.mxu0 0
  %1461 = vmatprep.mubr.bf16.mxu0 0
  %1462 = vmatmul.mubr.bf16.gmra.mrb[0].mxu0 %v630
  %v1463 = vpop.f32.mrb[0].mxu0
  %v1464 = vadd.f32 0.0, %v1463
  %v1465 = vpop.f32.mrb[0].mxu0
  %v1466 = vpop.f32.mrb[0].mxu0
  %v1467 = vadd.f32 0.0, %v1466
  %v1468 = vpop.f32.mrb[0].mxu0
  %1469 = vdwg.mxu0
  %1471 = vrot.lane.b32.xlu0 %v454, 96
  %v1472 = vpop.permute.xlu0 %1471
  %v1474 = vsel %vm162, %v1472, 0
  %1476 = vmatprep.subr.bf16.mxu0 0
  %1477 = vmatpush1.bf16.xpose.msra.mxu0 %v1474
  %1478 = vmatprep.subr.bf16.mxu0 0
  %1479 = vmatpush1.bf16.xpose.msra.mxu0 0
  %1480 = vmatprep.subr.bf16.mxu0 0
  %1481 = vmatpush1.bf16.xpose.msra.mxu0 0
  %1482 = vmatprep.subr.bf16.mxu0 0
  %1483 = vmatpush1.bf16.xpose.msra.mxu0 0
  %1484 = vmatprep.subr.bf16.mxu0 0
  %1485 = vmatpush1.bf16.xpose.msra.mxu0 0
  %1486 = vmatprep.subr.bf16.mxu0 0
  %1487 = vmatpush1.bf16.xpose.msra.mxu0 0
  %1488 = vmatprep.subr.bf16.mxu0 0
  %1489 = vmatpush1.bf16.xpose.msra.mxu0 0
  %1490 = vmatprep.subr.bf16.mxu0 0
  %1491 = vmatpush1.bf16.xpose.msra.mxu0 0
  %1492 = vmatprep.subr.bf16.mxu0 0
  %1493 = vmatpush1.bf16.xpose.msra.mxu0 0
  %1494 = vmatprep.subr.bf16.mxu0 0
  %1495 = vmatpush1.bf16.xpose.msra.mxu0 0
  %1496 = vmatprep.subr.bf16.mxu0 0
  %1497 = vmatpush1.bf16.xpose.msra.mxu0 0
  %1498 = vmatprep.subr.bf16.mxu0 0
  %1499 = vmatpush1.bf16.xpose.msra.mxu0 0
  %1500 = vmatprep.subr.bf16.mxu0 0
  %1501 = vmatpush1.bf16.xpose.msra.mxu0 0
  %1502 = vmatprep.subr.bf16.mxu0 0
  %1503 = vmatpush1.bf16.xpose.msra.mxu0 0
  %1504 = vmatprep.subr.bf16.mxu0 0
  %1505 = vmatpush1.bf16.xpose.msra.mxu0 0
  %1506 = vmatprep.subr.bf16.mxu0 0
  %1507 = vmatpush1.bf16.xpose.msra.mxu0 0
  %1508 = vmatprep.mubr.bf16.mxu0 0
  %1509 = vmatmul.mubr.bf16.gmra.mrb[0].mxu0 %v680
  %v1510 = vpop.f32.mrb[0].mxu0
  %v1511 = vadd.f32 0.0, %v1510
  %v1512 = vpop.f32.mrb[0].mxu0
  %v1513 = vpop.f32.mrb[0].mxu0
  %v1514 = vadd.f32 0.0, %v1513
  %v1515 = vpop.f32.mrb[0].mxu0
  %1516 = vdwg.mxu0
  %1518 = vrot.lane.b32.xlu0 %v455, 96
  %v1519 = vpop.permute.xlu0 %1518
  %v1521 = vsel %vm162, %v1519, 0
  %1523 = vmatprep.subr.bf16.mxu0 0
  %1524 = vmatpush1.bf16.xpose.msra.mxu0 %v1521
  %1525 = vmatprep.subr.bf16.mxu0 0
  %1526 = vmatpush1.bf16.xpose.msra.mxu0 0
  %1527 = vmatprep.subr.bf16.mxu0 0
  %1528 = vmatpush1.bf16.xpose.msra.mxu0 0
  %1529 = vmatprep.subr.bf16.mxu0 0
  %1530 = vmatpush1.bf16.xpose.msra.mxu0 0
  %1531 = vmatprep.subr.bf16.mxu0 0
  %1532 = vmatpush1.bf16.xpose.msra.mxu0 0
  %1533 = vmatprep.subr.bf16.mxu0 0
  %1534 = vmatpush1.bf16.xpose.msra.mxu0 0
  %1535 = vmatprep.subr.bf16.mxu0 0
  %1536 = vmatpush1.bf16.xpose.msra.mxu0 0
  %1537 = vmatprep.subr.bf16.mxu0 0
  %1538 = vmatpush1.bf16.xpose.msra.mxu0 0
  %1539 = vmatprep.subr.bf16.mxu0 0
  %1540 = vmatpush1.bf16.xpose.msra.mxu0 0
  %1541 = vmatprep.subr.bf16.mxu0 0
  %1542 = vmatpush1.bf16.xpose.msra.mxu0 0
  %1543 = vmatprep.subr.bf16.mxu0 0
  %1544 = vmatpush1.bf16.xpose.msra.mxu0 0
  %1545 = vmatprep.subr.bf16.mxu0 0
  %1546 = vmatpush1.bf16.xpose.msra.mxu0 0
  %1547 = vmatprep.subr.bf16.mxu0 0
  %1548 = vmatpush1.bf16.xpose.msra.mxu0 0
  %1549 = vmatprep.subr.bf16.mxu0 0
  %1550 = vmatpush1.bf16.xpose.msra.mxu0 0
  %1551 = vmatprep.subr.bf16.mxu0 0
  %1552 = vmatpush1.bf16.xpose.msra.mxu0 0
  %1553 = vmatprep.subr.bf16.mxu0 0
  %1554 = vmatpush1.bf16.xpose.msra.mxu0 0
  %1555 = vmatprep.mubr.bf16.mxu0 0
  %1556 = vmatmul.mubr.bf16.gmra.mrb[0].mxu0 %v730
  %v1557 = vpop.f32.mrb[0].mxu0
  %v1558 = vadd.f32 0.0, %v1557
  %v1559 = vpop.f32.mrb[0].mxu0
  %v1560 = vpop.f32.mrb[0].mxu0
  %v1561 = vadd.f32 0.0, %v1560
  %v1562 = vpop.f32.mrb[0].mxu0
  %1563 = vdwg.mxu0
  %1565 = vrot.lane.b32.xlu0 %v456, 96
  %v1566 = vpop.permute.xlu0 %1565
  %v1568 = vsel %vm162, %v1566, 0
  %1570 = vmatprep.subr.bf16.mxu0 0
  %1571 = vmatpush1.bf16.xpose.msra.mxu0 %v1568
  %1572 = vmatprep.subr.bf16.mxu0 0
  %1573 = vmatpush1.bf16.xpose.msra.mxu0 0
  %1574 = vmatprep.subr.bf16.mxu0 0
  %1575 = vmatpush1.bf16.xpose.msra.mxu0 0
  %1576 = vmatprep.subr.bf16.mxu0 0
  %1577 = vmatpush1.bf16.xpose.msra.mxu0 0
  %1578 = vmatprep.subr.bf16.mxu0 0
  %1579 = vmatpush1.bf16.xpose.msra.mxu0 0
  %1580 = vmatprep.subr.bf16.mxu0 0
  %1581 = vmatpush1.bf16.xpose.msra.mxu0 0
  %1582 = vmatprep.subr.bf16.mxu0 0
  %1583 = vmatpush1.bf16.xpose.msra.mxu0 0
  %1584 = vmatprep.subr.bf16.mxu0 0
  %1585 = vmatpush1.bf16.xpose.msra.mxu0 0
  %1586 = vmatprep.subr.bf16.mxu0 0
  %1587 = vmatpush1.bf16.xpose.msra.mxu0 0
  %1588 = vmatprep.subr.bf16.mxu0 0
  %1589 = vmatpush1.bf16.xpose.msra.mxu0 0
  %1590 = vmatprep.subr.bf16.mxu0 0
  %1591 = vmatpush1.bf16.xpose.msra.mxu0 0
  %1592 = vmatprep.subr.bf16.mxu0 0
  %1593 = vmatpush1.bf16.xpose.msra.mxu0 0
  %1594 = vmatprep.subr.bf16.mxu0 0
  %1595 = vmatpush1.bf16.xpose.msra.mxu0 0
  %1596 = vmatprep.subr.bf16.mxu0 0
  %1597 = vmatpush1.bf16.xpose.msra.mxu0 0
  %1598 = vmatprep.subr.bf16.mxu0 0
  %1599 = vmatpush1.bf16.xpose.msra.mxu0 0
  %1600 = vmatprep.subr.bf16.mxu0 0
  %1601 = vmatpush1.bf16.xpose.msra.mxu0 0
  %1602 = vmatprep.mubr.bf16.mxu0 0
  %1603 = vmatmul.mubr.bf16.gmra.mrb[0].mxu0 %v780
  %v1604 = vpop.f32.mrb[0].mxu0
  %v1605 = vadd.f32 0.0, %v1604
  %v1606 = vpop.f32.mrb[0].mxu0
  %v1607 = vpop.f32.mrb[0].mxu0
  %v1608 = vadd.f32 0.0, %v1607
  %v1609 = vpop.f32.mrb[0].mxu0
  %1610 = vdwg.mxu0
  %1612 = vrot.lane.b32.xlu0 %v457, 96
  %v1613 = vpop.permute.xlu0 %1612
  %v1615 = vsel %vm162, %v1613, 0
  %1617 = vmatprep.subr.bf16.mxu0 0
  %1618 = vmatpush1.bf16.xpose.msra.mxu0 %v1615
  %1619 = vmatprep.subr.bf16.mxu0 0
  %1620 = vmatpush1.bf16.xpose.msra.mxu0 0
  %1621 = vmatprep.subr.bf16.mxu0 0
  %1622 = vmatpush1.bf16.xpose.msra.mxu0 0
  %1623 = vmatprep.subr.bf16.mxu0 0
  %1624 = vmatpush1.bf16.xpose.msra.mxu0 0
  %1625 = vmatprep.subr.bf16.mxu0 0
  %1626 = vmatpush1.bf16.xpose.msra.mxu0 0
  %1627 = vmatprep.subr.bf16.mxu0 0
  %1628 = vmatpush1.bf16.xpose.msra.mxu0 0
  %1629 = vmatprep.subr.bf16.mxu0 0
  %1630 = vmatpush1.bf16.xpose.msra.mxu0 0
  %1631 = vmatprep.subr.bf16.mxu0 0
  %1632 = vmatpush1.bf16.xpose.msra.mxu0 0
  %1633 = vmatprep.subr.bf16.mxu0 0
  %1634 = vmatpush1.bf16.xpose.msra.mxu0 0
  %1635 = vmatprep.subr.bf16.mxu0 0
  %1636 = vmatpush1.bf16.xpose.msra.mxu0 0
  %1637 = vmatprep.subr.bf16.mxu0 0
  %1638 = vmatpush1.bf16.xpose.msra.mxu0 0
  %1639 = vmatprep.subr.bf16.mxu0 0
  %1640 = vmatpush1.bf16.xpose.msra.mxu0 0
  %1641 = vmatprep.subr.bf16.mxu0 0
  %1642 = vmatpush1.bf16.xpose.msra.mxu0 0
  %1643 = vmatprep.subr.bf16.mxu0 0
  %1644 = vmatpush1.bf16.xpose.msra.mxu0 0
  %1645 = vmatprep.subr.bf16.mxu0 0
  %1646 = vmatpush1.bf16.xpose.msra.mxu0 0
  %1647 = vmatprep.subr.bf16.mxu0 0
  %1648 = vmatpush1.bf16.xpose.msra.mxu0 0
  %1649 = vmatprep.mubr.bf16.mxu0 0
  %1650 = vmatmul.mubr.bf16.gmra.mrb[0].mxu0 %v830
  %v1651 = vpop.f32.mrb[0].mxu0
  %v1652 = vadd.f32 0.0, %v1651
  %v1653 = vpop.f32.mrb[0].mxu0
  %v1654 = vpop.f32.mrb[0].mxu0
  %v1655 = vadd.f32 0.0, %v1654
  %v1656 = vpop.f32.mrb[0].mxu0
  %1657 = vdwg.mxu0
  %1659 = vrot.lane.b32.xlu0 %v458, 96
  %v1660 = vpop.permute.xlu0 %1659
  %v1662 = vsel %vm162, %v1660, 0
  %1664 = vmatprep.subr.bf16.mxu0 0
  %1665 = vmatpush1.bf16.xpose.msra.mxu0 %v1662
  %1666 = vmatprep.subr.bf16.mxu0 0
  %1667 = vmatpush1.bf16.xpose.msra.mxu0 0
  %1668 = vmatprep.subr.bf16.mxu0 0
  %1669 = vmatpush1.bf16.xpose.msra.mxu0 0
  %1670 = vmatprep.subr.bf16.mxu0 0
  %1671 = vmatpush1.bf16.xpose.msra.mxu0 0
  %1672 = vmatprep.subr.bf16.mxu0 0
  %1673 = vmatpush1.bf16.xpose.msra.mxu0 0
  %1674 = vmatprep.subr.bf16.mxu0 0
  %1675 = vmatpush1.bf16.xpose.msra.mxu0 0
  %1676 = vmatprep.subr.bf16.mxu0 0
  %1677 = vmatpush1.bf16.xpose.msra.mxu0 0
  %1678 = vmatprep.subr.bf16.mxu0 0
  %1679 = vmatpush1.bf16.xpose.msra.mxu0 0
  %1680 = vmatprep.subr.bf16.mxu0 0
  %1681 = vmatpush1.bf16.xpose.msra.mxu0 0
  %1682 = vmatprep.subr.bf16.mxu0 0
  %1683 = vmatpush1.bf16.xpose.msra.mxu0 0
  %1684 = vmatprep.subr.bf16.mxu0 0
  %1685 = vmatpush1.bf16.xpose.msra.mxu0 0
  %1686 = vmatprep.subr.bf16.mxu0 0
  %1687 = vmatpush1.bf16.xpose.msra.mxu0 0
  %1688 = vmatprep.subr.bf16.mxu0 0
  %1689 = vmatpush1.bf16.xpose.msra.mxu0 0
  %1690 = vmatprep.subr.bf16.mxu0 0
  %1691 = vmatpush1.bf16.xpose.msra.mxu0 0
  %1692 = vmatprep.subr.bf16.mxu0 0
  %1693 = vmatpush1.bf16.xpose.msra.mxu0 0
  %1694 = vmatprep.subr.bf16.mxu0 0
  %1695 = vmatpush1.bf16.xpose.msra.mxu0 0
  %1696 = vmatprep.mubr.bf16.mxu0 0
  %1697 = vmatmul.mubr.bf16.gmra.mrb[0].mxu0 %v880
  %v1698 = vpop.f32.mrb[0].mxu0
  %v1699 = vadd.f32 0.0, %v1698
  %v1700 = vpop.f32.mrb[0].mxu0
  %v1701 = vpop.f32.mrb[0].mxu0
  %v1702 = vadd.f32 0.0, %v1701
  %v1703 = vpop.f32.mrb[0].mxu0
  %1704 = vdwg.mxu0
  %1706 = vrot.lane.b32.xlu0 %v459, 96
  %v1707 = vpop.permute.xlu0 %1706
  %v1709 = vsel %vm162, %v1707, 0
  %1711 = vmatprep.subr.bf16.mxu0 0
  %1712 = vmatpush1.bf16.xpose.msra.mxu0 %v1709
  %1713 = vmatprep.subr.bf16.mxu0 0
  %1714 = vmatpush1.bf16.xpose.msra.mxu0 0
  %1715 = vmatprep.subr.bf16.mxu0 0
  %1716 = vmatpush1.bf16.xpose.msra.mxu0 0
  %1717 = vmatprep.subr.bf16.mxu0 0
  %1718 = vmatpush1.bf16.xpose.msra.mxu0 0
  %1719 = vmatprep.subr.bf16.mxu0 0
  %1720 = vmatpush1.bf16.xpose.msra.mxu0 0
  %1721 = vmatprep.subr.bf16.mxu0 0
  %1722 = vmatpush1.bf16.xpose.msra.mxu0 0
  %1723 = vmatprep.subr.bf16.mxu0 0
  %1724 = vmatpush1.bf16.xpose.msra.mxu0 0
  %1725 = vmatprep.subr.bf16.mxu0 0
  %1726 = vmatpush1.bf16.xpose.msra.mxu0 0
  %1727 = vmatprep.subr.bf16.mxu0 0
  %1728 = vmatpush1.bf16.xpose.msra.mxu0 0
  %1729 = vmatprep.subr.bf16.mxu0 0
  %1730 = vmatpush1.bf16.xpose.msra.mxu0 0
  %1731 = vmatprep.subr.bf16.mxu0 0
  %1732 = vmatpush1.bf16.xpose.msra.mxu0 0
  %1733 = vmatprep.subr.bf16.mxu0 0
  %1734 = vmatpush1.bf16.xpose.msra.mxu0 0
  %1735 = vmatprep.subr.bf16.mxu0 0
  %1736 = vmatpush1.bf16.xpose.msra.mxu0 0
  %1737 = vmatprep.subr.bf16.mxu0 0
  %1738 = vmatpush1.bf16.xpose.msra.mxu0 0
  %1739 = vmatprep.subr.bf16.mxu0 0
  %1740 = vmatpush1.bf16.xpose.msra.mxu0 0
  %1741 = vmatprep.subr.bf16.mxu0 0
  %1742 = vmatpush1.bf16.xpose.msra.mxu0 0
  %1743 = vmatprep.mubr.bf16.mxu0 0
  %1744 = vmatmul.mubr.bf16.gmra.mrb[0].mxu0 %v930
  %v1745 = vpop.f32.mrb[0].mxu0
  %v1746 = vadd.f32 0.0, %v1745
  %v1747 = vpop.f32.mrb[0].mxu0
  %v1748 = vpop.f32.mrb[0].mxu0
  %v1749 = vadd.f32 0.0, %v1748
  %v1750 = vpop.f32.mrb[0].mxu0
  %1751 = vdwg.mxu0
  %1753 = vrot.lane.b32.xlu0 %v460, 96
  %v1754 = vpop.permute.xlu0 %1753
  %v1756 = vsel %vm162, %v1754, 0
  %1758 = vmatprep.subr.bf16.mxu0 0
  %1759 = vmatpush1.bf16.xpose.msra.mxu0 %v1756
  %1760 = vmatprep.subr.bf16.mxu0 0
  %1761 = vmatpush1.bf16.xpose.msra.mxu0 0
  %1762 = vmatprep.subr.bf16.mxu0 0
  %1763 = vmatpush1.bf16.xpose.msra.mxu0 0
  %1764 = vmatprep.subr.bf16.mxu0 0
  %1765 = vmatpush1.bf16.xpose.msra.mxu0 0
  %1766 = vmatprep.subr.bf16.mxu0 0
  %1767 = vmatpush1.bf16.xpose.msra.mxu0 0
  %1768 = vmatprep.subr.bf16.mxu0 0
  %1769 = vmatpush1.bf16.xpose.msra.mxu0 0
  %1770 = vmatprep.subr.bf16.mxu0 0
  %1771 = vmatpush1.bf16.xpose.msra.mxu0 0
  %1772 = vmatprep.subr.bf16.mxu0 0
  %1773 = vmatpush1.bf16.xpose.msra.mxu0 0
  %1774 = vmatprep.subr.bf16.mxu0 0
  %1775 = vmatpush1.bf16.xpose.msra.mxu0 0
  %1776 = vmatprep.subr.bf16.mxu0 0
  %1777 = vmatpush1.bf16.xpose.msra.mxu0 0
  %1778 = vmatprep.subr.bf16.mxu0 0
  %1779 = vmatpush1.bf16.xpose.msra.mxu0 0
  %1780 = vmatprep.subr.bf16.mxu0 0
  %1781 = vmatpush1.bf16.xpose.msra.mxu0 0
  %1782 = vmatprep.subr.bf16.mxu0 0
  %1783 = vmatpush1.bf16.xpose.msra.mxu0 0
  %1784 = vmatprep.subr.bf16.mxu0 0
  %1785 = vmatpush1.bf16.xpose.msra.mxu0 0
  %1786 = vmatprep.subr.bf16.mxu0 0
  %1787 = vmatpush1.bf16.xpose.msra.mxu0 0
  %1788 = vmatprep.subr.bf16.mxu0 0
  %1789 = vmatpush1.bf16.xpose.msra.mxu0 0
  %1790 = vmatprep.mubr.bf16.mxu0 0
  %1791 = vmatmul.mubr.bf16.gmra.mrb[0].mxu0 %v980
  %v1792 = vpop.f32.mrb[0].mxu0
  %v1793 = vadd.f32 0.0, %v1792
  %v1794 = vpop.f32.mrb[0].mxu0
  %v1795 = vpop.f32.mrb[0].mxu0
  %v1796 = vadd.f32 0.0, %v1795
  %v1797 = vpop.f32.mrb[0].mxu0
  %1798 = vdwg.mxu0
  %1800 = vrot.lane.b32.xlu0 %v461, 96
  %v1801 = vpop.permute.xlu0 %1800
  %v1803 = vsel %vm162, %v1801, 0
  %1805 = vmatprep.subr.bf16.mxu0 0
  %1806 = vmatpush1.bf16.xpose.msra.mxu0 %v1803
  %1807 = vmatprep.subr.bf16.mxu0 0
  %1808 = vmatpush1.bf16.xpose.msra.mxu0 0
  %1809 = vmatprep.subr.bf16.mxu0 0
  %1810 = vmatpush1.bf16.xpose.msra.mxu0 0
  %1811 = vmatprep.subr.bf16.mxu0 0
  %1812 = vmatpush1.bf16.xpose.msra.mxu0 0
  %1813 = vmatprep.subr.bf16.mxu0 0
  %1814 = vmatpush1.bf16.xpose.msra.mxu0 0
  %1815 = vmatprep.subr.bf16.mxu0 0
  %1816 = vmatpush1.bf16.xpose.msra.mxu0 0
  %1817 = vmatprep.subr.bf16.mxu0 0
  %1818 = vmatpush1.bf16.xpose.msra.mxu0 0
  %1819 = vmatprep.subr.bf16.mxu0 0
  %1820 = vmatpush1.bf16.xpose.msra.mxu0 0
  %1821 = vmatprep.subr.bf16.mxu0 0
  %1822 = vmatpush1.bf16.xpose.msra.mxu0 0
  %1823 = vmatprep.subr.bf16.mxu0 0
  %1824 = vmatpush1.bf16.xpose.msra.mxu0 0
  %1825 = vmatprep.subr.bf16.mxu0 0
  %1826 = vmatpush1.bf16.xpose.msra.mxu0 0
  %1827 = vmatprep.subr.bf16.mxu0 0
  %1828 = vmatpush1.bf16.xpose.msra.mxu0 0
  %1829 = vmatprep.subr.bf16.mxu0 0
  %1830 = vmatpush1.bf16.xpose.msra.mxu0 0
  %1831 = vmatprep.subr.bf16.mxu0 0
  %1832 = vmatpush1.bf16.xpose.msra.mxu0 0
  %1833 = vmatprep.subr.bf16.mxu0 0
  %1834 = vmatpush1.bf16.xpose.msra.mxu0 0
  %1835 = vmatprep.subr.bf16.mxu0 0
  %1836 = vmatpush1.bf16.xpose.msra.mxu0 0
  %1837 = vmatprep.mubr.bf16.mxu0 0
  %1838 = vmatmul.mubr.bf16.gmra.mrb[0].mxu0 %v1030
  %v1839 = vpop.f32.mrb[0].mxu0
  %v1840 = vadd.f32 0.0, %v1839
  %v1841 = vpop.f32.mrb[0].mxu0
  %v1842 = vpop.f32.mrb[0].mxu0
  %v1843 = vadd.f32 0.0, %v1842
  %v1844 = vpop.f32.mrb[0].mxu0
  %1845 = vdwg.mxu0
  %1847 = vrot.lane.b32.xlu0 %v462, 96
  %v1848 = vpop.permute.xlu0 %1847
  %v1850 = vsel %vm162, %v1848, 0
  %1852 = vmatprep.subr.bf16.mxu0 0
  %1853 = vmatpush1.bf16.xpose.msra.mxu0 %v1850
  %1854 = vmatprep.subr.bf16.mxu0 0
  %1855 = vmatpush1.bf16.xpose.msra.mxu0 0
  %1856 = vmatprep.subr.bf16.mxu0 0
  %1857 = vmatpush1.bf16.xpose.msra.mxu0 0
  %1858 = vmatprep.subr.bf16.mxu0 0
  %1859 = vmatpush1.bf16.xpose.msra.mxu0 0
  %1860 = vmatprep.subr.bf16.mxu0 0
  %1861 = vmatpush1.bf16.xpose.msra.mxu0 0
  %1862 = vmatprep.subr.bf16.mxu0 0
  %1863 = vmatpush1.bf16.xpose.msra.mxu0 0
  %1864 = vmatprep.subr.bf16.mxu0 0
  %1865 = vmatpush1.bf16.xpose.msra.mxu0 0
  %1866 = vmatprep.subr.bf16.mxu0 0
  %1867 = vmatpush1.bf16.xpose.msra.mxu0 0
  %1868 = vmatprep.subr.bf16.mxu0 0
  %1869 = vmatpush1.bf16.xpose.msra.mxu0 0
  %1870 = vmatprep.subr.bf16.mxu0 0
  %1871 = vmatpush1.bf16.xpose.msra.mxu0 0
  %1872 = vmatprep.subr.bf16.mxu0 0
  %1873 = vmatpush1.bf16.xpose.msra.mxu0 0
  %1874 = vmatprep.subr.bf16.mxu0 0
  %1875 = vmatpush1.bf16.xpose.msra.mxu0 0
  %1876 = vmatprep.subr.bf16.mxu0 0
  %1877 = vmatpush1.bf16.xpose.msra.mxu0 0
  %1878 = vmatprep.subr.bf16.mxu0 0
  %1879 = vmatpush1.bf16.xpose.msra.mxu0 0
  %1880 = vmatprep.subr.bf16.mxu0 0
  %1881 = vmatpush1.bf16.xpose.msra.mxu0 0
  %1882 = vmatprep.subr.bf16.mxu0 0
  %1883 = vmatpush1.bf16.xpose.msra.mxu0 0
  %1884 = vmatprep.mubr.bf16.mxu0 0
  %1885 = vmatmul.mubr.bf16.gmra.mrb[0].mxu0 %v1080
  %v1886 = vpop.f32.mrb[0].mxu0
  %v1887 = vadd.f32 0.0, %v1886
  %v1888 = vpop.f32.mrb[0].mxu0
  %v1889 = vpop.f32.mrb[0].mxu0
  %v1890 = vadd.f32 0.0, %v1889
  %v1891 = vpop.f32.mrb[0].mxu0
  %1892 = vdwg.mxu0
  %1894 = vrot.lane.b32.xlu0 %v463, 96
  %v1895 = vpop.permute.xlu0 %1894
  %v1897 = vsel %vm162, %v1895, 0
  %1899 = vmatprep.subr.bf16.mxu0 0
  %1900 = vmatpush1.bf16.xpose.msra.mxu0 %v1897
  %1901 = vmatprep.subr.bf16.mxu0 0
  %1902 = vmatpush1.bf16.xpose.msra.mxu0 0
  %1903 = vmatprep.subr.bf16.mxu0 0
  %1904 = vmatpush1.bf16.xpose.msra.mxu0 0
  %1905 = vmatprep.subr.bf16.mxu0 0
  %1906 = vmatpush1.bf16.xpose.msra.mxu0 0
  %1907 = vmatprep.subr.bf16.mxu0 0
  %1908 = vmatpush1.bf16.xpose.msra.mxu0 0
  %1909 = vmatprep.subr.bf16.mxu0 0
  %1910 = vmatpush1.bf16.xpose.msra.mxu0 0
  %1911 = vmatprep.subr.bf16.mxu0 0
  %1912 = vmatpush1.bf16.xpose.msra.mxu0 0
  %1913 = vmatprep.subr.bf16.mxu0 0
  %1914 = vmatpush1.bf16.xpose.msra.mxu0 0
  %1915 = vmatprep.subr.bf16.mxu0 0
  %1916 = vmatpush1.bf16.xpose.msra.mxu0 0
  %1917 = vmatprep.subr.bf16.mxu0 0
  %1918 = vmatpush1.bf16.xpose.msra.mxu0 0
  %1919 = vmatprep.subr.bf16.mxu0 0
  %1920 = vmatpush1.bf16.xpose.msra.mxu0 0
  %1921 = vmatprep.subr.bf16.mxu0 0
  %1922 = vmatpush1.bf16.xpose.msra.mxu0 0
  %1923 = vmatprep.subr.bf16.mxu0 0
  %1924 = vmatpush1.bf16.xpose.msra.mxu0 0
  %1925 = vmatprep.subr.bf16.mxu0 0
  %1926 = vmatpush1.bf16.xpose.msra.mxu0 0
  %1927 = vmatprep.subr.bf16.mxu0 0
  %1928 = vmatpush1.bf16.xpose.msra.mxu0 0
  %1929 = vmatprep.subr.bf16.mxu0 0
  %1930 = vmatpush1.bf16.xpose.msra.mxu0 0
  %1931 = vmatprep.mubr.bf16.mxu0 0
  %1932 = vmatmul.mubr.bf16.gmra.mrb[0].mxu0 %v1130
  %v1933 = vpop.f32.mrb[0].mxu0
  %v1934 = vadd.f32 0.0, %v1933
  %v1935 = vpop.f32.mrb[0].mxu0
  %v1936 = vpop.f32.mrb[0].mxu0
  %v1937 = vadd.f32 0.0, %v1936
  %v1938 = vpop.f32.mrb[0].mxu0
  %1939 = vdwg.mxu0
  %1941 = vrot.lane.b32.xlu0 %v464, 96
  %v1942 = vpop.permute.xlu0 %1941
  %v1944 = vsel %vm162, %v1942, 0
  %1946 = vmatprep.subr.bf16.mxu0 0
  %1947 = vmatpush1.bf16.xpose.msra.mxu0 %v1944
  %1948 = vmatprep.subr.bf16.mxu0 0
  %1949 = vmatpush1.bf16.xpose.msra.mxu0 0
  %1950 = vmatprep.subr.bf16.mxu0 0
  %1951 = vmatpush1.bf16.xpose.msra.mxu0 0
  %1952 = vmatprep.subr.bf16.mxu0 0
  %1953 = vmatpush1.bf16.xpose.msra.mxu0 0
  %1954 = vmatprep.subr.bf16.mxu0 0
  %1955 = vmatpush1.bf16.xpose.msra.mxu0 0
  %1956 = vmatprep.subr.bf16.mxu0 0
  %1957 = vmatpush1.bf16.xpose.msra.mxu0 0
  %1958 = vmatprep.subr.bf16.mxu0 0
  %1959 = vmatpush1.bf16.xpose.msra.mxu0 0
  %1960 = vmatprep.subr.bf16.mxu0 0
  %1961 = vmatpush1.bf16.xpose.msra.mxu0 0
  %1962 = vmatprep.subr.bf16.mxu0 0
  %1963 = vmatpush1.bf16.xpose.msra.mxu0 0
  %1964 = vmatprep.subr.bf16.mxu0 0
  %1965 = vmatpush1.bf16.xpose.msra.mxu0 0
  %1966 = vmatprep.subr.bf16.mxu0 0
  %1967 = vmatpush1.bf16.xpose.msra.mxu0 0
  %1968 = vmatprep.subr.bf16.mxu0 0
  %1969 = vmatpush1.bf16.xpose.msra.mxu0 0
  %1970 = vmatprep.subr.bf16.mxu0 0
  %1971 = vmatpush1.bf16.xpose.msra.mxu0 0
  %1972 = vmatprep.subr.bf16.mxu0 0
  %1973 = vmatpush1.bf16.xpose.msra.mxu0 0
  %1974 = vmatprep.subr.bf16.mxu0 0
  %1975 = vmatpush1.bf16.xpose.msra.mxu0 0
  %1976 = vmatprep.subr.bf16.mxu0 0
  %1977 = vmatpush1.bf16.xpose.msra.mxu0 0
  %1978 = vmatprep.mubr.bf16.mxu0 0
  %1979 = vmatmul.mubr.bf16.gmra.mrb[0].mxu0 %v1180
  %v1980 = vpop.f32.mrb[0].mxu0
  %v1981 = vadd.f32 0.0, %v1980
  %v1982 = vpop.f32.mrb[0].mxu0
  %v1983 = vpop.f32.mrb[0].mxu0
  %v1984 = vadd.f32 0.0, %v1983
  %v1985 = vpop.f32.mrb[0].mxu0
  %1986 = vdwg.mxu0
  %1988 = vrot.lane.b32.xlu0 %v465, 96
  %v1989 = vpop.permute.xlu0 %1988
  %v1991 = vsel %vm162, %v1989, 0
  %1993 = vmatprep.subr.bf16.mxu0 0
  %1994 = vmatpush1.bf16.xpose.msra.mxu0 %v1991
  %1995 = vmatprep.subr.bf16.mxu0 0
  %1996 = vmatpush1.bf16.xpose.msra.mxu0 0
  %1997 = vmatprep.subr.bf16.mxu0 0
  %1998 = vmatpush1.bf16.xpose.msra.mxu0 0
  %1999 = vmatprep.subr.bf16.mxu0 0
  %2000 = vmatpush1.bf16.xpose.msra.mxu0 0
  %2001 = vmatprep.subr.bf16.mxu0 0
  %2002 = vmatpush1.bf16.xpose.msra.mxu0 0
  %2003 = vmatprep.subr.bf16.mxu0 0
  %2004 = vmatpush1.bf16.xpose.msra.mxu0 0
  %2005 = vmatprep.subr.bf16.mxu0 0
  %2006 = vmatpush1.bf16.xpose.msra.mxu0 0
  %2007 = vmatprep.subr.bf16.mxu0 0
  %2008 = vmatpush1.bf16.xpose.msra.mxu0 0
  %2009 = vmatprep.subr.bf16.mxu0 0
  %2010 = vmatpush1.bf16.xpose.msra.mxu0 0
  %2011 = vmatprep.subr.bf16.mxu0 0
  %2012 = vmatpush1.bf16.xpose.msra.mxu0 0
  %2013 = vmatprep.subr.bf16.mxu0 0
  %2014 = vmatpush1.bf16.xpose.msra.mxu0 0
  %2015 = vmatprep.subr.bf16.mxu0 0
  %2016 = vmatpush1.bf16.xpose.msra.mxu0 0
  %2017 = vmatprep.subr.bf16.mxu0 0
  %2018 = vmatpush1.bf16.xpose.msra.mxu0 0
  %2019 = vmatprep.subr.bf16.mxu0 0
  %2020 = vmatpush1.bf16.xpose.msra.mxu0 0
  %2021 = vmatprep.subr.bf16.mxu0 0
  %2022 = vmatpush1.bf16.xpose.msra.mxu0 0
  %2023 = vmatprep.subr.bf16.mxu0 0
  %2024 = vmatpush1.bf16.xpose.msra.mxu0 0
  %2025 = vmatprep.mubr.bf16.mxu0 0
  %2026 = vmatmul.mubr.bf16.gmra.mrb[0].mxu0 %v1230
  %v2027 = vpop.f32.mrb[0].mxu0
  %v2028 = vadd.f32 0.0, %v2027
  %v2029 = vpop.f32.mrb[0].mxu0
  %v2030 = vpop.f32.mrb[0].mxu0
  %v2031 = vadd.f32 0.0, %v2030
  %v2032 = vpop.f32.mrb[0].mxu0
  %2033 = vdwg.mxu0
  %2035 = vrot.lane.b32.xlu0 %v466, 96
  %v2036 = vpop.permute.xlu0 %2035
  %v2038 = vsel %vm162, %v2036, 0
  %2040 = vmatprep.subr.bf16.mxu0 0
  %2041 = vmatpush1.bf16.xpose.msra.mxu0 %v2038
  %2042 = vmatprep.subr.bf16.mxu0 0
  %2043 = vmatpush1.bf16.xpose.msra.mxu0 0
  %2044 = vmatprep.subr.bf16.mxu0 0
  %2045 = vmatpush1.bf16.xpose.msra.mxu0 0
  %2046 = vmatprep.subr.bf16.mxu0 0
  %2047 = vmatpush1.bf16.xpose.msra.mxu0 0
  %2048 = vmatprep.subr.bf16.mxu0 0
  %2049 = vmatpush1.bf16.xpose.msra.mxu0 0
  %2050 = vmatprep.subr.bf16.mxu0 0
  %2051 = vmatpush1.bf16.xpose.msra.mxu0 0
  %2052 = vmatprep.subr.bf16.mxu0 0
  %2053 = vmatpush1.bf16.xpose.msra.mxu0 0
  %2054 = vmatprep.subr.bf16.mxu0 0
  %2055 = vmatpush1.bf16.xpose.msra.mxu0 0
  %2056 = vmatprep.subr.bf16.mxu0 0
  %2057 = vmatpush1.bf16.xpose.msra.mxu0 0
  %2058 = vmatprep.subr.bf16.mxu0 0
  %2059 = vmatpush1.bf16.xpose.msra.mxu0 0
  %2060 = vmatprep.subr.bf16.mxu0 0
  %2061 = vmatpush1.bf16.xpose.msra.mxu0 0
  %2062 = vmatprep.subr.bf16.mxu0 0
  %2063 = vmatpush1.bf16.xpose.msra.mxu0 0
  %2064 = vmatprep.subr.bf16.mxu0 0
  %2065 = vmatpush1.bf16.xpose.msra.mxu0 0
  %2066 = vmatprep.subr.bf16.mxu0 0
  %2067 = vmatpush1.bf16.xpose.msra.mxu0 0
  %2068 = vmatprep.subr.bf16.mxu0 0
  %2069 = vmatpush1.bf16.xpose.msra.mxu0 0
  %2070 = vmatprep.subr.bf16.mxu0 0
  %2071 = vmatpush1.bf16.xpose.msra.mxu0 0
  %2072 = vmatprep.mubr.bf16.mxu0 0
  %2073 = vmatmul.mubr.bf16.gmra.mrb[0].mxu0 %v1280
  %v2074 = vpop.f32.mrb[0].mxu0
  %v2075 = vadd.f32 0.0, %v2074
  %v2076 = vpop.f32.mrb[0].mxu0
  %v2077 = vpop.f32.mrb[0].mxu0
  %v2078 = vadd.f32 0.0, %v2077
  %v2079 = vpop.f32.mrb[0].mxu0
  %2080 = vdwg.mxu0
  %2082 = vrot.lane.b32.xlu0 %v467, 96
  %v2083 = vpop.permute.xlu0 %2082
  %v2085 = vsel %vm162, %v2083, 0
  %2087 = vmatprep.subr.bf16.mxu0 0
  %2088 = vmatpush1.bf16.xpose.msra.mxu0 %v2085
  %2089 = vmatprep.subr.bf16.mxu0 0
  %2090 = vmatpush1.bf16.xpose.msra.mxu0 0
  %2091 = vmatprep.subr.bf16.mxu0 0
  %2092 = vmatpush1.bf16.xpose.msra.mxu0 0
  %2093 = vmatprep.subr.bf16.mxu0 0
  %2094 = vmatpush1.bf16.xpose.msra.mxu0 0
  %2095 = vmatprep.subr.bf16.mxu0 0
  %2096 = vmatpush1.bf16.xpose.msra.mxu0 0
  %2097 = vmatprep.subr.bf16.mxu0 0
  %2098 = vmatpush1.bf16.xpose.msra.mxu0 0
  %2099 = vmatprep.subr.bf16.mxu0 0
  %2100 = vmatpush1.bf16.xpose.msra.mxu0 0
  %2101 = vmatprep.subr.bf16.mxu0 0
  %2102 = vmatpush1.bf16.xpose.msra.mxu0 0
  %2103 = vmatprep.subr.bf16.mxu0 0
  %2104 = vmatpush1.bf16.xpose.msra.mxu0 0
  %2105 = vmatprep.subr.bf16.mxu0 0
  %2106 = vmatpush1.bf16.xpose.msra.mxu0 0
  %2107 = vmatprep.subr.bf16.mxu0 0
  %2108 = vmatpush1.bf16.xpose.msra.mxu0 0
  %2109 = vmatprep.subr.bf16.mxu0 0
  %2110 = vmatpush1.bf16.xpose.msra.mxu0 0
  %2111 = vmatprep.subr.bf16.mxu0 0
  %2112 = vmatpush1.bf16.xpose.msra.mxu0 0
  %2113 = vmatprep.subr.bf16.mxu0 0
  %2114 = vmatpush1.bf16.xpose.msra.mxu0 0
  %2115 = vmatprep.subr.bf16.mxu0 0
  %2116 = vmatpush1.bf16.xpose.msra.mxu0 0
  %2117 = vmatprep.subr.bf16.mxu0 0
  %2118 = vmatpush1.bf16.xpose.msra.mxu0 0
  %2119 = vmatprep.mubr.bf16.mxu0 0
  %2120 = vmatmul.mubr.bf16.gmra.mrb[0].mxu0 %v1330
  %v2121 = vpop.f32.mrb[0].mxu0
  %v2122 = vadd.f32 0.0, %v2121
  %v2123 = vpop.f32.mrb[0].mxu0
  %v2124 = vpop.f32.mrb[0].mxu0
  %v2125 = vadd.f32 0.0, %v2124
  %v2126 = vpop.f32.mrb[0].mxu0
  %2127 = vdwg.mxu0
  %2129 = vrot.lane.b32.xlu0 %v468, 96
  %v2130 = vpop.permute.xlu0 %2129
  %v2132 = vsel %vm162, %v2130, 0
  %2134 = vmatprep.subr.bf16.mxu0 0
  %2135 = vmatpush1.bf16.xpose.msra.mxu0 %v2132
  %2136 = vmatprep.subr.bf16.mxu0 0
  %2137 = vmatpush1.bf16.xpose.msra.mxu0 0
  %2138 = vmatprep.subr.bf16.mxu0 0
  %2139 = vmatpush1.bf16.xpose.msra.mxu0 0
  %2140 = vmatprep.subr.bf16.mxu0 0
  %2141 = vmatpush1.bf16.xpose.msra.mxu0 0
  %2142 = vmatprep.subr.bf16.mxu0 0
  %2143 = vmatpush1.bf16.xpose.msra.mxu0 0
  %2144 = vmatprep.subr.bf16.mxu0 0
  %2145 = vmatpush1.bf16.xpose.msra.mxu0 0
  %2146 = vmatprep.subr.bf16.mxu0 0
  %2147 = vmatpush1.bf16.xpose.msra.mxu0 0
  %2148 = vmatprep.subr.bf16.mxu0 0
  %2149 = vmatpush1.bf16.xpose.msra.mxu0 0
  %2150 = vmatprep.subr.bf16.mxu0 0
  %2151 = vmatpush1.bf16.xpose.msra.mxu0 0
  %2152 = vmatprep.subr.bf16.mxu0 0
  %2153 = vmatpush1.bf16.xpose.msra.mxu0 0
  %2154 = vmatprep.subr.bf16.mxu0 0
  %2155 = vmatpush1.bf16.xpose.msra.mxu0 0
  %2156 = vmatprep.subr.bf16.mxu0 0
  %2157 = vmatpush1.bf16.xpose.msra.mxu0 0
  %2158 = vmatprep.subr.bf16.mxu0 0
  %2159 = vmatpush1.bf16.xpose.msra.mxu0 0
  %2160 = vmatprep.subr.bf16.mxu0 0
  %2161 = vmatpush1.bf16.xpose.msra.mxu0 0
  %2162 = vmatprep.subr.bf16.mxu0 0
  %2163 = vmatpush1.bf16.xpose.msra.mxu0 0
  %2164 = vmatprep.subr.bf16.mxu0 0
  %2165 = vmatpush1.bf16.xpose.msra.mxu0 0
  %2166 = vmatprep.mubr.bf16.mxu0 0
  %2167 = vmatmul.mubr.bf16.gmra.mrb[0].mxu0 %v580
  %v2168 = vpop.f32.mrb[0].mxu0
  %v2169 = vadd.f32 0.0, %v2168
  %v2170 = vpop.f32.mrb[0].mxu0
  %v2171 = vpop.f32.mrb[0].mxu0
  %v2172 = vadd.f32 0.0, %v2171
  %v2173 = vpop.f32.mrb[0].mxu0
  %2174 = vdwg.mxu0
  %2176 = vrot.lane.b32.xlu0 %v469, 96
  %v2177 = vpop.permute.xlu0 %2176
  %v2179 = vsel %vm162, %v2177, 0
  %2181 = vmatprep.subr.bf16.mxu0 0
  %2182 = vmatpush1.bf16.xpose.msra.mxu0 %v2179
  %2183 = vmatprep.subr.bf16.mxu0 0
  %2184 = vmatpush1.bf16.xpose.msra.mxu0 0
  %2185 = vmatprep.subr.bf16.mxu0 0
  %2186 = vmatpush1.bf16.xpose.msra.mxu0 0
  %2187 = vmatprep.subr.bf16.mxu0 0
  %2188 = vmatpush1.bf16.xpose.msra.mxu0 0
  %2189 = vmatprep.subr.bf16.mxu0 0
  %2190 = vmatpush1.bf16.xpose.msra.mxu0 0
  %2191 = vmatprep.subr.bf16.mxu0 0
  %2192 = vmatpush1.bf16.xpose.msra.mxu0 0
  %2193 = vmatprep.subr.bf16.mxu0 0
  %2194 = vmatpush1.bf16.xpose.msra.mxu0 0
  %2195 = vmatprep.subr.bf16.mxu0 0
  %2196 = vmatpush1.bf16.xpose.msra.mxu0 0
  %2197 = vmatprep.subr.bf16.mxu0 0
  %2198 = vmatpush1.bf16.xpose.msra.mxu0 0
  %2199 = vmatprep.subr.bf16.mxu0 0
  %2200 = vmatpush1.bf16.xpose.msra.mxu0 0
  %2201 = vmatprep.subr.bf16.mxu0 0
  %2202 = vmatpush1.bf16.xpose.msra.mxu0 0
  %2203 = vmatprep.subr.bf16.mxu0 0
  %2204 = vmatpush1.bf16.xpose.msra.mxu0 0
  %2205 = vmatprep.subr.bf16.mxu0 0
  %2206 = vmatpush1.bf16.xpose.msra.mxu0 0
  %2207 = vmatprep.subr.bf16.mxu0 0
  %2208 = vmatpush1.bf16.xpose.msra.mxu0 0
  %2209 = vmatprep.subr.bf16.mxu0 0
  %2210 = vmatpush1.bf16.xpose.msra.mxu0 0
  %2211 = vmatprep.subr.bf16.mxu0 0
  %2212 = vmatpush1.bf16.xpose.msra.mxu0 0
  %2213 = vmatprep.mubr.bf16.mxu0 0
  %2214 = vmatmul.mubr.bf16.gmra.mrb[0].mxu0 %v630
  %v2215 = vpop.f32.mrb[0].mxu0
  %v2216 = vadd.f32 0.0, %v2215
  %v2217 = vpop.f32.mrb[0].mxu0
  %v2218 = vpop.f32.mrb[0].mxu0
  %v2219 = vadd.f32 0.0, %v2218
  %v2220 = vpop.f32.mrb[0].mxu0
  %2221 = vdwg.mxu0
  %2223 = vrot.lane.b32.xlu0 %v470, 96
  %v2224 = vpop.permute.xlu0 %2223
  %v2226 = vsel %vm162, %v2224, 0
  %2228 = vmatprep.subr.bf16.mxu0 0
  %2229 = vmatpush1.bf16.xpose.msra.mxu0 %v2226
  %2230 = vmatprep.subr.bf16.mxu0 0
  %2231 = vmatpush1.bf16.xpose.msra.mxu0 0
  %2232 = vmatprep.subr.bf16.mxu0 0
  %2233 = vmatpush1.bf16.xpose.msra.mxu0 0
  %2234 = vmatprep.subr.bf16.mxu0 0
  %2235 = vmatpush1.bf16.xpose.msra.mxu0 0
  %2236 = vmatprep.subr.bf16.mxu0 0
  %2237 = vmatpush1.bf16.xpose.msra.mxu0 0
  %2238 = vmatprep.subr.bf16.mxu0 0
  %2239 = vmatpush1.bf16.xpose.msra.mxu0 0
  %2240 = vmatprep.subr.bf16.mxu0 0
  %2241 = vmatpush1.bf16.xpose.msra.mxu0 0
  %2242 = vmatprep.subr.bf16.mxu0 0
  %2243 = vmatpush1.bf16.xpose.msra.mxu0 0
  %2244 = vmatprep.subr.bf16.mxu0 0
  %2245 = vmatpush1.bf16.xpose.msra.mxu0 0
  %2246 = vmatprep.subr.bf16.mxu0 0
  %2247 = vmatpush1.bf16.xpose.msra.mxu0 0
  %2248 = vmatprep.subr.bf16.mxu0 0
  %2249 = vmatpush1.bf16.xpose.msra.mxu0 0
  %2250 = vmatprep.subr.bf16.mxu0 0
  %2251 = vmatpush1.bf16.xpose.msra.mxu0 0
  %2252 = vmatprep.subr.bf16.mxu0 0
  %2253 = vmatpush1.bf16.xpose.msra.mxu0 0
  %2254 = vmatprep.subr.bf16.mxu0 0
  %2255 = vmatpush1.bf16.xpose.msra.mxu0 0
  %2256 = vmatprep.subr.bf16.mxu0 0
  %2257 = vmatpush1.bf16.xpose.msra.mxu0 0
  %2258 = vmatprep.subr.bf16.mxu0 0
  %2259 = vmatpush1.bf16.xpose.msra.mxu0 0
  %2260 = vmatprep.mubr.bf16.mxu0 0
  %2261 = vmatmul.mubr.bf16.gmra.mrb[0].mxu0 %v680
  %v2262 = vpop.f32.mrb[0].mxu0
  %v2263 = vadd.f32 0.0, %v2262
  %v2264 = vpop.f32.mrb[0].mxu0
  %v2265 = vpop.f32.mrb[0].mxu0
  %v2266 = vadd.f32 0.0, %v2265
  %v2267 = vpop.f32.mrb[0].mxu0
  %2268 = vdwg.mxu0
  %2270 = vrot.lane.b32.xlu0 %v471, 96
  %v2271 = vpop.permute.xlu0 %2270
  %v2273 = vsel %vm162, %v2271, 0
  %2275 = vmatprep.subr.bf16.mxu0 0
  %2276 = vmatpush1.bf16.xpose.msra.mxu0 %v2273
  %2277 = vmatprep.subr.bf16.mxu0 0
  %2278 = vmatpush1.bf16.xpose.msra.mxu0 0
  %2279 = vmatprep.subr.bf16.mxu0 0
  %2280 = vmatpush1.bf16.xpose.msra.mxu0 0
  %2281 = vmatprep.subr.bf16.mxu0 0
  %2282 = vmatpush1.bf16.xpose.msra.mxu0 0
  %2283 = vmatprep.subr.bf16.mxu0 0
  %2284 = vmatpush1.bf16.xpose.msra.mxu0 0
  %2285 = vmatprep.subr.bf16.mxu0 0
  %2286 = vmatpush1.bf16.xpose.msra.mxu0 0
  %2287 = vmatprep.subr.bf16.mxu0 0
  %2288 = vmatpush1.bf16.xpose.msra.mxu0 0
  %2289 = vmatprep.subr.bf16.mxu0 0
  %2290 = vmatpush1.bf16.xpose.msra.mxu0 0
  %2291 = vmatprep.subr.bf16.mxu0 0
  %2292 = vmatpush1.bf16.xpose.msra.mxu0 0
  %2293 = vmatprep.subr.bf16.mxu0 0
  %2294 = vmatpush1.bf16.xpose.msra.mxu0 0
  %2295 = vmatprep.subr.bf16.mxu0 0
  %2296 = vmatpush1.bf16.xpose.msra.mxu0 0
  %2297 = vmatprep.subr.bf16.mxu0 0
  %2298 = vmatpush1.bf16.xpose.msra.mxu0 0
  %2299 = vmatprep.subr.bf16.mxu0 0
  %2300 = vmatpush1.bf16.xpose.msra.mxu0 0
  %2301 = vmatprep.subr.bf16.mxu0 0
  %2302 = vmatpush1.bf16.xpose.msra.mxu0 0
  %2303 = vmatprep.subr.bf16.mxu0 0
  %2304 = vmatpush1.bf16.xpose.msra.mxu0 0
  %2305 = vmatprep.subr.bf16.mxu0 0
  %2306 = vmatpush1.bf16.xpose.msra.mxu0 0
  %2307 = vmatprep.mubr.bf16.mxu0 0
  %2308 = vmatmul.mubr.bf16.gmra.mrb[0].mxu0 %v730
  %v2309 = vpop.f32.mrb[0].mxu0
  %v2310 = vadd.f32 0.0, %v2309
  %v2311 = vpop.f32.mrb[0].mxu0
  %v2312 = vpop.f32.mrb[0].mxu0
  %v2313 = vadd.f32 0.0, %v2312
  %v2314 = vpop.f32.mrb[0].mxu0
  %2315 = vdwg.mxu0
  %2317 = vrot.lane.b32.xlu0 %v472, 96
  %v2318 = vpop.permute.xlu0 %2317
  %v2320 = vsel %vm162, %v2318, 0
  %2322 = vmatprep.subr.bf16.mxu0 0
  %2323 = vmatpush1.bf16.xpose.msra.mxu0 %v2320
  %2324 = vmatprep.subr.bf16.mxu0 0
  %2325 = vmatpush1.bf16.xpose.msra.mxu0 0
  %2326 = vmatprep.subr.bf16.mxu0 0
  %2327 = vmatpush1.bf16.xpose.msra.mxu0 0
  %2328 = vmatprep.subr.bf16.mxu0 0
  %2329 = vmatpush1.bf16.xpose.msra.mxu0 0
  %2330 = vmatprep.subr.bf16.mxu0 0
  %2331 = vmatpush1.bf16.xpose.msra.mxu0 0
  %2332 = vmatprep.subr.bf16.mxu0 0
  %2333 = vmatpush1.bf16.xpose.msra.mxu0 0
  %2334 = vmatprep.subr.bf16.mxu0 0
  %2335 = vmatpush1.bf16.xpose.msra.mxu0 0
  %2336 = vmatprep.subr.bf16.mxu0 0
  %2337 = vmatpush1.bf16.xpose.msra.mxu0 0
  %2338 = vmatprep.subr.bf16.mxu0 0
  %2339 = vmatpush1.bf16.xpose.msra.mxu0 0
  %2340 = vmatprep.subr.bf16.mxu0 0
  %2341 = vmatpush1.bf16.xpose.msra.mxu0 0
  %2342 = vmatprep.subr.bf16.mxu0 0
  %2343 = vmatpush1.bf16.xpose.msra.mxu0 0
  %2344 = vmatprep.subr.bf16.mxu0 0
  %2345 = vmatpush1.bf16.xpose.msra.mxu0 0
  %2346 = vmatprep.subr.bf16.mxu0 0
  %2347 = vmatpush1.bf16.xpose.msra.mxu0 0
  %2348 = vmatprep.subr.bf16.mxu0 0
  %2349 = vmatpush1.bf16.xpose.msra.mxu0 0
  %2350 = vmatprep.subr.bf16.mxu0 0
  %2351 = vmatpush1.bf16.xpose.msra.mxu0 0
  %2352 = vmatprep.subr.bf16.mxu0 0
  %2353 = vmatpush1.bf16.xpose.msra.mxu0 0
  %2354 = vmatprep.mubr.bf16.mxu0 0
  %2355 = vmatmul.mubr.bf16.gmra.mrb[0].mxu0 %v780
  %v2356 = vpop.f32.mrb[0].mxu0
  %v2357 = vadd.f32 0.0, %v2356
  %v2358 = vpop.f32.mrb[0].mxu0
  %v2359 = vpop.f32.mrb[0].mxu0
  %v2360 = vadd.f32 0.0, %v2359
  %v2361 = vpop.f32.mrb[0].mxu0
  %2362 = vdwg.mxu0
  %2364 = vrot.lane.b32.xlu0 %v473, 96
  %v2365 = vpop.permute.xlu0 %2364
  %v2367 = vsel %vm162, %v2365, 0
  %2369 = vmatprep.subr.bf16.mxu0 0
  %2370 = vmatpush1.bf16.xpose.msra.mxu0 %v2367
  %2371 = vmatprep.subr.bf16.mxu0 0
  %2372 = vmatpush1.bf16.xpose.msra.mxu0 0
  %2373 = vmatprep.subr.bf16.mxu0 0
  %2374 = vmatpush1.bf16.xpose.msra.mxu0 0
  %2375 = vmatprep.subr.bf16.mxu0 0
  %2376 = vmatpush1.bf16.xpose.msra.mxu0 0
  %2377 = vmatprep.subr.bf16.mxu0 0
  %2378 = vmatpush1.bf16.xpose.msra.mxu0 0
  %2379 = vmatprep.subr.bf16.mxu0 0
  %2380 = vmatpush1.bf16.xpose.msra.mxu0 0
  %2381 = vmatprep.subr.bf16.mxu0 0
  %2382 = vmatpush1.bf16.xpose.msra.mxu0 0
  %2383 = vmatprep.subr.bf16.mxu0 0
  %2384 = vmatpush1.bf16.xpose.msra.mxu0 0
  %2385 = vmatprep.subr.bf16.mxu0 0
  %2386 = vmatpush1.bf16.xpose.msra.mxu0 0
  %2387 = vmatprep.subr.bf16.mxu0 0
  %2388 = vmatpush1.bf16.xpose.msra.mxu0 0
  %2389 = vmatprep.subr.bf16.mxu0 0
  %2390 = vmatpush1.bf16.xpose.msra.mxu0 0
  %2391 = vmatprep.subr.bf16.mxu0 0
  %2392 = vmatpush1.bf16.xpose.msra.mxu0 0
  %2393 = vmatprep.subr.bf16.mxu0 0
  %2394 = vmatpush1.bf16.xpose.msra.mxu0 0
  %2395 = vmatprep.subr.bf16.mxu0 0
  %2396 = vmatpush1.bf16.xpose.msra.mxu0 0
  %2397 = vmatprep.subr.bf16.mxu0 0
  %2398 = vmatpush1.bf16.xpose.msra.mxu0 0
  %2399 = vmatprep.subr.bf16.mxu0 0
  %2400 = vmatpush1.bf16.xpose.msra.mxu0 0
  %2401 = vmatprep.mubr.bf16.mxu0 0
  %2402 = vmatmul.mubr.bf16.gmra.mrb[0].mxu0 %v830
  %v2403 = vpop.f32.mrb[0].mxu0
  %v2404 = vadd.f32 0.0, %v2403
  %v2405 = vpop.f32.mrb[0].mxu0
  %v2406 = vpop.f32.mrb[0].mxu0
  %v2407 = vadd.f32 0.0, %v2406
  %v2408 = vpop.f32.mrb[0].mxu0
  %2409 = vdwg.mxu0
  %2411 = vrot.lane.b32.xlu0 %v474, 96
  %v2412 = vpop.permute.xlu0 %2411
  %v2414 = vsel %vm162, %v2412, 0
  %2416 = vmatprep.subr.bf16.mxu0 0
  %2417 = vmatpush1.bf16.xpose.msra.mxu0 %v2414
  %2418 = vmatprep.subr.bf16.mxu0 0
  %2419 = vmatpush1.bf16.xpose.msra.mxu0 0
  %2420 = vmatprep.subr.bf16.mxu0 0
  %2421 = vmatpush1.bf16.xpose.msra.mxu0 0
  %2422 = vmatprep.subr.bf16.mxu0 0
  %2423 = vmatpush1.bf16.xpose.msra.mxu0 0
  %2424 = vmatprep.subr.bf16.mxu0 0
  %2425 = vmatpush1.bf16.xpose.msra.mxu0 0
  %2426 = vmatprep.subr.bf16.mxu0 0
  %2427 = vmatpush1.bf16.xpose.msra.mxu0 0
  %2428 = vmatprep.subr.bf16.mxu0 0
  %2429 = vmatpush1.bf16.xpose.msra.mxu0 0
  %2430 = vmatprep.subr.bf16.mxu0 0
  %2431 = vmatpush1.bf16.xpose.msra.mxu0 0
  %2432 = vmatprep.subr.bf16.mxu0 0
  %2433 = vmatpush1.bf16.xpose.msra.mxu0 0
  %2434 = vmatprep.subr.bf16.mxu0 0
  %2435 = vmatpush1.bf16.xpose.msra.mxu0 0
  %2436 = vmatprep.subr.bf16.mxu0 0
  %2437 = vmatpush1.bf16.xpose.msra.mxu0 0
  %2438 = vmatprep.subr.bf16.mxu0 0
  %2439 = vmatpush1.bf16.xpose.msra.mxu0 0
  %2440 = vmatprep.subr.bf16.mxu0 0
  %2441 = vmatpush1.bf16.xpose.msra.mxu0 0
  %2442 = vmatprep.subr.bf16.mxu0 0
  %2443 = vmatpush1.bf16.xpose.msra.mxu0 0
  %2444 = vmatprep.subr.bf16.mxu0 0
  %2445 = vmatpush1.bf16.xpose.msra.mxu0 0
  %2446 = vmatprep.subr.bf16.mxu0 0
  %2447 = vmatpush1.bf16.xpose.msra.mxu0 0
  %2448 = vmatprep.mubr.bf16.mxu0 0
  %2449 = vmatmul.mubr.bf16.gmra.mrb[0].mxu0 %v880
  %v2450 = vpop.f32.mrb[0].mxu0
  %v2451 = vadd.f32 0.0, %v2450
  %v2452 = vpop.f32.mrb[0].mxu0
  %v2453 = vpop.f32.mrb[0].mxu0
  %v2454 = vadd.f32 0.0, %v2453
  %v2455 = vpop.f32.mrb[0].mxu0
  %2456 = vdwg.mxu0
  %2458 = vrot.lane.b32.xlu0 %v475, 96
  %v2459 = vpop.permute.xlu0 %2458
  %v2461 = vsel %vm162, %v2459, 0
  %2463 = vmatprep.subr.bf16.mxu0 0
  %2464 = vmatpush1.bf16.xpose.msra.mxu0 %v2461
  %2465 = vmatprep.subr.bf16.mxu0 0
  %2466 = vmatpush1.bf16.xpose.msra.mxu0 0
  %2467 = vmatprep.subr.bf16.mxu0 0
  %2468 = vmatpush1.bf16.xpose.msra.mxu0 0
  %2469 = vmatprep.subr.bf16.mxu0 0
  %2470 = vmatpush1.bf16.xpose.msra.mxu0 0
  %2471 = vmatprep.subr.bf16.mxu0 0
  %2472 = vmatpush1.bf16.xpose.msra.mxu0 0
  %2473 = vmatprep.subr.bf16.mxu0 0
  %2474 = vmatpush1.bf16.xpose.msra.mxu0 0
  %2475 = vmatprep.subr.bf16.mxu0 0
  %2476 = vmatpush1.bf16.xpose.msra.mxu0 0
  %2477 = vmatprep.subr.bf16.mxu0 0
  %2478 = vmatpush1.bf16.xpose.msra.mxu0 0
  %2479 = vmatprep.subr.bf16.mxu0 0
  %2480 = vmatpush1.bf16.xpose.msra.mxu0 0
  %2481 = vmatprep.subr.bf16.mxu0 0
  %2482 = vmatpush1.bf16.xpose.msra.mxu0 0
  %2483 = vmatprep.subr.bf16.mxu0 0
  %2484 = vmatpush1.bf16.xpose.msra.mxu0 0
  %2485 = vmatprep.subr.bf16.mxu0 0
  %2486 = vmatpush1.bf16.xpose.msra.mxu0 0
  %2487 = vmatprep.subr.bf16.mxu0 0
  %2488 = vmatpush1.bf16.xpose.msra.mxu0 0
  %2489 = vmatprep.subr.bf16.mxu0 0
  %2490 = vmatpush1.bf16.xpose.msra.mxu0 0
  %2491 = vmatprep.subr.bf16.mxu0 0
  %2492 = vmatpush1.bf16.xpose.msra.mxu0 0
  %2493 = vmatprep.subr.bf16.mxu0 0
  %2494 = vmatpush1.bf16.xpose.msra.mxu0 0
  %2495 = vmatprep.mubr.bf16.mxu0 0
  %2496 = vmatmul.mubr.bf16.gmra.mrb[0].mxu0 %v930
  %v2497 = vpop.f32.mrb[0].mxu0
  %v2498 = vadd.f32 0.0, %v2497
  %v2499 = vpop.f32.mrb[0].mxu0
  %v2500 = vpop.f32.mrb[0].mxu0
  %v2501 = vadd.f32 0.0, %v2500
  %v2502 = vpop.f32.mrb[0].mxu0
  %2503 = vdwg.mxu0
  %2505 = vrot.lane.b32.xlu0 %v476, 96
  %v2506 = vpop.permute.xlu0 %2505
  %v2508 = vsel %vm162, %v2506, 0
  %2510 = vmatprep.subr.bf16.mxu0 0
  %2511 = vmatpush1.bf16.xpose.msra.mxu0 %v2508
  %2512 = vmatprep.subr.bf16.mxu0 0
  %2513 = vmatpush1.bf16.xpose.msra.mxu0 0
  %2514 = vmatprep.subr.bf16.mxu0 0
  %2515 = vmatpush1.bf16.xpose.msra.mxu0 0
  %2516 = vmatprep.subr.bf16.mxu0 0
  %2517 = vmatpush1.bf16.xpose.msra.mxu0 0
  %2518 = vmatprep.subr.bf16.mxu0 0
  %2519 = vmatpush1.bf16.xpose.msra.mxu0 0
  %2520 = vmatprep.subr.bf16.mxu0 0
  %2521 = vmatpush1.bf16.xpose.msra.mxu0 0
  %2522 = vmatprep.subr.bf16.mxu0 0
  %2523 = vmatpush1.bf16.xpose.msra.mxu0 0
  %2524 = vmatprep.subr.bf16.mxu0 0
  %2525 = vmatpush1.bf16.xpose.msra.mxu0 0
  %2526 = vmatprep.subr.bf16.mxu0 0
  %2527 = vmatpush1.bf16.xpose.msra.mxu0 0
  %2528 = vmatprep.subr.bf16.mxu0 0
  %2529 = vmatpush1.bf16.xpose.msra.mxu0 0
  %2530 = vmatprep.subr.bf16.mxu0 0
  %2531 = vmatpush1.bf16.xpose.msra.mxu0 0
  %2532 = vmatprep.subr.bf16.mxu0 0
  %2533 = vmatpush1.bf16.xpose.msra.mxu0 0
  %2534 = vmatprep.subr.bf16.mxu0 0
  %2535 = vmatpush1.bf16.xpose.msra.mxu0 0
  %2536 = vmatprep.subr.bf16.mxu0 0
  %2537 = vmatpush1.bf16.xpose.msra.mxu0 0
  %2538 = vmatprep.subr.bf16.mxu0 0
  %2539 = vmatpush1.bf16.xpose.msra.mxu0 0
  %2540 = vmatprep.subr.bf16.mxu0 0
  %2541 = vmatpush1.bf16.xpose.msra.mxu0 0
  %2542 = vmatprep.mubr.bf16.mxu0 0
  %2543 = vmatmul.mubr.bf16.gmra.mrb[0].mxu0 %v980
  %v2544 = vpop.f32.mrb[0].mxu0
  %v2545 = vadd.f32 0.0, %v2544
  %v2546 = vpop.f32.mrb[0].mxu0
  %v2547 = vpop.f32.mrb[0].mxu0
  %v2548 = vadd.f32 0.0, %v2547
  %v2549 = vpop.f32.mrb[0].mxu0
  %2550 = vdwg.mxu0
  %2552 = vrot.lane.b32.xlu0 %v477, 96
  %v2553 = vpop.permute.xlu0 %2552
  %v2555 = vsel %vm162, %v2553, 0
  %2557 = vmatprep.subr.bf16.mxu0 0
  %2558 = vmatpush1.bf16.xpose.msra.mxu0 %v2555
  %2559 = vmatprep.subr.bf16.mxu0 0
  %2560 = vmatpush1.bf16.xpose.msra.mxu0 0
  %2561 = vmatprep.subr.bf16.mxu0 0
  %2562 = vmatpush1.bf16.xpose.msra.mxu0 0
  %2563 = vmatprep.subr.bf16.mxu0 0
  %2564 = vmatpush1.bf16.xpose.msra.mxu0 0
  %2565 = vmatprep.subr.bf16.mxu0 0
  %2566 = vmatpush1.bf16.xpose.msra.mxu0 0
  %2567 = vmatprep.subr.bf16.mxu0 0
  %2568 = vmatpush1.bf16.xpose.msra.mxu0 0
  %2569 = vmatprep.subr.bf16.mxu0 0
  %2570 = vmatpush1.bf16.xpose.msra.mxu0 0
  %2571 = vmatprep.subr.bf16.mxu0 0
  %2572 = vmatpush1.bf16.xpose.msra.mxu0 0
  %2573 = vmatprep.subr.bf16.mxu0 0
  %2574 = vmatpush1.bf16.xpose.msra.mxu0 0
  %2575 = vmatprep.subr.bf16.mxu0 0
  %2576 = vmatpush1.bf16.xpose.msra.mxu0 0
  %2577 = vmatprep.subr.bf16.mxu0 0
  %2578 = vmatpush1.bf16.xpose.msra.mxu0 0
  %2579 = vmatprep.subr.bf16.mxu0 0
  %2580 = vmatpush1.bf16.xpose.msra.mxu0 0
  %2581 = vmatprep.subr.bf16.mxu0 0
  %2582 = vmatpush1.bf16.xpose.msra.mxu0 0
  %2583 = vmatprep.subr.bf16.mxu0 0
  %2584 = vmatpush1.bf16.xpose.msra.mxu0 0
  %2585 = vmatprep.subr.bf16.mxu0 0
  %2586 = vmatpush1.bf16.xpose.msra.mxu0 0
  %2587 = vmatprep.subr.bf16.mxu0 0
  %2588 = vmatpush1.bf16.xpose.msra.mxu0 0
  %2589 = vmatprep.mubr.bf16.mxu0 0
  %2590 = vmatmul.mubr.bf16.gmra.mrb[0].mxu0 %v1030
  %v2591 = vpop.f32.mrb[0].mxu0
  %v2592 = vadd.f32 0.0, %v2591
  %v2593 = vpop.f32.mrb[0].mxu0
  %v2594 = vpop.f32.mrb[0].mxu0
  %v2595 = vadd.f32 0.0, %v2594
  %v2596 = vpop.f32.mrb[0].mxu0
  %2597 = vdwg.mxu0
  %2599 = vrot.lane.b32.xlu0 %v478, 96
  %v2600 = vpop.permute.xlu0 %2599
  %v2602 = vsel %vm162, %v2600, 0
  %2604 = vmatprep.subr.bf16.mxu0 0
  %2605 = vmatpush1.bf16.xpose.msra.mxu0 %v2602
  %2606 = vmatprep.subr.bf16.mxu0 0
  %2607 = vmatpush1.bf16.xpose.msra.mxu0 0
  %2608 = vmatprep.subr.bf16.mxu0 0
  %2609 = vmatpush1.bf16.xpose.msra.mxu0 0
  %2610 = vmatprep.subr.bf16.mxu0 0
  %2611 = vmatpush1.bf16.xpose.msra.mxu0 0
  %2612 = vmatprep.subr.bf16.mxu0 0
  %2613 = vmatpush1.bf16.xpose.msra.mxu0 0
  %2614 = vmatprep.subr.bf16.mxu0 0
  %2615 = vmatpush1.bf16.xpose.msra.mxu0 0
  %2616 = vmatprep.subr.bf16.mxu0 0
  %2617 = vmatpush1.bf16.xpose.msra.mxu0 0
  %2618 = vmatprep.subr.bf16.mxu0 0
  %2619 = vmatpush1.bf16.xpose.msra.mxu0 0
  %2620 = vmatprep.subr.bf16.mxu0 0
  %2621 = vmatpush1.bf16.xpose.msra.mxu0 0
  %2622 = vmatprep.subr.bf16.mxu0 0
  %2623 = vmatpush1.bf16.xpose.msra.mxu0 0
  %2624 = vmatprep.subr.bf16.mxu0 0
  %2625 = vmatpush1.bf16.xpose.msra.mxu0 0
  %2626 = vmatprep.subr.bf16.mxu0 0
  %2627 = vmatpush1.bf16.xpose.msra.mxu0 0
  %2628 = vmatprep.subr.bf16.mxu0 0
  %2629 = vmatpush1.bf16.xpose.msra.mxu0 0
  %2630 = vmatprep.subr.bf16.mxu0 0
  %2631 = vmatpush1.bf16.xpose.msra.mxu0 0
  %2632 = vmatprep.subr.bf16.mxu0 0
  %2633 = vmatpush1.bf16.xpose.msra.mxu0 0
  %2634 = vmatprep.subr.bf16.mxu0 0
  %2635 = vmatpush1.bf16.xpose.msra.mxu0 0
  %2636 = vmatprep.mubr.bf16.mxu0 0
  %2637 = vmatmul.mubr.bf16.gmra.mrb[0].mxu0 %v1080
  %v2638 = vpop.f32.mrb[0].mxu0
  %v2639 = vadd.f32 0.0, %v2638
  %v2640 = vpop.f32.mrb[0].mxu0
  %v2641 = vpop.f32.mrb[0].mxu0
  %v2642 = vadd.f32 0.0, %v2641
  %v2643 = vpop.f32.mrb[0].mxu0
  %2644 = vdwg.mxu0
  %2646 = vrot.lane.b32.xlu0 %v479, 96
  %v2647 = vpop.permute.xlu0 %2646
  %v2649 = vsel %vm162, %v2647, 0
  %2651 = vmatprep.subr.bf16.mxu0 0
  %2652 = vmatpush1.bf16.xpose.msra.mxu0 %v2649
  %2653 = vmatprep.subr.bf16.mxu0 0
  %2654 = vmatpush1.bf16.xpose.msra.mxu0 0
  %2655 = vmatprep.subr.bf16.mxu0 0
  %2656 = vmatpush1.bf16.xpose.msra.mxu0 0
  %2657 = vmatprep.subr.bf16.mxu0 0
  %2658 = vmatpush1.bf16.xpose.msra.mxu0 0
  %2659 = vmatprep.subr.bf16.mxu0 0
  %2660 = vmatpush1.bf16.xpose.msra.mxu0 0
  %2661 = vmatprep.subr.bf16.mxu0 0
  %2662 = vmatpush1.bf16.xpose.msra.mxu0 0
  %2663 = vmatprep.subr.bf16.mxu0 0
  %2664 = vmatpush1.bf16.xpose.msra.mxu0 0
  %2665 = vmatprep.subr.bf16.mxu0 0
  %2666 = vmatpush1.bf16.xpose.msra.mxu0 0
  %2667 = vmatprep.subr.bf16.mxu0 0
  %2668 = vmatpush1.bf16.xpose.msra.mxu0 0
  %2669 = vmatprep.subr.bf16.mxu0 0
  %2670 = vmatpush1.bf16.xpose.msra.mxu0 0
  %2671 = vmatprep.subr.bf16.mxu0 0
  %2672 = vmatpush1.bf16.xpose.msra.mxu0 0
  %2673 = vmatprep.subr.bf16.mxu0 0
  %2674 = vmatpush1.bf16.xpose.msra.mxu0 0
  %2675 = vmatprep.subr.bf16.mxu0 0
  %2676 = vmatpush1.bf16.xpose.msra.mxu0 0
  %2677 = vmatprep.subr.bf16.mxu0 0
  %2678 = vmatpush1.bf16.xpose.msra.mxu0 0
  %2679 = vmatprep.subr.bf16.mxu0 0
  %2680 = vmatpush1.bf16.xpose.msra.mxu0 0
  %2681 = vmatprep.subr.bf16.mxu0 0
  %2682 = vmatpush1.bf16.xpose.msra.mxu0 0
  %2683 = vmatprep.mubr.bf16.mxu0 0
  %2684 = vmatmul.mubr.bf16.gmra.mrb[0].mxu0 %v1130
  %v2685 = vpop.f32.mrb[0].mxu0
  %v2686 = vadd.f32 0.0, %v2685
  %v2687 = vpop.f32.mrb[0].mxu0
  %v2688 = vpop.f32.mrb[0].mxu0
  %v2689 = vadd.f32 0.0, %v2688
  %v2690 = vpop.f32.mrb[0].mxu0
  %2691 = vdwg.mxu0
  %2693 = vrot.lane.b32.xlu0 %v480, 96
  %v2694 = vpop.permute.xlu0 %2693
  %v2696 = vsel %vm162, %v2694, 0
  %2698 = vmatprep.subr.bf16.mxu0 0
  %2699 = vmatpush1.bf16.xpose.msra.mxu0 %v2696
  %2700 = vmatprep.subr.bf16.mxu0 0
  %2701 = vmatpush1.bf16.xpose.msra.mxu0 0
  %2702 = vmatprep.subr.bf16.mxu0 0
  %2703 = vmatpush1.bf16.xpose.msra.mxu0 0
  %2704 = vmatprep.subr.bf16.mxu0 0
  %2705 = vmatpush1.bf16.xpose.msra.mxu0 0
  %2706 = vmatprep.subr.bf16.mxu0 0
  %2707 = vmatpush1.bf16.xpose.msra.mxu0 0
  %2708 = vmatprep.subr.bf16.mxu0 0
  %2709 = vmatpush1.bf16.xpose.msra.mxu0 0
  %2710 = vmatprep.subr.bf16.mxu0 0
  %2711 = vmatpush1.bf16.xpose.msra.mxu0 0
  %2712 = vmatprep.subr.bf16.mxu0 0
  %2713 = vmatpush1.bf16.xpose.msra.mxu0 0
  %2714 = vmatprep.subr.bf16.mxu0 0
  %2715 = vmatpush1.bf16.xpose.msra.mxu0 0
  %2716 = vmatprep.subr.bf16.mxu0 0
  %2717 = vmatpush1.bf16.xpose.msra.mxu0 0
  %2718 = vmatprep.subr.bf16.mxu0 0
  %2719 = vmatpush1.bf16.xpose.msra.mxu0 0
  %2720 = vmatprep.subr.bf16.mxu0 0
  %2721 = vmatpush1.bf16.xpose.msra.mxu0 0
  %2722 = vmatprep.subr.bf16.mxu0 0
  %2723 = vmatpush1.bf16.xpose.msra.mxu0 0
  %2724 = vmatprep.subr.bf16.mxu0 0
  %2725 = vmatpush1.bf16.xpose.msra.mxu0 0
  %2726 = vmatprep.subr.bf16.mxu0 0
  %2727 = vmatpush1.bf16.xpose.msra.mxu0 0
  %2728 = vmatprep.subr.bf16.mxu0 0
  %2729 = vmatpush1.bf16.xpose.msra.mxu0 0
  %2730 = vmatprep.mubr.bf16.mxu0 0
  %2731 = vmatmul.mubr.bf16.gmra.mrb[0].mxu0 %v1180
  %v2732 = vpop.f32.mrb[0].mxu0
  %v2733 = vadd.f32 0.0, %v2732
  %v2734 = vpop.f32.mrb[0].mxu0
  %v2735 = vpop.f32.mrb[0].mxu0
  %v2736 = vadd.f32 0.0, %v2735
  %v2737 = vpop.f32.mrb[0].mxu0
  %2738 = vdwg.mxu0
  %2740 = vrot.lane.b32.xlu0 %v481, 96
  %v2741 = vpop.permute.xlu0 %2740
  %v2743 = vsel %vm162, %v2741, 0
  %2745 = vmatprep.subr.bf16.mxu0 0
  %2746 = vmatpush1.bf16.xpose.msra.mxu0 %v2743
  %2747 = vmatprep.subr.bf16.mxu0 0
  %2748 = vmatpush1.bf16.xpose.msra.mxu0 0
  %2749 = vmatprep.subr.bf16.mxu0 0
  %2750 = vmatpush1.bf16.xpose.msra.mxu0 0
  %2751 = vmatprep.subr.bf16.mxu0 0
  %2752 = vmatpush1.bf16.xpose.msra.mxu0 0
  %2753 = vmatprep.subr.bf16.mxu0 0
  %2754 = vmatpush1.bf16.xpose.msra.mxu0 0
  %2755 = vmatprep.subr.bf16.mxu0 0
  %2756 = vmatpush1.bf16.xpose.msra.mxu0 0
  %2757 = vmatprep.subr.bf16.mxu0 0
  %2758 = vmatpush1.bf16.xpose.msra.mxu0 0
  %2759 = vmatprep.subr.bf16.mxu0 0
  %2760 = vmatpush1.bf16.xpose.msra.mxu0 0
  %2761 = vmatprep.subr.bf16.mxu0 0
  %2762 = vmatpush1.bf16.xpose.msra.mxu0 0
  %2763 = vmatprep.subr.bf16.mxu0 0
  %2764 = vmatpush1.bf16.xpose.msra.mxu0 0
  %2765 = vmatprep.subr.bf16.mxu0 0
  %2766 = vmatpush1.bf16.xpose.msra.mxu0 0
  %2767 = vmatprep.subr.bf16.mxu0 0
  %2768 = vmatpush1.bf16.xpose.msra.mxu0 0
  %2769 = vmatprep.subr.bf16.mxu0 0
  %2770 = vmatpush1.bf16.xpose.msra.mxu0 0
  %2771 = vmatprep.subr.bf16.mxu0 0
  %2772 = vmatpush1.bf16.xpose.msra.mxu0 0
  %2773 = vmatprep.subr.bf16.mxu0 0
  %2774 = vmatpush1.bf16.xpose.msra.mxu0 0
  %2775 = vmatprep.subr.bf16.mxu0 0
  %2776 = vmatpush1.bf16.xpose.msra.mxu0 0
  %2777 = vmatprep.mubr.bf16.mxu0 0
  %2778 = vmatmul.mubr.bf16.gmra.mrb[0].mxu0 %v1230
  %v2779 = vpop.f32.mrb[0].mxu0
  %v2780 = vadd.f32 0.0, %v2779
  %v2781 = vpop.f32.mrb[0].mxu0
  %v2782 = vpop.f32.mrb[0].mxu0
  %v2783 = vadd.f32 0.0, %v2782
  %v2784 = vpop.f32.mrb[0].mxu0
  %2785 = vdwg.mxu0
  %2787 = vrot.lane.b32.xlu0 %v482, 96
  %v2788 = vpop.permute.xlu0 %2787
  %v2790 = vsel %vm162, %v2788, 0
  %2792 = vmatprep.subr.bf16.mxu0 0
  %2793 = vmatpush1.bf16.xpose.msra.mxu0 %v2790
  %2794 = vmatprep.subr.bf16.mxu0 0
  %2795 = vmatpush1.bf16.xpose.msra.mxu0 0
  %2796 = vmatprep.subr.bf16.mxu0 0
  %2797 = vmatpush1.bf16.xpose.msra.mxu0 0
  %2798 = vmatprep.subr.bf16.mxu0 0
  %2799 = vmatpush1.bf16.xpose.msra.mxu0 0
  %2800 = vmatprep.subr.bf16.mxu0 0
  %2801 = vmatpush1.bf16.xpose.msra.mxu0 0
  %2802 = vmatprep.subr.bf16.mxu0 0
  %2803 = vmatpush1.bf16.xpose.msra.mxu0 0
  %2804 = vmatprep.subr.bf16.mxu0 0
  %2805 = vmatpush1.bf16.xpose.msra.mxu0 0
  %2806 = vmatprep.subr.bf16.mxu0 0
  %2807 = vmatpush1.bf16.xpose.msra.mxu0 0
  %2808 = vmatprep.subr.bf16.mxu0 0
  %2809 = vmatpush1.bf16.xpose.msra.mxu0 0
  %2810 = vmatprep.subr.bf16.mxu0 0
  %2811 = vmatpush1.bf16.xpose.msra.mxu0 0
  %2812 = vmatprep.subr.bf16.mxu0 0
  %2813 = vmatpush1.bf16.xpose.msra.mxu0 0
  %2814 = vmatprep.subr.bf16.mxu0 0
  %2815 = vmatpush1.bf16.xpose.msra.mxu0 0
  %2816 = vmatprep.subr.bf16.mxu0 0
  %2817 = vmatpush1.bf16.xpose.msra.mxu0 0
  %2818 = vmatprep.subr.bf16.mxu0 0
  %2819 = vmatpush1.bf16.xpose.msra.mxu0 0
  %2820 = vmatprep.subr.bf16.mxu0 0
  %2821 = vmatpush1.bf16.xpose.msra.mxu0 0
  %2822 = vmatprep.subr.bf16.mxu0 0
  %2823 = vmatpush1.bf16.xpose.msra.mxu0 0
  %2824 = vmatprep.mubr.bf16.mxu0 0
  %2825 = vmatmul.mubr.bf16.gmra.mrb[0].mxu0 %v1280
  %v2826 = vpop.f32.mrb[0].mxu0
  %v2827 = vadd.f32 0.0, %v2826
  %v2828 = vpop.f32.mrb[0].mxu0
  %v2829 = vpop.f32.mrb[0].mxu0
  %v2830 = vadd.f32 0.0, %v2829
  %v2831 = vpop.f32.mrb[0].mxu0
  %2832 = vdwg.mxu0
  %2834 = vrot.lane.b32.xlu0 %v483, 96
  %v2835 = vpop.permute.xlu0 %2834
  %v2837 = vsel %vm162, %v2835, 0
  %2839 = vmatprep.subr.bf16.mxu0 0
  %2840 = vmatpush1.bf16.xpose.msra.mxu0 %v2837
  %2841 = vmatprep.subr.bf16.mxu0 0
  %2842 = vmatpush1.bf16.xpose.msra.mxu0 0
  %2843 = vmatprep.subr.bf16.mxu0 0
  %2844 = vmatpush1.bf16.xpose.msra.mxu0 0
  %2845 = vmatprep.subr.bf16.mxu0 0
  %2846 = vmatpush1.bf16.xpose.msra.mxu0 0
  %2847 = vmatprep.subr.bf16.mxu0 0
  %2848 = vmatpush1.bf16.xpose.msra.mxu0 0
  %2849 = vmatprep.subr.bf16.mxu0 0
  %2850 = vmatpush1.bf16.xpose.msra.mxu0 0
  %2851 = vmatprep.subr.bf16.mxu0 0
  %2852 = vmatpush1.bf16.xpose.msra.mxu0 0
  %2853 = vmatprep.subr.bf16.mxu0 0
  %2854 = vmatpush1.bf16.xpose.msra.mxu0 0
  %2855 = vmatprep.subr.bf16.mxu0 0
  %2856 = vmatpush1.bf16.xpose.msra.mxu0 0
  %2857 = vmatprep.subr.bf16.mxu0 0
  %2858 = vmatpush1.bf16.xpose.msra.mxu0 0
  %2859 = vmatprep.subr.bf16.mxu0 0
  %2860 = vmatpush1.bf16.xpose.msra.mxu0 0
  %2861 = vmatprep.subr.bf16.mxu0 0
  %2862 = vmatpush1.bf16.xpose.msra.mxu0 0
  %2863 = vmatprep.subr.bf16.mxu0 0
  %2864 = vmatpush1.bf16.xpose.msra.mxu0 0
  %2865 = vmatprep.subr.bf16.mxu0 0
  %2866 = vmatpush1.bf16.xpose.msra.mxu0 0
  %2867 = vmatprep.subr.bf16.mxu0 0
  %2868 = vmatpush1.bf16.xpose.msra.mxu0 0
  %2869 = vmatprep.subr.bf16.mxu0 0
  %2870 = vmatpush1.bf16.xpose.msra.mxu0 0
  %2871 = vmatprep.mubr.bf16.mxu0 0
  %2872 = vmatmul.mubr.bf16.gmra.mrb[0].mxu0 %v1330
  %v2873 = vpop.f32.mrb[0].mxu0
  %v2874 = vadd.f32 0.0, %v2873
  %v2875 = vpop.f32.mrb[0].mxu0
  %v2876 = vpop.f32.mrb[0].mxu0
  %v2877 = vadd.f32 0.0, %v2876
  %v2878 = vpop.f32.mrb[0].mxu0
  %2879 = vdwg.mxu0
  %2881 = vrot.lane.b32.xlu0 %v484, 96
  %v2882 = vpop.permute.xlu0 %2881
  %v2884 = vsel %vm162, %v2882, 0
  %2886 = vmatprep.subr.bf16.mxu0 0
  %2887 = vmatpush1.bf16.xpose.msra.mxu0 %v2884
  %2888 = vmatprep.subr.bf16.mxu0 0
  %2889 = vmatpush1.bf16.xpose.msra.mxu0 0
  %2890 = vmatprep.subr.bf16.mxu0 0
  %2891 = vmatpush1.bf16.xpose.msra.mxu0 0
  %2892 = vmatprep.subr.bf16.mxu0 0
  %2893 = vmatpush1.bf16.xpose.msra.mxu0 0
  %2894 = vmatprep.subr.bf16.mxu0 0
  %2895 = vmatpush1.bf16.xpose.msra.mxu0 0
  %2896 = vmatprep.subr.bf16.mxu0 0
  %2897 = vmatpush1.bf16.xpose.msra.mxu0 0
  %2898 = vmatprep.subr.bf16.mxu0 0
  %2899 = vmatpush1.bf16.xpose.msra.mxu0 0
  %2900 = vmatprep.subr.bf16.mxu0 0
  %2901 = vmatpush1.bf16.xpose.msra.mxu0 0
  %2902 = vmatprep.subr.bf16.mxu0 0
  %2903 = vmatpush1.bf16.xpose.msra.mxu0 0
  %2904 = vmatprep.subr.bf16.mxu0 0
  %2905 = vmatpush1.bf16.xpose.msra.mxu0 0
  %2906 = vmatprep.subr.bf16.mxu0 0
  %2907 = vmatpush1.bf16.xpose.msra.mxu0 0
  %2908 = vmatprep.subr.bf16.mxu0 0
  %2909 = vmatpush1.bf16.xpose.msra.mxu0 0
  %2910 = vmatprep.subr.bf16.mxu0 0
  %2911 = vmatpush1.bf16.xpose.msra.mxu0 0
  %2912 = vmatprep.subr.bf16.mxu0 0
  %2913 = vmatpush1.bf16.xpose.msra.mxu0 0
  %2914 = vmatprep.subr.bf16.mxu0 0
  %2915 = vmatpush1.bf16.xpose.msra.mxu0 0
  %2916 = vmatprep.subr.bf16.mxu0 0
  %2917 = vmatpush1.bf16.xpose.msra.mxu0 0
  %2918 = vmatprep.mubr.bf16.mxu0 0
  %2919 = vmatmul.mubr.bf16.gmra.mrb[0].mxu0 %v580
  %v2920 = vpop.f32.mrb[0].mxu0
  %v2921 = vadd.f32 0.0, %v2920
  %v2922 = vpop.f32.mrb[0].mxu0
  %v2923 = vpop.f32.mrb[0].mxu0
  %v2924 = vadd.f32 0.0, %v2923
  %v2925 = vpop.f32.mrb[0].mxu0
  %2926 = vdwg.mxu0
  %2928 = vrot.lane.b32.xlu0 %v485, 96
  %v2929 = vpop.permute.xlu0 %2928
  %v2931 = vsel %vm162, %v2929, 0
  %2933 = vmatprep.subr.bf16.mxu0 0
  %2934 = vmatpush1.bf16.xpose.msra.mxu0 %v2931
  %2935 = vmatprep.subr.bf16.mxu0 0
  %2936 = vmatpush1.bf16.xpose.msra.mxu0 0
  %2937 = vmatprep.subr.bf16.mxu0 0
  %2938 = vmatpush1.bf16.xpose.msra.mxu0 0
  %2939 = vmatprep.subr.bf16.mxu0 0
  %2940 = vmatpush1.bf16.xpose.msra.mxu0 0
  %2941 = vmatprep.subr.bf16.mxu0 0
  %2942 = vmatpush1.bf16.xpose.msra.mxu0 0
  %2943 = vmatprep.subr.bf16.mxu0 0
  %2944 = vmatpush1.bf16.xpose.msra.mxu0 0
  %2945 = vmatprep.subr.bf16.mxu0 0
  %2946 = vmatpush1.bf16.xpose.msra.mxu0 0
  %2947 = vmatprep.subr.bf16.mxu0 0
  %2948 = vmatpush1.bf16.xpose.msra.mxu0 0
  %2949 = vmatprep.subr.bf16.mxu0 0
  %2950 = vmatpush1.bf16.xpose.msra.mxu0 0
  %2951 = vmatprep.subr.bf16.mxu0 0
  %2952 = vmatpush1.bf16.xpose.msra.mxu0 0
  %2953 = vmatprep.subr.bf16.mxu0 0
  %2954 = vmatpush1.bf16.xpose.msra.mxu0 0
  %2955 = vmatprep.subr.bf16.mxu0 0
  %2956 = vmatpush1.bf16.xpose.msra.mxu0 0
  %2957 = vmatprep.subr.bf16.mxu0 0
  %2958 = vmatpush1.bf16.xpose.msra.mxu0 0
  %2959 = vmatprep.subr.bf16.mxu0 0
  %2960 = vmatpush1.bf16.xpose.msra.mxu0 0
  %2961 = vmatprep.subr.bf16.mxu0 0
  %2962 = vmatpush1.bf16.xpose.msra.mxu0 0
  %2963 = vmatprep.subr.bf16.mxu0 0
  %2964 = vmatpush1.bf16.xpose.msra.mxu0 0
  %2965 = vmatprep.mubr.bf16.mxu0 0
  %2966 = vmatmul.mubr.bf16.gmra.mrb[0].mxu0 %v630
  %v2967 = vpop.f32.mrb[0].mxu0
  %v2968 = vadd.f32 0.0, %v2967
  %v2969 = vpop.f32.mrb[0].mxu0
  %v2970 = vpop.f32.mrb[0].mxu0
  %v2971 = vadd.f32 0.0, %v2970
  %v2972 = vpop.f32.mrb[0].mxu0
  %2973 = vdwg.mxu0
  %2975 = vrot.lane.b32.xlu0 %v486, 96
  %v2976 = vpop.permute.xlu0 %2975
  %v2978 = vsel %vm162, %v2976, 0
  %2980 = vmatprep.subr.bf16.mxu0 0
  %2981 = vmatpush1.bf16.xpose.msra.mxu0 %v2978
  %2982 = vmatprep.subr.bf16.mxu0 0
  %2983 = vmatpush1.bf16.xpose.msra.mxu0 0
  %2984 = vmatprep.subr.bf16.mxu0 0
  %2985 = vmatpush1.bf16.xpose.msra.mxu0 0
  %2986 = vmatprep.subr.bf16.mxu0 0
  %2987 = vmatpush1.bf16.xpose.msra.mxu0 0
  %2988 = vmatprep.subr.bf16.mxu0 0
  %2989 = vmatpush1.bf16.xpose.msra.mxu0 0
  %2990 = vmatprep.subr.bf16.mxu0 0
  %2991 = vmatpush1.bf16.xpose.msra.mxu0 0
  %2992 = vmatprep.subr.bf16.mxu0 0
  %2993 = vmatpush1.bf16.xpose.msra.mxu0 0
  %2994 = vmatprep.subr.bf16.mxu0 0
  %2995 = vmatpush1.bf16.xpose.msra.mxu0 0
  %2996 = vmatprep.subr.bf16.mxu0 0
  %2997 = vmatpush1.bf16.xpose.msra.mxu0 0
  %2998 = vmatprep.subr.bf16.mxu0 0
  %2999 = vmatpush1.bf16.xpose.msra.mxu0 0
  %3000 = vmatprep.subr.bf16.mxu0 0
  %3001 = vmatpush1.bf16.xpose.msra.mxu0 0
  %3002 = vmatprep.subr.bf16.mxu0 0
  %3003 = vmatpush1.bf16.xpose.msra.mxu0 0
  %3004 = vmatprep.subr.bf16.mxu0 0
  %3005 = vmatpush1.bf16.xpose.msra.mxu0 0
  %3006 = vmatprep.subr.bf16.mxu0 0
  %3007 = vmatpush1.bf16.xpose.msra.mxu0 0
  %3008 = vmatprep.subr.bf16.mxu0 0
  %3009 = vmatpush1.bf16.xpose.msra.mxu0 0
  %3010 = vmatprep.subr.bf16.mxu0 0
  %3011 = vmatpush1.bf16.xpose.msra.mxu0 0
  %3012 = vmatprep.mubr.bf16.mxu0 0
  %3013 = vmatmul.mubr.bf16.gmra.mrb[0].mxu0 %v680
  %v3014 = vpop.f32.mrb[0].mxu0
  %v3015 = vadd.f32 0.0, %v3014
  %v3016 = vpop.f32.mrb[0].mxu0
  %v3017 = vpop.f32.mrb[0].mxu0
  %v3018 = vadd.f32 0.0, %v3017
  %v3019 = vpop.f32.mrb[0].mxu0
  %3020 = vdwg.mxu0
  %3022 = vrot.lane.b32.xlu0 %v487, 96
  %v3023 = vpop.permute.xlu0 %3022
  %v3025 = vsel %vm162, %v3023, 0
  %3027 = vmatprep.subr.bf16.mxu0 0
  %3028 = vmatpush1.bf16.xpose.msra.mxu0 %v3025
  %3029 = vmatprep.subr.bf16.mxu0 0
  %3030 = vmatpush1.bf16.xpose.msra.mxu0 0
  %3031 = vmatprep.subr.bf16.mxu0 0
  %3032 = vmatpush1.bf16.xpose.msra.mxu0 0
  %3033 = vmatprep.subr.bf16.mxu0 0
  %3034 = vmatpush1.bf16.xpose.msra.mxu0 0
  %3035 = vmatprep.subr.bf16.mxu0 0
  %3036 = vmatpush1.bf16.xpose.msra.mxu0 0
  %3037 = vmatprep.subr.bf16.mxu0 0
  %3038 = vmatpush1.bf16.xpose.msra.mxu0 0
  %3039 = vmatprep.subr.bf16.mxu0 0
  %3040 = vmatpush1.bf16.xpose.msra.mxu0 0
  %3041 = vmatprep.subr.bf16.mxu0 0
  %3042 = vmatpush1.bf16.xpose.msra.mxu0 0
  %3043 = vmatprep.subr.bf16.mxu0 0
  %3044 = vmatpush1.bf16.xpose.msra.mxu0 0
  %3045 = vmatprep.subr.bf16.mxu0 0
  %3046 = vmatpush1.bf16.xpose.msra.mxu0 0
  %3047 = vmatprep.subr.bf16.mxu0 0
  %3048 = vmatpush1.bf16.xpose.msra.mxu0 0
  %3049 = vmatprep.subr.bf16.mxu0 0
  %3050 = vmatpush1.bf16.xpose.msra.mxu0 0
  %3051 = vmatprep.subr.bf16.mxu0 0
  %3052 = vmatpush1.bf16.xpose.msra.mxu0 0
  %3053 = vmatprep.subr.bf16.mxu0 0
  %3054 = vmatpush1.bf16.xpose.msra.mxu0 0
  %3055 = vmatprep.subr.bf16.mxu0 0
  %3056 = vmatpush1.bf16.xpose.msra.mxu0 0
  %3057 = vmatprep.subr.bf16.mxu0 0
  %3058 = vmatpush1.bf16.xpose.msra.mxu0 0
  %3059 = vmatprep.mubr.bf16.mxu0 0
  %3060 = vmatmul.mubr.bf16.gmra.mrb[0].mxu0 %v730
  %v3061 = vpop.f32.mrb[0].mxu0
  %v3062 = vadd.f32 0.0, %v3061
  %v3063 = vpop.f32.mrb[0].mxu0
  %v3064 = vpop.f32.mrb[0].mxu0
  %v3065 = vadd.f32 0.0, %v3064
  %v3066 = vpop.f32.mrb[0].mxu0
  %3067 = vdwg.mxu0
  %3069 = vrot.lane.b32.xlu0 %v488, 96
  %v3070 = vpop.permute.xlu0 %3069
  %v3072 = vsel %vm162, %v3070, 0
  %3074 = vmatprep.subr.bf16.mxu0 0
  %3075 = vmatpush1.bf16.xpose.msra.mxu0 %v3072
  %3076 = vmatprep.subr.bf16.mxu0 0
  %3077 = vmatpush1.bf16.xpose.msra.mxu0 0
  %3078 = vmatprep.subr.bf16.mxu0 0
  %3079 = vmatpush1.bf16.xpose.msra.mxu0 0
  %3080 = vmatprep.subr.bf16.mxu0 0
  %3081 = vmatpush1.bf16.xpose.msra.mxu0 0
  %3082 = vmatprep.subr.bf16.mxu0 0
  %3083 = vmatpush1.bf16.xpose.msra.mxu0 0
  %3084 = vmatprep.subr.bf16.mxu0 0
  %3085 = vmatpush1.bf16.xpose.msra.mxu0 0
  %3086 = vmatprep.subr.bf16.mxu0 0
  %3087 = vmatpush1.bf16.xpose.msra.mxu0 0
  %3088 = vmatprep.subr.bf16.mxu0 0
  %3089 = vmatpush1.bf16.xpose.msra.mxu0 0
  %3090 = vmatprep.subr.bf16.mxu0 0
  %3091 = vmatpush1.bf16.xpose.msra.mxu0 0
  %3092 = vmatprep.subr.bf16.mxu0 0
  %3093 = vmatpush1.bf16.xpose.msra.mxu0 0
  %3094 = vmatprep.subr.bf16.mxu0 0
  %3095 = vmatpush1.bf16.xpose.msra.mxu0 0
  %3096 = vmatprep.subr.bf16.mxu0 0
  %3097 = vmatpush1.bf16.xpose.msra.mxu0 0
  %3098 = vmatprep.subr.bf16.mxu0 0
  %3099 = vmatpush1.bf16.xpose.msra.mxu0 0
  %3100 = vmatprep.subr.bf16.mxu0 0
  %3101 = vmatpush1.bf16.xpose.msra.mxu0 0
  %3102 = vmatprep.subr.bf16.mxu0 0
  %3103 = vmatpush1.bf16.xpose.msra.mxu0 0
  %3104 = vmatprep.subr.bf16.mxu0 0
  %3105 = vmatpush1.bf16.xpose.msra.mxu0 0
  %3106 = vmatprep.mubr.bf16.mxu0 0
  %3107 = vmatmul.mubr.bf16.gmra.mrb[0].mxu0 %v780
  %v3108 = vpop.f32.mrb[0].mxu0
  %v3109 = vadd.f32 0.0, %v3108
  %v3110 = vpop.f32.mrb[0].mxu0
  %v3111 = vpop.f32.mrb[0].mxu0
  %v3112 = vadd.f32 0.0, %v3111
  %v3113 = vpop.f32.mrb[0].mxu0
  %3114 = vdwg.mxu0
  %3116 = vrot.lane.b32.xlu0 %v489, 96
  %v3117 = vpop.permute.xlu0 %3116
  %v3119 = vsel %vm162, %v3117, 0
  %3121 = vmatprep.subr.bf16.mxu0 0
  %3122 = vmatpush1.bf16.xpose.msra.mxu0 %v3119
  %3123 = vmatprep.subr.bf16.mxu0 0
  %3124 = vmatpush1.bf16.xpose.msra.mxu0 0
  %3125 = vmatprep.subr.bf16.mxu0 0
  %3126 = vmatpush1.bf16.xpose.msra.mxu0 0
  %3127 = vmatprep.subr.bf16.mxu0 0
  %3128 = vmatpush1.bf16.xpose.msra.mxu0 0
  %3129 = vmatprep.subr.bf16.mxu0 0
  %3130 = vmatpush1.bf16.xpose.msra.mxu0 0
  %3131 = vmatprep.subr.bf16.mxu0 0
  %3132 = vmatpush1.bf16.xpose.msra.mxu0 0
  %3133 = vmatprep.subr.bf16.mxu0 0
  %3134 = vmatpush1.bf16.xpose.msra.mxu0 0
  %3135 = vmatprep.subr.bf16.mxu0 0
  %3136 = vmatpush1.bf16.xpose.msra.mxu0 0
  %3137 = vmatprep.subr.bf16.mxu0 0
  %3138 = vmatpush1.bf16.xpose.msra.mxu0 0
  %3139 = vmatprep.subr.bf16.mxu0 0
  %3140 = vmatpush1.bf16.xpose.msra.mxu0 0
  %3141 = vmatprep.subr.bf16.mxu0 0
  %3142 = vmatpush1.bf16.xpose.msra.mxu0 0
  %3143 = vmatprep.subr.bf16.mxu0 0
  %3144 = vmatpush1.bf16.xpose.msra.mxu0 0
  %3145 = vmatprep.subr.bf16.mxu0 0
  %3146 = vmatpush1.bf16.xpose.msra.mxu0 0
  %3147 = vmatprep.subr.bf16.mxu0 0
  %3148 = vmatpush1.bf16.xpose.msra.mxu0 0
  %3149 = vmatprep.subr.bf16.mxu0 0
  %3150 = vmatpush1.bf16.xpose.msra.mxu0 0
  %3151 = vmatprep.subr.bf16.mxu0 0
  %3152 = vmatpush1.bf16.xpose.msra.mxu0 0
  %3153 = vmatprep.mubr.bf16.mxu0 0
  %3154 = vmatmul.mubr.bf16.gmra.mrb[0].mxu0 %v830
  %v3155 = vpop.f32.mrb[0].mxu0
  %v3156 = vadd.f32 0.0, %v3155
  %v3157 = vpop.f32.mrb[0].mxu0
  %v3158 = vpop.f32.mrb[0].mxu0
  %v3159 = vadd.f32 0.0, %v3158
  %v3160 = vpop.f32.mrb[0].mxu0
  %3161 = vdwg.mxu0
  %3163 = vrot.lane.b32.xlu0 %v490, 96
  %v3164 = vpop.permute.xlu0 %3163
  %v3166 = vsel %vm162, %v3164, 0
  %3168 = vmatprep.subr.bf16.mxu0 0
  %3169 = vmatpush1.bf16.xpose.msra.mxu0 %v3166
  %3170 = vmatprep.subr.bf16.mxu0 0
  %3171 = vmatpush1.bf16.xpose.msra.mxu0 0
  %3172 = vmatprep.subr.bf16.mxu0 0
  %3173 = vmatpush1.bf16.xpose.msra.mxu0 0
  %3174 = vmatprep.subr.bf16.mxu0 0
  %3175 = vmatpush1.bf16.xpose.msra.mxu0 0
  %3176 = vmatprep.subr.bf16.mxu0 0
  %3177 = vmatpush1.bf16.xpose.msra.mxu0 0
  %3178 = vmatprep.subr.bf16.mxu0 0
  %3179 = vmatpush1.bf16.xpose.msra.mxu0 0
  %3180 = vmatprep.subr.bf16.mxu0 0
  %3181 = vmatpush1.bf16.xpose.msra.mxu0 0
  %3182 = vmatprep.subr.bf16.mxu0 0
  %3183 = vmatpush1.bf16.xpose.msra.mxu0 0
  %3184 = vmatprep.subr.bf16.mxu0 0
  %3185 = vmatpush1.bf16.xpose.msra.mxu0 0
  %3186 = vmatprep.subr.bf16.mxu0 0
  %3187 = vmatpush1.bf16.xpose.msra.mxu0 0
  %3188 = vmatprep.subr.bf16.mxu0 0
  %3189 = vmatpush1.bf16.xpose.msra.mxu0 0
  %3190 = vmatprep.subr.bf16.mxu0 0
  %3191 = vmatpush1.bf16.xpose.msra.mxu0 0
  %3192 = vmatprep.subr.bf16.mxu0 0
  %3193 = vmatpush1.bf16.xpose.msra.mxu0 0
  %3194 = vmatprep.subr.bf16.mxu0 0
  %3195 = vmatpush1.bf16.xpose.msra.mxu0 0
  %3196 = vmatprep.subr.bf16.mxu0 0
  %3197 = vmatpush1.bf16.xpose.msra.mxu0 0
  %3198 = vmatprep.subr.bf16.mxu0 0
  %3199 = vmatpush1.bf16.xpose.msra.mxu0 0
  %3200 = vmatprep.mubr.bf16.mxu0 0
  %3201 = vmatmul.mubr.bf16.gmra.mrb[0].mxu0 %v880
  %v3202 = vpop.f32.mrb[0].mxu0
  %v3203 = vadd.f32 0.0, %v3202
  %v3204 = vpop.f32.mrb[0].mxu0
  %v3205 = vpop.f32.mrb[0].mxu0
  %v3206 = vadd.f32 0.0, %v3205
  %v3207 = vpop.f32.mrb[0].mxu0
  %3208 = vdwg.mxu0
  %3210 = vrot.lane.b32.xlu0 %v491, 96
  %v3211 = vpop.permute.xlu0 %3210
  %v3213 = vsel %vm162, %v3211, 0
  %3215 = vmatprep.subr.bf16.mxu0 0
  %3216 = vmatpush1.bf16.xpose.msra.mxu0 %v3213
  %3217 = vmatprep.subr.bf16.mxu0 0
  %3218 = vmatpush1.bf16.xpose.msra.mxu0 0
  %3219 = vmatprep.subr.bf16.mxu0 0
  %3220 = vmatpush1.bf16.xpose.msra.mxu0 0
  %3221 = vmatprep.subr.bf16.mxu0 0
  %3222 = vmatpush1.bf16.xpose.msra.mxu0 0
  %3223 = vmatprep.subr.bf16.mxu0 0
  %3224 = vmatpush1.bf16.xpose.msra.mxu0 0
  %3225 = vmatprep.subr.bf16.mxu0 0
  %3226 = vmatpush1.bf16.xpose.msra.mxu0 0
  %3227 = vmatprep.subr.bf16.mxu0 0
  %3228 = vmatpush1.bf16.xpose.msra.mxu0 0
  %3229 = vmatprep.subr.bf16.mxu0 0
  %3230 = vmatpush1.bf16.xpose.msra.mxu0 0
  %3231 = vmatprep.subr.bf16.mxu0 0
  %3232 = vmatpush1.bf16.xpose.msra.mxu0 0
  %3233 = vmatprep.subr.bf16.mxu0 0
  %3234 = vmatpush1.bf16.xpose.msra.mxu0 0
  %3235 = vmatprep.subr.bf16.mxu0 0
  %3236 = vmatpush1.bf16.xpose.msra.mxu0 0
  %3237 = vmatprep.subr.bf16.mxu0 0
  %3238 = vmatpush1.bf16.xpose.msra.mxu0 0
  %3239 = vmatprep.subr.bf16.mxu0 0
  %3240 = vmatpush1.bf16.xpose.msra.mxu0 0
  %3241 = vmatprep.subr.bf16.mxu0 0
  %3242 = vmatpush1.bf16.xpose.msra.mxu0 0
  %3243 = vmatprep.subr.bf16.mxu0 0
  %3244 = vmatpush1.bf16.xpose.msra.mxu0 0
  %3245 = vmatprep.subr.bf16.mxu0 0
  %3246 = vmatpush1.bf16.xpose.msra.mxu0 0
  %3247 = vmatprep.mubr.bf16.mxu0 0
  %3248 = vmatmul.mubr.bf16.gmra.mrb[0].mxu0 %v930
  %v3249 = vpop.f32.mrb[0].mxu0
  %v3250 = vadd.f32 0.0, %v3249
  %v3251 = vpop.f32.mrb[0].mxu0
  %v3252 = vpop.f32.mrb[0].mxu0
  %v3253 = vadd.f32 0.0, %v3252
  %v3254 = vpop.f32.mrb[0].mxu0
  %3255 = vdwg.mxu0
  %3257 = vrot.lane.b32.xlu0 %v492, 96
  %v3258 = vpop.permute.xlu0 %3257
  %v3260 = vsel %vm162, %v3258, 0
  %3262 = vmatprep.subr.bf16.mxu0 0
  %3263 = vmatpush1.bf16.xpose.msra.mxu0 %v3260
  %3264 = vmatprep.subr.bf16.mxu0 0
  %3265 = vmatpush1.bf16.xpose.msra.mxu0 0
  %3266 = vmatprep.subr.bf16.mxu0 0
  %3267 = vmatpush1.bf16.xpose.msra.mxu0 0
  %3268 = vmatprep.subr.bf16.mxu0 0
  %3269 = vmatpush1.bf16.xpose.msra.mxu0 0
  %3270 = vmatprep.subr.bf16.mxu0 0
  %3271 = vmatpush1.bf16.xpose.msra.mxu0 0
  %3272 = vmatprep.subr.bf16.mxu0 0
  %3273 = vmatpush1.bf16.xpose.msra.mxu0 0
  %3274 = vmatprep.subr.bf16.mxu0 0
  %3275 = vmatpush1.bf16.xpose.msra.mxu0 0
  %3276 = vmatprep.subr.bf16.mxu0 0
  %3277 = vmatpush1.bf16.xpose.msra.mxu0 0
  %3278 = vmatprep.subr.bf16.mxu0 0
  %3279 = vmatpush1.bf16.xpose.msra.mxu0 0
  %3280 = vmatprep.subr.bf16.mxu0 0
  %3281 = vmatpush1.bf16.xpose.msra.mxu0 0
  %3282 = vmatprep.subr.bf16.mxu0 0
  %3283 = vmatpush1.bf16.xpose.msra.mxu0 0
  %3284 = vmatprep.subr.bf16.mxu0 0
  %3285 = vmatpush1.bf16.xpose.msra.mxu0 0
  %3286 = vmatprep.subr.bf16.mxu0 0
  %3287 = vmatpush1.bf16.xpose.msra.mxu0 0
  %3288 = vmatprep.subr.bf16.mxu0 0
  %3289 = vmatpush1.bf16.xpose.msra.mxu0 0
  %3290 = vmatprep.subr.bf16.mxu0 0
  %3291 = vmatpush1.bf16.xpose.msra.mxu0 0
  %3292 = vmatprep.subr.bf16.mxu0 0
  %3293 = vmatpush1.bf16.xpose.msra.mxu0 0
  %3294 = vmatprep.mubr.bf16.mxu0 0
  %3295 = vmatmul.mubr.bf16.gmra.mrb[0].mxu0 %v980
  %v3296 = vpop.f32.mrb[0].mxu0
  %v3297 = vadd.f32 0.0, %v3296
  %v3298 = vpop.f32.mrb[0].mxu0
  %v3299 = vpop.f32.mrb[0].mxu0
  %v3300 = vadd.f32 0.0, %v3299
  %v3301 = vpop.f32.mrb[0].mxu0
  %3302 = vdwg.mxu0
  %3304 = vrot.lane.b32.xlu0 %v493, 96
  %v3305 = vpop.permute.xlu0 %3304
  %v3307 = vsel %vm162, %v3305, 0
  %3309 = vmatprep.subr.bf16.mxu0 0
  %3310 = vmatpush1.bf16.xpose.msra.mxu0 %v3307
  %3311 = vmatprep.subr.bf16.mxu0 0
  %3312 = vmatpush1.bf16.xpose.msra.mxu0 0
  %3313 = vmatprep.subr.bf16.mxu0 0
  %3314 = vmatpush1.bf16.xpose.msra.mxu0 0
  %3315 = vmatprep.subr.bf16.mxu0 0
  %3316 = vmatpush1.bf16.xpose.msra.mxu0 0
  %3317 = vmatprep.subr.bf16.mxu0 0
  %3318 = vmatpush1.bf16.xpose.msra.mxu0 0
  %3319 = vmatprep.subr.bf16.mxu0 0
  %3320 = vmatpush1.bf16.xpose.msra.mxu0 0
  %3321 = vmatprep.subr.bf16.mxu0 0
  %3322 = vmatpush1.bf16.xpose.msra.mxu0 0
  %3323 = vmatprep.subr.bf16.mxu0 0
  %3324 = vmatpush1.bf16.xpose.msra.mxu0 0
  %3325 = vmatprep.subr.bf16.mxu0 0
  %3326 = vmatpush1.bf16.xpose.msra.mxu0 0
  %3327 = vmatprep.subr.bf16.mxu0 0
  %3328 = vmatpush1.bf16.xpose.msra.mxu0 0
  %3329 = vmatprep.subr.bf16.mxu0 0
  %3330 = vmatpush1.bf16.xpose.msra.mxu0 0
  %3331 = vmatprep.subr.bf16.mxu0 0
  %3332 = vmatpush1.bf16.xpose.msra.mxu0 0
  %3333 = vmatprep.subr.bf16.mxu0 0
  %3334 = vmatpush1.bf16.xpose.msra.mxu0 0
  %3335 = vmatprep.subr.bf16.mxu0 0
  %3336 = vmatpush1.bf16.xpose.msra.mxu0 0
  %3337 = vmatprep.subr.bf16.mxu0 0
  %3338 = vmatpush1.bf16.xpose.msra.mxu0 0
  %3339 = vmatprep.subr.bf16.mxu0 0
  %3340 = vmatpush1.bf16.xpose.msra.mxu0 0
  %3341 = vmatprep.mubr.bf16.mxu0 0
  %3342 = vmatmul.mubr.bf16.gmra.mrb[0].mxu0 %v1030
  %v3343 = vpop.f32.mrb[0].mxu0
  %v3344 = vadd.f32 0.0, %v3343
  %v3345 = vpop.f32.mrb[0].mxu0
  %v3346 = vpop.f32.mrb[0].mxu0
  %v3347 = vadd.f32 0.0, %v3346
  %v3348 = vpop.f32.mrb[0].mxu0
  %3349 = vdwg.mxu0
  %3351 = vrot.lane.b32.xlu0 %v494, 96
  %v3352 = vpop.permute.xlu0 %3351
  %v3354 = vsel %vm162, %v3352, 0
  %3356 = vmatprep.subr.bf16.mxu0 0
  %3357 = vmatpush1.bf16.xpose.msra.mxu0 %v3354
  %3358 = vmatprep.subr.bf16.mxu0 0
  %3359 = vmatpush1.bf16.xpose.msra.mxu0 0
  %3360 = vmatprep.subr.bf16.mxu0 0
  %3361 = vmatpush1.bf16.xpose.msra.mxu0 0
  %3362 = vmatprep.subr.bf16.mxu0 0
  %3363 = vmatpush1.bf16.xpose.msra.mxu0 0
  %3364 = vmatprep.subr.bf16.mxu0 0
  %3365 = vmatpush1.bf16.xpose.msra.mxu0 0
  %3366 = vmatprep.subr.bf16.mxu0 0
  %3367 = vmatpush1.bf16.xpose.msra.mxu0 0
  %3368 = vmatprep.subr.bf16.mxu0 0
  %3369 = vmatpush1.bf16.xpose.msra.mxu0 0
  %3370 = vmatprep.subr.bf16.mxu0 0
  %3371 = vmatpush1.bf16.xpose.msra.mxu0 0
  %3372 = vmatprep.subr.bf16.mxu0 0
  %3373 = vmatpush1.bf16.xpose.msra.mxu0 0
  %3374 = vmatprep.subr.bf16.mxu0 0
  %3375 = vmatpush1.bf16.xpose.msra.mxu0 0
  %3376 = vmatprep.subr.bf16.mxu0 0
  %3377 = vmatpush1.bf16.xpose.msra.mxu0 0
  %3378 = vmatprep.subr.bf16.mxu0 0
  %3379 = vmatpush1.bf16.xpose.msra.mxu0 0
  %3380 = vmatprep.subr.bf16.mxu0 0
  %3381 = vmatpush1.bf16.xpose.msra.mxu0 0
  %3382 = vmatprep.subr.bf16.mxu0 0
  %3383 = vmatpush1.bf16.xpose.msra.mxu0 0
  %3384 = vmatprep.subr.bf16.mxu0 0
  %3385 = vmatpush1.bf16.xpose.msra.mxu0 0
  %3386 = vmatprep.subr.bf16.mxu0 0
  %3387 = vmatpush1.bf16.xpose.msra.mxu0 0
  %3388 = vmatprep.mubr.bf16.mxu0 0
  %3389 = vmatmul.mubr.bf16.gmra.mrb[0].mxu0 %v1080
  %v3390 = vpop.f32.mrb[0].mxu0
  %v3391 = vadd.f32 0.0, %v3390
  %v3392 = vpop.f32.mrb[0].mxu0
  %v3393 = vpop.f32.mrb[0].mxu0
  %v3394 = vadd.f32 0.0, %v3393
  %v3395 = vpop.f32.mrb[0].mxu0
  %3396 = vdwg.mxu0
  %3398 = vrot.lane.b32.xlu0 %v495, 96
  %v3399 = vpop.permute.xlu0 %3398
  %v3401 = vsel %vm162, %v3399, 0
  %3403 = vmatprep.subr.bf16.mxu0 0
  %3404 = vmatpush1.bf16.xpose.msra.mxu0 %v3401
  %3405 = vmatprep.subr.bf16.mxu0 0
  %3406 = vmatpush1.bf16.xpose.msra.mxu0 0
  %3407 = vmatprep.subr.bf16.mxu0 0
  %3408 = vmatpush1.bf16.xpose.msra.mxu0 0
  %3409 = vmatprep.subr.bf16.mxu0 0
  %3410 = vmatpush1.bf16.xpose.msra.mxu0 0
  %3411 = vmatprep.subr.bf16.mxu0 0
  %3412 = vmatpush1.bf16.xpose.msra.mxu0 0
  %3413 = vmatprep.subr.bf16.mxu0 0
  %3414 = vmatpush1.bf16.xpose.msra.mxu0 0
  %3415 = vmatprep.subr.bf16.mxu0 0
  %3416 = vmatpush1.bf16.xpose.msra.mxu0 0
  %3417 = vmatprep.subr.bf16.mxu0 0
  %3418 = vmatpush1.bf16.xpose.msra.mxu0 0
  %3419 = vmatprep.subr.bf16.mxu0 0
  %3420 = vmatpush1.bf16.xpose.msra.mxu0 0
  %3421 = vmatprep.subr.bf16.mxu0 0
  %3422 = vmatpush1.bf16.xpose.msra.mxu0 0
  %3423 = vmatprep.subr.bf16.mxu0 0
  %3424 = vmatpush1.bf16.xpose.msra.mxu0 0
  %3425 = vmatprep.subr.bf16.mxu0 0
  %3426 = vmatpush1.bf16.xpose.msra.mxu0 0
  %3427 = vmatprep.subr.bf16.mxu0 0
  %3428 = vmatpush1.bf16.xpose.msra.mxu0 0
  %3429 = vmatprep.subr.bf16.mxu0 0
  %3430 = vmatpush1.bf16.xpose.msra.mxu0 0
  %3431 = vmatprep.subr.bf16.mxu0 0
  %3432 = vmatpush1.bf16.xpose.msra.mxu0 0
  %3433 = vmatprep.subr.bf16.mxu0 0
  %3434 = vmatpush1.bf16.xpose.msra.mxu0 0
  %3435 = vmatprep.mubr.bf16.mxu0 0
  %3436 = vmatmul.mubr.bf16.gmra.mrb[0].mxu0 %v1130
  %v3437 = vpop.f32.mrb[0].mxu0
  %v3438 = vadd.f32 0.0, %v3437
  %v3439 = vpop.f32.mrb[0].mxu0
  %v3440 = vpop.f32.mrb[0].mxu0
  %v3441 = vadd.f32 0.0, %v3440
  %v3442 = vpop.f32.mrb[0].mxu0
  %3443 = vdwg.mxu0
  %3445 = vrot.lane.b32.xlu0 %v496, 96
  %v3446 = vpop.permute.xlu0 %3445
  %v3448 = vsel %vm162, %v3446, 0
  %3450 = vmatprep.subr.bf16.mxu0 0
  %3451 = vmatpush1.bf16.xpose.msra.mxu0 %v3448
  %3452 = vmatprep.subr.bf16.mxu0 0
  %3453 = vmatpush1.bf16.xpose.msra.mxu0 0
  %3454 = vmatprep.subr.bf16.mxu0 0
  %3455 = vmatpush1.bf16.xpose.msra.mxu0 0
  %3456 = vmatprep.subr.bf16.mxu0 0
  %3457 = vmatpush1.bf16.xpose.msra.mxu0 0
  %3458 = vmatprep.subr.bf16.mxu0 0
  %3459 = vmatpush1.bf16.xpose.msra.mxu0 0
  %3460 = vmatprep.subr.bf16.mxu0 0
  %3461 = vmatpush1.bf16.xpose.msra.mxu0 0
  %3462 = vmatprep.subr.bf16.mxu0 0
  %3463 = vmatpush1.bf16.xpose.msra.mxu0 0
  %3464 = vmatprep.subr.bf16.mxu0 0
  %3465 = vmatpush1.bf16.xpose.msra.mxu0 0
  %3466 = vmatprep.subr.bf16.mxu0 0
  %3467 = vmatpush1.bf16.xpose.msra.mxu0 0
  %3468 = vmatprep.subr.bf16.mxu0 0
  %3469 = vmatpush1.bf16.xpose.msra.mxu0 0
  %3470 = vmatprep.subr.bf16.mxu0 0
  %3471 = vmatpush1.bf16.xpose.msra.mxu0 0
  %3472 = vmatprep.subr.bf16.mxu0 0
  %3473 = vmatpush1.bf16.xpose.msra.mxu0 0
  %3474 = vmatprep.subr.bf16.mxu0 0
  %3475 = vmatpush1.bf16.xpose.msra.mxu0 0
  %3476 = vmatprep.subr.bf16.mxu0 0
  %3477 = vmatpush1.bf16.xpose.msra.mxu0 0
  %3478 = vmatprep.subr.bf16.mxu0 0
  %3479 = vmatpush1.bf16.xpose.msra.mxu0 0
  %3480 = vmatprep.subr.bf16.mxu0 0
  %3481 = vmatpush1.bf16.xpose.msra.mxu0 0
  %3482 = vmatprep.mubr.bf16.mxu0 0
  %3483 = vmatmul.mubr.bf16.gmra.mrb[0].mxu0 %v1180
  %v3484 = vpop.f32.mrb[0].mxu0
  %v3485 = vadd.f32 0.0, %v3484
  %v3486 = vpop.f32.mrb[0].mxu0
  %v3487 = vpop.f32.mrb[0].mxu0
  %v3488 = vadd.f32 0.0, %v3487
  %v3489 = vpop.f32.mrb[0].mxu0
  %3490 = vdwg.mxu0
  %3492 = vrot.lane.b32.xlu0 %v497, 96
  %v3493 = vpop.permute.xlu0 %3492
  %v3495 = vsel %vm162, %v3493, 0
  %3497 = vmatprep.subr.bf16.mxu0 0
  %3498 = vmatpush1.bf16.xpose.msra.mxu0 %v3495
  %3499 = vmatprep.subr.bf16.mxu0 0
  %3500 = vmatpush1.bf16.xpose.msra.mxu0 0
  %3501 = vmatprep.subr.bf16.mxu0 0
  %3502 = vmatpush1.bf16.xpose.msra.mxu0 0
  %3503 = vmatprep.subr.bf16.mxu0 0
  %3504 = vmatpush1.bf16.xpose.msra.mxu0 0
  %3505 = vmatprep.subr.bf16.mxu0 0
  %3506 = vmatpush1.bf16.xpose.msra.mxu0 0
  %3507 = vmatprep.subr.bf16.mxu0 0
  %3508 = vmatpush1.bf16.xpose.msra.mxu0 0
  %3509 = vmatprep.subr.bf16.mxu0 0
  %3510 = vmatpush1.bf16.xpose.msra.mxu0 0
  %3511 = vmatprep.subr.bf16.mxu0 0
  %3512 = vmatpush1.bf16.xpose.msra.mxu0 0
  %3513 = vmatprep.subr.bf16.mxu0 0
  %3514 = vmatpush1.bf16.xpose.msra.mxu0 0
  %3515 = vmatprep.subr.bf16.mxu0 0
  %3516 = vmatpush1.bf16.xpose.msra.mxu0 0
  %3517 = vmatprep.subr.bf16.mxu0 0
  %3518 = vmatpush1.bf16.xpose.msra.mxu0 0
  %3519 = vmatprep.subr.bf16.mxu0 0
  %3520 = vmatpush1.bf16.xpose.msra.mxu0 0
  %3521 = vmatprep.subr.bf16.mxu0 0
  %3522 = vmatpush1.bf16.xpose.msra.mxu0 0
  %3523 = vmatprep.subr.bf16.mxu0 0
  %3524 = vmatpush1.bf16.xpose.msra.mxu0 0
  %3525 = vmatprep.subr.bf16.mxu0 0
  %3526 = vmatpush1.bf16.xpose.msra.mxu0 0
  %3527 = vmatprep.subr.bf16.mxu0 0
  %3528 = vmatpush1.bf16.xpose.msra.mxu0 0
  %3529 = vmatprep.mubr.bf16.mxu0 0
  %3530 = vmatmul.mubr.bf16.gmra.mrb[0].mxu0 %v1230
  %v3531 = vpop.f32.mrb[0].mxu0
  %v3532 = vadd.f32 0.0, %v3531
  %v3533 = vpop.f32.mrb[0].mxu0
  %v3534 = vpop.f32.mrb[0].mxu0
  %v3535 = vadd.f32 0.0, %v3534
  %v3536 = vpop.f32.mrb[0].mxu0
  %3537 = vdwg.mxu0
  %3539 = vrot.lane.b32.xlu0 %v498, 96
  %v3540 = vpop.permute.xlu0 %3539
  %v3542 = vsel %vm162, %v3540, 0
  %3544 = vmatprep.subr.bf16.mxu0 0
  %3545 = vmatpush1.bf16.xpose.msra.mxu0 %v3542
  %3546 = vmatprep.subr.bf16.mxu0 0
  %3547 = vmatpush1.bf16.xpose.msra.mxu0 0
  %3548 = vmatprep.subr.bf16.mxu0 0
  %3549 = vmatpush1.bf16.xpose.msra.mxu0 0
  %3550 = vmatprep.subr.bf16.mxu0 0
  %3551 = vmatpush1.bf16.xpose.msra.mxu0 0
  %3552 = vmatprep.subr.bf16.mxu0 0
  %3553 = vmatpush1.bf16.xpose.msra.mxu0 0
  %3554 = vmatprep.subr.bf16.mxu0 0
  %3555 = vmatpush1.bf16.xpose.msra.mxu0 0
  %3556 = vmatprep.subr.bf16.mxu0 0
  %3557 = vmatpush1.bf16.xpose.msra.mxu0 0
  %3558 = vmatprep.subr.bf16.mxu0 0
  %3559 = vmatpush1.bf16.xpose.msra.mxu0 0
  %3560 = vmatprep.subr.bf16.mxu0 0
  %3561 = vmatpush1.bf16.xpose.msra.mxu0 0
  %3562 = vmatprep.subr.bf16.mxu0 0
  %3563 = vmatpush1.bf16.xpose.msra.mxu0 0
  %3564 = vmatprep.subr.bf16.mxu0 0
  %3565 = vmatpush1.bf16.xpose.msra.mxu0 0
  %3566 = vmatprep.subr.bf16.mxu0 0
  %3567 = vmatpush1.bf16.xpose.msra.mxu0 0
  %3568 = vmatprep.subr.bf16.mxu0 0
  %3569 = vmatpush1.bf16.xpose.msra.mxu0 0
  %3570 = vmatprep.subr.bf16.mxu0 0
  %3571 = vmatpush1.bf16.xpose.msra.mxu0 0
  %3572 = vmatprep.subr.bf16.mxu0 0
  %3573 = vmatpush1.bf16.xpose.msra.mxu0 0
  %3574 = vmatprep.subr.bf16.mxu0 0
  %3575 = vmatpush1.bf16.xpose.msra.mxu0 0
  %3576 = vmatprep.mubr.bf16.mxu0 0
  %3577 = vmatmul.mubr.bf16.gmra.mrb[0].mxu0 %v1280
  %v3578 = vpop.f32.mrb[0].mxu0
  %v3579 = vadd.f32 0.0, %v3578
  %v3580 = vpop.f32.mrb[0].mxu0
  %v3581 = vpop.f32.mrb[0].mxu0
  %v3582 = vadd.f32 0.0, %v3581
  %v3583 = vpop.f32.mrb[0].mxu0
  %3584 = vdwg.mxu0
  %3586 = vrot.lane.b32.xlu0 %v499, 96
  %v3587 = vpop.permute.xlu0 %3586
  %v3589 = vsel %vm162, %v3587, 0
  %3591 = vmatprep.subr.bf16.mxu0 0
  %3592 = vmatpush1.bf16.xpose.msra.mxu0 %v3589
  %3593 = vmatprep.subr.bf16.mxu0 0
  %3594 = vmatpush1.bf16.xpose.msra.mxu0 0
  %3595 = vmatprep.subr.bf16.mxu0 0
  %3596 = vmatpush1.bf16.xpose.msra.mxu0 0
  %3597 = vmatprep.subr.bf16.mxu0 0
  %3598 = vmatpush1.bf16.xpose.msra.mxu0 0
  %3599 = vmatprep.subr.bf16.mxu0 0
  %3600 = vmatpush1.bf16.xpose.msra.mxu0 0
  %3601 = vmatprep.subr.bf16.mxu0 0
  %3602 = vmatpush1.bf16.xpose.msra.mxu0 0
  %3603 = vmatprep.subr.bf16.mxu0 0
  %3604 = vmatpush1.bf16.xpose.msra.mxu0 0
  %3605 = vmatprep.subr.bf16.mxu0 0
  %3606 = vmatpush1.bf16.xpose.msra.mxu0 0
  %3607 = vmatprep.subr.bf16.mxu0 0
  %3608 = vmatpush1.bf16.xpose.msra.mxu0 0
  %3609 = vmatprep.subr.bf16.mxu0 0
  %3610 = vmatpush1.bf16.xpose.msra.mxu0 0
  %3611 = vmatprep.subr.bf16.mxu0 0
  %3612 = vmatpush1.bf16.xpose.msra.mxu0 0
  %3613 = vmatprep.subr.bf16.mxu0 0
  %3614 = vmatpush1.bf16.xpose.msra.mxu0 0
  %3615 = vmatprep.subr.bf16.mxu0 0
  %3616 = vmatpush1.bf16.xpose.msra.mxu0 0
  %3617 = vmatprep.subr.bf16.mxu0 0
  %3618 = vmatpush1.bf16.xpose.msra.mxu0 0
  %3619 = vmatprep.subr.bf16.mxu0 0
  %3620 = vmatpush1.bf16.xpose.msra.mxu0 0
  %3621 = vmatprep.subr.bf16.mxu0 0
  %3622 = vmatpush1.bf16.xpose.msra.mxu0 0
  %3623 = vmatprep.mubr.bf16.mxu0 0
  %3624 = vmatmul.mubr.bf16.gmra.mrb[0].mxu0 %v1330
  %v3625 = vpop.f32.mrb[0].mxu0
  %v3626 = vadd.f32 0.0, %v3625
  %v3627 = vpop.f32.mrb[0].mxu0
  %v3628 = vpop.f32.mrb[0].mxu0
  %v3629 = vadd.f32 0.0, %v3628
  %v3630 = vpop.f32.mrb[0].mxu0
  %3631 = vdwg.mxu0
  %v3632 = vmul.f32 %v620, 0.35355338
  %v3633 = vmul.f32 %v623, 0.35355338
  %v3634 = vmul.f32 %v670, 0.35355338
  %v3635 = vmul.f32 %v673, 0.35355338
  %v3636 = vmul.f32 %v720, 0.35355338
  %v3637 = vmul.f32 %v723, 0.35355338
  %v3638 = vmul.f32 %v770, 0.35355338
  %v3639 = vmul.f32 %v773, 0.35355338
  %v3640 = vmul.f32 %v820, 0.35355338
  %v3641 = vmul.f32 %v823, 0.35355338
  %v3642 = vmul.f32 %v870, 0.35355338
  %v3643 = vmul.f32 %v873, 0.35355338
  %v3644 = vmul.f32 %v920, 0.35355338
  %v3645 = vmul.f32 %v923, 0.35355338
  %v3646 = vmul.f32 %v970, 0.35355338
  %v3647 = vmul.f32 %v973, 0.35355338
  %v3648 = vmul.f32 %v1020, 0.35355338
  %v3649 = vmul.f32 %v1023, 0.35355338
  %v3650 = vmul.f32 %v1070, 0.35355338
  %v3651 = vmul.f32 %v1073, 0.35355338
  %v3652 = vmul.f32 %v1120, 0.35355338
  %v3653 = vmul.f32 %v1123, 0.35355338
  %v3654 = vmul.f32 %v1170, 0.35355338
  %v3655 = vmul.f32 %v1173, 0.35355338
  %v3656 = vmul.f32 %v1220, 0.35355338
  %v3657 = vmul.f32 %v1223, 0.35355338
  %v3658 = vmul.f32 %v1270, 0.35355338
  %v3659 = vmul.f32 %v1273, 0.35355338
  %v3660 = vmul.f32 %v1320, 0.35355338
  %v3661 = vmul.f32 %v1323, 0.35355338
  %v3662 = vmul.f32 %v1370, 0.35355338
  %v3663 = vmul.f32 %v1373, 0.35355338
  %v3664 = vmul.f32 %v1417, 0.35355338
  %v3665 = vmul.f32 %v1420, 0.35355338
  %v3666 = vmul.f32 %v1464, 0.35355338
  %v3667 = vmul.f32 %v1467, 0.35355338
  %v3668 = vmul.f32 %v1511, 0.35355338
  %v3669 = vmul.f32 %v1514, 0.35355338
  %v3670 = vmul.f32 %v1558, 0.35355338
  %v3671 = vmul.f32 %v1561, 0.35355338
  %v3672 = vmul.f32 %v1605, 0.35355338
  %v3673 = vmul.f32 %v1608, 0.35355338
  %v3674 = vmul.f32 %v1652, 0.35355338
  %v3675 = vmul.f32 %v1655, 0.35355338
  %v3676 = vmul.f32 %v1699, 0.35355338
  %v3677 = vmul.f32 %v1702, 0.35355338
  %v3678 = vmul.f32 %v1746, 0.35355338
  %v3679 = vmul.f32 %v1749, 0.35355338
  %v3680 = vmul.f32 %v1793, 0.35355338
  %v3681 = vmul.f32 %v1796, 0.35355338
  %v3682 = vmul.f32 %v1840, 0.35355338
  %v3683 = vmul.f32 %v1843, 0.35355338
  %v3684 = vmul.f32 %v1887, 0.35355338
  %v3685 = vmul.f32 %v1890, 0.35355338
  %v3686 = vmul.f32 %v1934, 0.35355338
  %v3687 = vmul.f32 %v1937, 0.35355338
  %v3688 = vmul.f32 %v1981, 0.35355338
  %v3689 = vmul.f32 %v1984, 0.35355338
  %v3690 = vmul.f32 %v2028, 0.35355338
  %v3691 = vmul.f32 %v2031, 0.35355338
  %v3692 = vmul.f32 %v2075, 0.35355338
  %v3693 = vmul.f32 %v2078, 0.35355338
  %v3694 = vmul.f32 %v2122, 0.35355338
  %v3695 = vmul.f32 %v2125, 0.35355338
  %v3696 = vmul.f32 %v2169, 0.35355338
  %v3697 = vmul.f32 %v2172, 0.35355338
  %v3698 = vmul.f32 %v2216, 0.35355338
  %v3699 = vmul.f32 %v2219, 0.35355338
  %v3700 = vmul.f32 %v2263, 0.35355338
  %v3701 = vmul.f32 %v2266, 0.35355338
  %v3702 = vmul.f32 %v2310, 0.35355338
  %v3703 = vmul.f32 %v2313, 0.35355338
  %v3704 = vmul.f32 %v2357, 0.35355338
  %v3705 = vmul.f32 %v2360, 0.35355338
  %v3706 = vmul.f32 %v2404, 0.35355338
  %v3707 = vmul.f32 %v2407, 0.35355338
  %v3708 = vmul.f32 %v2451, 0.35355338
  %v3709 = vmul.f32 %v2454, 0.35355338
  %v3710 = vmul.f32 %v2498, 0.35355338
  %v3711 = vmul.f32 %v2501, 0.35355338
  %v3712 = vmul.f32 %v2545, 0.35355338
  %v3713 = vmul.f32 %v2548, 0.35355338
  %v3714 = vmul.f32 %v2592, 0.35355338
  %v3715 = vmul.f32 %v2595, 0.35355338
  %v3716 = vmul.f32 %v2639, 0.35355338
  %v3717 = vmul.f32 %v2642, 0.35355338
  %v3718 = vmul.f32 %v2686, 0.35355338
  %v3719 = vmul.f32 %v2689, 0.35355338
  %v3720 = vmul.f32 %v2733, 0.35355338
  %v3721 = vmul.f32 %v2736, 0.35355338
  %v3722 = vmul.f32 %v2780, 0.35355338
  %v3723 = vmul.f32 %v2783, 0.35355338
  %v3724 = vmul.f32 %v2827, 0.35355338
  %v3725 = vmul.f32 %v2830, 0.35355338
  %v3726 = vmul.f32 %v2874, 0.35355338
  %v3727 = vmul.f32 %v2877, 0.35355338
  %v3728 = vmul.f32 %v2921, 0.35355338
  %v3729 = vmul.f32 %v2924, 0.35355338
  %v3730 = vmul.f32 %v2968, 0.35355338
  %v3731 = vmul.f32 %v2971, 0.35355338
  %v3732 = vmul.f32 %v3015, 0.35355338
  %v3733 = vmul.f32 %v3018, 0.35355338
  %v3734 = vmul.f32 %v3062, 0.35355338
  %v3735 = vmul.f32 %v3065, 0.35355338
  %v3736 = vmul.f32 %v3109, 0.35355338
  %v3737 = vmul.f32 %v3112, 0.35355338
  %v3738 = vmul.f32 %v3156, 0.35355338
  %v3739 = vmul.f32 %v3159, 0.35355338
  %v3740 = vmul.f32 %v3203, 0.35355338
  %v3741 = vmul.f32 %v3206, 0.35355338
  %v3742 = vmul.f32 %v3250, 0.35355338
  %v3743 = vmul.f32 %v3253, 0.35355338
  %v3744 = vmul.f32 %v3297, 0.35355338
  %v3745 = vmul.f32 %v3300, 0.35355338
  %v3746 = vmul.f32 %v3344, 0.35355338
  %v3747 = vmul.f32 %v3347, 0.35355338
  %v3748 = vmul.f32 %v3391, 0.35355338
  %v3749 = vmul.f32 %v3394, 0.35355338
  %v3750 = vmul.f32 %v3438, 0.35355338
  %v3751 = vmul.f32 %v3441, 0.35355338
  %v3752 = vmul.f32 %v3485, 0.35355338
  %v3753 = vmul.f32 %v3488, 0.35355338
  %v3754 = vmul.f32 %v3532, 0.35355338
  %v3755 = vmul.f32 %v3535, 0.35355338
  %v3756 = vmul.f32 %v3579, 0.35355338
  %v3757 = vmul.f32 %v3582, 0.35355338
  %v3758 = vmul.f32 %v3626, 0.35355338
  %v3759 = vmul.f32 %v3629, 0.35355338
  %v3760 = vld [vmem:[%s3] sm:$0xff]
  %v3761 = vld [vmem:[%s3 + $0x8] sm:$0xff]
  %v3762 = vld [vmem:[%s3 + $0x10] sm:$0xff]
  %v3763 = vld [vmem:[%s3 + $0x18] sm:$0xff]
  %v3764 = vld [vmem:[%s3 + $0x20] sm:$0xff]
  %v3765 = vld [vmem:[%s3 + $0x28] sm:$0xff]
  %v3766 = vld [vmem:[%s3 + $0x30] sm:$0xff]
  %v3767 = vld [vmem:[%s3 + $0x38] sm:$0xff]
  %v3768 = vadd.f32 %v3632, %v3760
  %v3769 = vadd.f32 %v3633, %v3761
  %v3770 = vadd.f32 %v3634, %v3760
  %v3771 = vadd.f32 %v3635, %v3761
  %v3772 = vadd.f32 %v3636, %v3760
  %v3773 = vadd.f32 %v3637, %v3761
  %v3774 = vadd.f32 %v3638, %v3760
  %v3775 = vadd.f32 %v3639, %v3761
  %v3776 = vadd.f32 %v3640, %v3760
  %v3777 = vadd.f32 %v3641, %v3761
  %v3778 = vadd.f32 %v3642, %v3760
  %v3779 = vadd.f32 %v3643, %v3761
  %v3780 = vadd.f32 %v3644, %v3760
  %v3781 = vadd.f32 %v3645, %v3761
  %v3782 = vadd.f32 %v3646, %v3760
  %v3783 = vadd.f32 %v3647, %v3761
  %v3784 = vadd.f32 %v3648, %v3760
  %v3785 = vadd.f32 %v3649, %v3761
  %v3786 = vadd.f32 %v3650, %v3760
  %v3787 = vadd.f32 %v3651, %v3761
  %v3788 = vadd.f32 %v3652, %v3760
  %v3789 = vadd.f32 %v3653, %v3761
  %v3790 = vadd.f32 %v3654, %v3760
  %v3791 = vadd.f32 %v3655, %v3761
  %v3792 = vadd.f32 %v3656, %v3760
  %v3793 = vadd.f32 %v3657, %v3761
  %v3794 = vadd.f32 %v3658, %v3760
  %v3795 = vadd.f32 %v3659, %v3761
  %v3796 = vadd.f32 %v3660, %v3760
  %v3797 = vadd.f32 %v3661, %v3761
  %v3798 = vadd.f32 %v3662, %v3760
  %v3799 = vadd.f32 %v3663, %v3761
  %v3800 = vadd.f32 %v3664, %v3762
  %v3801 = vadd.f32 %v3665, %v3763
  %v3802 = vadd.f32 %v3666, %v3762
  %v3803 = vadd.f32 %v3667, %v3763
  %v3804 = vadd.f32 %v3668, %v3762
  %v3805 = vadd.f32 %v3669, %v3763
  %v3806 = vadd.f32 %v3670, %v3762
  %v3807 = vadd.f32 %v3671, %v3763
  %v3808 = vadd.f32 %v3672, %v3762
  %v3809 = vadd.f32 %v3673, %v3763
  %v3810 = vadd.f32 %v3674, %v3762
  %v3811 = vadd.f32 %v3675, %v3763
  %v3812 = vadd.f32 %v3676, %v3762
  %v3813 = vadd.f32 %v3677, %v3763
  %v3814 = vadd.f32 %v3678, %v3762
  %v3815 = vadd.f32 %v3679, %v3763
  %v3816 = vadd.f32 %v3680, %v3762
  %v3817 = vadd.f32 %v3681, %v3763
  %v3818 = vadd.f32 %v3682, %v3762
  %v3819 = vadd.f32 %v3683, %v3763
  %v3820 = vadd.f32 %v3684, %v3762
  %v3821 = vadd.f32 %v3685, %v3763
  %v3822 = vadd.f32 %v3686, %v3762
  %v3823 = vadd.f32 %v3687, %v3763
  %v3824 = vadd.f32 %v3688, %v3762
  %v3825 = vadd.f32 %v3689, %v3763
  %v3826 = vadd.f32 %v3690, %v3762
  %v3827 = vadd.f32 %v3691, %v3763
  %v3828 = vadd.f32 %v3692, %v3762
  %v3829 = vadd.f32 %v3693, %v3763
  %v3830 = vadd.f32 %v3694, %v3762
  %v3831 = vadd.f32 %v3695, %v3763
  %v3832 = vadd.f32 %v3696, %v3764
  %v3833 = vadd.f32 %v3697, %v3765
  %v3834 = vadd.f32 %v3698, %v3764
  %v3835 = vadd.f32 %v3699, %v3765
  %v3836 = vadd.f32 %v3700, %v3764
  %v3837 = vadd.f32 %v3701, %v3765
  %v3838 = vadd.f32 %v3702, %v3764
  %v3839 = vadd.f32 %v3703, %v3765
  %v3840 = vadd.f32 %v3704, %v3764
  %v3841 = vadd.f32 %v3705, %v3765
  %v3842 = vadd.f32 %v3706, %v3764
  %v3843 = vadd.f32 %v3707, %v3765
  %v3844 = vadd.f32 %v3708, %v3764
  %v3845 = vadd.f32 %v3709, %v3765
  %v3846 = vadd.f32 %v3710, %v3764
  %v3847 = vadd.f32 %v3711, %v3765
  %v3848 = vadd.f32 %v3712, %v3764
  %v3849 = vadd.f32 %v3713, %v3765
  %v3850 = vadd.f32 %v3714, %v3764
  %v3851 = vadd.f32 %v3715, %v3765
  %v3852 = vadd.f32 %v3716, %v3764
  %v3853 = vadd.f32 %v3717, %v3765
  %v3854 = vadd.f32 %v3718, %v3764
  %v3855 = vadd.f32 %v3719, %v3765
  %v3856 = vadd.f32 %v3720, %v3764
  %v3857 = vadd.f32 %v3721, %v3765
  %v3858 = vadd.f32 %v3722, %v3764
  %v3859 = vadd.f32 %v3723, %v3765
  %v3860 = vadd.f32 %v3724, %v3764
  %v3861 = vadd.f32 %v3725, %v3765
  %v3862 = vadd.f32 %v3726, %v3764
  %v3863 = vadd.f32 %v3727, %v3765
  %v3864 = vadd.f32 %v3728, %v3766
  %v3865 = vadd.f32 %v3729, %v3767
  %v3866 = vadd.f32 %v3730, %v3766
  %v3867 = vadd.f32 %v3731, %v3767
  %v3868 = vadd.f32 %v3732, %v3766
  %v3869 = vadd.f32 %v3733, %v3767
  %v3870 = vadd.f32 %v3734, %v3766
  %v3871 = vadd.f32 %v3735, %v3767
  %v3872 = vadd.f32 %v3736, %v3766
  %v3873 = vadd.f32 %v3737, %v3767
  %v3874 = vadd.f32 %v3738, %v3766
  %v3875 = vadd.f32 %v3739, %v3767
  %v3876 = vadd.f32 %v3740, %v3766
  %v3877 = vadd.f32 %v3741, %v3767
  %v3878 = vadd.f32 %v3742, %v3766
  %v3879 = vadd.f32 %v3743, %v3767
  %v3880 = vadd.f32 %v3744, %v3766
  %v3881 = vadd.f32 %v3745, %v3767
  %v3882 = vadd.f32 %v3746, %v3766
  %v3883 = vadd.f32 %v3747, %v3767
  %v3884 = vadd.f32 %v3748, %v3766
  %v3885 = vadd.f32 %v3749, %v3767
  %v3886 = vadd.f32 %v3750, %v3766
  %v3887 = vadd.f32 %v3751, %v3767
  %v3888 = vadd.f32 %v3752, %v3766
  %v3889 = vadd.f32 %v3753, %v3767
  %v3890 = vadd.f32 %v3754, %v3766
  %v3891 = vadd.f32 %v3755, %v3767
  %v3892 = vadd.f32 %v3756, %v3766
  %v3893 = vadd.f32 %v3757, %v3767
  %v3894 = vadd.f32 %v3758, %v3766
  %v3895 = vadd.f32 %v3759, %v3767
  %vm3896 = vcmask 130048
  %v3897 = vsel %vm3896, %v3768, -inf
  %3898 = vmax.xlane.f32.xlu0 %v3897
  %v3899 = vpop.xlane.xlu0 %3898
  %v3900 = vsel %vm3896, %v3769, -inf
  %3901 = vmax.xlane.f32.xlu0 %v3900
  %v3902 = vpop.xlane.xlu0 %3901
  %v3903 = vsel %vm3896, %v3770, -inf
  %3904 = vmax.xlane.f32.xlu0 %v3903
  %v3905 = vpop.xlane.xlu0 %3904
  %v3906 = vsel %vm3896, %v3771, -inf
  %3907 = vmax.xlane.f32.xlu0 %v3906
  %v3908 = vpop.xlane.xlu0 %3907
  %v3909 = vsel %vm3896, %v3772, -inf
  %3910 = vmax.xlane.f32.xlu0 %v3909
  %v3911 = vpop.xlane.xlu0 %3910
  %v3912 = vsel %vm3896, %v3773, -inf
  %3913 = vmax.xlane.f32.xlu0 %v3912
  %v3914 = vpop.xlane.xlu0 %3913
  %v3915 = vsel %vm3896, %v3774, -inf
  %3916 = vmax.xlane.f32.xlu0 %v3915
  %v3917 = vpop.xlane.xlu0 %3916
  %v3918 = vsel %vm3896, %v3775, -inf
  %3919 = vmax.xlane.f32.xlu0 %v3918
  %v3920 = vpop.xlane.xlu0 %3919
  %v3921 = vsel %vm3896, %v3776, -inf
  %3922 = vmax.xlane.f32.xlu0 %v3921
  %v3923 = vpop.xlane.xlu0 %3922
  %v3924 = vsel %vm3896, %v3777, -inf
  %3925 = vmax.xlane.f32.xlu0 %v3924
  %v3926 = vpop.xlane.xlu0 %3925
  %v3927 = vsel %vm3896, %v3778, -inf
  %3928 = vmax.xlane.f32.xlu0 %v3927
  %v3929 = vpop.xlane.xlu0 %3928
  %v3930 = vsel %vm3896, %v3779, -inf
  %3931 = vmax.xlane.f32.xlu0 %v3930
  %v3932 = vpop.xlane.xlu0 %3931
  %v3933 = vsel %vm3896, %v3780, -inf
  %3934 = vmax.xlane.f32.xlu0 %v3933
  %v3935 = vpop.xlane.xlu0 %3934
  %v3936 = vsel %vm3896, %v3781, -inf
  %3937 = vmax.xlane.f32.xlu0 %v3936
  %v3938 = vpop.xlane.xlu0 %3937
  %v3939 = vsel %vm3896, %v3782, -inf
  %3940 = vmax.xlane.f32.xlu0 %v3939
  %v3941 = vpop.xlane.xlu0 %3940
  %v3942 = vsel %vm3896, %v3783, -inf
  %3943 = vmax.xlane.f32.xlu0 %v3942
  %v3944 = vpop.xlane.xlu0 %3943
  %v3945 = vsel %vm3896, %v3784, -inf
  %3946 = vmax.xlane.f32.xlu0 %v3945
  %v3947 = vpop.xlane.xlu0 %3946
  %v3948 = vsel %vm3896, %v3785, -inf
  %3949 = vmax.xlane.f32.xlu0 %v3948
  %v3950 = vpop.xlane.xlu0 %3949
  %v3951 = vsel %vm3896, %v3786, -inf
  %3952 = vmax.xlane.f32.xlu0 %v3951
  %v3953 = vpop.xlane.xlu0 %3952
  %v3954 = vsel %vm3896, %v3787, -inf
  %3955 = vmax.xlane.f32.xlu0 %v3954
  %v3956 = vpop.xlane.xlu0 %3955
  %v3957 = vsel %vm3896, %v3788, -inf
  %3958 = vmax.xlane.f32.xlu0 %v3957
  %v3959 = vpop.xlane.xlu0 %3958
  %v3960 = vsel %vm3896, %v3789, -inf
  %3961 = vmax.xlane.f32.xlu0 %v3960
  %v3962 = vpop.xlane.xlu0 %3961
  %v3963 = vsel %vm3896, %v3790, -inf
  %3964 = vmax.xlane.f32.xlu0 %v3963
  %v3965 = vpop.xlane.xlu0 %3964
  %v3966 = vsel %vm3896, %v3791, -inf
  %3967 = vmax.xlane.f32.xlu0 %v3966
  %v3968 = vpop.xlane.xlu0 %3967
  %v3969 = vsel %vm3896, %v3792, -inf
  %3970 = vmax.xlane.f32.xlu0 %v3969
  %v3971 = vpop.xlane.xlu0 %3970
  %v3972 = vsel %vm3896, %v3793, -inf
  %3973 = vmax.xlane.f32.xlu0 %v3972
  %v3974 = vpop.xlane.xlu0 %3973
  %v3975 = vsel %vm3896, %v3794, -inf
  %3976 = vmax.xlane.f32.xlu0 %v3975
  %v3977 = vpop.xlane.xlu0 %3976
  %v3978 = vsel %vm3896, %v3795, -inf
  %3979 = vmax.xlane.f32.xlu0 %v3978
  %v3980 = vpop.xlane.xlu0 %3979
  %v3981 = vsel %vm3896, %v3796, -inf
  %3982 = vmax.xlane.f32.xlu0 %v3981
  %v3983 = vpop.xlane.xlu0 %3982
  %v3984 = vsel %vm3896, %v3797, -inf
  %3985 = vmax.xlane.f32.xlu0 %v3984
  %v3986 = vpop.xlane.xlu0 %3985
  %v3987 = vsel %vm3896, %v3798, -inf
  %3988 = vmax.xlane.f32.xlu0 %v3987
  %v3989 = vpop.xlane.xlu0 %3988
  %v3990 = vsel %vm3896, %v3799, -inf
  %3991 = vmax.xlane.f32.xlu0 %v3990
  %v3992 = vpop.xlane.xlu0 %3991
  %v3993 = vsel %vm3896, %v3800, -inf
  %3994 = vmax.xlane.f32.xlu0 %v3993
  %v3995 = vpop.xlane.xlu0 %3994
  %v3996 = vsel %vm3896, %v3801, -inf
  %3997 = vmax.xlane.f32.xlu0 %v3996
  %v3998 = vpop.xlane.xlu0 %3997
  %v3999 = vsel %vm3896, %v3802, -inf
  %4000 = vmax.xlane.f32.xlu0 %v3999
  %v4001 = vpop.xlane.xlu0 %4000
  %v4002 = vsel %vm3896, %v3803, -inf
  %4003 = vmax.xlane.f32.xlu0 %v4002
  %v4004 = vpop.xlane.xlu0 %4003
  %v4005 = vsel %vm3896, %v3804, -inf
  %4006 = vmax.xlane.f32.xlu0 %v4005
  %v4007 = vpop.xlane.xlu0 %4006
  %v4008 = vsel %vm3896, %v3805, -inf
  %4009 = vmax.xlane.f32.xlu0 %v4008
  %v4010 = vpop.xlane.xlu0 %4009
  %v4011 = vsel %vm3896, %v3806, -inf
  %4012 = vmax.xlane.f32.xlu0 %v4011
  %v4013 = vpop.xlane.xlu0 %4012
  %v4014 = vsel %vm3896, %v3807, -inf
  %4015 = vmax.xlane.f32.xlu0 %v4014
  %v4016 = vpop.xlane.xlu0 %4015
  %v4017 = vsel %vm3896, %v3808, -inf
  %4018 = vmax.xlane.f32.xlu0 %v4017
  %v4019 = vpop.xlane.xlu0 %4018
  %v4020 = vsel %vm3896, %v3809, -inf
  %4021 = vmax.xlane.f32.xlu0 %v4020
  %v4022 = vpop.xlane.xlu0 %4021
  %v4023 = vsel %vm3896, %v3810, -inf
  %4024 = vmax.xlane.f32.xlu0 %v4023
  %v4025 = vpop.xlane.xlu0 %4024
  %v4026 = vsel %vm3896, %v3811, -inf
  %4027 = vmax.xlane.f32.xlu0 %v4026
  %v4028 = vpop.xlane.xlu0 %4027
  %v4029 = vsel %vm3896, %v3812, -inf
  %4030 = vmax.xlane.f32.xlu0 %v4029
  %v4031 = vpop.xlane.xlu0 %4030
  %v4032 = vsel %vm3896, %v3813, -inf
  %4033 = vmax.xlane.f32.xlu0 %v4032
  %v4034 = vpop.xlane.xlu0 %4033
  %v4035 = vsel %vm3896, %v3814, -inf
  %4036 = vmax.xlane.f32.xlu0 %v4035
  %v4037 = vpop.xlane.xlu0 %4036
  %v4038 = vsel %vm3896, %v3815, -inf
  %4039 = vmax.xlane.f32.xlu0 %v4038
  %v4040 = vpop.xlane.xlu0 %4039
  %v4041 = vsel %vm3896, %v3816, -inf
  %4042 = vmax.xlane.f32.xlu0 %v4041
  %v4043 = vpop.xlane.xlu0 %4042
  %v4044 = vsel %vm3896, %v3817, -inf
  %4045 = vmax.xlane.f32.xlu0 %v4044
  %v4046 = vpop.xlane.xlu0 %4045
  %v4047 = vsel %vm3896, %v3818, -inf
  %4048 = vmax.xlane.f32.xlu0 %v4047
  %v4049 = vpop.xlane.xlu0 %4048
  %v4050 = vsel %vm3896, %v3819, -inf
  %4051 = vmax.xlane.f32.xlu0 %v4050
  %v4052 = vpop.xlane.xlu0 %4051
  %v4053 = vsel %vm3896, %v3820, -inf
  %4054 = vmax.xlane.f32.xlu0 %v4053
  %v4055 = vpop.xlane.xlu0 %4054
  %v4056 = vsel %vm3896, %v3821, -inf
  %4057 = vmax.xlane.f32.xlu0 %v4056
  %v4058 = vpop.xlane.xlu0 %4057
  %v4059 = vsel %vm3896, %v3822, -inf
  %4060 = vmax.xlane.f32.xlu0 %v4059
  %v4061 = vpop.xlane.xlu0 %4060
  %v4062 = vsel %vm3896, %v3823, -inf
  %4063 = vmax.xlane.f32.xlu0 %v4062
  %v4064 = vpop.xlane.xlu0 %4063
  %v4065 = vsel %vm3896, %v3824, -inf
  %4066 = vmax.xlane.f32.xlu0 %v4065
  %v4067 = vpop.xlane.xlu0 %4066
  %v4068 = vsel %vm3896, %v3825, -inf
  %4069 = vmax.xlane.f32.xlu0 %v4068
  %v4070 = vpop.xlane.xlu0 %4069
  %v4071 = vsel %vm3896, %v3826, -inf
  %4072 = vmax.xlane.f32.xlu0 %v4071
  %v4073 = vpop.xlane.xlu0 %4072
  %v4074 = vsel %vm3896, %v3827, -inf
  %4075 = vmax.xlane.f32.xlu0 %v4074
  %v4076 = vpop.xlane.xlu0 %4075
  %v4077 = vsel %vm3896, %v3828, -inf
  %4078 = vmax.xlane.f32.xlu0 %v4077
  %v4079 = vpop.xlane.xlu0 %4078
  %v4080 = vsel %vm3896, %v3829, -inf
  %4081 = vmax.xlane.f32.xlu0 %v4080
  %v4082 = vpop.xlane.xlu0 %4081
  %v4083 = vsel %vm3896, %v3830, -inf
  %4084 = vmax.xlane.f32.xlu0 %v4083
  %v4085 = vpop.xlane.xlu0 %4084
  %v4086 = vsel %vm3896, %v3831, -inf
  %4087 = vmax.xlane.f32.xlu0 %v4086
  %v4088 = vpop.xlane.xlu0 %4087
  %v4089 = vsel %vm3896, %v3832, -inf
  %4090 = vmax.xlane.f32.xlu0 %v4089
  %v4091 = vpop.xlane.xlu0 %4090
  %v4092 = vsel %vm3896, %v3833, -inf
  %4093 = vmax.xlane.f32.xlu0 %v4092
  %v4094 = vpop.xlane.xlu0 %4093
  %v4095 = vsel %vm3896, %v3834, -inf
  %4096 = vmax.xlane.f32.xlu0 %v4095
  %v4097 = vpop.xlane.xlu0 %4096
  %v4098 = vsel %vm3896, %v3835, -inf
  %4099 = vmax.xlane.f32.xlu0 %v4098
  %v4100 = vpop.xlane.xlu0 %4099
  %v4101 = vsel %vm3896, %v3836, -inf
  %4102 = vmax.xlane.f32.xlu0 %v4101
  %v4103 = vpop.xlane.xlu0 %4102
  %v4104 = vsel %vm3896, %v3837, -inf
  %4105 = vmax.xlane.f32.xlu0 %v4104
  %v4106 = vpop.xlane.xlu0 %4105
  %v4107 = vsel %vm3896, %v3838, -inf
  %4108 = vmax.xlane.f32.xlu0 %v4107
  %v4109 = vpop.xlane.xlu0 %4108
  %v4110 = vsel %vm3896, %v3839, -inf
  %4111 = vmax.xlane.f32.xlu0 %v4110
  %v4112 = vpop.xlane.xlu0 %4111
  %v4113 = vsel %vm3896, %v3840, -inf
  %4114 = vmax.xlane.f32.xlu0 %v4113
  %v4115 = vpop.xlane.xlu0 %4114
  %v4116 = vsel %vm3896, %v3841, -inf
  %4117 = vmax.xlane.f32.xlu0 %v4116
  %v4118 = vpop.xlane.xlu0 %4117
  %v4119 = vsel %vm3896, %v3842, -inf
  %4120 = vmax.xlane.f32.xlu0 %v4119
  %v4121 = vpop.xlane.xlu0 %4120
  %v4122 = vsel %vm3896, %v3843, -inf
  %4123 = vmax.xlane.f32.xlu0 %v4122
  %v4124 = vpop.xlane.xlu0 %4123
  %v4125 = vsel %vm3896, %v3844, -inf
  %4126 = vmax.xlane.f32.xlu0 %v4125
  %v4127 = vpop.xlane.xlu0 %4126
  %v4128 = vsel %vm3896, %v3845, -inf
  %4129 = vmax.xlane.f32.xlu0 %v4128
  %v4130 = vpop.xlane.xlu0 %4129
  %v4131 = vsel %vm3896, %v3846, -inf
  %4132 = vmax.xlane.f32.xlu0 %v4131
  %v4133 = vpop.xlane.xlu0 %4132
  %v4134 = vsel %vm3896, %v3847, -inf
  %4135 = vmax.xlane.f32.xlu0 %v4134
  %v4136 = vpop.xlane.xlu0 %4135
  %v4137 = vsel %vm3896, %v3848, -inf
  %4138 = vmax.xlane.f32.xlu0 %v4137
  %v4139 = vpop.xlane.xlu0 %4138
  %v4140 = vsel %vm3896, %v3849, -inf
  %4141 = vmax.xlane.f32.xlu0 %v4140
  %v4142 = vpop.xlane.xlu0 %4141
  %v4143 = vsel %vm3896, %v3850, -inf
  %4144 = vmax.xlane.f32.xlu0 %v4143
  %v4145 = vpop.xlane.xlu0 %4144
  %v4146 = vsel %vm3896, %v3851, -inf
  %4147 = vmax.xlane.f32.xlu0 %v4146
  %v4148 = vpop.xlane.xlu0 %4147
  %v4149 = vsel %vm3896, %v3852, -inf
  %4150 = vmax.xlane.f32.xlu0 %v4149
  %v4151 = vpop.xlane.xlu0 %4150
  %v4152 = vsel %vm3896, %v3853, -inf
  %4153 = vmax.xlane.f32.xlu0 %v4152
  %v4154 = vpop.xlane.xlu0 %4153
  %v4155 = vsel %vm3896, %v3854, -inf
  %4156 = vmax.xlane.f32.xlu0 %v4155
  %v4157 = vpop.xlane.xlu0 %4156
  %v4158 = vsel %vm3896, %v3855, -inf
  %4159 = vmax.xlane.f32.xlu0 %v4158
  %v4160 = vpop.xlane.xlu0 %4159
  %v4161 = vsel %vm3896, %v3856, -inf
  %4162 = vmax.xlane.f32.xlu0 %v4161
  %v4163 = vpop.xlane.xlu0 %4162
  %v4164 = vsel %vm3896, %v3857, -inf
  %4165 = vmax.xlane.f32.xlu0 %v4164
  %v4166 = vpop.xlane.xlu0 %4165
  %v4167 = vsel %vm3896, %v3858, -inf
  %4168 = vmax.xlane.f32.xlu0 %v4167
  %v4169 = vpop.xlane.xlu0 %4168
  %v4170 = vsel %vm3896, %v3859, -inf
  %4171 = vmax.xlane.f32.xlu0 %v4170
  %v4172 = vpop.xlane.xlu0 %4171
  %v4173 = vsel %vm3896, %v3860, -inf
  %4174 = vmax.xlane.f32.xlu0 %v4173
  %v4175 = vpop.xlane.xlu0 %4174
  %v4176 = vsel %vm3896, %v3861, -inf
  %4177 = vmax.xlane.f32.xlu0 %v4176
  %v4178 = vpop.xlane.xlu0 %4177
  %v4179 = vsel %vm3896, %v3862, -inf
  %4180 = vmax.xlane.f32.xlu0 %v4179
  %v4181 = vpop.xlane.xlu0 %4180
  %v4182 = vsel %vm3896, %v3863, -inf
  %4183 = vmax.xlane.f32.xlu0 %v4182
  %v4184 = vpop.xlane.xlu0 %4183
  %v4185 = vsel %vm3896, %v3864, -inf
  %4186 = vmax.xlane.f32.xlu0 %v4185
  %v4187 = vpop.xlane.xlu0 %4186
  %v4188 = vsel %vm3896, %v3865, -inf
  %4189 = vmax.xlane.f32.xlu0 %v4188
  %v4190 = vpop.xlane.xlu0 %4189
  %v4191 = vsel %vm3896, %v3866, -inf
  %4192 = vmax.xlane.f32.xlu0 %v4191
  %v4193 = vpop.xlane.xlu0 %4192
  %v4194 = vsel %vm3896, %v3867, -inf
  %4195 = vmax.xlane.f32.xlu0 %v4194
  %v4196 = vpop.xlane.xlu0 %4195
  %v4197 = vsel %vm3896, %v3868, -inf
  %4198 = vmax.xlane.f32.xlu0 %v4197
  %v4199 = vpop.xlane.xlu0 %4198
  %v4200 = vsel %vm3896, %v3869, -inf
  %4201 = vmax.xlane.f32.xlu0 %v4200
  %v4202 = vpop.xlane.xlu0 %4201
  %v4203 = vsel %vm3896, %v3870, -inf
  %4204 = vmax.xlane.f32.xlu0 %v4203
  %v4205 = vpop.xlane.xlu0 %4204
  %v4206 = vsel %vm3896, %v3871, -inf
  %4207 = vmax.xlane.f32.xlu0 %v4206
  %v4208 = vpop.xlane.xlu0 %4207
  %v4209 = vsel %vm3896, %v3872, -inf
  %4210 = vmax.xlane.f32.xlu0 %v4209
  %v4211 = vpop.xlane.xlu0 %4210
  %v4212 = vsel %vm3896, %v3873, -inf
  %4213 = vmax.xlane.f32.xlu0 %v4212
  %v4214 = vpop.xlane.xlu0 %4213
  %v4215 = vsel %vm3896, %v3874, -inf
  %4216 = vmax.xlane.f32.xlu0 %v4215
  %v4217 = vpop.xlane.xlu0 %4216
  %v4218 = vsel %vm3896, %v3875, -inf
  %4219 = vmax.xlane.f32.xlu0 %v4218
  %v4220 = vpop.xlane.xlu0 %4219
  %v4221 = vsel %vm3896, %v3876, -inf
  %4222 = vmax.xlane.f32.xlu0 %v4221
  %v4223 = vpop.xlane.xlu0 %4222
  %v4224 = vsel %vm3896, %v3877, -inf
  %4225 = vmax.xlane.f32.xlu0 %v4224
  %v4226 = vpop.xlane.xlu0 %4225
  %v4227 = vsel %vm3896, %v3878, -inf
  %4228 = vmax.xlane.f32.xlu0 %v4227
  %v4229 = vpop.xlane.xlu0 %4228
  %v4230 = vsel %vm3896, %v3879, -inf
  %4231 = vmax.xlane.f32.xlu0 %v4230
  %v4232 = vpop.xlane.xlu0 %4231
  %v4233 = vsel %vm3896, %v3880, -inf
  %4234 = vmax.xlane.f32.xlu0 %v4233
  %v4235 = vpop.xlane.xlu0 %4234
  %v4236 = vsel %vm3896, %v3881, -inf
  %4237 = vmax.xlane.f32.xlu0 %v4236
  %v4238 = vpop.xlane.xlu0 %4237
  %v4239 = vsel %vm3896, %v3882, -inf
  %4240 = vmax.xlane.f32.xlu0 %v4239
  %v4241 = vpop.xlane.xlu0 %4240
  %v4242 = vsel %vm3896, %v3883, -inf
  %4243 = vmax.xlane.f32.xlu0 %v4242
  %v4244 = vpop.xlane.xlu0 %4243
  %v4245 = vsel %vm3896, %v3884, -inf
  %4246 = vmax.xlane.f32.xlu0 %v4245
  %v4247 = vpop.xlane.xlu0 %4246
  %v4248 = vsel %vm3896, %v3885, -inf
  %4249 = vmax.xlane.f32.xlu0 %v4248
  %v4250 = vpop.xlane.xlu0 %4249
  %v4251 = vsel %vm3896, %v3886, -inf
  %4252 = vmax.xlane.f32.xlu0 %v4251
  %v4253 = vpop.xlane.xlu0 %4252
  %v4254 = vsel %vm3896, %v3887, -inf
  %4255 = vmax.xlane.f32.xlu0 %v4254
  %v4256 = vpop.xlane.xlu0 %4255
  %v4257 = vsel %vm3896, %v3888, -inf
  %4258 = vmax.xlane.f32.xlu0 %v4257
  %v4259 = vpop.xlane.xlu0 %4258
  %v4260 = vsel %vm3896, %v3889, -inf
  %4261 = vmax.xlane.f32.xlu0 %v4260
  %v4262 = vpop.xlane.xlu0 %4261
  %v4263 = vsel %vm3896, %v3890, -inf
  %4264 = vmax.xlane.f32.xlu0 %v4263
  %v4265 = vpop.xlane.xlu0 %4264
  %v4266 = vsel %vm3896, %v3891, -inf
  %4267 = vmax.xlane.f32.xlu0 %v4266
  %v4268 = vpop.xlane.xlu0 %4267
  %v4269 = vsel %vm3896, %v3892, -inf
  %4270 = vmax.xlane.f32.xlu0 %v4269
  %v4271 = vpop.xlane.xlu0 %4270
  %v4272 = vsel %vm3896, %v3893, -inf
  %4273 = vmax.xlane.f32.xlu0 %v4272
  %v4274 = vpop.xlane.xlu0 %4273
  %v4275 = vsel %vm3896, %v3894, -inf
  %4276 = vmax.xlane.f32.xlu0 %v4275
  %v4277 = vpop.xlane.xlu0 %4276
  %v4278 = vsel %vm3896, %v3895, -inf
  %4279 = vmax.xlane.f32.xlu0 %v4278
  %v4280 = vpop.xlane.xlu0 %4279
  %v4281 = vsub.f32 %v3768, %v3899
  %v4282 = vsub.f32 %v3769, %v3902
  %v4283 = vsub.f32 %v3770, %v3905
  %v4284 = vsub.f32 %v3771, %v3908
  %v4285 = vsub.f32 %v3772, %v3911
  %v4286 = vsub.f32 %v3773, %v3914
  %v4287 = vsub.f32 %v3774, %v3917
  %v4288 = vsub.f32 %v3775, %v3920
  %v4289 = vsub.f32 %v3776, %v3923
  %v4290 = vsub.f32 %v3777, %v3926
  %v4291 = vsub.f32 %v3778, %v3929
  %v4292 = vsub.f32 %v3779, %v3932
  %v4293 = vsub.f32 %v3780, %v3935
  %v4294 = vsub.f32 %v3781, %v3938
  %v4295 = vsub.f32 %v3782, %v3941
  %v4296 = vsub.f32 %v3783, %v3944
  %v4297 = vsub.f32 %v3784, %v3947
  %v4298 = vsub.f32 %v3785, %v3950
  %v4299 = vsub.f32 %v3786, %v3953
  %v4300 = vsub.f32 %v3787, %v3956
  %v4301 = vsub.f32 %v3788, %v3959
  %v4302 = vsub.f32 %v3789, %v3962
  %v4303 = vsub.f32 %v3790, %v3965
  %v4304 = vsub.f32 %v3791, %v3968
  %v4305 = vsub.f32 %v3792, %v3971
  %v4306 = vsub.f32 %v3793, %v3974
  %v4307 = vsub.f32 %v3794, %v3977
  %v4308 = vsub.f32 %v3795, %v3980
  %v4309 = vsub.f32 %v3796, %v3983
  %v4310 = vsub.f32 %v3797, %v3986
  %v4311 = vsub.f32 %v3798, %v3989
  %v4312 = vsub.f32 %v3799, %v3992
  %v4313 = vsub.f32 %v3800, %v3995
  %v4314 = vsub.f32 %v3801, %v3998
  %v4315 = vsub.f32 %v3802, %v4001
  %v4316 = vsub.f32 %v3803, %v4004
  %v4317 = vsub.f32 %v3804, %v4007
  %v4318 = vsub.f32 %v3805, %v4010
  %v4319 = vsub.f32 %v3806, %v4013
  %v4320 = vsub.f32 %v3807, %v4016
  %v4321 = vsub.f32 %v3808, %v4019
  %v4322 = vsub.f32 %v3809, %v4022
  %v4323 = vsub.f32 %v3810, %v4025
  %v4324 = vsub.f32 %v3811, %v4028
  %v4325 = vsub.f32 %v3812, %v4031
  %v4326 = vsub.f32 %v3813, %v4034
  %v4327 = vsub.f32 %v3814, %v4037
  %v4328 = vsub.f32 %v3815, %v4040
  %v4329 = vsub.f32 %v3816, %v4043
  %v4330 = vsub.f32 %v3817, %v4046
  %v4331 = vsub.f32 %v3818, %v4049
  %v4332 = vsub.f32 %v3819, %v4052
  %v4333 = vsub.f32 %v3820, %v4055
  %v4334 = vsub.f32 %v3821, %v4058
  %v4335 = vsub.f32 %v3822, %v4061
  %v4336 = vsub.f32 %v3823, %v4064
  %v4337 = vsub.f32 %v3824, %v4067
  %v4338 = vsub.f32 %v3825, %v4070
  %v4339 = vsub.f32 %v3826, %v4073
  %v4340 = vsub.f32 %v3827, %v4076
  %v4341 = vsub.f32 %v3828, %v4079
  %v4342 = vsub.f32 %v3829, %v4082
  %v4343 = vsub.f32 %v3830, %v4085
  %v4344 = vsub.f32 %v3831, %v4088
  %v4345 = vsub.f32 %v3832, %v4091
  %v4346 = vsub.f32 %v3833, %v4094
  %v4347 = vsub.f32 %v3834, %v4097
  %v4348 = vsub.f32 %v3835, %v4100
  %v4349 = vsub.f32 %v3836, %v4103
  %v4350 = vsub.f32 %v3837, %v4106
  %v4351 = vsub.f32 %v3838, %v4109
  %v4352 = vsub.f32 %v3839, %v4112
  %v4353 = vsub.f32 %v3840, %v4115
  %v4354 = vsub.f32 %v3841, %v4118
  %v4355 = vsub.f32 %v3842, %v4121
  %v4356 = vsub.f32 %v3843, %v4124
  %v4357 = vsub.f32 %v3844, %v4127
  %v4358 = vsub.f32 %v3845, %v4130
  %v4359 = vsub.f32 %v3846, %v4133
  %v4360 = vsub.f32 %v3847, %v4136
  %v4361 = vsub.f32 %v3848, %v4139
  %v4362 = vsub.f32 %v3849, %v4142
  %v4363 = vsub.f32 %v3850, %v4145
  %v4364 = vsub.f32 %v3851, %v4148
  %v4365 = vsub.f32 %v3852, %v4151
  %v4366 = vsub.f32 %v3853, %v4154
  %v4367 = vsub.f32 %v3854, %v4157
  %v4368 = vsub.f32 %v3855, %v4160
  %v4369 = vsub.f32 %v3856, %v4163
  %v4370 = vsub.f32 %v3857, %v4166
  %v4371 = vsub.f32 %v3858, %v4169
  %v4372 = vsub.f32 %v3859, %v4172
  %v4373 = vsub.f32 %v3860, %v4175
  %v4374 = vsub.f32 %v3861, %v4178
  %v4375 = vsub.f32 %v3862, %v4181
  %v4376 = vsub.f32 %v3863, %v4184
  %v4377 = vsub.f32 %v3864, %v4187
  %v4378 = vsub.f32 %v3865, %v4190
  %v4379 = vsub.f32 %v3866, %v4193
  %v4380 = vsub.f32 %v3867, %v4196
  %v4381 = vsub.f32 %v3868, %v4199
  %v4382 = vsub.f32 %v3869, %v4202
  %v4383 = vsub.f32 %v3870, %v4205
  %v4384 = vsub.f32 %v3871, %v4208
  %v4385 = vsub.f32 %v3872, %v4211
  %v4386 = vsub.f32 %v3873, %v4214
  %v4387 = vsub.f32 %v3874, %v4217
  %v4388 = vsub.f32 %v3875, %v4220
  %v4389 = vsub.f32 %v3876, %v4223
  %v4390 = vsub.f32 %v3877, %v4226
  %v4391 = vsub.f32 %v3878, %v4229
  %v4392 = vsub.f32 %v3879, %v4232
  %v4393 = vsub.f32 %v3880, %v4235
  %v4394 = vsub.f32 %v3881, %v4238
  %v4395 = vsub.f32 %v3882, %v4241
  %v4396 = vsub.f32 %v3883, %v4244
  %v4397 = vsub.f32 %v3884, %v4247
  %v4398 = vsub.f32 %v3885, %v4250
  %v4399 = vsub.f32 %v3886, %v4253
  %v4400 = vsub.f32 %v3887, %v4256
  %v4401 = vsub.f32 %v3888, %v4259
  %v4402 = vsub.f32 %v3889, %v4262
  %v4403 = vsub.f32 %v3890, %v4265
  %v4404 = vsub.f32 %v3891, %v4268
  %v4405 = vsub.f32 %v3892, %v4271
  %v4406 = vsub.f32 %v3893, %v4274
  %v4407 = vsub.f32 %v3894, %v4277
  %v4408 = vsub.f32 %v3895, %v4280
  %v4409 = vmul.f32 %v4281, 1.442695
  %v4410 = vpow.pop %v4409
  %v4411 = vmul.f32 %v4282, 1.442695
  %v4412 = vpow.pop %v4411
  %v4413 = vmul.f32 %v4283, 1.442695
  %v4414 = vpow.pop %v4413
  %v4415 = vmul.f32 %v4284, 1.442695
  %v4416 = vpow.pop %v4415
  %v4417 = vmul.f32 %v4285, 1.442695
  %v4418 = vpow.pop %v4417
  %v4419 = vmul.f32 %v4286, 1.442695
  %v4420 = vpow.pop %v4419
  %v4421 = vmul.f32 %v4287, 1.442695
  %v4422 = vpow.pop %v4421
  %v4423 = vmul.f32 %v4288, 1.442695
  %v4424 = vpow.pop %v4423
  %v4425 = vmul.f32 %v4289, 1.442695
  %v4426 = vpow.pop %v4425
  %v4427 = vmul.f32 %v4290, 1.442695
  %v4428 = vpow.pop %v4427
  %v4429 = vmul.f32 %v4291, 1.442695
  %v4430 = vpow.pop %v4429
  %v4431 = vmul.f32 %v4292, 1.442695
  %v4432 = vpow.pop %v4431
  %v4433 = vmul.f32 %v4293, 1.442695
  %v4434 = vpow.pop %v4433
  %v4435 = vmul.f32 %v4294, 1.442695
  %v4436 = vpow.pop %v4435
  %v4437 = vmul.f32 %v4295, 1.442695
  %v4438 = vpow.pop %v4437
  %v4439 = vmul.f32 %v4296, 1.442695
  %v4440 = vpow.pop %v4439
  %v4441 = vmul.f32 %v4297, 1.442695
  %v4442 = vpow.pop %v4441
  %v4443 = vmul.f32 %v4298, 1.442695
  %v4444 = vpow.pop %v4443
  %v4445 = vmul.f32 %v4299, 1.442695
  %v4446 = vpow.pop %v4445
  %v4447 = vmul.f32 %v4300, 1.442695
  %v4448 = vpow.pop %v4447
  %v4449 = vmul.f32 %v4301, 1.442695
  %v4450 = vpow.pop %v4449
  %v4451 = vmul.f32 %v4302, 1.442695
  %v4452 = vpow.pop %v4451
  %v4453 = vmul.f32 %v4303, 1.442695
  %v4454 = vpow.pop %v4453
  %v4455 = vmul.f32 %v4304, 1.442695
  %v4456 = vpow.pop %v4455
  %v4457 = vmul.f32 %v4305, 1.442695
  %v4458 = vpow.pop %v4457
  %v4459 = vmul.f32 %v4306, 1.442695
  %v4460 = vpow.pop %v4459
  %v4461 = vmul.f32 %v4307, 1.442695
  %v4462 = vpow.pop %v4461
  %v4463 = vmul.f32 %v4308, 1.442695
  %v4464 = vpow.pop %v4463
  %v4465 = vmul.f32 %v4309, 1.442695
  %v4466 = vpow.pop %v4465
  %v4467 = vmul.f32 %v4310, 1.442695
  %v4468 = vpow.pop %v4467
  %v4469 = vmul.f32 %v4311, 1.442695
  %v4470 = vpow.pop %v4469
  %v4471 = vmul.f32 %v4312, 1.442695
  %v4472 = vpow.pop %v4471
  %v4473 = vmul.f32 %v4313, 1.442695
  %v4474 = vpow.pop %v4473
  %v4475 = vmul.f32 %v4314, 1.442695
  %v4476 = vpow.pop %v4475
  %v4477 = vmul.f32 %v4315, 1.442695
  %v4478 = vpow.pop %v4477
  %v4479 = vmul.f32 %v4316, 1.442695
  %v4480 = vpow.pop %v4479
  %v4481 = vmul.f32 %v4317, 1.442695
  %v4482 = vpow.pop %v4481
  %v4483 = vmul.f32 %v4318, 1.442695
  %v4484 = vpow.pop %v4483
  %v4485 = vmul.f32 %v4319, 1.442695
  %v4486 = vpow.pop %v4485
  %v4487 = vmul.f32 %v4320, 1.442695
  %v4488 = vpow.pop %v4487
  %v4489 = vmul.f32 %v4321, 1.442695
  %v4490 = vpow.pop %v4489
  %v4491 = vmul.f32 %v4322, 1.442695
  %v4492 = vpow.pop %v4491
  %v4493 = vmul.f32 %v4323, 1.442695
  %v4494 = vpow.pop %v4493
  %v4495 = vmul.f32 %v4324, 1.442695
  %v4496 = vpow.pop %v4495
  %v4497 = vmul.f32 %v4325, 1.442695
  %v4498 = vpow.pop %v4497
  %v4499 = vmul.f32 %v4326, 1.442695
  %v4500 = vpow.pop %v4499
  %v4501 = vmul.f32 %v4327, 1.442695
  %v4502 = vpow.pop %v4501
  %v4503 = vmul.f32 %v4328, 1.442695
  %v4504 = vpow.pop %v4503
  %v4505 = vmul.f32 %v4329, 1.442695
  %v4506 = vpow.pop %v4505
  %v4507 = vmul.f32 %v4330, 1.442695
  %v4508 = vpow.pop %v4507
  %v4509 = vmul.f32 %v4331, 1.442695
  %v4510 = vpow.pop %v4509
  %v4511 = vmul.f32 %v4332, 1.442695
  %v4512 = vpow.pop %v4511
  %v4513 = vmul.f32 %v4333, 1.442695
  %v4514 = vpow.pop %v4513
  %v4515 = vmul.f32 %v4334, 1.442695
  %v4516 = vpow.pop %v4515
  %v4517 = vmul.f32 %v4335, 1.442695
  %v4518 = vpow.pop %v4517
  %v4519 = vmul.f32 %v4336, 1.442695
  %v4520 = vpow.pop %v4519
  %v4521 = vmul.f32 %v4337, 1.442695
  %v4522 = vpow.pop %v4521
  %v4523 = vmul.f32 %v4338, 1.442695
  %v4524 = vpow.pop %v4523
  %v4525 = vmul.f32 %v4339, 1.442695
  %v4526 = vpow.pop %v4525
  %v4527 = vmul.f32 %v4340, 1.442695
  %v4528 = vpow.pop %v4527
  %v4529 = vmul.f32 %v4341, 1.442695
  %v4530 = vpow.pop %v4529
  %v4531 = vmul.f32 %v4342, 1.442695
  %v4532 = vpow.pop %v4531
  %v4533 = vmul.f32 %v4343, 1.442695
  %v4534 = vpow.pop %v4533
  %v4535 = vmul.f32 %v4344, 1.442695
  %v4536 = vpow.pop %v4535
  %v4537 = vmul.f32 %v4345, 1.442695
  %v4538 = vpow.pop %v4537
  %v4539 = vmul.f32 %v4346, 1.442695
  %v4540 = vpow.pop %v4539
  %v4541 = vmul.f32 %v4347, 1.442695
  %v4542 = vpow.pop %v4541
  %v4543 = vmul.f32 %v4348, 1.442695
  %v4544 = vpow.pop %v4543
  %v4545 = vmul.f32 %v4349, 1.442695
  %v4546 = vpow.pop %v4545
  %v4547 = vmul.f32 %v4350, 1.442695
  %v4548 = vpow.pop %v4547
  %v4549 = vmul.f32 %v4351, 1.442695
  %v4550 = vpow.pop %v4549
  %v4551 = vmul.f32 %v4352, 1.442695
  %v4552 = vpow.pop %v4551
  %v4553 = vmul.f32 %v4353, 1.442695
  %v4554 = vpow.pop %v4553
  %v4555 = vmul.f32 %v4354, 1.442695
  %v4556 = vpow.pop %v4555
  %v4557 = vmul.f32 %v4355, 1.442695
  %v4558 = vpow.pop %v4557
  %v4559 = vmul.f32 %v4356, 1.442695
  %v4560 = vpow.pop %v4559
  %v4561 = vmul.f32 %v4357, 1.442695
  %v4562 = vpow.pop %v4561
  %v4563 = vmul.f32 %v4358, 1.442695
  %v4564 = vpow.pop %v4563
  %v4565 = vmul.f32 %v4359, 1.442695
  %v4566 = vpow.pop %v4565
  %v4567 = vmul.f32 %v4360, 1.442695
  %v4568 = vpow.pop %v4567
  %v4569 = vmul.f32 %v4361, 1.442695
  %v4570 = vpow.pop %v4569
  %v4571 = vmul.f32 %v4362, 1.442695
  %v4572 = vpow.pop %v4571
  %v4573 = vmul.f32 %v4363, 1.442695
  %v4574 = vpow.pop %v4573
  %v4575 = vmul.f32 %v4364, 1.442695
  %v4576 = vpow.pop %v4575
  %v4577 = vmul.f32 %v4365, 1.442695
  %v4578 = vpow.pop %v4577
  %v4579 = vmul.f32 %v4366, 1.442695
  %v4580 = vpow.pop %v4579
  %v4581 = vmul.f32 %v4367, 1.442695
  %v4582 = vpow.pop %v4581
  %v4583 = vmul.f32 %v4368, 1.442695
  %v4584 = vpow.pop %v4583
  %v4585 = vmul.f32 %v4369, 1.442695
  %v4586 = vpow.pop %v4585
  %v4587 = vmul.f32 %v4370, 1.442695
  %v4588 = vpow.pop %v4587
  %v4589 = vmul.f32 %v4371, 1.442695
  %v4590 = vpow.pop %v4589
  %v4591 = vmul.f32 %v4372, 1.442695
  %v4592 = vpow.pop %v4591
  %v4593 = vmul.f32 %v4373, 1.442695
  %v4594 = vpow.pop %v4593
  %v4595 = vmul.f32 %v4374, 1.442695
  %v4596 = vpow.pop %v4595
  %v4597 = vmul.f32 %v4375, 1.442695
  %v4598 = vpow.pop %v4597
  %v4599 = vmul.f32 %v4376, 1.442695
  %v4600 = vpow.pop %v4599
  %v4601 = vmul.f32 %v4377, 1.442695
  %v4602 = vpow.pop %v4601
  %v4603 = vmul.f32 %v4378, 1.442695
  %v4604 = vpow.pop %v4603
  %v4605 = vmul.f32 %v4379, 1.442695
  %v4606 = vpow.pop %v4605
  %v4607 = vmul.f32 %v4380, 1.442695
  %v4608 = vpow.pop %v4607
  %v4609 = vmul.f32 %v4381, 1.442695
  %v4610 = vpow.pop %v4609
  %v4611 = vmul.f32 %v4382, 1.442695
  %v4612 = vpow.pop %v4611
  %v4613 = vmul.f32 %v4383, 1.442695
  %v4614 = vpow.pop %v4613
  %v4615 = vmul.f32 %v4384, 1.442695
  %v4616 = vpow.pop %v4615
  %v4617 = vmul.f32 %v4385, 1.442695
  %v4618 = vpow.pop %v4617
  %v4619 = vmul.f32 %v4386, 1.442695
  %v4620 = vpow.pop %v4619
  %v4621 = vmul.f32 %v4387, 1.442695
  %v4622 = vpow.pop %v4621
  %v4623 = vmul.f32 %v4388, 1.442695
  %v4624 = vpow.pop %v4623
  %v4625 = vmul.f32 %v4389, 1.442695
  %v4626 = vpow.pop %v4625
  %v4627 = vmul.f32 %v4390, 1.442695
  %v4628 = vpow.pop %v4627
  %v4629 = vmul.f32 %v4391, 1.442695
  %v4630 = vpow.pop %v4629
  %v4631 = vmul.f32 %v4392, 1.442695
  %v4632 = vpow.pop %v4631
  %v4633 = vmul.f32 %v4393, 1.442695
  %v4634 = vpow.pop %v4633
  %v4635 = vmul.f32 %v4394, 1.442695
  %v4636 = vpow.pop %v4635
  %v4637 = vmul.f32 %v4395, 1.442695
  %v4638 = vpow.pop %v4637
  %v4639 = vmul.f32 %v4396, 1.442695
  %v4640 = vpow.pop %v4639
  %v4641 = vmul.f32 %v4397, 1.442695
  %v4642 = vpow.pop %v4641
  %v4643 = vmul.f32 %v4398, 1.442695
  %v4644 = vpow.pop %v4643
  %v4645 = vmul.f32 %v4399, 1.442695
  %v4646 = vpow.pop %v4645
  %v4647 = vmul.f32 %v4400, 1.442695
  %v4648 = vpow.pop %v4647
  %v4649 = vmul.f32 %v4401, 1.442695
  %v4650 = vpow.pop %v4649
  %v4651 = vmul.f32 %v4402, 1.442695
  %v4652 = vpow.pop %v4651
  %v4653 = vmul.f32 %v4403, 1.442695
  %v4654 = vpow.pop %v4653
  %v4655 = vmul.f32 %v4404, 1.442695
  %v4656 = vpow.pop %v4655
  %v4657 = vmul.f32 %v4405, 1.442695
  %v4658 = vpow.pop %v4657
  %v4659 = vmul.f32 %v4406, 1.442695
  %v4660 = vpow.pop %v4659
  %v4661 = vmul.f32 %v4407, 1.442695
  %v4662 = vpow.pop %v4661
  %v4663 = vmul.f32 %v4408, 1.442695
  %v4664 = vpow.pop %v4663
  %v4665 = vsel %vm3896, %v4410, 0.0
  %4666 = vadd.xlane.f32.xlu0 %v4665
  %v4667 = vpop.xlane.xlu0 %4666
  %v4668 = vsel %vm3896, %v4412, 0.0
  %4669 = vadd.xlane.f32.xlu0 %v4668
  %v4670 = vpop.xlane.xlu0 %4669
  %v4671 = vsel %vm3896, %v4414, 0.0
  %4672 = vadd.xlane.f32.xlu0 %v4671
  %v4673 = vpop.xlane.xlu0 %4672
  %v4674 = vsel %vm3896, %v4416, 0.0
  %4675 = vadd.xlane.f32.xlu0 %v4674
  %v4676 = vpop.xlane.xlu0 %4675
  %v4677 = vsel %vm3896, %v4418, 0.0
  %4678 = vadd.xlane.f32.xlu0 %v4677
  %v4679 = vpop.xlane.xlu0 %4678
  %v4680 = vsel %vm3896, %v4420, 0.0
  %4681 = vadd.xlane.f32.xlu0 %v4680
  %v4682 = vpop.xlane.xlu0 %4681
  %v4683 = vsel %vm3896, %v4422, 0.0
  %4684 = vadd.xlane.f32.xlu0 %v4683
  %v4685 = vpop.xlane.xlu0 %4684
  %v4686 = vsel %vm3896, %v4424, 0.0
  %4687 = vadd.xlane.f32.xlu0 %v4686
  %v4688 = vpop.xlane.xlu0 %4687
  %v4689 = vsel %vm3896, %v4426, 0.0
  %4690 = vadd.xlane.f32.xlu0 %v4689
  %v4691 = vpop.xlane.xlu0 %4690
  %v4692 = vsel %vm3896, %v4428, 0.0
  %4693 = vadd.xlane.f32.xlu0 %v4692
  %v4694 = vpop.xlane.xlu0 %4693
  %v4695 = vsel %vm3896, %v4430, 0.0
  %4696 = vadd.xlane.f32.xlu0 %v4695
  %v4697 = vpop.xlane.xlu0 %4696
  %v4698 = vsel %vm3896, %v4432, 0.0
  %4699 = vadd.xlane.f32.xlu0 %v4698
  %v4700 = vpop.xlane.xlu0 %4699
  %v4701 = vsel %vm3896, %v4434, 0.0
  %4702 = vadd.xlane.f32.xlu0 %v4701
  %v4703 = vpop.xlane.xlu0 %4702
  %v4704 = vsel %vm3896, %v4436, 0.0
  %4705 = vadd.xlane.f32.xlu0 %v4704
  %v4706 = vpop.xlane.xlu0 %4705
  %v4707 = vsel %vm3896, %v4438, 0.0
  %4708 = vadd.xlane.f32.xlu0 %v4707
  %v4709 = vpop.xlane.xlu0 %4708
  %v4710 = vsel %vm3896, %v4440, 0.0
  %4711 = vadd.xlane.f32.xlu0 %v4710
  %v4712 = vpop.xlane.xlu0 %4711
  %v4713 = vsel %vm3896, %v4442, 0.0
  %4714 = vadd.xlane.f32.xlu0 %v4713
  %v4715 = vpop.xlane.xlu0 %4714
  %v4716 = vsel %vm3896, %v4444, 0.0
  %4717 = vadd.xlane.f32.xlu0 %v4716
  %v4718 = vpop.xlane.xlu0 %4717
  %v4719 = vsel %vm3896, %v4446, 0.0
  %4720 = vadd.xlane.f32.xlu0 %v4719
  %v4721 = vpop.xlane.xlu0 %4720
  %v4722 = vsel %vm3896, %v4448, 0.0
  %4723 = vadd.xlane.f32.xlu0 %v4722
  %v4724 = vpop.xlane.xlu0 %4723
  %v4725 = vsel %vm3896, %v4450, 0.0
  %4726 = vadd.xlane.f32.xlu0 %v4725
  %v4727 = vpop.xlane.xlu0 %4726
  %v4728 = vsel %vm3896, %v4452, 0.0
  %4729 = vadd.xlane.f32.xlu0 %v4728
  %v4730 = vpop.xlane.xlu0 %4729
  %v4731 = vsel %vm3896, %v4454, 0.0
  %4732 = vadd.xlane.f32.xlu0 %v4731
  %v4733 = vpop.xlane.xlu0 %4732
  %v4734 = vsel %vm3896, %v4456, 0.0
  %4735 = vadd.xlane.f32.xlu0 %v4734
  %v4736 = vpop.xlane.xlu0 %4735
  %v4737 = vsel %vm3896, %v4458, 0.0
  %4738 = vadd.xlane.f32.xlu0 %v4737
  %v4739 = vpop.xlane.xlu0 %4738
  %v4740 = vsel %vm3896, %v4460, 0.0
  %4741 = vadd.xlane.f32.xlu0 %v4740
  %v4742 = vpop.xlane.xlu0 %4741
  %v4743 = vsel %vm3896, %v4462, 0.0
  %4744 = vadd.xlane.f32.xlu0 %v4743
  %v4745 = vpop.xlane.xlu0 %4744
  %v4746 = vsel %vm3896, %v4464, 0.0
  %4747 = vadd.xlane.f32.xlu0 %v4746
  %v4748 = vpop.xlane.xlu0 %4747
  %v4749 = vsel %vm3896, %v4466, 0.0
  %4750 = vadd.xlane.f32.xlu0 %v4749
  %v4751 = vpop.xlane.xlu0 %4750
  %v4752 = vsel %vm3896, %v4468, 0.0
  %4753 = vadd.xlane.f32.xlu0 %v4752
  %v4754 = vpop.xlane.xlu0 %4753
  %v4755 = vsel %vm3896, %v4470, 0.0
  %4756 = vadd.xlane.f32.xlu0 %v4755
  %v4757 = vpop.xlane.xlu0 %4756
  %v4758 = vsel %vm3896, %v4472, 0.0
  %4759 = vadd.xlane.f32.xlu0 %v4758
  %v4760 = vpop.xlane.xlu0 %4759
  %v4761 = vsel %vm3896, %v4474, 0.0
  %4762 = vadd.xlane.f32.xlu0 %v4761
  %v4763 = vpop.xlane.xlu0 %4762
  %v4764 = vsel %vm3896, %v4476, 0.0
  %4765 = vadd.xlane.f32.xlu0 %v4764
  %v4766 = vpop.xlane.xlu0 %4765
  %v4767 = vsel %vm3896, %v4478, 0.0
  %4768 = vadd.xlane.f32.xlu0 %v4767
  %v4769 = vpop.xlane.xlu0 %4768
  %v4770 = vsel %vm3896, %v4480, 0.0
  %4771 = vadd.xlane.f32.xlu0 %v4770
  %v4772 = vpop.xlane.xlu0 %4771
  %v4773 = vsel %vm3896, %v4482, 0.0
  %4774 = vadd.xlane.f32.xlu0 %v4773
  %v4775 = vpop.xlane.xlu0 %4774
  %v4776 = vsel %vm3896, %v4484, 0.0
  %4777 = vadd.xlane.f32.xlu0 %v4776
  %v4778 = vpop.xlane.xlu0 %4777
  %v4779 = vsel %vm3896, %v4486, 0.0
  %4780 = vadd.xlane.f32.xlu0 %v4779
  %v4781 = vpop.xlane.xlu0 %4780
  %v4782 = vsel %vm3896, %v4488, 0.0
  %4783 = vadd.xlane.f32.xlu0 %v4782
  %v4784 = vpop.xlane.xlu0 %4783
  %v4785 = vsel %vm3896, %v4490, 0.0
  %4786 = vadd.xlane.f32.xlu0 %v4785
  %v4787 = vpop.xlane.xlu0 %4786
  %v4788 = vsel %vm3896, %v4492, 0.0
  %4789 = vadd.xlane.f32.xlu0 %v4788
  %v4790 = vpop.xlane.xlu0 %4789
  %v4791 = vsel %vm3896, %v4494, 0.0
  %4792 = vadd.xlane.f32.xlu0 %v4791
  %v4793 = vpop.xlane.xlu0 %4792
  %v4794 = vsel %vm3896, %v4496, 0.0
  %4795 = vadd.xlane.f32.xlu0 %v4794
  %v4796 = vpop.xlane.xlu0 %4795
  %v4797 = vsel %vm3896, %v4498, 0.0
  %4798 = vadd.xlane.f32.xlu0 %v4797
  %v4799 = vpop.xlane.xlu0 %4798
  %v4800 = vsel %vm3896, %v4500, 0.0
  %4801 = vadd.xlane.f32.xlu0 %v4800
  %v4802 = vpop.xlane.xlu0 %4801
  %v4803 = vsel %vm3896, %v4502, 0.0
  %4804 = vadd.xlane.f32.xlu0 %v4803
  %v4805 = vpop.xlane.xlu0 %4804
  %v4806 = vsel %vm3896, %v4504, 0.0
  %4807 = vadd.xlane.f32.xlu0 %v4806
  %v4808 = vpop.xlane.xlu0 %4807
  %v4809 = vsel %vm3896, %v4506, 0.0
  %4810 = vadd.xlane.f32.xlu0 %v4809
  %v4811 = vpop.xlane.xlu0 %4810
  %v4812 = vsel %vm3896, %v4508, 0.0
  %4813 = vadd.xlane.f32.xlu0 %v4812
  %v4814 = vpop.xlane.xlu0 %4813
  %v4815 = vsel %vm3896, %v4510, 0.0
  %4816 = vadd.xlane.f32.xlu0 %v4815
  %v4817 = vpop.xlane.xlu0 %4816
  %v4818 = vsel %vm3896, %v4512, 0.0
  %4819 = vadd.xlane.f32.xlu0 %v4818
  %v4820 = vpop.xlane.xlu0 %4819
  %v4821 = vsel %vm3896, %v4514, 0.0
  %4822 = vadd.xlane.f32.xlu0 %v4821
  %v4823 = vpop.xlane.xlu0 %4822
  %v4824 = vsel %vm3896, %v4516, 0.0
  %4825 = vadd.xlane.f32.xlu0 %v4824
  %v4826 = vpop.xlane.xlu0 %4825
  %v4827 = vsel %vm3896, %v4518, 0.0
  %4828 = vadd.xlane.f32.xlu0 %v4827
  %v4829 = vpop.xlane.xlu0 %4828
  %v4830 = vsel %vm3896, %v4520, 0.0
  %4831 = vadd.xlane.f32.xlu0 %v4830
  %v4832 = vpop.xlane.xlu0 %4831
  %v4833 = vsel %vm3896, %v4522, 0.0
  %4834 = vadd.xlane.f32.xlu0 %v4833
  %v4835 = vpop.xlane.xlu0 %4834
  %v4836 = vsel %vm3896, %v4524, 0.0
  %4837 = vadd.xlane.f32.xlu0 %v4836
  %v4838 = vpop.xlane.xlu0 %4837
  %v4839 = vsel %vm3896, %v4526, 0.0
  %4840 = vadd.xlane.f32.xlu0 %v4839
  %v4841 = vpop.xlane.xlu0 %4840
  %v4842 = vsel %vm3896, %v4528, 0.0
  %4843 = vadd.xlane.f32.xlu0 %v4842
  %v4844 = vpop.xlane.xlu0 %4843
  %v4845 = vsel %vm3896, %v4530, 0.0
  %4846 = vadd.xlane.f32.xlu0 %v4845
  %v4847 = vpop.xlane.xlu0 %4846
  %v4848 = vsel %vm3896, %v4532, 0.0
  %4849 = vadd.xlane.f32.xlu0 %v4848
  %v4850 = vpop.xlane.xlu0 %4849
  %v4851 = vsel %vm3896, %v4534, 0.0
  %4852 = vadd.xlane.f32.xlu0 %v4851
  %v4853 = vpop.xlane.xlu0 %4852
  %v4854 = vsel %vm3896, %v4536, 0.0
  %4855 = vadd.xlane.f32.xlu0 %v4854
  %v4856 = vpop.xlane.xlu0 %4855
  %v4857 = vsel %vm3896, %v4538, 0.0
  %4858 = vadd.xlane.f32.xlu0 %v4857
  %v4859 = vpop.xlane.xlu0 %4858
  %v4860 = vsel %vm3896, %v4540, 0.0
  %4861 = vadd.xlane.f32.xlu0 %v4860
  %v4862 = vpop.xlane.xlu0 %4861
  %v4863 = vsel %vm3896, %v4542, 0.0
  %4864 = vadd.xlane.f32.xlu0 %v4863
  %v4865 = vpop.xlane.xlu0 %4864
  %v4866 = vsel %vm3896, %v4544, 0.0
  %4867 = vadd.xlane.f32.xlu0 %v4866
  %v4868 = vpop.xlane.xlu0 %4867
  %v4869 = vsel %vm3896, %v4546, 0.0
  %4870 = vadd.xlane.f32.xlu0 %v4869
  %v4871 = vpop.xlane.xlu0 %4870
  %v4872 = vsel %vm3896, %v4548, 0.0
  %4873 = vadd.xlane.f32.xlu0 %v4872
  %v4874 = vpop.xlane.xlu0 %4873
  %v4875 = vsel %vm3896, %v4550, 0.0
  %4876 = vadd.xlane.f32.xlu0 %v4875
  %v4877 = vpop.xlane.xlu0 %4876
  %v4878 = vsel %vm3896, %v4552, 0.0
  %4879 = vadd.xlane.f32.xlu0 %v4878
  %v4880 = vpop.xlane.xlu0 %4879
  %v4881 = vsel %vm3896, %v4554, 0.0
  %4882 = vadd.xlane.f32.xlu0 %v4881
  %v4883 = vpop.xlane.xlu0 %4882
  %v4884 = vsel %vm3896, %v4556, 0.0
  %4885 = vadd.xlane.f32.xlu0 %v4884
  %v4886 = vpop.xlane.xlu0 %4885
  %v4887 = vsel %vm3896, %v4558, 0.0
  %4888 = vadd.xlane.f32.xlu0 %v4887
  %v4889 = vpop.xlane.xlu0 %4888
  %v4890 = vsel %vm3896, %v4560, 0.0
  %4891 = vadd.xlane.f32.xlu0 %v4890
  %v4892 = vpop.xlane.xlu0 %4891
  %v4893 = vsel %vm3896, %v4562, 0.0
  %4894 = vadd.xlane.f32.xlu0 %v4893
  %v4895 = vpop.xlane.xlu0 %4894
  %v4896 = vsel %vm3896, %v4564, 0.0
  %4897 = vadd.xlane.f32.xlu0 %v4896
  %v4898 = vpop.xlane.xlu0 %4897
  %v4899 = vsel %vm3896, %v4566, 0.0
  %4900 = vadd.xlane.f32.xlu0 %v4899
  %v4901 = vpop.xlane.xlu0 %4900
  %v4902 = vsel %vm3896, %v4568, 0.0
  %4903 = vadd.xlane.f32.xlu0 %v4902
  %v4904 = vpop.xlane.xlu0 %4903
  %v4905 = vsel %vm3896, %v4570, 0.0
  %4906 = vadd.xlane.f32.xlu0 %v4905
  %v4907 = vpop.xlane.xlu0 %4906
  %v4908 = vsel %vm3896, %v4572, 0.0
  %4909 = vadd.xlane.f32.xlu0 %v4908
  %v4910 = vpop.xlane.xlu0 %4909
  %v4911 = vsel %vm3896, %v4574, 0.0
  %4912 = vadd.xlane.f32.xlu0 %v4911
  %v4913 = vpop.xlane.xlu0 %4912
  %v4914 = vsel %vm3896, %v4576, 0.0
  %4915 = vadd.xlane.f32.xlu0 %v4914
  %v4916 = vpop.xlane.xlu0 %4915
  %v4917 = vsel %vm3896, %v4578, 0.0
  %4918 = vadd.xlane.f32.xlu0 %v4917
  %v4919 = vpop.xlane.xlu0 %4918
  %v4920 = vsel %vm3896, %v4580, 0.0
  %4921 = vadd.xlane.f32.xlu0 %v4920
  %v4922 = vpop.xlane.xlu0 %4921
  %v4923 = vsel %vm3896, %v4582, 0.0
  %4924 = vadd.xlane.f32.xlu0 %v4923
  %v4925 = vpop.xlane.xlu0 %4924
  %v4926 = vsel %vm3896, %v4584, 0.0
  %4927 = vadd.xlane.f32.xlu0 %v4926
  %v4928 = vpop.xlane.xlu0 %4927
  %v4929 = vsel %vm3896, %v4586, 0.0
  %4930 = vadd.xlane.f32.xlu0 %v4929
  %v4931 = vpop.xlane.xlu0 %4930
  %v4932 = vsel %vm3896, %v4588, 0.0
  %4933 = vadd.xlane.f32.xlu0 %v4932
  %v4934 = vpop.xlane.xlu0 %4933
  %v4935 = vsel %vm3896, %v4590, 0.0
  %4936 = vadd.xlane.f32.xlu0 %v4935
  %v4937 = vpop.xlane.xlu0 %4936
  %v4938 = vsel %vm3896, %v4592, 0.0
  %4939 = vadd.xlane.f32.xlu0 %v4938
  %v4940 = vpop.xlane.xlu0 %4939
  %v4941 = vsel %vm3896, %v4594, 0.0
  %4942 = vadd.xlane.f32.xlu0 %v4941
  %v4943 = vpop.xlane.xlu0 %4942
  %v4944 = vsel %vm3896, %v4596, 0.0
  %4945 = vadd.xlane.f32.xlu0 %v4944
  %v4946 = vpop.xlane.xlu0 %4945
  %v4947 = vsel %vm3896, %v4598, 0.0
  %4948 = vadd.xlane.f32.xlu0 %v4947
  %v4949 = vpop.xlane.xlu0 %4948
  %v4950 = vsel %vm3896, %v4600, 0.0
  %4951 = vadd.xlane.f32.xlu0 %v4950
  %v4952 = vpop.xlane.xlu0 %4951
  %v4953 = vsel %vm3896, %v4602, 0.0
  %4954 = vadd.xlane.f32.xlu0 %v4953
  %v4955 = vpop.xlane.xlu0 %4954
  %v4956 = vsel %vm3896, %v4604, 0.0
  %4957 = vadd.xlane.f32.xlu0 %v4956
  %v4958 = vpop.xlane.xlu0 %4957
  %v4959 = vsel %vm3896, %v4606, 0.0
  %4960 = vadd.xlane.f32.xlu0 %v4959
  %v4961 = vpop.xlane.xlu0 %4960
  %v4962 = vsel %vm3896, %v4608, 0.0
  %4963 = vadd.xlane.f32.xlu0 %v4962
  %v4964 = vpop.xlane.xlu0 %4963
  %v4965 = vsel %vm3896, %v4610, 0.0
  %4966 = vadd.xlane.f32.xlu0 %v4965
  %v4967 = vpop.xlane.xlu0 %4966
  %v4968 = vsel %vm3896, %v4612, 0.0
  %4969 = vadd.xlane.f32.xlu0 %v4968
  %v4970 = vpop.xlane.xlu0 %4969
  %v4971 = vsel %vm3896, %v4614, 0.0
  %4972 = vadd.xlane.f32.xlu0 %v4971
  %v4973 = vpop.xlane.xlu0 %4972
  %v4974 = vsel %vm3896, %v4616, 0.0
  %4975 = vadd.xlane.f32.xlu0 %v4974
  %v4976 = vpop.xlane.xlu0 %4975
  %v4977 = vsel %vm3896, %v4618, 0.0
  %4978 = vadd.xlane.f32.xlu0 %v4977
  %v4979 = vpop.xlane.xlu0 %4978
  %v4980 = vsel %vm3896, %v4620, 0.0
  %4981 = vadd.xlane.f32.xlu0 %v4980
  %v4982 = vpop.xlane.xlu0 %4981
  %v4983 = vsel %vm3896, %v4622, 0.0
  %4984 = vadd.xlane.f32.xlu0 %v4983
  %v4985 = vpop.xlane.xlu0 %4984
  %v4986 = vsel %vm3896, %v4624, 0.0
  %4987 = vadd.xlane.f32.xlu0 %v4986
  %v4988 = vpop.xlane.xlu0 %4987
  %v4989 = vsel %vm3896, %v4626, 0.0
  %4990 = vadd.xlane.f32.xlu0 %v4989
  %v4991 = vpop.xlane.xlu0 %4990
  %v4992 = vsel %vm3896, %v4628, 0.0
  %4993 = vadd.xlane.f32.xlu0 %v4992
  %v4994 = vpop.xlane.xlu0 %4993
  %v4995 = vsel %vm3896, %v4630, 0.0
  %4996 = vadd.xlane.f32.xlu0 %v4995
  %v4997 = vpop.xlane.xlu0 %4996
  %v4998 = vsel %vm3896, %v4632, 0.0
  %4999 = vadd.xlane.f32.xlu0 %v4998
  %v5000 = vpop.xlane.xlu0 %4999
  %v5001 = vsel %vm3896, %v4634, 0.0
  %5002 = vadd.xlane.f32.xlu0 %v5001
  %v5003 = vpop.xlane.xlu0 %5002
  %v5004 = vsel %vm3896, %v4636, 0.0
  %5005 = vadd.xlane.f32.xlu0 %v5004
  %v5006 = vpop.xlane.xlu0 %5005
  %v5007 = vsel %vm3896, %v4638, 0.0
  %5008 = vadd.xlane.f32.xlu0 %v5007
  %v5009 = vpop.xlane.xlu0 %5008
  %v5010 = vsel %vm3896, %v4640, 0.0
  %5011 = vadd.xlane.f32.xlu0 %v5010
  %v5012 = vpop.xlane.xlu0 %5011
  %v5013 = vsel %vm3896, %v4642, 0.0
  %5014 = vadd.xlane.f32.xlu0 %v5013
  %v5015 = vpop.xlane.xlu0 %5014
  %v5016 = vsel %vm3896, %v4644, 0.0
  %5017 = vadd.xlane.f32.xlu0 %v5016
  %v5018 = vpop.xlane.xlu0 %5017
  %v5019 = vsel %vm3896, %v4646, 0.0
  %5020 = vadd.xlane.f32.xlu0 %v5019
  %v5021 = vpop.xlane.xlu0 %5020
  %v5022 = vsel %vm3896, %v4648, 0.0
  %5023 = vadd.xlane.f32.xlu0 %v5022
  %v5024 = vpop.xlane.xlu0 %5023
  %v5025 = vsel %vm3896, %v4650, 0.0
  %5026 = vadd.xlane.f32.xlu0 %v5025
  %v5027 = vpop.xlane.xlu0 %5026
  %v5028 = vsel %vm3896, %v4652, 0.0
  %5029 = vadd.xlane.f32.xlu0 %v5028
  %v5030 = vpop.xlane.xlu0 %5029
  %v5031 = vsel %vm3896, %v4654, 0.0
  %5032 = vadd.xlane.f32.xlu0 %v5031
  %v5033 = vpop.xlane.xlu0 %5032
  %v5034 = vsel %vm3896, %v4656, 0.0
  %5035 = vadd.xlane.f32.xlu0 %v5034
  %v5036 = vpop.xlane.xlu0 %5035
  %v5037 = vsel %vm3896, %v4658, 0.0
  %5038 = vadd.xlane.f32.xlu0 %v5037
  %v5039 = vpop.xlane.xlu0 %5038
  %v5040 = vsel %vm3896, %v4660, 0.0
  %5041 = vadd.xlane.f32.xlu0 %v5040
  %v5042 = vpop.xlane.xlu0 %5041
  %v5043 = vsel %vm3896, %v4662, 0.0
  %5044 = vadd.xlane.f32.xlu0 %v5043
  %v5045 = vpop.xlane.xlu0 %5044
  %v5046 = vsel %vm3896, %v4664, 0.0
  %5047 = vadd.xlane.f32.xlu0 %v5046
  %v5048 = vpop.xlane.xlu0 %5047
  %v5049 = vrcp.pop %v4667
  %v5050 = vmul.f32 %v4410, %v5049
  %v5051 = vrcp.pop %v4670
  %v5052 = vmul.f32 %v4412, %v5051
  %v5053 = vrcp.pop %v4673
  %v5054 = vmul.f32 %v4414, %v5053
  %v5055 = vrcp.pop %v4676
  %v5056 = vmul.f32 %v4416, %v5055
  %v5057 = vrcp.pop %v4679
  %v5058 = vmul.f32 %v4418, %v5057
  %v5059 = vrcp.pop %v4682
  %v5060 = vmul.f32 %v4420, %v5059
  %v5061 = vrcp.pop %v4685
  %v5062 = vmul.f32 %v4422, %v5061
  %v5063 = vrcp.pop %v4688
  %v5064 = vmul.f32 %v4424, %v5063
  %v5065 = vrcp.pop %v4691
  %v5066 = vmul.f32 %v4426, %v5065
  %v5067 = vrcp.pop %v4694
  %v5068 = vmul.f32 %v4428, %v5067
  %v5069 = vrcp.pop %v4697
  %v5070 = vmul.f32 %v4430, %v5069
  %v5071 = vrcp.pop %v4700
  %v5072 = vmul.f32 %v4432, %v5071
  %v5073 = vrcp.pop %v4703
  %v5074 = vmul.f32 %v4434, %v5073
  %v5075 = vrcp.pop %v4706
  %v5076 = vmul.f32 %v4436, %v5075
  %v5077 = vrcp.pop %v4709
  %v5078 = vmul.f32 %v4438, %v5077
  %v5079 = vrcp.pop %v4712
  %v5080 = vmul.f32 %v4440, %v5079
  %v5081 = vrcp.pop %v4715
  %v5082 = vmul.f32 %v4442, %v5081
  %v5083 = vrcp.pop %v4718
  %v5084 = vmul.f32 %v4444, %v5083
  %v5085 = vrcp.pop %v4721
  %v5086 = vmul.f32 %v4446, %v5085
  %v5087 = vrcp.pop %v4724
  %v5088 = vmul.f32 %v4448, %v5087
  %v5089 = vrcp.pop %v4727
  %v5090 = vmul.f32 %v4450, %v5089
  %v5091 = vrcp.pop %v4730
  %v5092 = vmul.f32 %v4452, %v5091
  %v5093 = vrcp.pop %v4733
  %v5094 = vmul.f32 %v4454, %v5093
  %v5095 = vrcp.pop %v4736
  %v5096 = vmul.f32 %v4456, %v5095
  %v5097 = vrcp.pop %v4739
  %v5098 = vmul.f32 %v4458, %v5097
  %v5099 = vrcp.pop %v4742
  %v5100 = vmul.f32 %v4460, %v5099
  %v5101 = vrcp.pop %v4745
  %v5102 = vmul.f32 %v4462, %v5101
  %v5103 = vrcp.pop %v4748
  %v5104 = vmul.f32 %v4464, %v5103
  %v5105 = vrcp.pop %v4751
  %v5106 = vmul.f32 %v4466, %v5105
  %v5107 = vrcp.pop %v4754
  %v5108 = vmul.f32 %v4468, %v5107
  %v5109 = vrcp.pop %v4757
  %v5110 = vmul.f32 %v4470, %v5109
  %v5111 = vrcp.pop %v4760
  %v5112 = vmul.f32 %v4472, %v5111
  %v5113 = vrcp.pop %v4763
  %v5114 = vmul.f32 %v4474, %v5113
  %v5115 = vrcp.pop %v4766
  %v5116 = vmul.f32 %v4476, %v5115
  %v5117 = vrcp.pop %v4769
  %v5118 = vmul.f32 %v4478, %v5117
  %v5119 = vrcp.pop %v4772
  %v5120 = vmul.f32 %v4480, %v5119
  %v5121 = vrcp.pop %v4775
  %v5122 = vmul.f32 %v4482, %v5121
  %v5123 = vrcp.pop %v4778
  %v5124 = vmul.f32 %v4484, %v5123
  %v5125 = vrcp.pop %v4781
  %v5126 = vmul.f32 %v4486, %v5125
  %v5127 = vrcp.pop %v4784
  %v5128 = vmul.f32 %v4488, %v5127
  %v5129 = vrcp.pop %v4787
  %v5130 = vmul.f32 %v4490, %v5129
  %v5131 = vrcp.pop %v4790
  %v5132 = vmul.f32 %v4492, %v5131
  %v5133 = vrcp.pop %v4793
  %v5134 = vmul.f32 %v4494, %v5133
  %v5135 = vrcp.pop %v4796
  %v5136 = vmul.f32 %v4496, %v5135
  %v5137 = vrcp.pop %v4799
  %v5138 = vmul.f32 %v4498, %v5137
  %v5139 = vrcp.pop %v4802
  %v5140 = vmul.f32 %v4500, %v5139
  %v5141 = vrcp.pop %v4805
  %v5142 = vmul.f32 %v4502, %v5141
  %v5143 = vrcp.pop %v4808
  %v5144 = vmul.f32 %v4504, %v5143
  %v5145 = vrcp.pop %v4811
  %v5146 = vmul.f32 %v4506, %v5145
  %v5147 = vrcp.pop %v4814
  %v5148 = vmul.f32 %v4508, %v5147
  %v5149 = vrcp.pop %v4817
  %v5150 = vmul.f32 %v4510, %v5149
  %v5151 = vrcp.pop %v4820
  %v5152 = vmul.f32 %v4512, %v5151
  %v5153 = vrcp.pop %v4823
  %v5154 = vmul.f32 %v4514, %v5153
  %v5155 = vrcp.pop %v4826
  %v5156 = vmul.f32 %v4516, %v5155
  %v5157 = vrcp.pop %v4829
  %v5158 = vmul.f32 %v4518, %v5157
  %v5159 = vrcp.pop %v4832
  %v5160 = vmul.f32 %v4520, %v5159
  %v5161 = vrcp.pop %v4835
  %v5162 = vmul.f32 %v4522, %v5161
  %v5163 = vrcp.pop %v4838
  %v5164 = vmul.f32 %v4524, %v5163
  %v5165 = vrcp.pop %v4841
  %v5166 = vmul.f32 %v4526, %v5165
  %v5167 = vrcp.pop %v4844
  %v5168 = vmul.f32 %v4528, %v5167
  %v5169 = vrcp.pop %v4847
  %v5170 = vmul.f32 %v4530, %v5169
  %v5171 = vrcp.pop %v4850
  %v5172 = vmul.f32 %v4532, %v5171
  %v5173 = vrcp.pop %v4853
  %v5174 = vmul.f32 %v4534, %v5173
  %v5175 = vrcp.pop %v4856
  %v5176 = vmul.f32 %v4536, %v5175
  %v5177 = vrcp.pop %v4859
  %v5178 = vmul.f32 %v4538, %v5177
  %v5179 = vrcp.pop %v4862
  %v5180 = vmul.f32 %v4540, %v5179
  %v5181 = vrcp.pop %v4865
  %v5182 = vmul.f32 %v4542, %v5181
  %v5183 = vrcp.pop %v4868
  %v5184 = vmul.f32 %v4544, %v5183
  %v5185 = vrcp.pop %v4871
  %v5186 = vmul.f32 %v4546, %v5185
  %v5187 = vrcp.pop %v4874
  %v5188 = vmul.f32 %v4548, %v5187
  %v5189 = vrcp.pop %v4877
  %v5190 = vmul.f32 %v4550, %v5189
  %v5191 = vrcp.pop %v4880
  %v5192 = vmul.f32 %v4552, %v5191
  %v5193 = vrcp.pop %v4883
  %v5194 = vmul.f32 %v4554, %v5193
  %v5195 = vrcp.pop %v4886
  %v5196 = vmul.f32 %v4556, %v5195
  %v5197 = vrcp.pop %v4889
  %v5198 = vmul.f32 %v4558, %v5197
  %v5199 = vrcp.pop %v4892
  %v5200 = vmul.f32 %v4560, %v5199
  %v5201 = vrcp.pop %v4895
  %v5202 = vmul.f32 %v4562, %v5201
  %v5203 = vrcp.pop %v4898
  %v5204 = vmul.f32 %v4564, %v5203
  %v5205 = vrcp.pop %v4901
  %v5206 = vmul.f32 %v4566, %v5205
  %v5207 = vrcp.pop %v4904
  %v5208 = vmul.f32 %v4568, %v5207
  %v5209 = vrcp.pop %v4907
  %v5210 = vmul.f32 %v4570, %v5209
  %v5211 = vrcp.pop %v4910
  %v5212 = vmul.f32 %v4572, %v5211
  %v5213 = vrcp.pop %v4913
  %v5214 = vmul.f32 %v4574, %v5213
  %v5215 = vrcp.pop %v4916
  %v5216 = vmul.f32 %v4576, %v5215
  %v5217 = vrcp.pop %v4919
  %v5218 = vmul.f32 %v4578, %v5217
  %v5219 = vrcp.pop %v4922
  %v5220 = vmul.f32 %v4580, %v5219
  %v5221 = vrcp.pop %v4925
  %v5222 = vmul.f32 %v4582, %v5221
  %v5223 = vrcp.pop %v4928
  %v5224 = vmul.f32 %v4584, %v5223
  %v5225 = vrcp.pop %v4931
  %v5226 = vmul.f32 %v4586, %v5225
  %v5227 = vrcp.pop %v4934
  %v5228 = vmul.f32 %v4588, %v5227
  %v5229 = vrcp.pop %v4937
  %v5230 = vmul.f32 %v4590, %v5229
  %v5231 = vrcp.pop %v4940
  %v5232 = vmul.f32 %v4592, %v5231
  %v5233 = vrcp.pop %v4943
  %v5234 = vmul.f32 %v4594, %v5233
  %v5235 = vrcp.pop %v4946
  %v5236 = vmul.f32 %v4596, %v5235
  %v5237 = vrcp.pop %v4949
  %v5238 = vmul.f32 %v4598, %v5237
  %v5239 = vrcp.pop %v4952
  %v5240 = vmul.f32 %v4600, %v5239
  %v5241 = vrcp.pop %v4955
  %v5242 = vmul.f32 %v4602, %v5241
  %v5243 = vrcp.pop %v4958
  %v5244 = vmul.f32 %v4604, %v5243
  %v5245 = vrcp.pop %v4961
  %v5246 = vmul.f32 %v4606, %v5245
  %v5247 = vrcp.pop %v4964
  %v5248 = vmul.f32 %v4608, %v5247
  %v5249 = vrcp.pop %v4967
  %v5250 = vmul.f32 %v4610, %v5249
  %v5251 = vrcp.pop %v4970
  %v5252 = vmul.f32 %v4612, %v5251
  %v5253 = vrcp.pop %v4973
  %v5254 = vmul.f32 %v4614, %v5253
  %v5255 = vrcp.pop %v4976
  %v5256 = vmul.f32 %v4616, %v5255
  %v5257 = vrcp.pop %v4979
  %v5258 = vmul.f32 %v4618, %v5257
  %v5259 = vrcp.pop %v4982
  %v5260 = vmul.f32 %v4620, %v5259
  %v5261 = vrcp.pop %v4985
  %v5262 = vmul.f32 %v4622, %v5261
  %v5263 = vrcp.pop %v4988
  %v5264 = vmul.f32 %v4624, %v5263
  %v5265 = vrcp.pop %v4991
  %v5266 = vmul.f32 %v4626, %v5265
  %v5267 = vrcp.pop %v4994
  %v5268 = vmul.f32 %v4628, %v5267
  %v5269 = vrcp.pop %v4997
  %v5270 = vmul.f32 %v4630, %v5269
  %v5271 = vrcp.pop %v5000
  %v5272 = vmul.f32 %v4632, %v5271
  %v5273 = vrcp.pop %v5003
  %v5274 = vmul.f32 %v4634, %v5273
  %v5275 = vrcp.pop %v5006
  %v5276 = vmul.f32 %v4636, %v5275
  %v5277 = vrcp.pop %v5009
  %v5278 = vmul.f32 %v4638, %v5277
  %v5279 = vrcp.pop %v5012
  %v5280 = vmul.f32 %v4640, %v5279
  %v5281 = vrcp.pop %v5015
  %v5282 = vmul.f32 %v4642, %v5281
  %v5283 = vrcp.pop %v5018
  %v5284 = vmul.f32 %v4644, %v5283
  %v5285 = vrcp.pop %v5021
  %v5286 = vmul.f32 %v4646, %v5285
  %v5287 = vrcp.pop %v5024
  %v5288 = vmul.f32 %v4648, %v5287
  %v5289 = vrcp.pop %v5027
  %v5290 = vmul.f32 %v4650, %v5289
  %v5291 = vrcp.pop %v5030
  %v5292 = vmul.f32 %v4652, %v5291
  %v5293 = vrcp.pop %v5033
  %v5294 = vmul.f32 %v4654, %v5293
  %v5295 = vrcp.pop %v5036
  %v5296 = vmul.f32 %v4656, %v5295
  %v5297 = vrcp.pop %v5039
  %v5298 = vmul.f32 %v4658, %v5297
  %v5299 = vrcp.pop %v5042
  %v5300 = vmul.f32 %v4660, %v5299
  %v5301 = vrcp.pop %v5045
  %v5302 = vmul.f32 %v4662, %v5301
  %v5303 = vrcp.pop %v5048
  %v5304 = vmul.f32 %v4664, %v5303
  %v5305 = vpack.c.bf16 %v5052, %v5050
  %v5306 = vpack.c.bf16 %v5056, %v5054
  %v5307 = vpack.c.bf16 %v5060, %v5058
  %v5308 = vpack.c.bf16 %v5064, %v5062
  %v5309 = vpack.c.bf16 %v5068, %v5066
  %v5310 = vpack.c.bf16 %v5072, %v5070
  %v5311 = vpack.c.bf16 %v5076, %v5074
  %v5312 = vpack.c.bf16 %v5080, %v5078
  %v5313 = vpack.c.bf16 %v5084, %v5082
  %v5314 = vpack.c.bf16 %v5088, %v5086
  %v5315 = vpack.c.bf16 %v5092, %v5090
  %v5316 = vpack.c.bf16 %v5096, %v5094
  %v5317 = vpack.c.bf16 %v5100, %v5098
  %v5318 = vpack.c.bf16 %v5104, %v5102
  %v5319 = vpack.c.bf16 %v5108, %v5106
  %v5320 = vpack.c.bf16 %v5112, %v5110
  %v5321 = vpack.c.bf16 %v5116, %v5114
  %v5322 = vpack.c.bf16 %v5120, %v5118
  %v5323 = vpack.c.bf16 %v5124, %v5122
  %v5324 = vpack.c.bf16 %v5128, %v5126
  %v5325 = vpack.c.bf16 %v5132, %v5130
  %v5326 = vpack.c.bf16 %v5136, %v5134
  %v5327 = vpack.c.bf16 %v5140, %v5138
  %v5328 = vpack.c.bf16 %v5144, %v5142
  %v5329 = vpack.c.bf16 %v5148, %v5146
  %v5330 = vpack.c.bf16 %v5152, %v5150
  %v5331 = vpack.c.bf16 %v5156, %v5154
  %v5332 = vpack.c.bf16 %v5160, %v5158
  %v5333 = vpack.c.bf16 %v5164, %v5162
  %v5334 = vpack.c.bf16 %v5168, %v5166
  %v5335 = vpack.c.bf16 %v5172, %v5170
  %v5336 = vpack.c.bf16 %v5176, %v5174
  %v5337 = vpack.c.bf16 %v5180, %v5178
  %v5338 = vpack.c.bf16 %v5184, %v5182
  %v5339 = vpack.c.bf16 %v5188, %v5186
  %v5340 = vpack.c.bf16 %v5192, %v5190
  %v5341 = vpack.c.bf16 %v5196, %v5194
  %v5342 = vpack.c.bf16 %v5200, %v5198
  %v5343 = vpack.c.bf16 %v5204, %v5202
  %v5344 = vpack.c.bf16 %v5208, %v5206
  %v5345 = vpack.c.bf16 %v5212, %v5210
  %v5346 = vpack.c.bf16 %v5216, %v5214
  %v5347 = vpack.c.bf16 %v5220, %v5218
  %v5348 = vpack.c.bf16 %v5224, %v5222
  %v5349 = vpack.c.bf16 %v5228, %v5226
  %v5350 = vpack.c.bf16 %v5232, %v5230
  %v5351 = vpack.c.bf16 %v5236, %v5234
  %v5352 = vpack.c.bf16 %v5240, %v5238
  %v5353 = vpack.c.bf16 %v5244, %v5242
  %v5354 = vpack.c.bf16 %v5248, %v5246
  %v5355 = vpack.c.bf16 %v5252, %v5250
  %v5356 = vpack.c.bf16 %v5256, %v5254
  %v5357 = vpack.c.bf16 %v5260, %v5258
  %v5358 = vpack.c.bf16 %v5264, %v5262
  %v5359 = vpack.c.bf16 %v5268, %v5266
  %v5360 = vpack.c.bf16 %v5272, %v5270
  %v5361 = vpack.c.bf16 %v5276, %v5274
  %v5362 = vpack.c.bf16 %v5280, %v5278
  %v5363 = vpack.c.bf16 %v5284, %v5282
  %v5364 = vpack.c.bf16 %v5288, %v5286
  %v5365 = vpack.c.bf16 %v5292, %v5290
  %v5366 = vpack.c.bf16 %v5296, %v5294
  %v5367 = vpack.c.bf16 %v5300, %v5298
  %v5368 = vpack.c.bf16 %v5304, %v5302
  %5370 = vrot.lane.b32.xlu0 %v512, 64
  %v5371 = vpop.permute.xlu0 %5370
  %v5374 = vsel %vm3896, %v5305, 0
  %5376 = vmatprep.subr.bf16.mxu0 0
  %5377 = vmatpush1.bf16.msra.mxu0 %v5371
  %5378 = vmatprep.subr.bf16.mxu0 0
  %5379 = vmatpush1.bf16.msra.mxu0 0
  %5380 = vmatprep.subr.bf16.mxu0 0
  %5381 = vmatpush1.bf16.msra.mxu0 0
  %5382 = vmatprep.subr.bf16.mxu0 0
  %5383 = vmatpush1.bf16.msra.mxu0 0
  %5384 = vmatprep.subr.bf16.mxu0 0
  %5385 = vmatpush1.bf16.msra.mxu0 0
  %5386 = vmatprep.subr.bf16.mxu0 0
  %5387 = vmatpush1.bf16.msra.mxu0 0
  %5388 = vmatprep.subr.bf16.mxu0 0
  %5389 = vmatpush1.bf16.msra.mxu0 0
  %5390 = vmatprep.subr.bf16.mxu0 0
  %5391 = vmatpush1.bf16.msra.mxu0 0
  %5392 = vmatprep.subr.bf16.mxu0 0
  %5393 = vmatpush1.bf16.msra.mxu0 0
  %5394 = vmatprep.subr.bf16.mxu0 0
  %5395 = vmatpush1.bf16.msra.mxu0 0
  %5396 = vmatprep.subr.bf16.mxu0 0
  %5397 = vmatpush1.bf16.msra.mxu0 0
  %5398 = vmatprep.subr.bf16.mxu0 0
  %5399 = vmatpush1.bf16.msra.mxu0 0
  %5400 = vmatprep.subr.bf16.mxu0 0
  %5401 = vmatpush1.bf16.msra.mxu0 0
  %5402 = vmatprep.subr.bf16.mxu0 0
  %5403 = vmatpush1.bf16.msra.mxu0 0
  %5404 = vmatprep.subr.bf16.mxu0 0
  %5405 = vmatpush1.bf16.msra.mxu0 0
  %5406 = vmatprep.subr.bf16.mxu0 0
  %5407 = vmatpush1.bf16.msra.mxu0 0
  %5408 = vmatprep.mubr.bf16.mxu0 0
  %5409 = vmatmul.mubr.bf16.gmra.mrb[0].mxu0 %v5374
  %v5410 = vpop.f32.mrb[0].mxu0
  %v5411 = vadd.f32 0.0, %v5410
  %v5412 = vpop.f32.mrb[0].mxu0
  %v5413 = vpop.f32.mrb[0].mxu0
  %v5414 = vadd.f32 0.0, %v5413
  %v5415 = vpop.f32.mrb[0].mxu0
  %5416 = vdwg.mxu0
  %5418 = vrot.lane.b32.xlu0 %v513, 64
  %v5419 = vpop.permute.xlu0 %5418
  %v5422 = vsel %vm3896, %v5306, 0
  %5424 = vmatprep.subr.bf16.mxu0 0
  %5425 = vmatpush1.bf16.msra.mxu0 %v5419
  %5426 = vmatprep.subr.bf16.mxu0 0
  %5427 = vmatpush1.bf16.msra.mxu0 0
  %5428 = vmatprep.subr.bf16.mxu0 0
  %5429 = vmatpush1.bf16.msra.mxu0 0
  %5430 = vmatprep.subr.bf16.mxu0 0
  %5431 = vmatpush1.bf16.msra.mxu0 0
  %5432 = vmatprep.subr.bf16.mxu0 0
  %5433 = vmatpush1.bf16.msra.mxu0 0
  %5434 = vmatprep.subr.bf16.mxu0 0
  %5435 = vmatpush1.bf16.msra.mxu0 0
  %5436 = vmatprep.subr.bf16.mxu0 0
  %5437 = vmatpush1.bf16.msra.mxu0 0
  %5438 = vmatprep.subr.bf16.mxu0 0
  %5439 = vmatpush1.bf16.msra.mxu0 0
  %5440 = vmatprep.subr.bf16.mxu0 0
  %5441 = vmatpush1.bf16.msra.mxu0 0
  %5442 = vmatprep.subr.bf16.mxu0 0
  %5443 = vmatpush1.bf16.msra.mxu0 0
  %5444 = vmatprep.subr.bf16.mxu0 0
  %5445 = vmatpush1.bf16.msra.mxu0 0
  %5446 = vmatprep.subr.bf16.mxu0 0
  %5447 = vmatpush1.bf16.msra.mxu0 0
  %5448 = vmatprep.subr.bf16.mxu0 0
  %5449 = vmatpush1.bf16.msra.mxu0 0
  %5450 = vmatprep.subr.bf16.mxu0 0
  %5451 = vmatpush1.bf16.msra.mxu0 0
  %5452 = vmatprep.subr.bf16.mxu0 0
  %5453 = vmatpush1.bf16.msra.mxu0 0
  %5454 = vmatprep.subr.bf16.mxu0 0
  %5455 = vmatpush1.bf16.msra.mxu0 0
  %5456 = vmatprep.mubr.bf16.mxu0 0
  %5457 = vmatmul.mubr.bf16.gmra.mrb[0].mxu0 %v5422
  %v5458 = vpop.f32.mrb[0].mxu0
  %v5459 = vadd.f32 0.0, %v5458
  %v5460 = vpop.f32.mrb[0].mxu0
  %v5461 = vpop.f32.mrb[0].mxu0
  %v5462 = vadd.f32 0.0, %v5461
  %v5463 = vpop.f32.mrb[0].mxu0
  %5464 = vdwg.mxu0
  %5466 = vrot.lane.b32.xlu0 %v514, 64
  %v5467 = vpop.permute.xlu0 %5466
  %v5470 = vsel %vm3896, %v5307, 0
  %5472 = vmatprep.subr.bf16.mxu0 0
  %5473 = vmatpush1.bf16.msra.mxu0 %v5467
  %5474 = vmatprep.subr.bf16.mxu0 0
  %5475 = vmatpush1.bf16.msra.mxu0 0
  %5476 = vmatprep.subr.bf16.mxu0 0
  %5477 = vmatpush1.bf16.msra.mxu0 0
  %5478 = vmatprep.subr.bf16.mxu0 0
  %5479 = vmatpush1.bf16.msra.mxu0 0
  %5480 = vmatprep.subr.bf16.mxu0 0
  %5481 = vmatpush1.bf16.msra.mxu0 0
  %5482 = vmatprep.subr.bf16.mxu0 0
  %5483 = vmatpush1.bf16.msra.mxu0 0
  %5484 = vmatprep.subr.bf16.mxu0 0
  %5485 = vmatpush1.bf16.msra.mxu0 0
  %5486 = vmatprep.subr.bf16.mxu0 0
  %5487 = vmatpush1.bf16.msra.mxu0 0
  %5488 = vmatprep.subr.bf16.mxu0 0
  %5489 = vmatpush1.bf16.msra.mxu0 0
  %5490 = vmatprep.subr.bf16.mxu0 0
  %5491 = vmatpush1.bf16.msra.mxu0 0
  %5492 = vmatprep.subr.bf16.mxu0 0
  %5493 = vmatpush1.bf16.msra.mxu0 0
  %5494 = vmatprep.subr.bf16.mxu0 0
  %5495 = vmatpush1.bf16.msra.mxu0 0
  %5496 = vmatprep.subr.bf16.mxu0 0
  %5497 = vmatpush1.bf16.msra.mxu0 0
  %5498 = vmatprep.subr.bf16.mxu0 0
  %5499 = vmatpush1.bf16.msra.mxu0 0
  %5500 = vmatprep.subr.bf16.mxu0 0
  %5501 = vmatpush1.bf16.msra.mxu0 0
  %5502 = vmatprep.subr.bf16.mxu0 0
  %5503 = vmatpush1.bf16.msra.mxu0 0
  %5504 = vmatprep.mubr.bf16.mxu0 0
  %5505 = vmatmul.mubr.bf16.gmra.mrb[0].mxu0 %v5470
  %v5506 = vpop.f32.mrb[0].mxu0
  %v5507 = vadd.f32 0.0, %v5506
  %v5508 = vpop.f32.mrb[0].mxu0
  %v5509 = vpop.f32.mrb[0].mxu0
  %v5510 = vadd.f32 0.0, %v5509
  %v5511 = vpop.f32.mrb[0].mxu0
  %5512 = vdwg.mxu0
  %5514 = vrot.lane.b32.xlu0 %v515, 64
  %v5515 = vpop.permute.xlu0 %5514
  %v5518 = vsel %vm3896, %v5308, 0
  %5520 = vmatprep.subr.bf16.mxu0 0
  %5521 = vmatpush1.bf16.msra.mxu0 %v5515
  %5522 = vmatprep.subr.bf16.mxu0 0
  %5523 = vmatpush1.bf16.msra.mxu0 0
  %5524 = vmatprep.subr.bf16.mxu0 0
  %5525 = vmatpush1.bf16.msra.mxu0 0
  %5526 = vmatprep.subr.bf16.mxu0 0
  %5527 = vmatpush1.bf16.msra.mxu0 0
  %5528 = vmatprep.subr.bf16.mxu0 0
  %5529 = vmatpush1.bf16.msra.mxu0 0
  %5530 = vmatprep.subr.bf16.mxu0 0
  %5531 = vmatpush1.bf16.msra.mxu0 0
  %5532 = vmatprep.subr.bf16.mxu0 0
  %5533 = vmatpush1.bf16.msra.mxu0 0
  %5534 = vmatprep.subr.bf16.mxu0 0
  %5535 = vmatpush1.bf16.msra.mxu0 0
  %5536 = vmatprep.subr.bf16.mxu0 0
  %5537 = vmatpush1.bf16.msra.mxu0 0
  %5538 = vmatprep.subr.bf16.mxu0 0
  %5539 = vmatpush1.bf16.msra.mxu0 0
  %5540 = vmatprep.subr.bf16.mxu0 0
  %5541 = vmatpush1.bf16.msra.mxu0 0
  %5542 = vmatprep.subr.bf16.mxu0 0
  %5543 = vmatpush1.bf16.msra.mxu0 0
  %5544 = vmatprep.subr.bf16.mxu0 0
  %5545 = vmatpush1.bf16.msra.mxu0 0
  %5546 = vmatprep.subr.bf16.mxu0 0
  %5547 = vmatpush1.bf16.msra.mxu0 0
  %5548 = vmatprep.subr.bf16.mxu0 0
  %5549 = vmatpush1.bf16.msra.mxu0 0
  %5550 = vmatprep.subr.bf16.mxu0 0
  %5551 = vmatpush1.bf16.msra.mxu0 0
  %5552 = vmatprep.mubr.bf16.mxu0 0
  %5553 = vmatmul.mubr.bf16.gmra.mrb[0].mxu0 %v5518
  %v5554 = vpop.f32.mrb[0].mxu0
  %v5555 = vadd.f32 0.0, %v5554
  %v5556 = vpop.f32.mrb[0].mxu0
  %v5557 = vpop.f32.mrb[0].mxu0
  %v5558 = vadd.f32 0.0, %v5557
  %v5559 = vpop.f32.mrb[0].mxu0
  %5560 = vdwg.mxu0
  %5562 = vrot.lane.b32.xlu0 %v516, 64
  %v5563 = vpop.permute.xlu0 %5562
  %v5566 = vsel %vm3896, %v5309, 0
  %5568 = vmatprep.subr.bf16.mxu0 0
  %5569 = vmatpush1.bf16.msra.mxu0 %v5563
  %5570 = vmatprep.subr.bf16.mxu0 0
  %5571 = vmatpush1.bf16.msra.mxu0 0
  %5572 = vmatprep.subr.bf16.mxu0 0
  %5573 = vmatpush1.bf16.msra.mxu0 0
  %5574 = vmatprep.subr.bf16.mxu0 0
  %5575 = vmatpush1.bf16.msra.mxu0 0
  %5576 = vmatprep.subr.bf16.mxu0 0
  %5577 = vmatpush1.bf16.msra.mxu0 0
  %5578 = vmatprep.subr.bf16.mxu0 0
  %5579 = vmatpush1.bf16.msra.mxu0 0
  %5580 = vmatprep.subr.bf16.mxu0 0
  %5581 = vmatpush1.bf16.msra.mxu0 0
  %5582 = vmatprep.subr.bf16.mxu0 0
  %5583 = vmatpush1.bf16.msra.mxu0 0
  %5584 = vmatprep.subr.bf16.mxu0 0
  %5585 = vmatpush1.bf16.msra.mxu0 0
  %5586 = vmatprep.subr.bf16.mxu0 0
  %5587 = vmatpush1.bf16.msra.mxu0 0
  %5588 = vmatprep.subr.bf16.mxu0 0
  %5589 = vmatpush1.bf16.msra.mxu0 0
  %5590 = vmatprep.subr.bf16.mxu0 0
  %5591 = vmatpush1.bf16.msra.mxu0 0
  %5592 = vmatprep.subr.bf16.mxu0 0
  %5593 = vmatpush1.bf16.msra.mxu0 0
  %5594 = vmatprep.subr.bf16.mxu0 0
  %5595 = vmatpush1.bf16.msra.mxu0 0
  %5596 = vmatprep.subr.bf16.mxu0 0
  %5597 = vmatpush1.bf16.msra.mxu0 0
  %5598 = vmatprep.subr.bf16.mxu0 0
  %5599 = vmatpush1.bf16.msra.mxu0 0
  %5600 = vmatprep.mubr.bf16.mxu0 0
  %5601 = vmatmul.mubr.bf16.gmra.mrb[0].mxu0 %v5566
  %v5602 = vpop.f32.mrb[0].mxu0
  %v5603 = vadd.f32 0.0, %v5602
  %v5604 = vpop.f32.mrb[0].mxu0
  %v5605 = vpop.f32.mrb[0].mxu0
  %v5606 = vadd.f32 0.0, %v5605
  %v5607 = vpop.f32.mrb[0].mxu0
  %5608 = vdwg.mxu0
  %5610 = vrot.lane.b32.xlu0 %v517, 64
  %v5611 = vpop.permute.xlu0 %5610
  %v5614 = vsel %vm3896, %v5310, 0
  %5616 = vmatprep.subr.bf16.mxu0 0
  %5617 = vmatpush1.bf16.msra.mxu0 %v5611
  %5618 = vmatprep.subr.bf16.mxu0 0
  %5619 = vmatpush1.bf16.msra.mxu0 0
  %5620 = vmatprep.subr.bf16.mxu0 0
  %5621 = vmatpush1.bf16.msra.mxu0 0
  %5622 = vmatprep.subr.bf16.mxu0 0
  %5623 = vmatpush1.bf16.msra.mxu0 0
  %5624 = vmatprep.subr.bf16.mxu0 0
  %5625 = vmatpush1.bf16.msra.mxu0 0
  %5626 = vmatprep.subr.bf16.mxu0 0
  %5627 = vmatpush1.bf16.msra.mxu0 0
  %5628 = vmatprep.subr.bf16.mxu0 0
  %5629 = vmatpush1.bf16.msra.mxu0 0
  %5630 = vmatprep.subr.bf16.mxu0 0
  %5631 = vmatpush1.bf16.msra.mxu0 0
  %5632 = vmatprep.subr.bf16.mxu0 0
  %5633 = vmatpush1.bf16.msra.mxu0 0
  %5634 = vmatprep.subr.bf16.mxu0 0
  %5635 = vmatpush1.bf16.msra.mxu0 0
  %5636 = vmatprep.subr.bf16.mxu0 0
  %5637 = vmatpush1.bf16.msra.mxu0 0
  %5638 = vmatprep.subr.bf16.mxu0 0
  %5639 = vmatpush1.bf16.msra.mxu0 0
  %5640 = vmatprep.subr.bf16.mxu0 0
  %5641 = vmatpush1.bf16.msra.mxu0 0
  %5642 = vmatprep.subr.bf16.mxu0 0
  %5643 = vmatpush1.bf16.msra.mxu0 0
  %5644 = vmatprep.subr.bf16.mxu0 0
  %5645 = vmatpush1.bf16.msra.mxu0 0
  %5646 = vmatprep.subr.bf16.mxu0 0
  %5647 = vmatpush1.bf16.msra.mxu0 0
  %5648 = vmatprep.mubr.bf16.mxu0 0
  %5649 = vmatmul.mubr.bf16.gmra.mrb[0].mxu0 %v5614
  %v5650 = vpop.f32.mrb[0].mxu0
  %v5651 = vadd.f32 0.0, %v5650
  %v5652 = vpop.f32.mrb[0].mxu0
  %v5653 = vpop.f32.mrb[0].mxu0
  %v5654 = vadd.f32 0.0, %v5653
  %v5655 = vpop.f32.mrb[0].mxu0
  %5656 = vdwg.mxu0
  %5658 = vrot.lane.b32.xlu0 %v518, 64
  %v5659 = vpop.permute.xlu0 %5658
  %v5662 = vsel %vm3896, %v5311, 0
  %5664 = vmatprep.subr.bf16.mxu0 0
  %5665 = vmatpush1.bf16.msra.mxu0 %v5659
  %5666 = vmatprep.subr.bf16.mxu0 0
  %5667 = vmatpush1.bf16.msra.mxu0 0
  %5668 = vmatprep.subr.bf16.mxu0 0
  %5669 = vmatpush1.bf16.msra.mxu0 0
  %5670 = vmatprep.subr.bf16.mxu0 0
  %5671 = vmatpush1.bf16.msra.mxu0 0
  %5672 = vmatprep.subr.bf16.mxu0 0
  %5673 = vmatpush1.bf16.msra.mxu0 0
  %5674 = vmatprep.subr.bf16.mxu0 0
  %5675 = vmatpush1.bf16.msra.mxu0 0
  %5676 = vmatprep.subr.bf16.mxu0 0
  %5677 = vmatpush1.bf16.msra.mxu0 0
  %5678 = vmatprep.subr.bf16.mxu0 0
  %5679 = vmatpush1.bf16.msra.mxu0 0
  %5680 = vmatprep.subr.bf16.mxu0 0
  %5681 = vmatpush1.bf16.msra.mxu0 0
  %5682 = vmatprep.subr.bf16.mxu0 0
  %5683 = vmatpush1.bf16.msra.mxu0 0
  %5684 = vmatprep.subr.bf16.mxu0 0
  %5685 = vmatpush1.bf16.msra.mxu0 0
  %5686 = vmatprep.subr.bf16.mxu0 0
  %5687 = vmatpush1.bf16.msra.mxu0 0
  %5688 = vmatprep.subr.bf16.mxu0 0
  %5689 = vmatpush1.bf16.msra.mxu0 0
  %5690 = vmatprep.subr.bf16.mxu0 0
  %5691 = vmatpush1.bf16.msra.mxu0 0
  %5692 = vmatprep.subr.bf16.mxu0 0
  %5693 = vmatpush1.bf16.msra.mxu0 0
  %5694 = vmatprep.subr.bf16.mxu0 0
  %5695 = vmatpush1.bf16.msra.mxu0 0
  %5696 = vmatprep.mubr.bf16.mxu0 0
  %5697 = vmatmul.mubr.bf16.gmra.mrb[0].mxu0 %v5662
  %v5698 = vpop.f32.mrb[0].mxu0
  %v5699 = vadd.f32 0.0, %v5698
  %v5700 = vpop.f32.mrb[0].mxu0
  %v5701 = vpop.f32.mrb[0].mxu0
  %v5702 = vadd.f32 0.0, %v5701
  %v5703 = vpop.f32.mrb[0].mxu0
  %5704 = vdwg.mxu0
  %5706 = vrot.lane.b32.xlu0 %v519, 64
  %v5707 = vpop.permute.xlu0 %5706
  %v5710 = vsel %vm3896, %v5312, 0
  %5712 = vmatprep.subr.bf16.mxu0 0
  %5713 = vmatpush1.bf16.msra.mxu0 %v5707
  %5714 = vmatprep.subr.bf16.mxu0 0
  %5715 = vmatpush1.bf16.msra.mxu0 0
  %5716 = vmatprep.subr.bf16.mxu0 0
  %5717 = vmatpush1.bf16.msra.mxu0 0
  %5718 = vmatprep.subr.bf16.mxu0 0
  %5719 = vmatpush1.bf16.msra.mxu0 0
  %5720 = vmatprep.subr.bf16.mxu0 0
  %5721 = vmatpush1.bf16.msra.mxu0 0
  %5722 = vmatprep.subr.bf16.mxu0 0
  %5723 = vmatpush1.bf16.msra.mxu0 0
  %5724 = vmatprep.subr.bf16.mxu0 0
  %5725 = vmatpush1.bf16.msra.mxu0 0
  %5726 = vmatprep.subr.bf16.mxu0 0
  %5727 = vmatpush1.bf16.msra.mxu0 0
  %5728 = vmatprep.subr.bf16.mxu0 0
  %5729 = vmatpush1.bf16.msra.mxu0 0
  %5730 = vmatprep.subr.bf16.mxu0 0
  %5731 = vmatpush1.bf16.msra.mxu0 0
  %5732 = vmatprep.subr.bf16.mxu0 0
  %5733 = vmatpush1.bf16.msra.mxu0 0
  %5734 = vmatprep.subr.bf16.mxu0 0
  %5735 = vmatpush1.bf16.msra.mxu0 0
  %5736 = vmatprep.subr.bf16.mxu0 0
  %5737 = vmatpush1.bf16.msra.mxu0 0
  %5738 = vmatprep.subr.bf16.mxu0 0
  %5739 = vmatpush1.bf16.msra.mxu0 0
  %5740 = vmatprep.subr.bf16.mxu0 0
  %5741 = vmatpush1.bf16.msra.mxu0 0
  %5742 = vmatprep.subr.bf16.mxu0 0
  %5743 = vmatpush1.bf16.msra.mxu0 0
  %5744 = vmatprep.mubr.bf16.mxu0 0
  %5745 = vmatmul.mubr.bf16.gmra.mrb[0].mxu0 %v5710
  %v5746 = vpop.f32.mrb[0].mxu0
  %v5747 = vadd.f32 0.0, %v5746
  %v5748 = vpop.f32.mrb[0].mxu0
  %v5749 = vpop.f32.mrb[0].mxu0
  %v5750 = vadd.f32 0.0, %v5749
  %v5751 = vpop.f32.mrb[0].mxu0
  %5752 = vdwg.mxu0
  %5754 = vrot.lane.b32.xlu0 %v520, 64
  %v5755 = vpop.permute.xlu0 %5754
  %v5758 = vsel %vm3896, %v5313, 0
  %5760 = vmatprep.subr.bf16.mxu0 0
  %5761 = vmatpush1.bf16.msra.mxu0 %v5755
  %5762 = vmatprep.subr.bf16.mxu0 0
  %5763 = vmatpush1.bf16.msra.mxu0 0
  %5764 = vmatprep.subr.bf16.mxu0 0
  %5765 = vmatpush1.bf16.msra.mxu0 0
  %5766 = vmatprep.subr.bf16.mxu0 0
  %5767 = vmatpush1.bf16.msra.mxu0 0
  %5768 = vmatprep.subr.bf16.mxu0 0
  %5769 = vmatpush1.bf16.msra.mxu0 0
  %5770 = vmatprep.subr.bf16.mxu0 0
  %5771 = vmatpush1.bf16.msra.mxu0 0
  %5772 = vmatprep.subr.bf16.mxu0 0
  %5773 = vmatpush1.bf16.msra.mxu0 0
  %5774 = vmatprep.subr.bf16.mxu0 0
  %5775 = vmatpush1.bf16.msra.mxu0 0
  %5776 = vmatprep.subr.bf16.mxu0 0
  %5777 = vmatpush1.bf16.msra.mxu0 0
  %5778 = vmatprep.subr.bf16.mxu0 0
  %5779 = vmatpush1.bf16.msra.mxu0 0
  %5780 = vmatprep.subr.bf16.mxu0 0
  %5781 = vmatpush1.bf16.msra.mxu0 0
  %5782 = vmatprep.subr.bf16.mxu0 0
  %5783 = vmatpush1.bf16.msra.mxu0 0
  %5784 = vmatprep.subr.bf16.mxu0 0
  %5785 = vmatpush1.bf16.msra.mxu0 0
  %5786 = vmatprep.subr.bf16.mxu0 0
  %5787 = vmatpush1.bf16.msra.mxu0 0
  %5788 = vmatprep.subr.bf16.mxu0 0
  %5789 = vmatpush1.bf16.msra.mxu0 0
  %5790 = vmatprep.subr.bf16.mxu0 0
  %5791 = vmatpush1.bf16.msra.mxu0 0
  %5792 = vmatprep.mubr.bf16.mxu0 0
  %5793 = vmatmul.mubr.bf16.gmra.mrb[0].mxu0 %v5758
  %v5794 = vpop.f32.mrb[0].mxu0
  %v5795 = vadd.f32 0.0, %v5794
  %v5796 = vpop.f32.mrb[0].mxu0
  %v5797 = vpop.f32.mrb[0].mxu0
  %v5798 = vadd.f32 0.0, %v5797
  %v5799 = vpop.f32.mrb[0].mxu0
  %5800 = vdwg.mxu0
  %5802 = vrot.lane.b32.xlu0 %v521, 64
  %v5803 = vpop.permute.xlu0 %5802
  %v5806 = vsel %vm3896, %v5314, 0
  %5808 = vmatprep.subr.bf16.mxu0 0
  %5809 = vmatpush1.bf16.msra.mxu0 %v5803
  %5810 = vmatprep.subr.bf16.mxu0 0
  %5811 = vmatpush1.bf16.msra.mxu0 0
  %5812 = vmatprep.subr.bf16.mxu0 0
  %5813 = vmatpush1.bf16.msra.mxu0 0
  %5814 = vmatprep.subr.bf16.mxu0 0
  %5815 = vmatpush1.bf16.msra.mxu0 0
  %5816 = vmatprep.subr.bf16.mxu0 0
  %5817 = vmatpush1.bf16.msra.mxu0 0
  %5818 = vmatprep.subr.bf16.mxu0 0
  %5819 = vmatpush1.bf16.msra.mxu0 0
  %5820 = vmatprep.subr.bf16.mxu0 0
  %5821 = vmatpush1.bf16.msra.mxu0 0
  %5822 = vmatprep.subr.bf16.mxu0 0
  %5823 = vmatpush1.bf16.msra.mxu0 0
  %5824 = vmatprep.subr.bf16.mxu0 0
  %5825 = vmatpush1.bf16.msra.mxu0 0
  %5826 = vmatprep.subr.bf16.mxu0 0
  %5827 = vmatpush1.bf16.msra.mxu0 0
  %5828 = vmatprep.subr.bf16.mxu0 0
  %5829 = vmatpush1.bf16.msra.mxu0 0
  %5830 = vmatprep.subr.bf16.mxu0 0
  %5831 = vmatpush1.bf16.msra.mxu0 0
  %5832 = vmatprep.subr.bf16.mxu0 0
  %5833 = vmatpush1.bf16.msra.mxu0 0
  %5834 = vmatprep.subr.bf16.mxu0 0
  %5835 = vmatpush1.bf16.msra.mxu0 0
  %5836 = vmatprep.subr.bf16.mxu0 0
  %5837 = vmatpush1.bf16.msra.mxu0 0
  %5838 = vmatprep.subr.bf16.mxu0 0
  %5839 = vmatpush1.bf16.msra.mxu0 0
  %5840 = vmatprep.mubr.bf16.mxu0 0
  %5841 = vmatmul.mubr.bf16.gmra.mrb[0].mxu0 %v5806
  %v5842 = vpop.f32.mrb[0].mxu0
  %v5843 = vadd.f32 0.0, %v5842
  %v5844 = vpop.f32.mrb[0].mxu0
  %v5845 = vpop.f32.mrb[0].mxu0
  %v5846 = vadd.f32 0.0, %v5845
  %v5847 = vpop.f32.mrb[0].mxu0
  %5848 = vdwg.mxu0
  %5850 = vrot.lane.b32.xlu0 %v522, 64
  %v5851 = vpop.permute.xlu0 %5850
  %v5854 = vsel %vm3896, %v5315, 0
  %5856 = vmatprep.subr.bf16.mxu0 0
  %5857 = vmatpush1.bf16.msra.mxu0 %v5851
  %5858 = vmatprep.subr.bf16.mxu0 0
  %5859 = vmatpush1.bf16.msra.mxu0 0
  %5860 = vmatprep.subr.bf16.mxu0 0
  %5861 = vmatpush1.bf16.msra.mxu0 0
  %5862 = vmatprep.subr.bf16.mxu0 0
  %5863 = vmatpush1.bf16.msra.mxu0 0
  %5864 = vmatprep.subr.bf16.mxu0 0
  %5865 = vmatpush1.bf16.msra.mxu0 0
  %5866 = vmatprep.subr.bf16.mxu0 0
  %5867 = vmatpush1.bf16.msra.mxu0 0
  %5868 = vmatprep.subr.bf16.mxu0 0
  %5869 = vmatpush1.bf16.msra.mxu0 0
  %5870 = vmatprep.subr.bf16.mxu0 0
  %5871 = vmatpush1.bf16.msra.mxu0 0
  %5872 = vmatprep.subr.bf16.mxu0 0
  %5873 = vmatpush1.bf16.msra.mxu0 0
  %5874 = vmatprep.subr.bf16.mxu0 0
  %5875 = vmatpush1.bf16.msra.mxu0 0
  %5876 = vmatprep.subr.bf16.mxu0 0
  %5877 = vmatpush1.bf16.msra.mxu0 0
  %5878 = vmatprep.subr.bf16.mxu0 0
  %5879 = vmatpush1.bf16.msra.mxu0 0
  %5880 = vmatprep.subr.bf16.mxu0 0
  %5881 = vmatpush1.bf16.msra.mxu0 0
  %5882 = vmatprep.subr.bf16.mxu0 0
  %5883 = vmatpush1.bf16.msra.mxu0 0
  %5884 = vmatprep.subr.bf16.mxu0 0
  %5885 = vmatpush1.bf16.msra.mxu0 0
  %5886 = vmatprep.subr.bf16.mxu0 0
  %5887 = vmatpush1.bf16.msra.mxu0 0
  %5888 = vmatprep.mubr.bf16.mxu0 0
  %5889 = vmatmul.mubr.bf16.gmra.mrb[0].mxu0 %v5854
  %v5890 = vpop.f32.mrb[0].mxu0
  %v5891 = vadd.f32 0.0, %v5890
  %v5892 = vpop.f32.mrb[0].mxu0
  %v5893 = vpop.f32.mrb[0].mxu0
  %v5894 = vadd.f32 0.0, %v5893
  %v5895 = vpop.f32.mrb[0].mxu0
  %5896 = vdwg.mxu0
  %5898 = vrot.lane.b32.xlu0 %v523, 64
  %v5899 = vpop.permute.xlu0 %5898
  %v5902 = vsel %vm3896, %v5316, 0
  %5904 = vmatprep.subr.bf16.mxu0 0
  %5905 = vmatpush1.bf16.msra.mxu0 %v5899
  %5906 = vmatprep.subr.bf16.mxu0 0
  %5907 = vmatpush1.bf16.msra.mxu0 0
  %5908 = vmatprep.subr.bf16.mxu0 0
  %5909 = vmatpush1.bf16.msra.mxu0 0
  %5910 = vmatprep.subr.bf16.mxu0 0
  %5911 = vmatpush1.bf16.msra.mxu0 0
  %5912 = vmatprep.subr.bf16.mxu0 0
  %5913 = vmatpush1.bf16.msra.mxu0 0
  %5914 = vmatprep.subr.bf16.mxu0 0
  %5915 = vmatpush1.bf16.msra.mxu0 0
  %5916 = vmatprep.subr.bf16.mxu0 0
  %5917 = vmatpush1.bf16.msra.mxu0 0
  %5918 = vmatprep.subr.bf16.mxu0 0
  %5919 = vmatpush1.bf16.msra.mxu0 0
  %5920 = vmatprep.subr.bf16.mxu0 0
  %5921 = vmatpush1.bf16.msra.mxu0 0
  %5922 = vmatprep.subr.bf16.mxu0 0
  %5923 = vmatpush1.bf16.msra.mxu0 0
  %5924 = vmatprep.subr.bf16.mxu0 0
  %5925 = vmatpush1.bf16.msra.mxu0 0
  %5926 = vmatprep.subr.bf16.mxu0 0
  %5927 = vmatpush1.bf16.msra.mxu0 0
  %5928 = vmatprep.subr.bf16.mxu0 0
  %5929 = vmatpush1.bf16.msra.mxu0 0
  %5930 = vmatprep.subr.bf16.mxu0 0
  %5931 = vmatpush1.bf16.msra.mxu0 0
  %5932 = vmatprep.subr.bf16.mxu0 0
  %5933 = vmatpush1.bf16.msra.mxu0 0
  %5934 = vmatprep.subr.bf16.mxu0 0
  %5935 = vmatpush1.bf16.msra.mxu0 0
  %5936 = vmatprep.mubr.bf16.mxu0 0
  %5937 = vmatmul.mubr.bf16.gmra.mrb[0].mxu0 %v5902
  %v5938 = vpop.f32.mrb[0].mxu0
  %v5939 = vadd.f32 0.0, %v5938
  %v5940 = vpop.f32.mrb[0].mxu0
  %v5941 = vpop.f32.mrb[0].mxu0
  %v5942 = vadd.f32 0.0, %v5941
  %v5943 = vpop.f32.mrb[0].mxu0
  %5944 = vdwg.mxu0
  %5946 = vrot.lane.b32.xlu0 %v524, 64
  %v5947 = vpop.permute.xlu0 %5946
  %v5950 = vsel %vm3896, %v5317, 0
  %5952 = vmatprep.subr.bf16.mxu0 0
  %5953 = vmatpush1.bf16.msra.mxu0 %v5947
  %5954 = vmatprep.subr.bf16.mxu0 0
  %5955 = vmatpush1.bf16.msra.mxu0 0
  %5956 = vmatprep.subr.bf16.mxu0 0
  %5957 = vmatpush1.bf16.msra.mxu0 0
  %5958 = vmatprep.subr.bf16.mxu0 0
  %5959 = vmatpush1.bf16.msra.mxu0 0
  %5960 = vmatprep.subr.bf16.mxu0 0
  %5961 = vmatpush1.bf16.msra.mxu0 0
  %5962 = vmatprep.subr.bf16.mxu0 0
  %5963 = vmatpush1.bf16.msra.mxu0 0
  %5964 = vmatprep.subr.bf16.mxu0 0
  %5965 = vmatpush1.bf16.msra.mxu0 0
  %5966 = vmatprep.subr.bf16.mxu0 0
  %5967 = vmatpush1.bf16.msra.mxu0 0
  %5968 = vmatprep.subr.bf16.mxu0 0
  %5969 = vmatpush1.bf16.msra.mxu0 0
  %5970 = vmatprep.subr.bf16.mxu0 0
  %5971 = vmatpush1.bf16.msra.mxu0 0
  %5972 = vmatprep.subr.bf16.mxu0 0
  %5973 = vmatpush1.bf16.msra.mxu0 0
  %5974 = vmatprep.subr.bf16.mxu0 0
  %5975 = vmatpush1.bf16.msra.mxu0 0
  %5976 = vmatprep.subr.bf16.mxu0 0
  %5977 = vmatpush1.bf16.msra.mxu0 0
  %5978 = vmatprep.subr.bf16.mxu0 0
  %5979 = vmatpush1.bf16.msra.mxu0 0
  %5980 = vmatprep.subr.bf16.mxu0 0
  %5981 = vmatpush1.bf16.msra.mxu0 0
  %5982 = vmatprep.subr.bf16.mxu0 0
  %5983 = vmatpush1.bf16.msra.mxu0 0
  %5984 = vmatprep.mubr.bf16.mxu0 0
  %5985 = vmatmul.mubr.bf16.gmra.mrb[0].mxu0 %v5950
  %v5986 = vpop.f32.mrb[0].mxu0
  %v5987 = vadd.f32 0.0, %v5986
  %v5988 = vpop.f32.mrb[0].mxu0
  %v5989 = vpop.f32.mrb[0].mxu0
  %v5990 = vadd.f32 0.0, %v5989
  %v5991 = vpop.f32.mrb[0].mxu0
  %5992 = vdwg.mxu0
  %5994 = vrot.lane.b32.xlu0 %v525, 64
  %v5995 = vpop.permute.xlu0 %5994
  %v5998 = vsel %vm3896, %v5318, 0
  %6000 = vmatprep.subr.bf16.mxu0 0
  %6001 = vmatpush1.bf16.msra.mxu0 %v5995
  %6002 = vmatprep.subr.bf16.mxu0 0
  %6003 = vmatpush1.bf16.msra.mxu0 0
  %6004 = vmatprep.subr.bf16.mxu0 0
  %6005 = vmatpush1.bf16.msra.mxu0 0
  %6006 = vmatprep.subr.bf16.mxu0 0
  %6007 = vmatpush1.bf16.msra.mxu0 0
  %6008 = vmatprep.subr.bf16.mxu0 0
  %6009 = vmatpush1.bf16.msra.mxu0 0
  %6010 = vmatprep.subr.bf16.mxu0 0
  %6011 = vmatpush1.bf16.msra.mxu0 0
  %6012 = vmatprep.subr.bf16.mxu0 0
  %6013 = vmatpush1.bf16.msra.mxu0 0
  %6014 = vmatprep.subr.bf16.mxu0 0
  %6015 = vmatpush1.bf16.msra.mxu0 0
  %6016 = vmatprep.subr.bf16.mxu0 0
  %6017 = vmatpush1.bf16.msra.mxu0 0
  %6018 = vmatprep.subr.bf16.mxu0 0
  %6019 = vmatpush1.bf16.msra.mxu0 0
  %6020 = vmatprep.subr.bf16.mxu0 0
  %6021 = vmatpush1.bf16.msra.mxu0 0
  %6022 = vmatprep.subr.bf16.mxu0 0
  %6023 = vmatpush1.bf16.msra.mxu0 0
  %6024 = vmatprep.subr.bf16.mxu0 0
  %6025 = vmatpush1.bf16.msra.mxu0 0
  %6026 = vmatprep.subr.bf16.mxu0 0
  %6027 = vmatpush1.bf16.msra.mxu0 0
  %6028 = vmatprep.subr.bf16.mxu0 0
  %6029 = vmatpush1.bf16.msra.mxu0 0
  %6030 = vmatprep.subr.bf16.mxu0 0
  %6031 = vmatpush1.bf16.msra.mxu0 0
  %6032 = vmatprep.mubr.bf16.mxu0 0
  %6033 = vmatmul.mubr.bf16.gmra.mrb[0].mxu0 %v5998
  %v6034 = vpop.f32.mrb[0].mxu0
  %v6035 = vadd.f32 0.0, %v6034
  %v6036 = vpop.f32.mrb[0].mxu0
  %v6037 = vpop.f32.mrb[0].mxu0
  %v6038 = vadd.f32 0.0, %v6037
  %v6039 = vpop.f32.mrb[0].mxu0
  %6040 = vdwg.mxu0
  %6042 = vrot.lane.b32.xlu0 %v526, 64
  %v6043 = vpop.permute.xlu0 %6042
  %v6046 = vsel %vm3896, %v5319, 0
  %6048 = vmatprep.subr.bf16.mxu0 0
  %6049 = vmatpush1.bf16.msra.mxu0 %v6043
  %6050 = vmatprep.subr.bf16.mxu0 0
  %6051 = vmatpush1.bf16.msra.mxu0 0
  %6052 = vmatprep.subr.bf16.mxu0 0
  %6053 = vmatpush1.bf16.msra.mxu0 0
  %6054 = vmatprep.subr.bf16.mxu0 0
  %6055 = vmatpush1.bf16.msra.mxu0 0
  %6056 = vmatprep.subr.bf16.mxu0 0
  %6057 = vmatpush1.bf16.msra.mxu0 0
  %6058 = vmatprep.subr.bf16.mxu0 0
  %6059 = vmatpush1.bf16.msra.mxu0 0
  %6060 = vmatprep.subr.bf16.mxu0 0
  %6061 = vmatpush1.bf16.msra.mxu0 0
  %6062 = vmatprep.subr.bf16.mxu0 0
  %6063 = vmatpush1.bf16.msra.mxu0 0
  %6064 = vmatprep.subr.bf16.mxu0 0
  %6065 = vmatpush1.bf16.msra.mxu0 0
  %6066 = vmatprep.subr.bf16.mxu0 0
  %6067 = vmatpush1.bf16.msra.mxu0 0
  %6068 = vmatprep.subr.bf16.mxu0 0
  %6069 = vmatpush1.bf16.msra.mxu0 0
  %6070 = vmatprep.subr.bf16.mxu0 0
  %6071 = vmatpush1.bf16.msra.mxu0 0
  %6072 = vmatprep.subr.bf16.mxu0 0
  %6073 = vmatpush1.bf16.msra.mxu0 0
  %6074 = vmatprep.subr.bf16.mxu0 0
  %6075 = vmatpush1.bf16.msra.mxu0 0
  %6076 = vmatprep.subr.bf16.mxu0 0
  %6077 = vmatpush1.bf16.msra.mxu0 0
  %6078 = vmatprep.subr.bf16.mxu0 0
  %6079 = vmatpush1.bf16.msra.mxu0 0
  %6080 = vmatprep.mubr.bf16.mxu0 0
  %6081 = vmatmul.mubr.bf16.gmra.mrb[0].mxu0 %v6046
  %v6082 = vpop.f32.mrb[0].mxu0
  %v6083 = vadd.f32 0.0, %v6082
  %v6084 = vpop.f32.mrb[0].mxu0
  %v6085 = vpop.f32.mrb[0].mxu0
  %v6086 = vadd.f32 0.0, %v6085
  %v6087 = vpop.f32.mrb[0].mxu0
  %6088 = vdwg.mxu0
  %6090 = vrot.lane.b32.xlu0 %v527, 64
  %v6091 = vpop.permute.xlu0 %6090
  %v6094 = vsel %vm3896, %v5320, 0
  %6096 = vmatprep.subr.bf16.mxu0 0
  %6097 = vmatpush1.bf16.msra.mxu0 %v6091
  %6098 = vmatprep.subr.bf16.mxu0 0
  %6099 = vmatpush1.bf16.msra.mxu0 0
  %6100 = vmatprep.subr.bf16.mxu0 0
  %6101 = vmatpush1.bf16.msra.mxu0 0
  %6102 = vmatprep.subr.bf16.mxu0 0
  %6103 = vmatpush1.bf16.msra.mxu0 0
  %6104 = vmatprep.subr.bf16.mxu0 0
  %6105 = vmatpush1.bf16.msra.mxu0 0
  %6106 = vmatprep.subr.bf16.mxu0 0
  %6107 = vmatpush1.bf16.msra.mxu0 0
  %6108 = vmatprep.subr.bf16.mxu0 0
  %6109 = vmatpush1.bf16.msra.mxu0 0
  %6110 = vmatprep.subr.bf16.mxu0 0
  %6111 = vmatpush1.bf16.msra.mxu0 0
  %6112 = vmatprep.subr.bf16.mxu0 0
  %6113 = vmatpush1.bf16.msra.mxu0 0
  %6114 = vmatprep.subr.bf16.mxu0 0
  %6115 = vmatpush1.bf16.msra.mxu0 0
  %6116 = vmatprep.subr.bf16.mxu0 0
  %6117 = vmatpush1.bf16.msra.mxu0 0
  %6118 = vmatprep.subr.bf16.mxu0 0
  %6119 = vmatpush1.bf16.msra.mxu0 0
  %6120 = vmatprep.subr.bf16.mxu0 0
  %6121 = vmatpush1.bf16.msra.mxu0 0
  %6122 = vmatprep.subr.bf16.mxu0 0
  %6123 = vmatpush1.bf16.msra.mxu0 0
  %6124 = vmatprep.subr.bf16.mxu0 0
  %6125 = vmatpush1.bf16.msra.mxu0 0
  %6126 = vmatprep.subr.bf16.mxu0 0
  %6127 = vmatpush1.bf16.msra.mxu0 0
  %6128 = vmatprep.mubr.bf16.mxu0 0
  %6129 = vmatmul.mubr.bf16.gmra.mrb[0].mxu0 %v6094
  %v6130 = vpop.f32.mrb[0].mxu0
  %v6131 = vadd.f32 0.0, %v6130
  %v6132 = vpop.f32.mrb[0].mxu0
  %v6133 = vpop.f32.mrb[0].mxu0
  %v6134 = vadd.f32 0.0, %v6133
  %v6135 = vpop.f32.mrb[0].mxu0
  %6136 = vdwg.mxu0
  %6138 = vrot.lane.b32.xlu0 %v528, 64
  %v6139 = vpop.permute.xlu0 %6138
  %v6142 = vsel %vm3896, %v5321, 0
  %6144 = vmatprep.subr.bf16.mxu0 0
  %6145 = vmatpush1.bf16.msra.mxu0 %v6139
  %6146 = vmatprep.subr.bf16.mxu0 0
  %6147 = vmatpush1.bf16.msra.mxu0 0
  %6148 = vmatprep.subr.bf16.mxu0 0
  %6149 = vmatpush1.bf16.msra.mxu0 0
  %6150 = vmatprep.subr.bf16.mxu0 0
  %6151 = vmatpush1.bf16.msra.mxu0 0
  %6152 = vmatprep.subr.bf16.mxu0 0
  %6153 = vmatpush1.bf16.msra.mxu0 0
  %6154 = vmatprep.subr.bf16.mxu0 0
  %6155 = vmatpush1.bf16.msra.mxu0 0
  %6156 = vmatprep.subr.bf16.mxu0 0
  %6157 = vmatpush1.bf16.msra.mxu0 0
  %6158 = vmatprep.subr.bf16.mxu0 0
  %6159 = vmatpush1.bf16.msra.mxu0 0
  %6160 = vmatprep.subr.bf16.mxu0 0
  %6161 = vmatpush1.bf16.msra.mxu0 0
  %6162 = vmatprep.subr.bf16.mxu0 0
  %6163 = vmatpush1.bf16.msra.mxu0 0
  %6164 = vmatprep.subr.bf16.mxu0 0
  %6165 = vmatpush1.bf16.msra.mxu0 0
  %6166 = vmatprep.subr.bf16.mxu0 0
  %6167 = vmatpush1.bf16.msra.mxu0 0
  %6168 = vmatprep.subr.bf16.mxu0 0
  %6169 = vmatpush1.bf16.msra.mxu0 0
  %6170 = vmatprep.subr.bf16.mxu0 0
  %6171 = vmatpush1.bf16.msra.mxu0 0
  %6172 = vmatprep.subr.bf16.mxu0 0
  %6173 = vmatpush1.bf16.msra.mxu0 0
  %6174 = vmatprep.subr.bf16.mxu0 0
  %6175 = vmatpush1.bf16.msra.mxu0 0
  %6176 = vmatprep.mubr.bf16.mxu0 0
  %6177 = vmatmul.mubr.bf16.gmra.mrb[0].mxu0 %v6142
  %v6178 = vpop.f32.mrb[0].mxu0
  %v6179 = vadd.f32 0.0, %v6178
  %v6180 = vpop.f32.mrb[0].mxu0
  %v6181 = vpop.f32.mrb[0].mxu0
  %v6182 = vadd.f32 0.0, %v6181
  %v6183 = vpop.f32.mrb[0].mxu0
  %6184 = vdwg.mxu0
  %6186 = vrot.lane.b32.xlu0 %v529, 64
  %v6187 = vpop.permute.xlu0 %6186
  %v6190 = vsel %vm3896, %v5322, 0
  %6192 = vmatprep.subr.bf16.mxu0 0
  %6193 = vmatpush1.bf16.msra.mxu0 %v6187
  %6194 = vmatprep.subr.bf16.mxu0 0
  %6195 = vmatpush1.bf16.msra.mxu0 0
  %6196 = vmatprep.subr.bf16.mxu0 0
  %6197 = vmatpush1.bf16.msra.mxu0 0
  %6198 = vmatprep.subr.bf16.mxu0 0
  %6199 = vmatpush1.bf16.msra.mxu0 0
  %6200 = vmatprep.subr.bf16.mxu0 0
  %6201 = vmatpush1.bf16.msra.mxu0 0
  %6202 = vmatprep.subr.bf16.mxu0 0
  %6203 = vmatpush1.bf16.msra.mxu0 0
  %6204 = vmatprep.subr.bf16.mxu0 0
  %6205 = vmatpush1.bf16.msra.mxu0 0
  %6206 = vmatprep.subr.bf16.mxu0 0
  %6207 = vmatpush1.bf16.msra.mxu0 0
  %6208 = vmatprep.subr.bf16.mxu0 0
  %6209 = vmatpush1.bf16.msra.mxu0 0
  %6210 = vmatprep.subr.bf16.mxu0 0
  %6211 = vmatpush1.bf16.msra.mxu0 0
  %6212 = vmatprep.subr.bf16.mxu0 0
  %6213 = vmatpush1.bf16.msra.mxu0 0
  %6214 = vmatprep.subr.bf16.mxu0 0
  %6215 = vmatpush1.bf16.msra.mxu0 0
  %6216 = vmatprep.subr.bf16.mxu0 0
  %6217 = vmatpush1.bf16.msra.mxu0 0
  %6218 = vmatprep.subr.bf16.mxu0 0
  %6219 = vmatpush1.bf16.msra.mxu0 0
  %6220 = vmatprep.subr.bf16.mxu0 0
  %6221 = vmatpush1.bf16.msra.mxu0 0
  %6222 = vmatprep.subr.bf16.mxu0 0
  %6223 = vmatpush1.bf16.msra.mxu0 0
  %6224 = vmatprep.mubr.bf16.mxu0 0
  %6225 = vmatmul.mubr.bf16.gmra.mrb[0].mxu0 %v6190
  %v6226 = vpop.f32.mrb[0].mxu0
  %v6227 = vadd.f32 0.0, %v6226
  %v6228 = vpop.f32.mrb[0].mxu0
  %v6229 = vpop.f32.mrb[0].mxu0
  %v6230 = vadd.f32 0.0, %v6229
  %v6231 = vpop.f32.mrb[0].mxu0
  %6232 = vdwg.mxu0
  %6234 = vrot.lane.b32.xlu0 %v530, 64
  %v6235 = vpop.permute.xlu0 %6234
  %v6238 = vsel %vm3896, %v5323, 0
  %6240 = vmatprep.subr.bf16.mxu0 0
  %6241 = vmatpush1.bf16.msra.mxu0 %v6235
  %6242 = vmatprep.subr.bf16.mxu0 0
  %6243 = vmatpush1.bf16.msra.mxu0 0
  %6244 = vmatprep.subr.bf16.mxu0 0
  %6245 = vmatpush1.bf16.msra.mxu0 0
  %6246 = vmatprep.subr.bf16.mxu0 0
  %6247 = vmatpush1.bf16.msra.mxu0 0
  %6248 = vmatprep.subr.bf16.mxu0 0
  %6249 = vmatpush1.bf16.msra.mxu0 0
  %6250 = vmatprep.subr.bf16.mxu0 0
  %6251 = vmatpush1.bf16.msra.mxu0 0
  %6252 = vmatprep.subr.bf16.mxu0 0
  %6253 = vmatpush1.bf16.msra.mxu0 0
  %6254 = vmatprep.subr.bf16.mxu0 0
  %6255 = vmatpush1.bf16.msra.mxu0 0
  %6256 = vmatprep.subr.bf16.mxu0 0
  %6257 = vmatpush1.bf16.msra.mxu0 0
  %6258 = vmatprep.subr.bf16.mxu0 0
  %6259 = vmatpush1.bf16.msra.mxu0 0
  %6260 = vmatprep.subr.bf16.mxu0 0
  %6261 = vmatpush1.bf16.msra.mxu0 0
  %6262 = vmatprep.subr.bf16.mxu0 0
  %6263 = vmatpush1.bf16.msra.mxu0 0
  %6264 = vmatprep.subr.bf16.mxu0 0
  %6265 = vmatpush1.bf16.msra.mxu0 0
  %6266 = vmatprep.subr.bf16.mxu0 0
  %6267 = vmatpush1.bf16.msra.mxu0 0
  %6268 = vmatprep.subr.bf16.mxu0 0
  %6269 = vmatpush1.bf16.msra.mxu0 0
  %6270 = vmatprep.subr.bf16.mxu0 0
  %6271 = vmatpush1.bf16.msra.mxu0 0
  %6272 = vmatprep.mubr.bf16.mxu0 0
  %6273 = vmatmul.mubr.bf16.gmra.mrb[0].mxu0 %v6238
  %v6274 = vpop.f32.mrb[0].mxu0
  %v6275 = vadd.f32 0.0, %v6274
  %v6276 = vpop.f32.mrb[0].mxu0
  %v6277 = vpop.f32.mrb[0].mxu0
  %v6278 = vadd.f32 0.0, %v6277
  %v6279 = vpop.f32.mrb[0].mxu0
  %6280 = vdwg.mxu0
  %6282 = vrot.lane.b32.xlu0 %v531, 64
  %v6283 = vpop.permute.xlu0 %6282
  %v6286 = vsel %vm3896, %v5324, 0
  %6288 = vmatprep.subr.bf16.mxu0 0
  %6289 = vmatpush1.bf16.msra.mxu0 %v6283
  %6290 = vmatprep.subr.bf16.mxu0 0
  %6291 = vmatpush1.bf16.msra.mxu0 0
  %6292 = vmatprep.subr.bf16.mxu0 0
  %6293 = vmatpush1.bf16.msra.mxu0 0
  %6294 = vmatprep.subr.bf16.mxu0 0
  %6295 = vmatpush1.bf16.msra.mxu0 0
  %6296 = vmatprep.subr.bf16.mxu0 0
  %6297 = vmatpush1.bf16.msra.mxu0 0
  %6298 = vmatprep.subr.bf16.mxu0 0
  %6299 = vmatpush1.bf16.msra.mxu0 0
  %6300 = vmatprep.subr.bf16.mxu0 0
  %6301 = vmatpush1.bf16.msra.mxu0 0
  %6302 = vmatprep.subr.bf16.mxu0 0
  %6303 = vmatpush1.bf16.msra.mxu0 0
  %6304 = vmatprep.subr.bf16.mxu0 0
  %6305 = vmatpush1.bf16.msra.mxu0 0
  %6306 = vmatprep.subr.bf16.mxu0 0
  %6307 = vmatpush1.bf16.msra.mxu0 0
  %6308 = vmatprep.subr.bf16.mxu0 0
  %6309 = vmatpush1.bf16.msra.mxu0 0
  %6310 = vmatprep.subr.bf16.mxu0 0
  %6311 = vmatpush1.bf16.msra.mxu0 0
  %6312 = vmatprep.subr.bf16.mxu0 0
  %6313 = vmatpush1.bf16.msra.mxu0 0
  %6314 = vmatprep.subr.bf16.mxu0 0
  %6315 = vmatpush1.bf16.msra.mxu0 0
  %6316 = vmatprep.subr.bf16.mxu0 0
  %6317 = vmatpush1.bf16.msra.mxu0 0
  %6318 = vmatprep.subr.bf16.mxu0 0
  %6319 = vmatpush1.bf16.msra.mxu0 0
  %6320 = vmatprep.mubr.bf16.mxu0 0
  %6321 = vmatmul.mubr.bf16.gmra.mrb[0].mxu0 %v6286
  %v6322 = vpop.f32.mrb[0].mxu0
  %v6323 = vadd.f32 0.0, %v6322
  %v6324 = vpop.f32.mrb[0].mxu0
  %v6325 = vpop.f32.mrb[0].mxu0
  %v6326 = vadd.f32 0.0, %v6325
  %v6327 = vpop.f32.mrb[0].mxu0
  %6328 = vdwg.mxu0
  %6330 = vrot.lane.b32.xlu0 %v532, 64
  %v6331 = vpop.permute.xlu0 %6330
  %v6334 = vsel %vm3896, %v5325, 0
  %6336 = vmatprep.subr.bf16.mxu0 0
  %6337 = vmatpush1.bf16.msra.mxu0 %v6331
  %6338 = vmatprep.subr.bf16.mxu0 0
  %6339 = vmatpush1.bf16.msra.mxu0 0
  %6340 = vmatprep.subr.bf16.mxu0 0
  %6341 = vmatpush1.bf16.msra.mxu0 0
  %6342 = vmatprep.subr.bf16.mxu0 0
  %6343 = vmatpush1.bf16.msra.mxu0 0
  %6344 = vmatprep.subr.bf16.mxu0 0
  %6345 = vmatpush1.bf16.msra.mxu0 0
  %6346 = vmatprep.subr.bf16.mxu0 0
  %6347 = vmatpush1.bf16.msra.mxu0 0
  %6348 = vmatprep.subr.bf16.mxu0 0
  %6349 = vmatpush1.bf16.msra.mxu0 0
  %6350 = vmatprep.subr.bf16.mxu0 0
  %6351 = vmatpush1.bf16.msra.mxu0 0
  %6352 = vmatprep.subr.bf16.mxu0 0
  %6353 = vmatpush1.bf16.msra.mxu0 0
  %6354 = vmatprep.subr.bf16.mxu0 0
  %6355 = vmatpush1.bf16.msra.mxu0 0
  %6356 = vmatprep.subr.bf16.mxu0 0
  %6357 = vmatpush1.bf16.msra.mxu0 0
  %6358 = vmatprep.subr.bf16.mxu0 0
  %6359 = vmatpush1.bf16.msra.mxu0 0
  %6360 = vmatprep.subr.bf16.mxu0 0
  %6361 = vmatpush1.bf16.msra.mxu0 0
  %6362 = vmatprep.subr.bf16.mxu0 0
  %6363 = vmatpush1.bf16.msra.mxu0 0
  %6364 = vmatprep.subr.bf16.mxu0 0
  %6365 = vmatpush1.bf16.msra.mxu0 0
  %6366 = vmatprep.subr.bf16.mxu0 0
  %6367 = vmatpush1.bf16.msra.mxu0 0
  %6368 = vmatprep.mubr.bf16.mxu0 0
  %6369 = vmatmul.mubr.bf16.gmra.mrb[0].mxu0 %v6334
  %v6370 = vpop.f32.mrb[0].mxu0
  %v6371 = vadd.f32 0.0, %v6370
  %v6372 = vpop.f32.mrb[0].mxu0
  %v6373 = vpop.f32.mrb[0].mxu0
  %v6374 = vadd.f32 0.0, %v6373
  %v6375 = vpop.f32.mrb[0].mxu0
  %6376 = vdwg.mxu0
  %6378 = vrot.lane.b32.xlu0 %v533, 64
  %v6379 = vpop.permute.xlu0 %6378
  %v6382 = vsel %vm3896, %v5326, 0
  %6384 = vmatprep.subr.bf16.mxu0 0
  %6385 = vmatpush1.bf16.msra.mxu0 %v6379
  %6386 = vmatprep.subr.bf16.mxu0 0
  %6387 = vmatpush1.bf16.msra.mxu0 0
  %6388 = vmatprep.subr.bf16.mxu0 0
  %6389 = vmatpush1.bf16.msra.mxu0 0
  %6390 = vmatprep.subr.bf16.mxu0 0
  %6391 = vmatpush1.bf16.msra.mxu0 0
  %6392 = vmatprep.subr.bf16.mxu0 0
  %6393 = vmatpush1.bf16.msra.mxu0 0
  %6394 = vmatprep.subr.bf16.mxu0 0
  %6395 = vmatpush1.bf16.msra.mxu0 0
  %6396 = vmatprep.subr.bf16.mxu0 0
  %6397 = vmatpush1.bf16.msra.mxu0 0
  %6398 = vmatprep.subr.bf16.mxu0 0
  %6399 = vmatpush1.bf16.msra.mxu0 0
  %6400 = vmatprep.subr.bf16.mxu0 0
  %6401 = vmatpush1.bf16.msra.mxu0 0
  %6402 = vmatprep.subr.bf16.mxu0 0
  %6403 = vmatpush1.bf16.msra.mxu0 0
  %6404 = vmatprep.subr.bf16.mxu0 0
  %6405 = vmatpush1.bf16.msra.mxu0 0
  %6406 = vmatprep.subr.bf16.mxu0 0
  %6407 = vmatpush1.bf16.msra.mxu0 0
  %6408 = vmatprep.subr.bf16.mxu0 0
  %6409 = vmatpush1.bf16.msra.mxu0 0
  %6410 = vmatprep.subr.bf16.mxu0 0
  %6411 = vmatpush1.bf16.msra.mxu0 0
  %6412 = vmatprep.subr.bf16.mxu0 0
  %6413 = vmatpush1.bf16.msra.mxu0 0
  %6414 = vmatprep.subr.bf16.mxu0 0
  %6415 = vmatpush1.bf16.msra.mxu0 0
  %6416 = vmatprep.mubr.bf16.mxu0 0
  %6417 = vmatmul.mubr.bf16.gmra.mrb[0].mxu0 %v6382
  %v6418 = vpop.f32.mrb[0].mxu0
  %v6419 = vadd.f32 0.0, %v6418
  %v6420 = vpop.f32.mrb[0].mxu0
  %v6421 = vpop.f32.mrb[0].mxu0
  %v6422 = vadd.f32 0.0, %v6421
  %v6423 = vpop.f32.mrb[0].mxu0
  %6424 = vdwg.mxu0
  %6426 = vrot.lane.b32.xlu0 %v534, 64
  %v6427 = vpop.permute.xlu0 %6426
  %v6430 = vsel %vm3896, %v5327, 0
  %6432 = vmatprep.subr.bf16.mxu0 0
  %6433 = vmatpush1.bf16.msra.mxu0 %v6427
  %6434 = vmatprep.subr.bf16.mxu0 0
  %6435 = vmatpush1.bf16.msra.mxu0 0
  %6436 = vmatprep.subr.bf16.mxu0 0
  %6437 = vmatpush1.bf16.msra.mxu0 0
  %6438 = vmatprep.subr.bf16.mxu0 0
  %6439 = vmatpush1.bf16.msra.mxu0 0
  %6440 = vmatprep.subr.bf16.mxu0 0
  %6441 = vmatpush1.bf16.msra.mxu0 0
  %6442 = vmatprep.subr.bf16.mxu0 0
  %6443 = vmatpush1.bf16.msra.mxu0 0
  %6444 = vmatprep.subr.bf16.mxu0 0
  %6445 = vmatpush1.bf16.msra.mxu0 0
  %6446 = vmatprep.subr.bf16.mxu0 0
  %6447 = vmatpush1.bf16.msra.mxu0 0
  %6448 = vmatprep.subr.bf16.mxu0 0
  %6449 = vmatpush1.bf16.msra.mxu0 0
  %6450 = vmatprep.subr.bf16.mxu0 0
  %6451 = vmatpush1.bf16.msra.mxu0 0
  %6452 = vmatprep.subr.bf16.mxu0 0
  %6453 = vmatpush1.bf16.msra.mxu0 0
  %6454 = vmatprep.subr.bf16.mxu0 0
  %6455 = vmatpush1.bf16.msra.mxu0 0
  %6456 = vmatprep.subr.bf16.mxu0 0
  %6457 = vmatpush1.bf16.msra.mxu0 0
  %6458 = vmatprep.subr.bf16.mxu0 0
  %6459 = vmatpush1.bf16.msra.mxu0 0
  %6460 = vmatprep.subr.bf16.mxu0 0
  %6461 = vmatpush1.bf16.msra.mxu0 0
  %6462 = vmatprep.subr.bf16.mxu0 0
  %6463 = vmatpush1.bf16.msra.mxu0 0
  %6464 = vmatprep.mubr.bf16.mxu0 0
  %6465 = vmatmul.mubr.bf16.gmra.mrb[0].mxu0 %v6430
  %v6466 = vpop.f32.mrb[0].mxu0
  %v6467 = vadd.f32 0.0, %v6466
  %v6468 = vpop.f32.mrb[0].mxu0
  %v6469 = vpop.f32.mrb[0].mxu0
  %v6470 = vadd.f32 0.0, %v6469
  %v6471 = vpop.f32.mrb[0].mxu0
  %6472 = vdwg.mxu0
  %6474 = vrot.lane.b32.xlu0 %v535, 64
  %v6475 = vpop.permute.xlu0 %6474
  %v6478 = vsel %vm3896, %v5328, 0
  %6480 = vmatprep.subr.bf16.mxu0 0
  %6481 = vmatpush1.bf16.msra.mxu0 %v6475
  %6482 = vmatprep.subr.bf16.mxu0 0
  %6483 = vmatpush1.bf16.msra.mxu0 0
  %6484 = vmatprep.subr.bf16.mxu0 0
  %6485 = vmatpush1.bf16.msra.mxu0 0
  %6486 = vmatprep.subr.bf16.mxu0 0
  %6487 = vmatpush1.bf16.msra.mxu0 0
  %6488 = vmatprep.subr.bf16.mxu0 0
  %6489 = vmatpush1.bf16.msra.mxu0 0
  %6490 = vmatprep.subr.bf16.mxu0 0
  %6491 = vmatpush1.bf16.msra.mxu0 0
  %6492 = vmatprep.subr.bf16.mxu0 0
  %6493 = vmatpush1.bf16.msra.mxu0 0
  %6494 = vmatprep.subr.bf16.mxu0 0
  %6495 = vmatpush1.bf16.msra.mxu0 0
  %6496 = vmatprep.subr.bf16.mxu0 0
  %6497 = vmatpush1.bf16.msra.mxu0 0
  %6498 = vmatprep.subr.bf16.mxu0 0
  %6499 = vmatpush1.bf16.msra.mxu0 0
  %6500 = vmatprep.subr.bf16.mxu0 0
  %6501 = vmatpush1.bf16.msra.mxu0 0
  %6502 = vmatprep.subr.bf16.mxu0 0
  %6503 = vmatpush1.bf16.msra.mxu0 0
  %6504 = vmatprep.subr.bf16.mxu0 0
  %6505 = vmatpush1.bf16.msra.mxu0 0
  %6506 = vmatprep.subr.bf16.mxu0 0
  %6507 = vmatpush1.bf16.msra.mxu0 0
  %6508 = vmatprep.subr.bf16.mxu0 0
  %6509 = vmatpush1.bf16.msra.mxu0 0
  %6510 = vmatprep.subr.bf16.mxu0 0
  %6511 = vmatpush1.bf16.msra.mxu0 0
  %6512 = vmatprep.mubr.bf16.mxu0 0
  %6513 = vmatmul.mubr.bf16.gmra.mrb[0].mxu0 %v6478
  %v6514 = vpop.f32.mrb[0].mxu0
  %v6515 = vadd.f32 0.0, %v6514
  %v6516 = vpop.f32.mrb[0].mxu0
  %v6517 = vpop.f32.mrb[0].mxu0
  %v6518 = vadd.f32 0.0, %v6517
  %v6519 = vpop.f32.mrb[0].mxu0
  %6520 = vdwg.mxu0
  %6522 = vrot.lane.b32.xlu0 %v536, 64
  %v6523 = vpop.permute.xlu0 %6522
  %v6526 = vsel %vm3896, %v5329, 0
  %6528 = vmatprep.subr.bf16.mxu0 0
  %6529 = vmatpush1.bf16.msra.mxu0 %v6523
  %6530 = vmatprep.subr.bf16.mxu0 0
  %6531 = vmatpush1.bf16.msra.mxu0 0
  %6532 = vmatprep.subr.bf16.mxu0 0
  %6533 = vmatpush1.bf16.msra.mxu0 0
  %6534 = vmatprep.subr.bf16.mxu0 0
  %6535 = vmatpush1.bf16.msra.mxu0 0
  %6536 = vmatprep.subr.bf16.mxu0 0
  %6537 = vmatpush1.bf16.msra.mxu0 0
  %6538 = vmatprep.subr.bf16.mxu0 0
  %6539 = vmatpush1.bf16.msra.mxu0 0
  %6540 = vmatprep.subr.bf16.mxu0 0
  %6541 = vmatpush1.bf16.msra.mxu0 0
  %6542 = vmatprep.subr.bf16.mxu0 0
  %6543 = vmatpush1.bf16.msra.mxu0 0
  %6544 = vmatprep.subr.bf16.mxu0 0
  %6545 = vmatpush1.bf16.msra.mxu0 0
  %6546 = vmatprep.subr.bf16.mxu0 0
  %6547 = vmatpush1.bf16.msra.mxu0 0
  %6548 = vmatprep.subr.bf16.mxu0 0
  %6549 = vmatpush1.bf16.msra.mxu0 0
  %6550 = vmatprep.subr.bf16.mxu0 0
  %6551 = vmatpush1.bf16.msra.mxu0 0
  %6552 = vmatprep.subr.bf16.mxu0 0
  %6553 = vmatpush1.bf16.msra.mxu0 0
  %6554 = vmatprep.subr.bf16.mxu0 0
  %6555 = vmatpush1.bf16.msra.mxu0 0
  %6556 = vmatprep.subr.bf16.mxu0 0
  %6557 = vmatpush1.bf16.msra.mxu0 0
  %6558 = vmatprep.subr.bf16.mxu0 0
  %6559 = vmatpush1.bf16.msra.mxu0 0
  %6560 = vmatprep.mubr.bf16.mxu0 0
  %6561 = vmatmul.mubr.bf16.gmra.mrb[0].mxu0 %v6526
  %v6562 = vpop.f32.mrb[0].mxu0
  %v6563 = vadd.f32 0.0, %v6562
  %v6564 = vpop.f32.mrb[0].mxu0
  %v6565 = vpop.f32.mrb[0].mxu0
  %v6566 = vadd.f32 0.0, %v6565
  %v6567 = vpop.f32.mrb[0].mxu0
  %6568 = vdwg.mxu0
  %6570 = vrot.lane.b32.xlu0 %v537, 64
  %v6571 = vpop.permute.xlu0 %6570
  %v6574 = vsel %vm3896, %v5330, 0
  %6576 = vmatprep.subr.bf16.mxu0 0
  %6577 = vmatpush1.bf16.msra.mxu0 %v6571
  %6578 = vmatprep.subr.bf16.mxu0 0
  %6579 = vmatpush1.bf16.msra.mxu0 0
  %6580 = vmatprep.subr.bf16.mxu0 0
  %6581 = vmatpush1.bf16.msra.mxu0 0
  %6582 = vmatprep.subr.bf16.mxu0 0
  %6583 = vmatpush1.bf16.msra.mxu0 0
  %6584 = vmatprep.subr.bf16.mxu0 0
  %6585 = vmatpush1.bf16.msra.mxu0 0
  %6586 = vmatprep.subr.bf16.mxu0 0
  %6587 = vmatpush1.bf16.msra.mxu0 0
  %6588 = vmatprep.subr.bf16.mxu0 0
  %6589 = vmatpush1.bf16.msra.mxu0 0
  %6590 = vmatprep.subr.bf16.mxu0 0
  %6591 = vmatpush1.bf16.msra.mxu0 0
  %6592 = vmatprep.subr.bf16.mxu0 0
  %6593 = vmatpush1.bf16.msra.mxu0 0
  %6594 = vmatprep.subr.bf16.mxu0 0
  %6595 = vmatpush1.bf16.msra.mxu0 0
  %6596 = vmatprep.subr.bf16.mxu0 0
  %6597 = vmatpush1.bf16.msra.mxu0 0
  %6598 = vmatprep.subr.bf16.mxu0 0
  %6599 = vmatpush1.bf16.msra.mxu0 0
  %6600 = vmatprep.subr.bf16.mxu0 0
  %6601 = vmatpush1.bf16.msra.mxu0 0
  %6602 = vmatprep.subr.bf16.mxu0 0
  %6603 = vmatpush1.bf16.msra.mxu0 0
  %6604 = vmatprep.subr.bf16.mxu0 0
  %6605 = vmatpush1.bf16.msra.mxu0 0
  %6606 = vmatprep.subr.bf16.mxu0 0
  %6607 = vmatpush1.bf16.msra.mxu0 0
  %6608 = vmatprep.mubr.bf16.mxu0 0
  %6609 = vmatmul.mubr.bf16.gmra.mrb[0].mxu0 %v6574
  %v6610 = vpop.f32.mrb[0].mxu0
  %v6611 = vadd.f32 0.0, %v6610
  %v6612 = vpop.f32.mrb[0].mxu0
  %v6613 = vpop.f32.mrb[0].mxu0
  %v6614 = vadd.f32 0.0, %v6613
  %v6615 = vpop.f32.mrb[0].mxu0
  %6616 = vdwg.mxu0
  %6618 = vrot.lane.b32.xlu0 %v538, 64
  %v6619 = vpop.permute.xlu0 %6618
  %v6622 = vsel %vm3896, %v5331, 0
  %6624 = vmatprep.subr.bf16.mxu0 0
  %6625 = vmatpush1.bf16.msra.mxu0 %v6619
  %6626 = vmatprep.subr.bf16.mxu0 0
  %6627 = vmatpush1.bf16.msra.mxu0 0
  %6628 = vmatprep.subr.bf16.mxu0 0
  %6629 = vmatpush1.bf16.msra.mxu0 0
  %6630 = vmatprep.subr.bf16.mxu0 0
  %6631 = vmatpush1.bf16.msra.mxu0 0
  %6632 = vmatprep.subr.bf16.mxu0 0
  %6633 = vmatpush1.bf16.msra.mxu0 0
  %6634 = vmatprep.subr.bf16.mxu0 0
  %6635 = vmatpush1.bf16.msra.mxu0 0
  %6636 = vmatprep.subr.bf16.mxu0 0
  %6637 = vmatpush1.bf16.msra.mxu0 0
  %6638 = vmatprep.subr.bf16.mxu0 0
  %6639 = vmatpush1.bf16.msra.mxu0 0
  %6640 = vmatprep.subr.bf16.mxu0 0
  %6641 = vmatpush1.bf16.msra.mxu0 0
  %6642 = vmatprep.subr.bf16.mxu0 0
  %6643 = vmatpush1.bf16.msra.mxu0 0
  %6644 = vmatprep.subr.bf16.mxu0 0
  %6645 = vmatpush1.bf16.msra.mxu0 0
  %6646 = vmatprep.subr.bf16.mxu0 0
  %6647 = vmatpush1.bf16.msra.mxu0 0
  %6648 = vmatprep.subr.bf16.mxu0 0
  %6649 = vmatpush1.bf16.msra.mxu0 0
  %6650 = vmatprep.subr.bf16.mxu0 0
  %6651 = vmatpush1.bf16.msra.mxu0 0
  %6652 = vmatprep.subr.bf16.mxu0 0
  %6653 = vmatpush1.bf16.msra.mxu0 0
  %6654 = vmatprep.subr.bf16.mxu0 0
  %6655 = vmatpush1.bf16.msra.mxu0 0
  %6656 = vmatprep.mubr.bf16.mxu0 0
  %6657 = vmatmul.mubr.bf16.gmra.mrb[0].mxu0 %v6622
  %v6658 = vpop.f32.mrb[0].mxu0
  %v6659 = vadd.f32 0.0, %v6658
  %v6660 = vpop.f32.mrb[0].mxu0
  %v6661 = vpop.f32.mrb[0].mxu0
  %v6662 = vadd.f32 0.0, %v6661
  %v6663 = vpop.f32.mrb[0].mxu0
  %6664 = vdwg.mxu0
  %6666 = vrot.lane.b32.xlu0 %v539, 64
  %v6667 = vpop.permute.xlu0 %6666
  %v6670 = vsel %vm3896, %v5332, 0
  %6672 = vmatprep.subr.bf16.mxu0 0
  %6673 = vmatpush1.bf16.msra.mxu0 %v6667
  %6674 = vmatprep.subr.bf16.mxu0 0
  %6675 = vmatpush1.bf16.msra.mxu0 0
  %6676 = vmatprep.subr.bf16.mxu0 0
  %6677 = vmatpush1.bf16.msra.mxu0 0
  %6678 = vmatprep.subr.bf16.mxu0 0
  %6679 = vmatpush1.bf16.msra.mxu0 0
  %6680 = vmatprep.subr.bf16.mxu0 0
  %6681 = vmatpush1.bf16.msra.mxu0 0
  %6682 = vmatprep.subr.bf16.mxu0 0
  %6683 = vmatpush1.bf16.msra.mxu0 0
  %6684 = vmatprep.subr.bf16.mxu0 0
  %6685 = vmatpush1.bf16.msra.mxu0 0
  %6686 = vmatprep.subr.bf16.mxu0 0
  %6687 = vmatpush1.bf16.msra.mxu0 0
  %6688 = vmatprep.subr.bf16.mxu0 0
  %6689 = vmatpush1.bf16.msra.mxu0 0
  %6690 = vmatprep.subr.bf16.mxu0 0
  %6691 = vmatpush1.bf16.msra.mxu0 0
  %6692 = vmatprep.subr.bf16.mxu0 0
  %6693 = vmatpush1.bf16.msra.mxu0 0
  %6694 = vmatprep.subr.bf16.mxu0 0
  %6695 = vmatpush1.bf16.msra.mxu0 0
  %6696 = vmatprep.subr.bf16.mxu0 0
  %6697 = vmatpush1.bf16.msra.mxu0 0
  %6698 = vmatprep.subr.bf16.mxu0 0
  %6699 = vmatpush1.bf16.msra.mxu0 0
  %6700 = vmatprep.subr.bf16.mxu0 0
  %6701 = vmatpush1.bf16.msra.mxu0 0
  %6702 = vmatprep.subr.bf16.mxu0 0
  %6703 = vmatpush1.bf16.msra.mxu0 0
  %6704 = vmatprep.mubr.bf16.mxu0 0
  %6705 = vmatmul.mubr.bf16.gmra.mrb[0].mxu0 %v6670
  %v6706 = vpop.f32.mrb[0].mxu0
  %v6707 = vadd.f32 0.0, %v6706
  %v6708 = vpop.f32.mrb[0].mxu0
  %v6709 = vpop.f32.mrb[0].mxu0
  %v6710 = vadd.f32 0.0, %v6709
  %v6711 = vpop.f32.mrb[0].mxu0
  %6712 = vdwg.mxu0
  %6714 = vrot.lane.b32.xlu0 %v540, 64
  %v6715 = vpop.permute.xlu0 %6714
  %v6718 = vsel %vm3896, %v5333, 0
  %6720 = vmatprep.subr.bf16.mxu0 0
  %6721 = vmatpush1.bf16.msra.mxu0 %v6715
  %6722 = vmatprep.subr.bf16.mxu0 0
  %6723 = vmatpush1.bf16.msra.mxu0 0
  %6724 = vmatprep.subr.bf16.mxu0 0
  %6725 = vmatpush1.bf16.msra.mxu0 0
  %6726 = vmatprep.subr.bf16.mxu0 0
  %6727 = vmatpush1.bf16.msra.mxu0 0
  %6728 = vmatprep.subr.bf16.mxu0 0
  %6729 = vmatpush1.bf16.msra.mxu0 0
  %6730 = vmatprep.subr.bf16.mxu0 0
  %6731 = vmatpush1.bf16.msra.mxu0 0
  %6732 = vmatprep.subr.bf16.mxu0 0
  %6733 = vmatpush1.bf16.msra.mxu0 0
  %6734 = vmatprep.subr.bf16.mxu0 0
  %6735 = vmatpush1.bf16.msra.mxu0 0
  %6736 = vmatprep.subr.bf16.mxu0 0
  %6737 = vmatpush1.bf16.msra.mxu0 0
  %6738 = vmatprep.subr.bf16.mxu0 0
  %6739 = vmatpush1.bf16.msra.mxu0 0
  %6740 = vmatprep.subr.bf16.mxu0 0
  %6741 = vmatpush1.bf16.msra.mxu0 0
  %6742 = vmatprep.subr.bf16.mxu0 0
  %6743 = vmatpush1.bf16.msra.mxu0 0
  %6744 = vmatprep.subr.bf16.mxu0 0
  %6745 = vmatpush1.bf16.msra.mxu0 0
  %6746 = vmatprep.subr.bf16.mxu0 0
  %6747 = vmatpush1.bf16.msra.mxu0 0
  %6748 = vmatprep.subr.bf16.mxu0 0
  %6749 = vmatpush1.bf16.msra.mxu0 0
  %6750 = vmatprep.subr.bf16.mxu0 0
  %6751 = vmatpush1.bf16.msra.mxu0 0
  %6752 = vmatprep.mubr.bf16.mxu0 0
  %6753 = vmatmul.mubr.bf16.gmra.mrb[0].mxu0 %v6718
  %v6754 = vpop.f32.mrb[0].mxu0
  %v6755 = vadd.f32 0.0, %v6754
  %v6756 = vpop.f32.mrb[0].mxu0
  %v6757 = vpop.f32.mrb[0].mxu0
  %v6758 = vadd.f32 0.0, %v6757
  %v6759 = vpop.f32.mrb[0].mxu0
  %6760 = vdwg.mxu0
  %6762 = vrot.lane.b32.xlu0 %v541, 64
  %v6763 = vpop.permute.xlu0 %6762
  %v6766 = vsel %vm3896, %v5334, 0
  %6768 = vmatprep.subr.bf16.mxu0 0
  %6769 = vmatpush1.bf16.msra.mxu0 %v6763
  %6770 = vmatprep.subr.bf16.mxu0 0
  %6771 = vmatpush1.bf16.msra.mxu0 0
  %6772 = vmatprep.subr.bf16.mxu0 0
  %6773 = vmatpush1.bf16.msra.mxu0 0
  %6774 = vmatprep.subr.bf16.mxu0 0
  %6775 = vmatpush1.bf16.msra.mxu0 0
  %6776 = vmatprep.subr.bf16.mxu0 0
  %6777 = vmatpush1.bf16.msra.mxu0 0
  %6778 = vmatprep.subr.bf16.mxu0 0
  %6779 = vmatpush1.bf16.msra.mxu0 0
  %6780 = vmatprep.subr.bf16.mxu0 0
  %6781 = vmatpush1.bf16.msra.mxu0 0
  %6782 = vmatprep.subr.bf16.mxu0 0
  %6783 = vmatpush1.bf16.msra.mxu0 0
  %6784 = vmatprep.subr.bf16.mxu0 0
  %6785 = vmatpush1.bf16.msra.mxu0 0
  %6786 = vmatprep.subr.bf16.mxu0 0
  %6787 = vmatpush1.bf16.msra.mxu0 0
  %6788 = vmatprep.subr.bf16.mxu0 0
  %6789 = vmatpush1.bf16.msra.mxu0 0
  %6790 = vmatprep.subr.bf16.mxu0 0
  %6791 = vmatpush1.bf16.msra.mxu0 0
  %6792 = vmatprep.subr.bf16.mxu0 0
  %6793 = vmatpush1.bf16.msra.mxu0 0
  %6794 = vmatprep.subr.bf16.mxu0 0
  %6795 = vmatpush1.bf16.msra.mxu0 0
  %6796 = vmatprep.subr.bf16.mxu0 0
  %6797 = vmatpush1.bf16.msra.mxu0 0
  %6798 = vmatprep.subr.bf16.mxu0 0
  %6799 = vmatpush1.bf16.msra.mxu0 0
  %6800 = vmatprep.mubr.bf16.mxu0 0
  %6801 = vmatmul.mubr.bf16.gmra.mrb[0].mxu0 %v6766
  %v6802 = vpop.f32.mrb[0].mxu0
  %v6803 = vadd.f32 0.0, %v6802
  %v6804 = vpop.f32.mrb[0].mxu0
  %v6805 = vpop.f32.mrb[0].mxu0
  %v6806 = vadd.f32 0.0, %v6805
  %v6807 = vpop.f32.mrb[0].mxu0
  %6808 = vdwg.mxu0
  %6810 = vrot.lane.b32.xlu0 %v542, 64
  %v6811 = vpop.permute.xlu0 %6810
  %v6814 = vsel %vm3896, %v5335, 0
  %6816 = vmatprep.subr.bf16.mxu0 0
  %6817 = vmatpush1.bf16.msra.mxu0 %v6811
  %6818 = vmatprep.subr.bf16.mxu0 0
  %6819 = vmatpush1.bf16.msra.mxu0 0
  %6820 = vmatprep.subr.bf16.mxu0 0
  %6821 = vmatpush1.bf16.msra.mxu0 0
  %6822 = vmatprep.subr.bf16.mxu0 0
  %6823 = vmatpush1.bf16.msra.mxu0 0
  %6824 = vmatprep.subr.bf16.mxu0 0
  %6825 = vmatpush1.bf16.msra.mxu0 0
  %6826 = vmatprep.subr.bf16.mxu0 0
  %6827 = vmatpush1.bf16.msra.mxu0 0
  %6828 = vmatprep.subr.bf16.mxu0 0
  %6829 = vmatpush1.bf16.msra.mxu0 0
  %6830 = vmatprep.subr.bf16.mxu0 0
  %6831 = vmatpush1.bf16.msra.mxu0 0
  %6832 = vmatprep.subr.bf16.mxu0 0
  %6833 = vmatpush1.bf16.msra.mxu0 0
  %6834 = vmatprep.subr.bf16.mxu0 0
  %6835 = vmatpush1.bf16.msra.mxu0 0
  %6836 = vmatprep.subr.bf16.mxu0 0
  %6837 = vmatpush1.bf16.msra.mxu0 0
  %6838 = vmatprep.subr.bf16.mxu0 0
  %6839 = vmatpush1.bf16.msra.mxu0 0
  %6840 = vmatprep.subr.bf16.mxu0 0
  %6841 = vmatpush1.bf16.msra.mxu0 0
  %6842 = vmatprep.subr.bf16.mxu0 0
  %6843 = vmatpush1.bf16.msra.mxu0 0
  %6844 = vmatprep.subr.bf16.mxu0 0
  %6845 = vmatpush1.bf16.msra.mxu0 0
  %6846 = vmatprep.subr.bf16.mxu0 0
  %6847 = vmatpush1.bf16.msra.mxu0 0
  %6848 = vmatprep.mubr.bf16.mxu0 0
  %6849 = vmatmul.mubr.bf16.gmra.mrb[0].mxu0 %v6814
  %v6850 = vpop.f32.mrb[0].mxu0
  %v6851 = vadd.f32 0.0, %v6850
  %v6852 = vpop.f32.mrb[0].mxu0
  %v6853 = vpop.f32.mrb[0].mxu0
  %v6854 = vadd.f32 0.0, %v6853
  %v6855 = vpop.f32.mrb[0].mxu0
  %6856 = vdwg.mxu0
  %6858 = vrot.lane.b32.xlu0 %v543, 64
  %v6859 = vpop.permute.xlu0 %6858
  %v6862 = vsel %vm3896, %v5336, 0
  %6864 = vmatprep.subr.bf16.mxu0 0
  %6865 = vmatpush1.bf16.msra.mxu0 %v6859
  %6866 = vmatprep.subr.bf16.mxu0 0
  %6867 = vmatpush1.bf16.msra.mxu0 0
  %6868 = vmatprep.subr.bf16.mxu0 0
  %6869 = vmatpush1.bf16.msra.mxu0 0
  %6870 = vmatprep.subr.bf16.mxu0 0
  %6871 = vmatpush1.bf16.msra.mxu0 0
  %6872 = vmatprep.subr.bf16.mxu0 0
  %6873 = vmatpush1.bf16.msra.mxu0 0
  %6874 = vmatprep.subr.bf16.mxu0 0
  %6875 = vmatpush1.bf16.msra.mxu0 0
  %6876 = vmatprep.subr.bf16.mxu0 0
  %6877 = vmatpush1.bf16.msra.mxu0 0
  %6878 = vmatprep.subr.bf16.mxu0 0
  %6879 = vmatpush1.bf16.msra.mxu0 0
  %6880 = vmatprep.subr.bf16.mxu0 0
  %6881 = vmatpush1.bf16.msra.mxu0 0
  %6882 = vmatprep.subr.bf16.mxu0 0
  %6883 = vmatpush1.bf16.msra.mxu0 0
  %6884 = vmatprep.subr.bf16.mxu0 0
  %6885 = vmatpush1.bf16.msra.mxu0 0
  %6886 = vmatprep.subr.bf16.mxu0 0
  %6887 = vmatpush1.bf16.msra.mxu0 0
  %6888 = vmatprep.subr.bf16.mxu0 0
  %6889 = vmatpush1.bf16.msra.mxu0 0
  %6890 = vmatprep.subr.bf16.mxu0 0
  %6891 = vmatpush1.bf16.msra.mxu0 0
  %6892 = vmatprep.subr.bf16.mxu0 0
  %6893 = vmatpush1.bf16.msra.mxu0 0
  %6894 = vmatprep.subr.bf16.mxu0 0
  %6895 = vmatpush1.bf16.msra.mxu0 0
  %6896 = vmatprep.mubr.bf16.mxu0 0
  %6897 = vmatmul.mubr.bf16.gmra.mrb[0].mxu0 %v6862
  %v6898 = vpop.f32.mrb[0].mxu0
  %v6899 = vadd.f32 0.0, %v6898
  %v6900 = vpop.f32.mrb[0].mxu0
  %v6901 = vpop.f32.mrb[0].mxu0
  %v6902 = vadd.f32 0.0, %v6901
  %v6903 = vpop.f32.mrb[0].mxu0
  %6904 = vdwg.mxu0
  %6906 = vrot.lane.b32.xlu0 %v544, 64
  %v6907 = vpop.permute.xlu0 %6906
  %v6910 = vsel %vm3896, %v5337, 0
  %6912 = vmatprep.subr.bf16.mxu0 0
  %6913 = vmatpush1.bf16.msra.mxu0 %v6907
  %6914 = vmatprep.subr.bf16.mxu0 0
  %6915 = vmatpush1.bf16.msra.mxu0 0
  %6916 = vmatprep.subr.bf16.mxu0 0
  %6917 = vmatpush1.bf16.msra.mxu0 0
  %6918 = vmatprep.subr.bf16.mxu0 0
  %6919 = vmatpush1.bf16.msra.mxu0 0
  %6920 = vmatprep.subr.bf16.mxu0 0
  %6921 = vmatpush1.bf16.msra.mxu0 0
  %6922 = vmatprep.subr.bf16.mxu0 0
  %6923 = vmatpush1.bf16.msra.mxu0 0
  %6924 = vmatprep.subr.bf16.mxu0 0
  %6925 = vmatpush1.bf16.msra.mxu0 0
  %6926 = vmatprep.subr.bf16.mxu0 0
  %6927 = vmatpush1.bf16.msra.mxu0 0
  %6928 = vmatprep.subr.bf16.mxu0 0
  %6929 = vmatpush1.bf16.msra.mxu0 0
  %6930 = vmatprep.subr.bf16.mxu0 0
  %6931 = vmatpush1.bf16.msra.mxu0 0
  %6932 = vmatprep.subr.bf16.mxu0 0
  %6933 = vmatpush1.bf16.msra.mxu0 0
  %6934 = vmatprep.subr.bf16.mxu0 0
  %6935 = vmatpush1.bf16.msra.mxu0 0
  %6936 = vmatprep.subr.bf16.mxu0 0
  %6937 = vmatpush1.bf16.msra.mxu0 0
  %6938 = vmatprep.subr.bf16.mxu0 0
  %6939 = vmatpush1.bf16.msra.mxu0 0
  %6940 = vmatprep.subr.bf16.mxu0 0
  %6941 = vmatpush1.bf16.msra.mxu0 0
  %6942 = vmatprep.subr.bf16.mxu0 0
  %6943 = vmatpush1.bf16.msra.mxu0 0
  %6944 = vmatprep.mubr.bf16.mxu0 0
  %6945 = vmatmul.mubr.bf16.gmra.mrb[0].mxu0 %v6910
  %v6946 = vpop.f32.mrb[0].mxu0
  %v6947 = vadd.f32 0.0, %v6946
  %v6948 = vpop.f32.mrb[0].mxu0
  %v6949 = vpop.f32.mrb[0].mxu0
  %v6950 = vadd.f32 0.0, %v6949
  %v6951 = vpop.f32.mrb[0].mxu0
  %6952 = vdwg.mxu0
  %6954 = vrot.lane.b32.xlu0 %v545, 64
  %v6955 = vpop.permute.xlu0 %6954
  %v6958 = vsel %vm3896, %v5338, 0
  %6960 = vmatprep.subr.bf16.mxu0 0
  %6961 = vmatpush1.bf16.msra.mxu0 %v6955
  %6962 = vmatprep.subr.bf16.mxu0 0
  %6963 = vmatpush1.bf16.msra.mxu0 0
  %6964 = vmatprep.subr.bf16.mxu0 0
  %6965 = vmatpush1.bf16.msra.mxu0 0
  %6966 = vmatprep.subr.bf16.mxu0 0
  %6967 = vmatpush1.bf16.msra.mxu0 0
  %6968 = vmatprep.subr.bf16.mxu0 0
  %6969 = vmatpush1.bf16.msra.mxu0 0
  %6970 = vmatprep.subr.bf16.mxu0 0
  %6971 = vmatpush1.bf16.msra.mxu0 0
  %6972 = vmatprep.subr.bf16.mxu0 0
  %6973 = vmatpush1.bf16.msra.mxu0 0
  %6974 = vmatprep.subr.bf16.mxu0 0
  %6975 = vmatpush1.bf16.msra.mxu0 0
  %6976 = vmatprep.subr.bf16.mxu0 0
  %6977 = vmatpush1.bf16.msra.mxu0 0
  %6978 = vmatprep.subr.bf16.mxu0 0
  %6979 = vmatpush1.bf16.msra.mxu0 0
  %6980 = vmatprep.subr.bf16.mxu0 0
  %6981 = vmatpush1.bf16.msra.mxu0 0
  %6982 = vmatprep.subr.bf16.mxu0 0
  %6983 = vmatpush1.bf16.msra.mxu0 0
  %6984 = vmatprep.subr.bf16.mxu0 0
  %6985 = vmatpush1.bf16.msra.mxu0 0
  %6986 = vmatprep.subr.bf16.mxu0 0
  %6987 = vmatpush1.bf16.msra.mxu0 0
  %6988 = vmatprep.subr.bf16.mxu0 0
  %6989 = vmatpush1.bf16.msra.mxu0 0
  %6990 = vmatprep.subr.bf16.mxu0 0
  %6991 = vmatpush1.bf16.msra.mxu0 0
  %6992 = vmatprep.mubr.bf16.mxu0 0
  %6993 = vmatmul.mubr.bf16.gmra.mrb[0].mxu0 %v6958
  %v6994 = vpop.f32.mrb[0].mxu0
  %v6995 = vadd.f32 0.0, %v6994
  %v6996 = vpop.f32.mrb[0].mxu0
  %v6997 = vpop.f32.mrb[0].mxu0
  %v6998 = vadd.f32 0.0, %v6997
  %v6999 = vpop.f32.mrb[0].mxu0
  %7000 = vdwg.mxu0
  %7002 = vrot.lane.b32.xlu0 %v546, 64
  %v7003 = vpop.permute.xlu0 %7002
  %v7006 = vsel %vm3896, %v5339, 0
  %7008 = vmatprep.subr.bf16.mxu0 0
  %7009 = vmatpush1.bf16.msra.mxu0 %v7003
  %7010 = vmatprep.subr.bf16.mxu0 0
  %7011 = vmatpush1.bf16.msra.mxu0 0
  %7012 = vmatprep.subr.bf16.mxu0 0
  %7013 = vmatpush1.bf16.msra.mxu0 0
  %7014 = vmatprep.subr.bf16.mxu0 0
  %7015 = vmatpush1.bf16.msra.mxu0 0
  %7016 = vmatprep.subr.bf16.mxu0 0
  %7017 = vmatpush1.bf16.msra.mxu0 0
  %7018 = vmatprep.subr.bf16.mxu0 0
  %7019 = vmatpush1.bf16.msra.mxu0 0
  %7020 = vmatprep.subr.bf16.mxu0 0
  %7021 = vmatpush1.bf16.msra.mxu0 0
  %7022 = vmatprep.subr.bf16.mxu0 0
  %7023 = vmatpush1.bf16.msra.mxu0 0
  %7024 = vmatprep.subr.bf16.mxu0 0
  %7025 = vmatpush1.bf16.msra.mxu0 0
  %7026 = vmatprep.subr.bf16.mxu0 0
  %7027 = vmatpush1.bf16.msra.mxu0 0
  %7028 = vmatprep.subr.bf16.mxu0 0
  %7029 = vmatpush1.bf16.msra.mxu0 0
  %7030 = vmatprep.subr.bf16.mxu0 0
  %7031 = vmatpush1.bf16.msra.mxu0 0
  %7032 = vmatprep.subr.bf16.mxu0 0
  %7033 = vmatpush1.bf16.msra.mxu0 0
  %7034 = vmatprep.subr.bf16.mxu0 0
  %7035 = vmatpush1.bf16.msra.mxu0 0
  %7036 = vmatprep.subr.bf16.mxu0 0
  %7037 = vmatpush1.bf16.msra.mxu0 0
  %7038 = vmatprep.subr.bf16.mxu0 0
  %7039 = vmatpush1.bf16.msra.mxu0 0
  %7040 = vmatprep.mubr.bf16.mxu0 0
  %7041 = vmatmul.mubr.bf16.gmra.mrb[0].mxu0 %v7006
  %v7042 = vpop.f32.mrb[0].mxu0
  %v7043 = vadd.f32 0.0, %v7042
  %v7044 = vpop.f32.mrb[0].mxu0
  %v7045 = vpop.f32.mrb[0].mxu0
  %v7046 = vadd.f32 0.0, %v7045
  %v7047 = vpop.f32.mrb[0].mxu0
  %7048 = vdwg.mxu0
  %7050 = vrot.lane.b32.xlu0 %v547, 64
  %v7051 = vpop.permute.xlu0 %7050
  %v7054 = vsel %vm3896, %v5340, 0
  %7056 = vmatprep.subr.bf16.mxu0 0
  %7057 = vmatpush1.bf16.msra.mxu0 %v7051
  %7058 = vmatprep.subr.bf16.mxu0 0
  %7059 = vmatpush1.bf16.msra.mxu0 0
  %7060 = vmatprep.subr.bf16.mxu0 0
  %7061 = vmatpush1.bf16.msra.mxu0 0
  %7062 = vmatprep.subr.bf16.mxu0 0
  %7063 = vmatpush1.bf16.msra.mxu0 0
  %7064 = vmatprep.subr.bf16.mxu0 0
  %7065 = vmatpush1.bf16.msra.mxu0 0
  %7066 = vmatprep.subr.bf16.mxu0 0
  %7067 = vmatpush1.bf16.msra.mxu0 0
  %7068 = vmatprep.subr.bf16.mxu0 0
  %7069 = vmatpush1.bf16.msra.mxu0 0
  %7070 = vmatprep.subr.bf16.mxu0 0
  %7071 = vmatpush1.bf16.msra.mxu0 0
  %7072 = vmatprep.subr.bf16.mxu0 0
  %7073 = vmatpush1.bf16.msra.mxu0 0
  %7074 = vmatprep.subr.bf16.mxu0 0
  %7075 = vmatpush1.bf16.msra.mxu0 0
  %7076 = vmatprep.subr.bf16.mxu0 0
  %7077 = vmatpush1.bf16.msra.mxu0 0
  %7078 = vmatprep.subr.bf16.mxu0 0
  %7079 = vmatpush1.bf16.msra.mxu0 0
  %7080 = vmatprep.subr.bf16.mxu0 0
  %7081 = vmatpush1.bf16.msra.mxu0 0
  %7082 = vmatprep.subr.bf16.mxu0 0
  %7083 = vmatpush1.bf16.msra.mxu0 0
  %7084 = vmatprep.subr.bf16.mxu0 0
  %7085 = vmatpush1.bf16.msra.mxu0 0
  %7086 = vmatprep.subr.bf16.mxu0 0
  %7087 = vmatpush1.bf16.msra.mxu0 0
  %7088 = vmatprep.mubr.bf16.mxu0 0
  %7089 = vmatmul.mubr.bf16.gmra.mrb[0].mxu0 %v7054
  %v7090 = vpop.f32.mrb[0].mxu0
  %v7091 = vadd.f32 0.0, %v7090
  %v7092 = vpop.f32.mrb[0].mxu0
  %v7093 = vpop.f32.mrb[0].mxu0
  %v7094 = vadd.f32 0.0, %v7093
  %v7095 = vpop.f32.mrb[0].mxu0
  %7096 = vdwg.mxu0
  %7098 = vrot.lane.b32.xlu0 %v548, 64
  %v7099 = vpop.permute.xlu0 %7098
  %v7102 = vsel %vm3896, %v5341, 0
  %7104 = vmatprep.subr.bf16.mxu0 0
  %7105 = vmatpush1.bf16.msra.mxu0 %v7099
  %7106 = vmatprep.subr.bf16.mxu0 0
  %7107 = vmatpush1.bf16.msra.mxu0 0
  %7108 = vmatprep.subr.bf16.mxu0 0
  %7109 = vmatpush1.bf16.msra.mxu0 0
  %7110 = vmatprep.subr.bf16.mxu0 0
  %7111 = vmatpush1.bf16.msra.mxu0 0
  %7112 = vmatprep.subr.bf16.mxu0 0
  %7113 = vmatpush1.bf16.msra.mxu0 0
  %7114 = vmatprep.subr.bf16.mxu0 0
  %7115 = vmatpush1.bf16.msra.mxu0 0
  %7116 = vmatprep.subr.bf16.mxu0 0
  %7117 = vmatpush1.bf16.msra.mxu0 0
  %7118 = vmatprep.subr.bf16.mxu0 0
  %7119 = vmatpush1.bf16.msra.mxu0 0
  %7120 = vmatprep.subr.bf16.mxu0 0
  %7121 = vmatpush1.bf16.msra.mxu0 0
  %7122 = vmatprep.subr.bf16.mxu0 0
  %7123 = vmatpush1.bf16.msra.mxu0 0
  %7124 = vmatprep.subr.bf16.mxu0 0
  %7125 = vmatpush1.bf16.msra.mxu0 0
  %7126 = vmatprep.subr.bf16.mxu0 0
  %7127 = vmatpush1.bf16.msra.mxu0 0
  %7128 = vmatprep.subr.bf16.mxu0 0
  %7129 = vmatpush1.bf16.msra.mxu0 0
  %7130 = vmatprep.subr.bf16.mxu0 0
  %7131 = vmatpush1.bf16.msra.mxu0 0
  %7132 = vmatprep.subr.bf16.mxu0 0
  %7133 = vmatpush1.bf16.msra.mxu0 0
  %7134 = vmatprep.subr.bf16.mxu0 0
  %7135 = vmatpush1.bf16.msra.mxu0 0
  %7136 = vmatprep.mubr.bf16.mxu0 0
  %7137 = vmatmul.mubr.bf16.gmra.mrb[0].mxu0 %v7102
  %v7138 = vpop.f32.mrb[0].mxu0
  %v7139 = vadd.f32 0.0, %v7138
  %v7140 = vpop.f32.mrb[0].mxu0
  %v7141 = vpop.f32.mrb[0].mxu0
  %v7142 = vadd.f32 0.0, %v7141
  %v7143 = vpop.f32.mrb[0].mxu0
  %7144 = vdwg.mxu0
  %7146 = vrot.lane.b32.xlu0 %v549, 64
  %v7147 = vpop.permute.xlu0 %7146
  %v7150 = vsel %vm3896, %v5342, 0
  %7152 = vmatprep.subr.bf16.mxu0 0
  %7153 = vmatpush1.bf16.msra.mxu0 %v7147
  %7154 = vmatprep.subr.bf16.mxu0 0
  %7155 = vmatpush1.bf16.msra.mxu0 0
  %7156 = vmatprep.subr.bf16.mxu0 0
  %7157 = vmatpush1.bf16.msra.mxu0 0
  %7158 = vmatprep.subr.bf16.mxu0 0
  %7159 = vmatpush1.bf16.msra.mxu0 0
  %7160 = vmatprep.subr.bf16.mxu0 0
  %7161 = vmatpush1.bf16.msra.mxu0 0
  %7162 = vmatprep.subr.bf16.mxu0 0
  %7163 = vmatpush1.bf16.msra.mxu0 0
  %7164 = vmatprep.subr.bf16.mxu0 0
  %7165 = vmatpush1.bf16.msra.mxu0 0
  %7166 = vmatprep.subr.bf16.mxu0 0
  %7167 = vmatpush1.bf16.msra.mxu0 0
  %7168 = vmatprep.subr.bf16.mxu0 0
  %7169 = vmatpush1.bf16.msra.mxu0 0
  %7170 = vmatprep.subr.bf16.mxu0 0
  %7171 = vmatpush1.bf16.msra.mxu0 0
  %7172 = vmatprep.subr.bf16.mxu0 0
  %7173 = vmatpush1.bf16.msra.mxu0 0
  %7174 = vmatprep.subr.bf16.mxu0 0
  %7175 = vmatpush1.bf16.msra.mxu0 0
  %7176 = vmatprep.subr.bf16.mxu0 0
  %7177 = vmatpush1.bf16.msra.mxu0 0
  %7178 = vmatprep.subr.bf16.mxu0 0
  %7179 = vmatpush1.bf16.msra.mxu0 0
  %7180 = vmatprep.subr.bf16.mxu0 0
  %7181 = vmatpush1.bf16.msra.mxu0 0
  %7182 = vmatprep.subr.bf16.mxu0 0
  %7183 = vmatpush1.bf16.msra.mxu0 0
  %7184 = vmatprep.mubr.bf16.mxu0 0
  %7185 = vmatmul.mubr.bf16.gmra.mrb[0].mxu0 %v7150
  %v7186 = vpop.f32.mrb[0].mxu0
  %v7187 = vadd.f32 0.0, %v7186
  %v7188 = vpop.f32.mrb[0].mxu0
  %v7189 = vpop.f32.mrb[0].mxu0
  %v7190 = vadd.f32 0.0, %v7189
  %v7191 = vpop.f32.mrb[0].mxu0
  %7192 = vdwg.mxu0
  %7194 = vrot.lane.b32.xlu0 %v550, 64
  %v7195 = vpop.permute.xlu0 %7194
  %v7198 = vsel %vm3896, %v5343, 0
  %7200 = vmatprep.subr.bf16.mxu0 0
  %7201 = vmatpush1.bf16.msra.mxu0 %v7195
  %7202 = vmatprep.subr.bf16.mxu0 0
  %7203 = vmatpush1.bf16.msra.mxu0 0
  %7204 = vmatprep.subr.bf16.mxu0 0
  %7205 = vmatpush1.bf16.msra.mxu0 0
  %7206 = vmatprep.subr.bf16.mxu0 0
  %7207 = vmatpush1.bf16.msra.mxu0 0
  %7208 = vmatprep.subr.bf16.mxu0 0
  %7209 = vmatpush1.bf16.msra.mxu0 0
  %7210 = vmatprep.subr.bf16.mxu0 0
  %7211 = vmatpush1.bf16.msra.mxu0 0
  %7212 = vmatprep.subr.bf16.mxu0 0
  %7213 = vmatpush1.bf16.msra.mxu0 0
  %7214 = vmatprep.subr.bf16.mxu0 0
  %7215 = vmatpush1.bf16.msra.mxu0 0
  %7216 = vmatprep.subr.bf16.mxu0 0
  %7217 = vmatpush1.bf16.msra.mxu0 0
  %7218 = vmatprep.subr.bf16.mxu0 0
  %7219 = vmatpush1.bf16.msra.mxu0 0
  %7220 = vmatprep.subr.bf16.mxu0 0
  %7221 = vmatpush1.bf16.msra.mxu0 0
  %7222 = vmatprep.subr.bf16.mxu0 0
  %7223 = vmatpush1.bf16.msra.mxu0 0
  %7224 = vmatprep.subr.bf16.mxu0 0
  %7225 = vmatpush1.bf16.msra.mxu0 0
  %7226 = vmatprep.subr.bf16.mxu0 0
  %7227 = vmatpush1.bf16.msra.mxu0 0
  %7228 = vmatprep.subr.bf16.mxu0 0
  %7229 = vmatpush1.bf16.msra.mxu0 0
  %7230 = vmatprep.subr.bf16.mxu0 0
  %7231 = vmatpush1.bf16.msra.mxu0 0
  %7232 = vmatprep.mubr.bf16.mxu0 0
  %7233 = vmatmul.mubr.bf16.gmra.mrb[0].mxu0 %v7198
  %v7234 = vpop.f32.mrb[0].mxu0
  %v7235 = vadd.f32 0.0, %v7234
  %v7236 = vpop.f32.mrb[0].mxu0
  %v7237 = vpop.f32.mrb[0].mxu0
  %v7238 = vadd.f32 0.0, %v7237
  %v7239 = vpop.f32.mrb[0].mxu0
  %7240 = vdwg.mxu0
  %7242 = vrot.lane.b32.xlu0 %v551, 64
  %v7243 = vpop.permute.xlu0 %7242
  %v7246 = vsel %vm3896, %v5344, 0
  %7248 = vmatprep.subr.bf16.mxu0 0
  %7249 = vmatpush1.bf16.msra.mxu0 %v7243
  %7250 = vmatprep.subr.bf16.mxu0 0
  %7251 = vmatpush1.bf16.msra.mxu0 0
  %7252 = vmatprep.subr.bf16.mxu0 0
  %7253 = vmatpush1.bf16.msra.mxu0 0
  %7254 = vmatprep.subr.bf16.mxu0 0
  %7255 = vmatpush1.bf16.msra.mxu0 0
  %7256 = vmatprep.subr.bf16.mxu0 0
  %7257 = vmatpush1.bf16.msra.mxu0 0
  %7258 = vmatprep.subr.bf16.mxu0 0
  %7259 = vmatpush1.bf16.msra.mxu0 0
  %7260 = vmatprep.subr.bf16.mxu0 0
  %7261 = vmatpush1.bf16.msra.mxu0 0
  %7262 = vmatprep.subr.bf16.mxu0 0
  %7263 = vmatpush1.bf16.msra.mxu0 0
  %7264 = vmatprep.subr.bf16.mxu0 0
  %7265 = vmatpush1.bf16.msra.mxu0 0
  %7266 = vmatprep.subr.bf16.mxu0 0
  %7267 = vmatpush1.bf16.msra.mxu0 0
  %7268 = vmatprep.subr.bf16.mxu0 0
  %7269 = vmatpush1.bf16.msra.mxu0 0
  %7270 = vmatprep.subr.bf16.mxu0 0
  %7271 = vmatpush1.bf16.msra.mxu0 0
  %7272 = vmatprep.subr.bf16.mxu0 0
  %7273 = vmatpush1.bf16.msra.mxu0 0
  %7274 = vmatprep.subr.bf16.mxu0 0
  %7275 = vmatpush1.bf16.msra.mxu0 0
  %7276 = vmatprep.subr.bf16.mxu0 0
  %7277 = vmatpush1.bf16.msra.mxu0 0
  %7278 = vmatprep.subr.bf16.mxu0 0
  %7279 = vmatpush1.bf16.msra.mxu0 0
  %7280 = vmatprep.mubr.bf16.mxu0 0
  %7281 = vmatmul.mubr.bf16.gmra.mrb[0].mxu0 %v7246
  %v7282 = vpop.f32.mrb[0].mxu0
  %v7283 = vadd.f32 0.0, %v7282
  %v7284 = vpop.f32.mrb[0].mxu0
  %v7285 = vpop.f32.mrb[0].mxu0
  %v7286 = vadd.f32 0.0, %v7285
  %v7287 = vpop.f32.mrb[0].mxu0
  %7288 = vdwg.mxu0
  %7290 = vrot.lane.b32.xlu0 %v552, 64
  %v7291 = vpop.permute.xlu0 %7290
  %v7294 = vsel %vm3896, %v5345, 0
  %7296 = vmatprep.subr.bf16.mxu0 0
  %7297 = vmatpush1.bf16.msra.mxu0 %v7291
  %7298 = vmatprep.subr.bf16.mxu0 0
  %7299 = vmatpush1.bf16.msra.mxu0 0
  %7300 = vmatprep.subr.bf16.mxu0 0
  %7301 = vmatpush1.bf16.msra.mxu0 0
  %7302 = vmatprep.subr.bf16.mxu0 0
  %7303 = vmatpush1.bf16.msra.mxu0 0
  %7304 = vmatprep.subr.bf16.mxu0 0
  %7305 = vmatpush1.bf16.msra.mxu0 0
  %7306 = vmatprep.subr.bf16.mxu0 0
  %7307 = vmatpush1.bf16.msra.mxu0 0
  %7308 = vmatprep.subr.bf16.mxu0 0
  %7309 = vmatpush1.bf16.msra.mxu0 0
  %7310 = vmatprep.subr.bf16.mxu0 0
  %7311 = vmatpush1.bf16.msra.mxu0 0
  %7312 = vmatprep.subr.bf16.mxu0 0
  %7313 = vmatpush1.bf16.msra.mxu0 0
  %7314 = vmatprep.subr.bf16.mxu0 0
  %7315 = vmatpush1.bf16.msra.mxu0 0
  %7316 = vmatprep.subr.bf16.mxu0 0
  %7317 = vmatpush1.bf16.msra.mxu0 0
  %7318 = vmatprep.subr.bf16.mxu0 0
  %7319 = vmatpush1.bf16.msra.mxu0 0
  %7320 = vmatprep.subr.bf16.mxu0 0
  %7321 = vmatpush1.bf16.msra.mxu0 0
  %7322 = vmatprep.subr.bf16.mxu0 0
  %7323 = vmatpush1.bf16.msra.mxu0 0
  %7324 = vmatprep.subr.bf16.mxu0 0
  %7325 = vmatpush1.bf16.msra.mxu0 0
  %7326 = vmatprep.subr.bf16.mxu0 0
  %7327 = vmatpush1.bf16.msra.mxu0 0
  %7328 = vmatprep.mubr.bf16.mxu0 0
  %7329 = vmatmul.mubr.bf16.gmra.mrb[0].mxu0 %v7294
  %v7330 = vpop.f32.mrb[0].mxu0
  %v7331 = vadd.f32 0.0, %v7330
  %v7332 = vpop.f32.mrb[0].mxu0
  %v7333 = vpop.f32.mrb[0].mxu0
  %v7334 = vadd.f32 0.0, %v7333
  %v7335 = vpop.f32.mrb[0].mxu0
  %7336 = vdwg.mxu0
  %7338 = vrot.lane.b32.xlu0 %v553, 64
  %v7339 = vpop.permute.xlu0 %7338
  %v7342 = vsel %vm3896, %v5346, 0
  %7344 = vmatprep.subr.bf16.mxu0 0
  %7345 = vmatpush1.bf16.msra.mxu0 %v7339
  %7346 = vmatprep.subr.bf16.mxu0 0
  %7347 = vmatpush1.bf16.msra.mxu0 0
  %7348 = vmatprep.subr.bf16.mxu0 0
  %7349 = vmatpush1.bf16.msra.mxu0 0
  %7350 = vmatprep.subr.bf16.mxu0 0
  %7351 = vmatpush1.bf16.msra.mxu0 0
  %7352 = vmatprep.subr.bf16.mxu0 0
  %7353 = vmatpush1.bf16.msra.mxu0 0
  %7354 = vmatprep.subr.bf16.mxu0 0
  %7355 = vmatpush1.bf16.msra.mxu0 0
  %7356 = vmatprep.subr.bf16.mxu0 0
  %7357 = vmatpush1.bf16.msra.mxu0 0
  %7358 = vmatprep.subr.bf16.mxu0 0
  %7359 = vmatpush1.bf16.msra.mxu0 0
  %7360 = vmatprep.subr.bf16.mxu0 0
  %7361 = vmatpush1.bf16.msra.mxu0 0
  %7362 = vmatprep.subr.bf16.mxu0 0
  %7363 = vmatpush1.bf16.msra.mxu0 0
  %7364 = vmatprep.subr.bf16.mxu0 0
  %7365 = vmatpush1.bf16.msra.mxu0 0
  %7366 = vmatprep.subr.bf16.mxu0 0
  %7367 = vmatpush1.bf16.msra.mxu0 0
  %7368 = vmatprep.subr.bf16.mxu0 0
  %7369 = vmatpush1.bf16.msra.mxu0 0
  %7370 = vmatprep.subr.bf16.mxu0 0
  %7371 = vmatpush1.bf16.msra.mxu0 0
  %7372 = vmatprep.subr.bf16.mxu0 0
  %7373 = vmatpush1.bf16.msra.mxu0 0
  %7374 = vmatprep.subr.bf16.mxu0 0
  %7375 = vmatpush1.bf16.msra.mxu0 0
  %7376 = vmatprep.mubr.bf16.mxu0 0
  %7377 = vmatmul.mubr.bf16.gmra.mrb[0].mxu0 %v7342
  %v7378 = vpop.f32.mrb[0].mxu0
  %v7379 = vadd.f32 0.0, %v7378
  %v7380 = vpop.f32.mrb[0].mxu0
  %v7381 = vpop.f32.mrb[0].mxu0
  %v7382 = vadd.f32 0.0, %v7381
  %v7383 = vpop.f32.mrb[0].mxu0
  %7384 = vdwg.mxu0
  %7386 = vrot.lane.b32.xlu0 %v554, 64
  %v7387 = vpop.permute.xlu0 %7386
  %v7390 = vsel %vm3896, %v5347, 0
  %7392 = vmatprep.subr.bf16.mxu0 0
  %7393 = vmatpush1.bf16.msra.mxu0 %v7387
  %7394 = vmatprep.subr.bf16.mxu0 0
  %7395 = vmatpush1.bf16.msra.mxu0 0
  %7396 = vmatprep.subr.bf16.mxu0 0
  %7397 = vmatpush1.bf16.msra.mxu0 0
  %7398 = vmatprep.subr.bf16.mxu0 0
  %7399 = vmatpush1.bf16.msra.mxu0 0
  %7400 = vmatprep.subr.bf16.mxu0 0
  %7401 = vmatpush1.bf16.msra.mxu0 0
  %7402 = vmatprep.subr.bf16.mxu0 0
  %7403 = vmatpush1.bf16.msra.mxu0 0
  %7404 = vmatprep.subr.bf16.mxu0 0
  %7405 = vmatpush1.bf16.msra.mxu0 0
  %7406 = vmatprep.subr.bf16.mxu0 0
  %7407 = vmatpush1.bf16.msra.mxu0 0
  %7408 = vmatprep.subr.bf16.mxu0 0
  %7409 = vmatpush1.bf16.msra.mxu0 0
  %7410 = vmatprep.subr.bf16.mxu0 0
  %7411 = vmatpush1.bf16.msra.mxu0 0
  %7412 = vmatprep.subr.bf16.mxu0 0
  %7413 = vmatpush1.bf16.msra.mxu0 0
  %7414 = vmatprep.subr.bf16.mxu0 0
  %7415 = vmatpush1.bf16.msra.mxu0 0
  %7416 = vmatprep.subr.bf16.mxu0 0
  %7417 = vmatpush1.bf16.msra.mxu0 0
  %7418 = vmatprep.subr.bf16.mxu0 0
  %7419 = vmatpush1.bf16.msra.mxu0 0
  %7420 = vmatprep.subr.bf16.mxu0 0
  %7421 = vmatpush1.bf16.msra.mxu0 0
  %7422 = vmatprep.subr.bf16.mxu0 0
  %7423 = vmatpush1.bf16.msra.mxu0 0
  %7424 = vmatprep.mubr.bf16.mxu0 0
  %7425 = vmatmul.mubr.bf16.gmra.mrb[0].mxu0 %v7390
  %v7426 = vpop.f32.mrb[0].mxu0
  %v7427 = vadd.f32 0.0, %v7426
  %v7428 = vpop.f32.mrb[0].mxu0
  %v7429 = vpop.f32.mrb[0].mxu0
  %v7430 = vadd.f32 0.0, %v7429
  %v7431 = vpop.f32.mrb[0].mxu0
  %7432 = vdwg.mxu0
  %7434 = vrot.lane.b32.xlu0 %v555, 64
  %v7435 = vpop.permute.xlu0 %7434
  %v7438 = vsel %vm3896, %v5348, 0
  %7440 = vmatprep.subr.bf16.mxu0 0
  %7441 = vmatpush1.bf16.msra.mxu0 %v7435
  %7442 = vmatprep.subr.bf16.mxu0 0
  %7443 = vmatpush1.bf16.msra.mxu0 0
  %7444 = vmatprep.subr.bf16.mxu0 0
  %7445 = vmatpush1.bf16.msra.mxu0 0
  %7446 = vmatprep.subr.bf16.mxu0 0
  %7447 = vmatpush1.bf16.msra.mxu0 0
  %7448 = vmatprep.subr.bf16.mxu0 0
  %7449 = vmatpush1.bf16.msra.mxu0 0
  %7450 = vmatprep.subr.bf16.mxu0 0
  %7451 = vmatpush1.bf16.msra.mxu0 0
  %7452 = vmatprep.subr.bf16.mxu0 0
  %7453 = vmatpush1.bf16.msra.mxu0 0
  %7454 = vmatprep.subr.bf16.mxu0 0
  %7455 = vmatpush1.bf16.msra.mxu0 0
  %7456 = vmatprep.subr.bf16.mxu0 0
  %7457 = vmatpush1.bf16.msra.mxu0 0
  %7458 = vmatprep.subr.bf16.mxu0 0
  %7459 = vmatpush1.bf16.msra.mxu0 0
  %7460 = vmatprep.subr.bf16.mxu0 0
  %7461 = vmatpush1.bf16.msra.mxu0 0
  %7462 = vmatprep.subr.bf16.mxu0 0
  %7463 = vmatpush1.bf16.msra.mxu0 0
  %7464 = vmatprep.subr.bf16.mxu0 0
  %7465 = vmatpush1.bf16.msra.mxu0 0
  %7466 = vmatprep.subr.bf16.mxu0 0
  %7467 = vmatpush1.bf16.msra.mxu0 0
  %7468 = vmatprep.subr.bf16.mxu0 0
  %7469 = vmatpush1.bf16.msra.mxu0 0
  %7470 = vmatprep.subr.bf16.mxu0 0
  %7471 = vmatpush1.bf16.msra.mxu0 0
  %7472 = vmatprep.mubr.bf16.mxu0 0
  %7473 = vmatmul.mubr.bf16.gmra.mrb[0].mxu0 %v7438
  %v7474 = vpop.f32.mrb[0].mxu0
  %v7475 = vadd.f32 0.0, %v7474
  %v7476 = vpop.f32.mrb[0].mxu0
  %v7477 = vpop.f32.mrb[0].mxu0
  %v7478 = vadd.f32 0.0, %v7477
  %v7479 = vpop.f32.mrb[0].mxu0
  %7480 = vdwg.mxu0
  %7482 = vrot.lane.b32.xlu0 %v556, 64
  %v7483 = vpop.permute.xlu0 %7482
  %v7486 = vsel %vm3896, %v5349, 0
  %7488 = vmatprep.subr.bf16.mxu0 0
  %7489 = vmatpush1.bf16.msra.mxu0 %v7483
  %7490 = vmatprep.subr.bf16.mxu0 0
  %7491 = vmatpush1.bf16.msra.mxu0 0
  %7492 = vmatprep.subr.bf16.mxu0 0
  %7493 = vmatpush1.bf16.msra.mxu0 0
  %7494 = vmatprep.subr.bf16.mxu0 0
  %7495 = vmatpush1.bf16.msra.mxu0 0
  %7496 = vmatprep.subr.bf16.mxu0 0
  %7497 = vmatpush1.bf16.msra.mxu0 0
  %7498 = vmatprep.subr.bf16.mxu0 0
  %7499 = vmatpush1.bf16.msra.mxu0 0
  %7500 = vmatprep.subr.bf16.mxu0 0
  %7501 = vmatpush1.bf16.msra.mxu0 0
  %7502 = vmatprep.subr.bf16.mxu0 0
  %7503 = vmatpush1.bf16.msra.mxu0 0
  %7504 = vmatprep.subr.bf16.mxu0 0
  %7505 = vmatpush1.bf16.msra.mxu0 0
  %7506 = vmatprep.subr.bf16.mxu0 0
  %7507 = vmatpush1.bf16.msra.mxu0 0
  %7508 = vmatprep.subr.bf16.mxu0 0
  %7509 = vmatpush1.bf16.msra.mxu0 0
  %7510 = vmatprep.subr.bf16.mxu0 0
  %7511 = vmatpush1.bf16.msra.mxu0 0
  %7512 = vmatprep.subr.bf16.mxu0 0
  %7513 = vmatpush1.bf16.msra.mxu0 0
  %7514 = vmatprep.subr.bf16.mxu0 0
  %7515 = vmatpush1.bf16.msra.mxu0 0
  %7516 = vmatprep.subr.bf16.mxu0 0
  %7517 = vmatpush1.bf16.msra.mxu0 0
  %7518 = vmatprep.subr.bf16.mxu0 0
  %7519 = vmatpush1.bf16.msra.mxu0 0
  %7520 = vmatprep.mubr.bf16.mxu0 0
  %7521 = vmatmul.mubr.bf16.gmra.mrb[0].mxu0 %v7486
  %v7522 = vpop.f32.mrb[0].mxu0
  %v7523 = vadd.f32 0.0, %v7522
  %v7524 = vpop.f32.mrb[0].mxu0
  %v7525 = vpop.f32.mrb[0].mxu0
  %v7526 = vadd.f32 0.0, %v7525
  %v7527 = vpop.f32.mrb[0].mxu0
  %7528 = vdwg.mxu0
  %7530 = vrot.lane.b32.xlu0 %v557, 64
  %v7531 = vpop.permute.xlu0 %7530
  %v7534 = vsel %vm3896, %v5350, 0
  %7536 = vmatprep.subr.bf16.mxu0 0
  %7537 = vmatpush1.bf16.msra.mxu0 %v7531
  %7538 = vmatprep.subr.bf16.mxu0 0
  %7539 = vmatpush1.bf16.msra.mxu0 0
  %7540 = vmatprep.subr.bf16.mxu0 0
  %7541 = vmatpush1.bf16.msra.mxu0 0
  %7542 = vmatprep.subr.bf16.mxu0 0
  %7543 = vmatpush1.bf16.msra.mxu0 0
  %7544 = vmatprep.subr.bf16.mxu0 0
  %7545 = vmatpush1.bf16.msra.mxu0 0
  %7546 = vmatprep.subr.bf16.mxu0 0
  %7547 = vmatpush1.bf16.msra.mxu0 0
  %7548 = vmatprep.subr.bf16.mxu0 0
  %7549 = vmatpush1.bf16.msra.mxu0 0
  %7550 = vmatprep.subr.bf16.mxu0 0
  %7551 = vmatpush1.bf16.msra.mxu0 0
  %7552 = vmatprep.subr.bf16.mxu0 0
  %7553 = vmatpush1.bf16.msra.mxu0 0
  %7554 = vmatprep.subr.bf16.mxu0 0
  %7555 = vmatpush1.bf16.msra.mxu0 0
  %7556 = vmatprep.subr.bf16.mxu0 0
  %7557 = vmatpush1.bf16.msra.mxu0 0
  %7558 = vmatprep.subr.bf16.mxu0 0
  %7559 = vmatpush1.bf16.msra.mxu0 0
  %7560 = vmatprep.subr.bf16.mxu0 0
  %7561 = vmatpush1.bf16.msra.mxu0 0
  %7562 = vmatprep.subr.bf16.mxu0 0
  %7563 = vmatpush1.bf16.msra.mxu0 0
  %7564 = vmatprep.subr.bf16.mxu0 0
  %7565 = vmatpush1.bf16.msra.mxu0 0
  %7566 = vmatprep.subr.bf16.mxu0 0
  %7567 = vmatpush1.bf16.msra.mxu0 0
  %7568 = vmatprep.mubr.bf16.mxu0 0
  %7569 = vmatmul.mubr.bf16.gmra.mrb[0].mxu0 %v7534
  %v7570 = vpop.f32.mrb[0].mxu0
  %v7571 = vadd.f32 0.0, %v7570
  %v7572 = vpop.f32.mrb[0].mxu0
  %v7573 = vpop.f32.mrb[0].mxu0
  %v7574 = vadd.f32 0.0, %v7573
  %v7575 = vpop.f32.mrb[0].mxu0
  %7576 = vdwg.mxu0
  %7578 = vrot.lane.b32.xlu0 %v558, 64
  %v7579 = vpop.permute.xlu0 %7578
  %v7582 = vsel %vm3896, %v5351, 0
  %7584 = vmatprep.subr.bf16.mxu0 0
  %7585 = vmatpush1.bf16.msra.mxu0 %v7579
  %7586 = vmatprep.subr.bf16.mxu0 0
  %7587 = vmatpush1.bf16.msra.mxu0 0
  %7588 = vmatprep.subr.bf16.mxu0 0
  %7589 = vmatpush1.bf16.msra.mxu0 0
  %7590 = vmatprep.subr.bf16.mxu0 0
  %7591 = vmatpush1.bf16.msra.mxu0 0
  %7592 = vmatprep.subr.bf16.mxu0 0
  %7593 = vmatpush1.bf16.msra.mxu0 0
  %7594 = vmatprep.subr.bf16.mxu0 0
  %7595 = vmatpush1.bf16.msra.mxu0 0
  %7596 = vmatprep.subr.bf16.mxu0 0
  %7597 = vmatpush1.bf16.msra.mxu0 0
  %7598 = vmatprep.subr.bf16.mxu0 0
  %7599 = vmatpush1.bf16.msra.mxu0 0
  %7600 = vmatprep.subr.bf16.mxu0 0
  %7601 = vmatpush1.bf16.msra.mxu0 0
  %7602 = vmatprep.subr.bf16.mxu0 0
  %7603 = vmatpush1.bf16.msra.mxu0 0
  %7604 = vmatprep.subr.bf16.mxu0 0
  %7605 = vmatpush1.bf16.msra.mxu0 0
  %7606 = vmatprep.subr.bf16.mxu0 0
  %7607 = vmatpush1.bf16.msra.mxu0 0
  %7608 = vmatprep.subr.bf16.mxu0 0
  %7609 = vmatpush1.bf16.msra.mxu0 0
  %7610 = vmatprep.subr.bf16.mxu0 0
  %7611 = vmatpush1.bf16.msra.mxu0 0
  %7612 = vmatprep.subr.bf16.mxu0 0
  %7613 = vmatpush1.bf16.msra.mxu0 0
  %7614 = vmatprep.subr.bf16.mxu0 0
  %7615 = vmatpush1.bf16.msra.mxu0 0
  %7616 = vmatprep.mubr.bf16.mxu0 0
  %7617 = vmatmul.mubr.bf16.gmra.mrb[0].mxu0 %v7582
  %v7618 = vpop.f32.mrb[0].mxu0
  %v7619 = vadd.f32 0.0, %v7618
  %v7620 = vpop.f32.mrb[0].mxu0
  %v7621 = vpop.f32.mrb[0].mxu0
  %v7622 = vadd.f32 0.0, %v7621
  %v7623 = vpop.f32.mrb[0].mxu0
  %7624 = vdwg.mxu0
  %7626 = vrot.lane.b32.xlu0 %v559, 64
  %v7627 = vpop.permute.xlu0 %7626
  %v7630 = vsel %vm3896, %v5352, 0
  %7632 = vmatprep.subr.bf16.mxu0 0
  %7633 = vmatpush1.bf16.msra.mxu0 %v7627
  %7634 = vmatprep.subr.bf16.mxu0 0
  %7635 = vmatpush1.bf16.msra.mxu0 0
  %7636 = vmatprep.subr.bf16.mxu0 0
  %7637 = vmatpush1.bf16.msra.mxu0 0
  %7638 = vmatprep.subr.bf16.mxu0 0
  %7639 = vmatpush1.bf16.msra.mxu0 0
  %7640 = vmatprep.subr.bf16.mxu0 0
  %7641 = vmatpush1.bf16.msra.mxu0 0
  %7642 = vmatprep.subr.bf16.mxu0 0
  %7643 = vmatpush1.bf16.msra.mxu0 0
  %7644 = vmatprep.subr.bf16.mxu0 0
  %7645 = vmatpush1.bf16.msra.mxu0 0
  %7646 = vmatprep.subr.bf16.mxu0 0
  %7647 = vmatpush1.bf16.msra.mxu0 0
  %7648 = vmatprep.subr.bf16.mxu0 0
  %7649 = vmatpush1.bf16.msra.mxu0 0
  %7650 = vmatprep.subr.bf16.mxu0 0
  %7651 = vmatpush1.bf16.msra.mxu0 0
  %7652 = vmatprep.subr.bf16.mxu0 0
  %7653 = vmatpush1.bf16.msra.mxu0 0
  %7654 = vmatprep.subr.bf16.mxu0 0
  %7655 = vmatpush1.bf16.msra.mxu0 0
  %7656 = vmatprep.subr.bf16.mxu0 0
  %7657 = vmatpush1.bf16.msra.mxu0 0
  %7658 = vmatprep.subr.bf16.mxu0 0
  %7659 = vmatpush1.bf16.msra.mxu0 0
  %7660 = vmatprep.subr.bf16.mxu0 0
  %7661 = vmatpush1.bf16.msra.mxu0 0
  %7662 = vmatprep.subr.bf16.mxu0 0
  %7663 = vmatpush1.bf16.msra.mxu0 0
  %7664 = vmatprep.mubr.bf16.mxu0 0
  %7665 = vmatmul.mubr.bf16.gmra.mrb[0].mxu0 %v7630
  %v7666 = vpop.f32.mrb[0].mxu0
  %v7667 = vadd.f32 0.0, %v7666
  %v7668 = vpop.f32.mrb[0].mxu0
  %v7669 = vpop.f32.mrb[0].mxu0
  %v7670 = vadd.f32 0.0, %v7669
  %v7671 = vpop.f32.mrb[0].mxu0
  %7672 = vdwg.mxu0
  %7674 = vrot.lane.b32.xlu0 %v560, 64
  %v7675 = vpop.permute.xlu0 %7674
  %v7678 = vsel %vm3896, %v5353, 0
  %7680 = vmatprep.subr.bf16.mxu0 0
  %7681 = vmatpush1.bf16.msra.mxu0 %v7675
  %7682 = vmatprep.subr.bf16.mxu0 0
  %7683 = vmatpush1.bf16.msra.mxu0 0
  %7684 = vmatprep.subr.bf16.mxu0 0
  %7685 = vmatpush1.bf16.msra.mxu0 0
  %7686 = vmatprep.subr.bf16.mxu0 0
  %7687 = vmatpush1.bf16.msra.mxu0 0
  %7688 = vmatprep.subr.bf16.mxu0 0
  %7689 = vmatpush1.bf16.msra.mxu0 0
  %7690 = vmatprep.subr.bf16.mxu0 0
  %7691 = vmatpush1.bf16.msra.mxu0 0
  %7692 = vmatprep.subr.bf16.mxu0 0
  %7693 = vmatpush1.bf16.msra.mxu0 0
  %7694 = vmatprep.subr.bf16.mxu0 0
  %7695 = vmatpush1.bf16.msra.mxu0 0
  %7696 = vmatprep.subr.bf16.mxu0 0
  %7697 = vmatpush1.bf16.msra.mxu0 0
  %7698 = vmatprep.subr.bf16.mxu0 0
  %7699 = vmatpush1.bf16.msra.mxu0 0
  %7700 = vmatprep.subr.bf16.mxu0 0
  %7701 = vmatpush1.bf16.msra.mxu0 0
  %7702 = vmatprep.subr.bf16.mxu0 0
  %7703 = vmatpush1.bf16.msra.mxu0 0
  %7704 = vmatprep.subr.bf16.mxu0 0
  %7705 = vmatpush1.bf16.msra.mxu0 0
  %7706 = vmatprep.subr.bf16.mxu0 0
  %7707 = vmatpush1.bf16.msra.mxu0 0
  %7708 = vmatprep.subr.bf16.mxu0 0
  %7709 = vmatpush1.bf16.msra.mxu0 0
  %7710 = vmatprep.subr.bf16.mxu0 0
  %7711 = vmatpush1.bf16.msra.mxu0 0
  %7712 = vmatprep.mubr.bf16.mxu0 0
  %7713 = vmatmul.mubr.bf16.gmra.mrb[0].mxu0 %v7678
  %v7714 = vpop.f32.mrb[0].mxu0
  %v7715 = vadd.f32 0.0, %v7714
  %v7716 = vpop.f32.mrb[0].mxu0
  %v7717 = vpop.f32.mrb[0].mxu0
  %v7718 = vadd.f32 0.0, %v7717
  %v7719 = vpop.f32.mrb[0].mxu0
  %7720 = vdwg.mxu0
  %7722 = vrot.lane.b32.xlu0 %v561, 64
  %v7723 = vpop.permute.xlu0 %7722
  %v7726 = vsel %vm3896, %v5354, 0
  %7728 = vmatprep.subr.bf16.mxu0 0
  %7729 = vmatpush1.bf16.msra.mxu0 %v7723
  %7730 = vmatprep.subr.bf16.mxu0 0
  %7731 = vmatpush1.bf16.msra.mxu0 0
  %7732 = vmatprep.subr.bf16.mxu0 0
  %7733 = vmatpush1.bf16.msra.mxu0 0
  %7734 = vmatprep.subr.bf16.mxu0 0
  %7735 = vmatpush1.bf16.msra.mxu0 0
  %7736 = vmatprep.subr.bf16.mxu0 0
  %7737 = vmatpush1.bf16.msra.mxu0 0
  %7738 = vmatprep.subr.bf16.mxu0 0
  %7739 = vmatpush1.bf16.msra.mxu0 0
  %7740 = vmatprep.subr.bf16.mxu0 0
  %7741 = vmatpush1.bf16.msra.mxu0 0
  %7742 = vmatprep.subr.bf16.mxu0 0
  %7743 = vmatpush1.bf16.msra.mxu0 0
  %7744 = vmatprep.subr.bf16.mxu0 0
  %7745 = vmatpush1.bf16.msra.mxu0 0
  %7746 = vmatprep.subr.bf16.mxu0 0
  %7747 = vmatpush1.bf16.msra.mxu0 0
  %7748 = vmatprep.subr.bf16.mxu0 0
  %7749 = vmatpush1.bf16.msra.mxu0 0
  %7750 = vmatprep.subr.bf16.mxu0 0
  %7751 = vmatpush1.bf16.msra.mxu0 0
  %7752 = vmatprep.subr.bf16.mxu0 0
  %7753 = vmatpush1.bf16.msra.mxu0 0
  %7754 = vmatprep.subr.bf16.mxu0 0
  %7755 = vmatpush1.bf16.msra.mxu0 0
  %7756 = vmatprep.subr.bf16.mxu0 0
  %7757 = vmatpush1.bf16.msra.mxu0 0
  %7758 = vmatprep.subr.bf16.mxu0 0
  %7759 = vmatpush1.bf16.msra.mxu0 0
  %7760 = vmatprep.mubr.bf16.mxu0 0
  %7761 = vmatmul.mubr.bf16.gmra.mrb[0].mxu0 %v7726
  %v7762 = vpop.f32.mrb[0].mxu0
  %v7763 = vadd.f32 0.0, %v7762
  %v7764 = vpop.f32.mrb[0].mxu0
  %v7765 = vpop.f32.mrb[0].mxu0
  %v7766 = vadd.f32 0.0, %v7765
  %v7767 = vpop.f32.mrb[0].mxu0
  %7768 = vdwg.mxu0
  %7770 = vrot.lane.b32.xlu0 %v562, 64
  %v7771 = vpop.permute.xlu0 %7770
  %v7774 = vsel %vm3896, %v5355, 0
  %7776 = vmatprep.subr.bf16.mxu0 0
  %7777 = vmatpush1.bf16.msra.mxu0 %v7771
  %7778 = vmatprep.subr.bf16.mxu0 0
  %7779 = vmatpush1.bf16.msra.mxu0 0
  %7780 = vmatprep.subr.bf16.mxu0 0
  %7781 = vmatpush1.bf16.msra.mxu0 0
  %7782 = vmatprep.subr.bf16.mxu0 0
  %7783 = vmatpush1.bf16.msra.mxu0 0
  %7784 = vmatprep.subr.bf16.mxu0 0
  %7785 = vmatpush1.bf16.msra.mxu0 0
  %7786 = vmatprep.subr.bf16.mxu0 0
  %7787 = vmatpush1.bf16.msra.mxu0 0
  %7788 = vmatprep.subr.bf16.mxu0 0
  %7789 = vmatpush1.bf16.msra.mxu0 0
  %7790 = vmatprep.subr.bf16.mxu0 0
  %7791 = vmatpush1.bf16.msra.mxu0 0
  %7792 = vmatprep.subr.bf16.mxu0 0
  %7793 = vmatpush1.bf16.msra.mxu0 0
  %7794 = vmatprep.subr.bf16.mxu0 0
  %7795 = vmatpush1.bf16.msra.mxu0 0
  %7796 = vmatprep.subr.bf16.mxu0 0
  %7797 = vmatpush1.bf16.msra.mxu0 0
  %7798 = vmatprep.subr.bf16.mxu0 0
  %7799 = vmatpush1.bf16.msra.mxu0 0
  %7800 = vmatprep.subr.bf16.mxu0 0
  %7801 = vmatpush1.bf16.msra.mxu0 0
  %7802 = vmatprep.subr.bf16.mxu0 0
  %7803 = vmatpush1.bf16.msra.mxu0 0
  %7804 = vmatprep.subr.bf16.mxu0 0
  %7805 = vmatpush1.bf16.msra.mxu0 0
  %7806 = vmatprep.subr.bf16.mxu0 0
  %7807 = vmatpush1.bf16.msra.mxu0 0
  %7808 = vmatprep.mubr.bf16.mxu0 0
  %7809 = vmatmul.mubr.bf16.gmra.mrb[0].mxu0 %v7774
  %v7810 = vpop.f32.mrb[0].mxu0
  %v7811 = vadd.f32 0.0, %v7810
  %v7812 = vpop.f32.mrb[0].mxu0
  %v7813 = vpop.f32.mrb[0].mxu0
  %v7814 = vadd.f32 0.0, %v7813
  %v7815 = vpop.f32.mrb[0].mxu0
  %7816 = vdwg.mxu0
  %7818 = vrot.lane.b32.xlu0 %v563, 64
  %v7819 = vpop.permute.xlu0 %7818
  %v7822 = vsel %vm3896, %v5356, 0
  %7824 = vmatprep.subr.bf16.mxu0 0
  %7825 = vmatpush1.bf16.msra.mxu0 %v7819
  %7826 = vmatprep.subr.bf16.mxu0 0
  %7827 = vmatpush1.bf16.msra.mxu0 0
  %7828 = vmatprep.subr.bf16.mxu0 0
  %7829 = vmatpush1.bf16.msra.mxu0 0
  %7830 = vmatprep.subr.bf16.mxu0 0
  %7831 = vmatpush1.bf16.msra.mxu0 0
  %7832 = vmatprep.subr.bf16.mxu0 0
  %7833 = vmatpush1.bf16.msra.mxu0 0
  %7834 = vmatprep.subr.bf16.mxu0 0
  %7835 = vmatpush1.bf16.msra.mxu0 0
  %7836 = vmatprep.subr.bf16.mxu0 0
  %7837 = vmatpush1.bf16.msra.mxu0 0
  %7838 = vmatprep.subr.bf16.mxu0 0
  %7839 = vmatpush1.bf16.msra.mxu0 0
  %7840 = vmatprep.subr.bf16.mxu0 0
  %7841 = vmatpush1.bf16.msra.mxu0 0
  %7842 = vmatprep.subr.bf16.mxu0 0
  %7843 = vmatpush1.bf16.msra.mxu0 0
  %7844 = vmatprep.subr.bf16.mxu0 0
  %7845 = vmatpush1.bf16.msra.mxu0 0
  %7846 = vmatprep.subr.bf16.mxu0 0
  %7847 = vmatpush1.bf16.msra.mxu0 0
  %7848 = vmatprep.subr.bf16.mxu0 0
  %7849 = vmatpush1.bf16.msra.mxu0 0
  %7850 = vmatprep.subr.bf16.mxu0 0
  %7851 = vmatpush1.bf16.msra.mxu0 0
  %7852 = vmatprep.subr.bf16.mxu0 0
  %7853 = vmatpush1.bf16.msra.mxu0 0
  %7854 = vmatprep.subr.bf16.mxu0 0
  %7855 = vmatpush1.bf16.msra.mxu0 0
  %7856 = vmatprep.mubr.bf16.mxu0 0
  %7857 = vmatmul.mubr.bf16.gmra.mrb[0].mxu0 %v7822
  %v7858 = vpop.f32.mrb[0].mxu0
  %v7859 = vadd.f32 0.0, %v7858
  %v7860 = vpop.f32.mrb[0].mxu0
  %v7861 = vpop.f32.mrb[0].mxu0
  %v7862 = vadd.f32 0.0, %v7861
  %v7863 = vpop.f32.mrb[0].mxu0
  %7864 = vdwg.mxu0
  %7866 = vrot.lane.b32.xlu0 %v564, 64
  %v7867 = vpop.permute.xlu0 %7866
  %v7870 = vsel %vm3896, %v5357, 0
  %7872 = vmatprep.subr.bf16.mxu0 0
  %7873 = vmatpush1.bf16.msra.mxu0 %v7867
  %7874 = vmatprep.subr.bf16.mxu0 0
  %7875 = vmatpush1.bf16.msra.mxu0 0
  %7876 = vmatprep.subr.bf16.mxu0 0
  %7877 = vmatpush1.bf16.msra.mxu0 0
  %7878 = vmatprep.subr.bf16.mxu0 0
  %7879 = vmatpush1.bf16.msra.mxu0 0
  %7880 = vmatprep.subr.bf16.mxu0 0
  %7881 = vmatpush1.bf16.msra.mxu0 0
  %7882 = vmatprep.subr.bf16.mxu0 0
  %7883 = vmatpush1.bf16.msra.mxu0 0
  %7884 = vmatprep.subr.bf16.mxu0 0
  %7885 = vmatpush1.bf16.msra.mxu0 0
  %7886 = vmatprep.subr.bf16.mxu0 0
  %7887 = vmatpush1.bf16.msra.mxu0 0
  %7888 = vmatprep.subr.bf16.mxu0 0
  %7889 = vmatpush1.bf16.msra.mxu0 0
  %7890 = vmatprep.subr.bf16.mxu0 0
  %7891 = vmatpush1.bf16.msra.mxu0 0
  %7892 = vmatprep.subr.bf16.mxu0 0
  %7893 = vmatpush1.bf16.msra.mxu0 0
  %7894 = vmatprep.subr.bf16.mxu0 0
  %7895 = vmatpush1.bf16.msra.mxu0 0
  %7896 = vmatprep.subr.bf16.mxu0 0
  %7897 = vmatpush1.bf16.msra.mxu0 0
  %7898 = vmatprep.subr.bf16.mxu0 0
  %7899 = vmatpush1.bf16.msra.mxu0 0
  %7900 = vmatprep.subr.bf16.mxu0 0
  %7901 = vmatpush1.bf16.msra.mxu0 0
  %7902 = vmatprep.subr.bf16.mxu0 0
  %7903 = vmatpush1.bf16.msra.mxu0 0
  %7904 = vmatprep.mubr.bf16.mxu0 0
  %7905 = vmatmul.mubr.bf16.gmra.mrb[0].mxu0 %v7870
  %v7906 = vpop.f32.mrb[0].mxu0
  %v7907 = vadd.f32 0.0, %v7906
  %v7908 = vpop.f32.mrb[0].mxu0
  %v7909 = vpop.f32.mrb[0].mxu0
  %v7910 = vadd.f32 0.0, %v7909
  %v7911 = vpop.f32.mrb[0].mxu0
  %7912 = vdwg.mxu0
  %7914 = vrot.lane.b32.xlu0 %v565, 64
  %v7915 = vpop.permute.xlu0 %7914
  %v7918 = vsel %vm3896, %v5358, 0
  %7920 = vmatprep.subr.bf16.mxu0 0
  %7921 = vmatpush1.bf16.msra.mxu0 %v7915
  %7922 = vmatprep.subr.bf16.mxu0 0
  %7923 = vmatpush1.bf16.msra.mxu0 0
  %7924 = vmatprep.subr.bf16.mxu0 0
  %7925 = vmatpush1.bf16.msra.mxu0 0
  %7926 = vmatprep.subr.bf16.mxu0 0
  %7927 = vmatpush1.bf16.msra.mxu0 0
  %7928 = vmatprep.subr.bf16.mxu0 0
  %7929 = vmatpush1.bf16.msra.mxu0 0
  %7930 = vmatprep.subr.bf16.mxu0 0
  %7931 = vmatpush1.bf16.msra.mxu0 0
  %7932 = vmatprep.subr.bf16.mxu0 0
  %7933 = vmatpush1.bf16.msra.mxu0 0
  %7934 = vmatprep.subr.bf16.mxu0 0
  %7935 = vmatpush1.bf16.msra.mxu0 0
  %7936 = vmatprep.subr.bf16.mxu0 0
  %7937 = vmatpush1.bf16.msra.mxu0 0
  %7938 = vmatprep.subr.bf16.mxu0 0
  %7939 = vmatpush1.bf16.msra.mxu0 0
  %7940 = vmatprep.subr.bf16.mxu0 0
  %7941 = vmatpush1.bf16.msra.mxu0 0
  %7942 = vmatprep.subr.bf16.mxu0 0
  %7943 = vmatpush1.bf16.msra.mxu0 0
  %7944 = vmatprep.subr.bf16.mxu0 0
  %7945 = vmatpush1.bf16.msra.mxu0 0
  %7946 = vmatprep.subr.bf16.mxu0 0
  %7947 = vmatpush1.bf16.msra.mxu0 0
  %7948 = vmatprep.subr.bf16.mxu0 0
  %7949 = vmatpush1.bf16.msra.mxu0 0
  %7950 = vmatprep.subr.bf16.mxu0 0
  %7951 = vmatpush1.bf16.msra.mxu0 0
  %7952 = vmatprep.mubr.bf16.mxu0 0
  %7953 = vmatmul.mubr.bf16.gmra.mrb[0].mxu0 %v7918
  %v7954 = vpop.f32.mrb[0].mxu0
  %v7955 = vadd.f32 0.0, %v7954
  %v7956 = vpop.f32.mrb[0].mxu0
  %v7957 = vpop.f32.mrb[0].mxu0
  %v7958 = vadd.f32 0.0, %v7957
  %v7959 = vpop.f32.mrb[0].mxu0
  %7960 = vdwg.mxu0
  %7962 = vrot.lane.b32.xlu0 %v566, 64
  %v7963 = vpop.permute.xlu0 %7962
  %v7966 = vsel %vm3896, %v5359, 0
  %7968 = vmatprep.subr.bf16.mxu0 0
  %7969 = vmatpush1.bf16.msra.mxu0 %v7963
  %7970 = vmatprep.subr.bf16.mxu0 0
  %7971 = vmatpush1.bf16.msra.mxu0 0
  %7972 = vmatprep.subr.bf16.mxu0 0
  %7973 = vmatpush1.bf16.msra.mxu0 0
  %7974 = vmatprep.subr.bf16.mxu0 0
  %7975 = vmatpush1.bf16.msra.mxu0 0
  %7976 = vmatprep.subr.bf16.mxu0 0
  %7977 = vmatpush1.bf16.msra.mxu0 0
  %7978 = vmatprep.subr.bf16.mxu0 0
  %7979 = vmatpush1.bf16.msra.mxu0 0
  %7980 = vmatprep.subr.bf16.mxu0 0
  %7981 = vmatpush1.bf16.msra.mxu0 0
  %7982 = vmatprep.subr.bf16.mxu0 0
  %7983 = vmatpush1.bf16.msra.mxu0 0
  %7984 = vmatprep.subr.bf16.mxu0 0
  %7985 = vmatpush1.bf16.msra.mxu0 0
  %7986 = vmatprep.subr.bf16.mxu0 0
  %7987 = vmatpush1.bf16.msra.mxu0 0
  %7988 = vmatprep.subr.bf16.mxu0 0
  %7989 = vmatpush1.bf16.msra.mxu0 0
  %7990 = vmatprep.subr.bf16.mxu0 0
  %7991 = vmatpush1.bf16.msra.mxu0 0
  %7992 = vmatprep.subr.bf16.mxu0 0
  %7993 = vmatpush1.bf16.msra.mxu0 0
  %7994 = vmatprep.subr.bf16.mxu0 0
  %7995 = vmatpush1.bf16.msra.mxu0 0
  %7996 = vmatprep.subr.bf16.mxu0 0
  %7997 = vmatpush1.bf16.msra.mxu0 0
  %7998 = vmatprep.subr.bf16.mxu0 0
  %7999 = vmatpush1.bf16.msra.mxu0 0
  %8000 = vmatprep.mubr.bf16.mxu0 0
  %8001 = vmatmul.mubr.bf16.gmra.mrb[0].mxu0 %v7966
  %v8002 = vpop.f32.mrb[0].mxu0
  %v8003 = vadd.f32 0.0, %v8002
  %v8004 = vpop.f32.mrb[0].mxu0
  %v8005 = vpop.f32.mrb[0].mxu0
  %v8006 = vadd.f32 0.0, %v8005
  %v8007 = vpop.f32.mrb[0].mxu0
  %8008 = vdwg.mxu0
  %8010 = vrot.lane.b32.xlu0 %v567, 64
  %v8011 = vpop.permute.xlu0 %8010
  %v8014 = vsel %vm3896, %v5360, 0
  %8016 = vmatprep.subr.bf16.mxu0 0
  %8017 = vmatpush1.bf16.msra.mxu0 %v8011
  %8018 = vmatprep.subr.bf16.mxu0 0
  %8019 = vmatpush1.bf16.msra.mxu0 0
  %8020 = vmatprep.subr.bf16.mxu0 0
  %8021 = vmatpush1.bf16.msra.mxu0 0
  %8022 = vmatprep.subr.bf16.mxu0 0
  %8023 = vmatpush1.bf16.msra.mxu0 0
  %8024 = vmatprep.subr.bf16.mxu0 0
  %8025 = vmatpush1.bf16.msra.mxu0 0
  %8026 = vmatprep.subr.bf16.mxu0 0
  %8027 = vmatpush1.bf16.msra.mxu0 0
  %8028 = vmatprep.subr.bf16.mxu0 0
  %8029 = vmatpush1.bf16.msra.mxu0 0
  %8030 = vmatprep.subr.bf16.mxu0 0
  %8031 = vmatpush1.bf16.msra.mxu0 0
  %8032 = vmatprep.subr.bf16.mxu0 0
  %8033 = vmatpush1.bf16.msra.mxu0 0
  %8034 = vmatprep.subr.bf16.mxu0 0
  %8035 = vmatpush1.bf16.msra.mxu0 0
  %8036 = vmatprep.subr.bf16.mxu0 0
  %8037 = vmatpush1.bf16.msra.mxu0 0
  %8038 = vmatprep.subr.bf16.mxu0 0
  %8039 = vmatpush1.bf16.msra.mxu0 0
  %8040 = vmatprep.subr.bf16.mxu0 0
  %8041 = vmatpush1.bf16.msra.mxu0 0
  %8042 = vmatprep.subr.bf16.mxu0 0
  %8043 = vmatpush1.bf16.msra.mxu0 0
  %8044 = vmatprep.subr.bf16.mxu0 0
  %8045 = vmatpush1.bf16.msra.mxu0 0
  %8046 = vmatprep.subr.bf16.mxu0 0
  %8047 = vmatpush1.bf16.msra.mxu0 0
  %8048 = vmatprep.mubr.bf16.mxu0 0
  %8049 = vmatmul.mubr.bf16.gmra.mrb[0].mxu0 %v8014
  %v8050 = vpop.f32.mrb[0].mxu0
  %v8051 = vadd.f32 0.0, %v8050
  %v8052 = vpop.f32.mrb[0].mxu0
  %v8053 = vpop.f32.mrb[0].mxu0
  %v8054 = vadd.f32 0.0, %v8053
  %v8055 = vpop.f32.mrb[0].mxu0
  %8056 = vdwg.mxu0
  %8058 = vrot.lane.b32.xlu0 %v568, 64
  %v8059 = vpop.permute.xlu0 %8058
  %v8062 = vsel %vm3896, %v5361, 0
  %8064 = vmatprep.subr.bf16.mxu0 0
  %8065 = vmatpush1.bf16.msra.mxu0 %v8059
  %8066 = vmatprep.subr.bf16.mxu0 0
  %8067 = vmatpush1.bf16.msra.mxu0 0
  %8068 = vmatprep.subr.bf16.mxu0 0
  %8069 = vmatpush1.bf16.msra.mxu0 0
  %8070 = vmatprep.subr.bf16.mxu0 0
  %8071 = vmatpush1.bf16.msra.mxu0 0
  %8072 = vmatprep.subr.bf16.mxu0 0
  %8073 = vmatpush1.bf16.msra.mxu0 0
  %8074 = vmatprep.subr.bf16.mxu0 0
  %8075 = vmatpush1.bf16.msra.mxu0 0
  %8076 = vmatprep.subr.bf16.mxu0 0
  %8077 = vmatpush1.bf16.msra.mxu0 0
  %8078 = vmatprep.subr.bf16.mxu0 0
  %8079 = vmatpush1.bf16.msra.mxu0 0
  %8080 = vmatprep.subr.bf16.mxu0 0
  %8081 = vmatpush1.bf16.msra.mxu0 0
  %8082 = vmatprep.subr.bf16.mxu0 0
  %8083 = vmatpush1.bf16.msra.mxu0 0
  %8084 = vmatprep.subr.bf16.mxu0 0
  %8085 = vmatpush1.bf16.msra.mxu0 0
  %8086 = vmatprep.subr.bf16.mxu0 0
  %8087 = vmatpush1.bf16.msra.mxu0 0
  %8088 = vmatprep.subr.bf16.mxu0 0
  %8089 = vmatpush1.bf16.msra.mxu0 0
  %8090 = vmatprep.subr.bf16.mxu0 0
  %8091 = vmatpush1.bf16.msra.mxu0 0
  %8092 = vmatprep.subr.bf16.mxu0 0
  %8093 = vmatpush1.bf16.msra.mxu0 0
  %8094 = vmatprep.subr.bf16.mxu0 0
  %8095 = vmatpush1.bf16.msra.mxu0 0
  %8096 = vmatprep.mubr.bf16.mxu0 0
  %8097 = vmatmul.mubr.bf16.gmra.mrb[0].mxu0 %v8062
  %v8098 = vpop.f32.mrb[0].mxu0
  %v8099 = vadd.f32 0.0, %v8098
  %v8100 = vpop.f32.mrb[0].mxu0
  %v8101 = vpop.f32.mrb[0].mxu0
  %v8102 = vadd.f32 0.0, %v8101
  %v8103 = vpop.f32.mrb[0].mxu0
  %8104 = vdwg.mxu0
  %8106 = vrot.lane.b32.xlu0 %v569, 64
  %v8107 = vpop.permute.xlu0 %8106
  %v8110 = vsel %vm3896, %v5362, 0
  %8112 = vmatprep.subr.bf16.mxu0 0
  %8113 = vmatpush1.bf16.msra.mxu0 %v8107
  %8114 = vmatprep.subr.bf16.mxu0 0
  %8115 = vmatpush1.bf16.msra.mxu0 0
  %8116 = vmatprep.subr.bf16.mxu0 0
  %8117 = vmatpush1.bf16.msra.mxu0 0
  %8118 = vmatprep.subr.bf16.mxu0 0
  %8119 = vmatpush1.bf16.msra.mxu0 0
  %8120 = vmatprep.subr.bf16.mxu0 0
  %8121 = vmatpush1.bf16.msra.mxu0 0
  %8122 = vmatprep.subr.bf16.mxu0 0
  %8123 = vmatpush1.bf16.msra.mxu0 0
  %8124 = vmatprep.subr.bf16.mxu0 0
  %8125 = vmatpush1.bf16.msra.mxu0 0
  %8126 = vmatprep.subr.bf16.mxu0 0
  %8127 = vmatpush1.bf16.msra.mxu0 0
  %8128 = vmatprep.subr.bf16.mxu0 0
  %8129 = vmatpush1.bf16.msra.mxu0 0
  %8130 = vmatprep.subr.bf16.mxu0 0
  %8131 = vmatpush1.bf16.msra.mxu0 0
  %8132 = vmatprep.subr.bf16.mxu0 0
  %8133 = vmatpush1.bf16.msra.mxu0 0
  %8134 = vmatprep.subr.bf16.mxu0 0
  %8135 = vmatpush1.bf16.msra.mxu0 0
  %8136 = vmatprep.subr.bf16.mxu0 0
  %8137 = vmatpush1.bf16.msra.mxu0 0
  %8138 = vmatprep.subr.bf16.mxu0 0
  %8139 = vmatpush1.bf16.msra.mxu0 0
  %8140 = vmatprep.subr.bf16.mxu0 0
  %8141 = vmatpush1.bf16.msra.mxu0 0
  %8142 = vmatprep.subr.bf16.mxu0 0
  %8143 = vmatpush1.bf16.msra.mxu0 0
  %8144 = vmatprep.mubr.bf16.mxu0 0
  %8145 = vmatmul.mubr.bf16.gmra.mrb[0].mxu0 %v8110
  %v8146 = vpop.f32.mrb[0].mxu0
  %v8147 = vadd.f32 0.0, %v8146
  %v8148 = vpop.f32.mrb[0].mxu0
  %v8149 = vpop.f32.mrb[0].mxu0
  %v8150 = vadd.f32 0.0, %v8149
  %v8151 = vpop.f32.mrb[0].mxu0
  %8152 = vdwg.mxu0
  %8154 = vrot.lane.b32.xlu0 %v570, 64
  %v8155 = vpop.permute.xlu0 %8154
  %v8158 = vsel %vm3896, %v5363, 0
  %8160 = vmatprep.subr.bf16.mxu0 0
  %8161 = vmatpush1.bf16.msra.mxu0 %v8155
  %8162 = vmatprep.subr.bf16.mxu0 0
  %8163 = vmatpush1.bf16.msra.mxu0 0
  %8164 = vmatprep.subr.bf16.mxu0 0
  %8165 = vmatpush1.bf16.msra.mxu0 0
  %8166 = vmatprep.subr.bf16.mxu0 0
  %8167 = vmatpush1.bf16.msra.mxu0 0
  %8168 = vmatprep.subr.bf16.mxu0 0
  %8169 = vmatpush1.bf16.msra.mxu0 0
  %8170 = vmatprep.subr.bf16.mxu0 0
  %8171 = vmatpush1.bf16.msra.mxu0 0
  %8172 = vmatprep.subr.bf16.mxu0 0
  %8173 = vmatpush1.bf16.msra.mxu0 0
  %8174 = vmatprep.subr.bf16.mxu0 0
  %8175 = vmatpush1.bf16.msra.mxu0 0
  %8176 = vmatprep.subr.bf16.mxu0 0
  %8177 = vmatpush1.bf16.msra.mxu0 0
  %8178 = vmatprep.subr.bf16.mxu0 0
  %8179 = vmatpush1.bf16.msra.mxu0 0
  %8180 = vmatprep.subr.bf16.mxu0 0
  %8181 = vmatpush1.bf16.msra.mxu0 0
  %8182 = vmatprep.subr.bf16.mxu0 0
  %8183 = vmatpush1.bf16.msra.mxu0 0
  %8184 = vmatprep.subr.bf16.mxu0 0
  %8185 = vmatpush1.bf16.msra.mxu0 0
  %8186 = vmatprep.subr.bf16.mxu0 0
  %8187 = vmatpush1.bf16.msra.mxu0 0
  %8188 = vmatprep.subr.bf16.mxu0 0
  %8189 = vmatpush1.bf16.msra.mxu0 0
  %8190 = vmatprep.subr.bf16.mxu0 0
  %8191 = vmatpush1.bf16.msra.mxu0 0
  %8192 = vmatprep.mubr.bf16.mxu0 0
  %8193 = vmatmul.mubr.bf16.gmra.mrb[0].mxu0 %v8158
  %v8194 = vpop.f32.mrb[0].mxu0
  %v8195 = vadd.f32 0.0, %v8194
  %v8196 = vpop.f32.mrb[0].mxu0
  %v8197 = vpop.f32.mrb[0].mxu0
  %v8198 = vadd.f32 0.0, %v8197
  %v8199 = vpop.f32.mrb[0].mxu0
  %8200 = vdwg.mxu0
  %8202 = vrot.lane.b32.xlu0 %v571, 64
  %v8203 = vpop.permute.xlu0 %8202
  %v8206 = vsel %vm3896, %v5364, 0
  %8208 = vmatprep.subr.bf16.mxu0 0
  %8209 = vmatpush1.bf16.msra.mxu0 %v8203
  %8210 = vmatprep.subr.bf16.mxu0 0
  %8211 = vmatpush1.bf16.msra.mxu0 0
  %8212 = vmatprep.subr.bf16.mxu0 0
  %8213 = vmatpush1.bf16.msra.mxu0 0
  %8214 = vmatprep.subr.bf16.mxu0 0
  %8215 = vmatpush1.bf16.msra.mxu0 0
  %8216 = vmatprep.subr.bf16.mxu0 0
  %8217 = vmatpush1.bf16.msra.mxu0 0
  %8218 = vmatprep.subr.bf16.mxu0 0
  %8219 = vmatpush1.bf16.msra.mxu0 0
  %8220 = vmatprep.subr.bf16.mxu0 0
  %8221 = vmatpush1.bf16.msra.mxu0 0
  %8222 = vmatprep.subr.bf16.mxu0 0
  %8223 = vmatpush1.bf16.msra.mxu0 0
  %8224 = vmatprep.subr.bf16.mxu0 0
  %8225 = vmatpush1.bf16.msra.mxu0 0
  %8226 = vmatprep.subr.bf16.mxu0 0
  %8227 = vmatpush1.bf16.msra.mxu0 0
  %8228 = vmatprep.subr.bf16.mxu0 0
  %8229 = vmatpush1.bf16.msra.mxu0 0
  %8230 = vmatprep.subr.bf16.mxu0 0
  %8231 = vmatpush1.bf16.msra.mxu0 0
  %8232 = vmatprep.subr.bf16.mxu0 0
  %8233 = vmatpush1.bf16.msra.mxu0 0
  %8234 = vmatprep.subr.bf16.mxu0 0
  %8235 = vmatpush1.bf16.msra.mxu0 0
  %8236 = vmatprep.subr.bf16.mxu0 0
  %8237 = vmatpush1.bf16.msra.mxu0 0
  %8238 = vmatprep.subr.bf16.mxu0 0
  %8239 = vmatpush1.bf16.msra.mxu0 0
  %8240 = vmatprep.mubr.bf16.mxu0 0
  %8241 = vmatmul.mubr.bf16.gmra.mrb[0].mxu0 %v8206
  %v8242 = vpop.f32.mrb[0].mxu0
  %v8243 = vadd.f32 0.0, %v8242
  %v8244 = vpop.f32.mrb[0].mxu0
  %v8245 = vpop.f32.mrb[0].mxu0
  %v8246 = vadd.f32 0.0, %v8245
  %v8247 = vpop.f32.mrb[0].mxu0
  %8248 = vdwg.mxu0
  %8250 = vrot.lane.b32.xlu0 %v572, 64
  %v8251 = vpop.permute.xlu0 %8250
  %v8254 = vsel %vm3896, %v5365, 0
  %8256 = vmatprep.subr.bf16.mxu0 0
  %8257 = vmatpush1.bf16.msra.mxu0 %v8251
  %8258 = vmatprep.subr.bf16.mxu0 0
  %8259 = vmatpush1.bf16.msra.mxu0 0
  %8260 = vmatprep.subr.bf16.mxu0 0
  %8261 = vmatpush1.bf16.msra.mxu0 0
  %8262 = vmatprep.subr.bf16.mxu0 0
  %8263 = vmatpush1.bf16.msra.mxu0 0
  %8264 = vmatprep.subr.bf16.mxu0 0
  %8265 = vmatpush1.bf16.msra.mxu0 0
  %8266 = vmatprep.subr.bf16.mxu0 0
  %8267 = vmatpush1.bf16.msra.mxu0 0
  %8268 = vmatprep.subr.bf16.mxu0 0
  %8269 = vmatpush1.bf16.msra.mxu0 0
  %8270 = vmatprep.subr.bf16.mxu0 0
  %8271 = vmatpush1.bf16.msra.mxu0 0
  %8272 = vmatprep.subr.bf16.mxu0 0
  %8273 = vmatpush1.bf16.msra.mxu0 0
  %8274 = vmatprep.subr.bf16.mxu0 0
  %8275 = vmatpush1.bf16.msra.mxu0 0
  %8276 = vmatprep.subr.bf16.mxu0 0
  %8277 = vmatpush1.bf16.msra.mxu0 0
  %8278 = vmatprep.subr.bf16.mxu0 0
  %8279 = vmatpush1.bf16.msra.mxu0 0
  %8280 = vmatprep.subr.bf16.mxu0 0
  %8281 = vmatpush1.bf16.msra.mxu0 0
  %8282 = vmatprep.subr.bf16.mxu0 0
  %8283 = vmatpush1.bf16.msra.mxu0 0
  %8284 = vmatprep.subr.bf16.mxu0 0
  %8285 = vmatpush1.bf16.msra.mxu0 0
  %8286 = vmatprep.subr.bf16.mxu0 0
  %8287 = vmatpush1.bf16.msra.mxu0 0
  %8288 = vmatprep.mubr.bf16.mxu0 0
  %8289 = vmatmul.mubr.bf16.gmra.mrb[0].mxu0 %v8254
  %v8290 = vpop.f32.mrb[0].mxu0
  %v8291 = vadd.f32 0.0, %v8290
  %v8292 = vpop.f32.mrb[0].mxu0
  %v8293 = vpop.f32.mrb[0].mxu0
  %v8294 = vadd.f32 0.0, %v8293
  %v8295 = vpop.f32.mrb[0].mxu0
  %8296 = vdwg.mxu0
  %8298 = vrot.lane.b32.xlu0 %v573, 64
  %v8299 = vpop.permute.xlu0 %8298
  %v8302 = vsel %vm3896, %v5366, 0
  %8304 = vmatprep.subr.bf16.mxu0 0
  %8305 = vmatpush1.bf16.msra.mxu0 %v8299
  %8306 = vmatprep.subr.bf16.mxu0 0
  %8307 = vmatpush1.bf16.msra.mxu0 0
  %8308 = vmatprep.subr.bf16.mxu0 0
  %8309 = vmatpush1.bf16.msra.mxu0 0
  %8310 = vmatprep.subr.bf16.mxu0 0
  %8311 = vmatpush1.bf16.msra.mxu0 0
  %8312 = vmatprep.subr.bf16.mxu0 0
  %8313 = vmatpush1.bf16.msra.mxu0 0
  %8314 = vmatprep.subr.bf16.mxu0 0
  %8315 = vmatpush1.bf16.msra.mxu0 0
  %8316 = vmatprep.subr.bf16.mxu0 0
  %8317 = vmatpush1.bf16.msra.mxu0 0
  %8318 = vmatprep.subr.bf16.mxu0 0
  %8319 = vmatpush1.bf16.msra.mxu0 0
  %8320 = vmatprep.subr.bf16.mxu0 0
  %8321 = vmatpush1.bf16.msra.mxu0 0
  %8322 = vmatprep.subr.bf16.mxu0 0
  %8323 = vmatpush1.bf16.msra.mxu0 0
  %8324 = vmatprep.subr.bf16.mxu0 0
  %8325 = vmatpush1.bf16.msra.mxu0 0
  %8326 = vmatprep.subr.bf16.mxu0 0
  %8327 = vmatpush1.bf16.msra.mxu0 0
  %8328 = vmatprep.subr.bf16.mxu0 0
  %8329 = vmatpush1.bf16.msra.mxu0 0
  %8330 = vmatprep.subr.bf16.mxu0 0
  %8331 = vmatpush1.bf16.msra.mxu0 0
  %8332 = vmatprep.subr.bf16.mxu0 0
  %8333 = vmatpush1.bf16.msra.mxu0 0
  %8334 = vmatprep.subr.bf16.mxu0 0
  %8335 = vmatpush1.bf16.msra.mxu0 0
  %8336 = vmatprep.mubr.bf16.mxu0 0
  %8337 = vmatmul.mubr.bf16.gmra.mrb[0].mxu0 %v8302
  %v8338 = vpop.f32.mrb[0].mxu0
  %v8339 = vadd.f32 0.0, %v8338
  %v8340 = vpop.f32.mrb[0].mxu0
  %v8341 = vpop.f32.mrb[0].mxu0
  %v8342 = vadd.f32 0.0, %v8341
  %v8343 = vpop.f32.mrb[0].mxu0
  %8344 = vdwg.mxu0
  %8346 = vrot.lane.b32.xlu0 %v574, 64
  %v8347 = vpop.permute.xlu0 %8346
  %v8350 = vsel %vm3896, %v5367, 0
  %8352 = vmatprep.subr.bf16.mxu0 0
  %8353 = vmatpush1.bf16.msra.mxu0 %v8347
  %8354 = vmatprep.subr.bf16.mxu0 0
  %8355 = vmatpush1.bf16.msra.mxu0 0
  %8356 = vmatprep.subr.bf16.mxu0 0
  %8357 = vmatpush1.bf16.msra.mxu0 0
  %8358 = vmatprep.subr.bf16.mxu0 0
  %8359 = vmatpush1.bf16.msra.mxu0 0
  %8360 = vmatprep.subr.bf16.mxu0 0
  %8361 = vmatpush1.bf16.msra.mxu0 0
  %8362 = vmatprep.subr.bf16.mxu0 0
  %8363 = vmatpush1.bf16.msra.mxu0 0
  %8364 = vmatprep.subr.bf16.mxu0 0
  %8365 = vmatpush1.bf16.msra.mxu0 0
  %8366 = vmatprep.subr.bf16.mxu0 0
  %8367 = vmatpush1.bf16.msra.mxu0 0
  %8368 = vmatprep.subr.bf16.mxu0 0
  %8369 = vmatpush1.bf16.msra.mxu0 0
  %8370 = vmatprep.subr.bf16.mxu0 0
  %8371 = vmatpush1.bf16.msra.mxu0 0
  %8372 = vmatprep.subr.bf16.mxu0 0
  %8373 = vmatpush1.bf16.msra.mxu0 0
  %8374 = vmatprep.subr.bf16.mxu0 0
  %8375 = vmatpush1.bf16.msra.mxu0 0
  %8376 = vmatprep.subr.bf16.mxu0 0
  %8377 = vmatpush1.bf16.msra.mxu0 0
  %8378 = vmatprep.subr.bf16.mxu0 0
  %8379 = vmatpush1.bf16.msra.mxu0 0
  %8380 = vmatprep.subr.bf16.mxu0 0
  %8381 = vmatpush1.bf16.msra.mxu0 0
  %8382 = vmatprep.subr.bf16.mxu0 0
  %8383 = vmatpush1.bf16.msra.mxu0 0
  %8384 = vmatprep.mubr.bf16.mxu0 0
  %8385 = vmatmul.mubr.bf16.gmra.mrb[0].mxu0 %v8350
  %v8386 = vpop.f32.mrb[0].mxu0
  %v8387 = vadd.f32 0.0, %v8386
  %v8388 = vpop.f32.mrb[0].mxu0
  %v8389 = vpop.f32.mrb[0].mxu0
  %v8390 = vadd.f32 0.0, %v8389
  %v8391 = vpop.f32.mrb[0].mxu0
  %8392 = vdwg.mxu0
  %8394 = vrot.lane.b32.xlu0 %v575, 64
  %v8395 = vpop.permute.xlu0 %8394
  %v8398 = vsel %vm3896, %v5368, 0
  %8400 = vmatprep.subr.bf16.mxu0 0
  %8401 = vmatpush1.bf16.msra.mxu0 %v8395
  %8402 = vmatprep.subr.bf16.mxu0 0
  %8403 = vmatpush1.bf16.msra.mxu0 0
  %8404 = vmatprep.subr.bf16.mxu0 0
  %8405 = vmatpush1.bf16.msra.mxu0 0
  %8406 = vmatprep.subr.bf16.mxu0 0
  %8407 = vmatpush1.bf16.msra.mxu0 0
  %8408 = vmatprep.subr.bf16.mxu0 0
  %8409 = vmatpush1.bf16.msra.mxu0 0
  %8410 = vmatprep.subr.bf16.mxu0 0
  %8411 = vmatpush1.bf16.msra.mxu0 0
  %8412 = vmatprep.subr.bf16.mxu0 0
  %8413 = vmatpush1.bf16.msra.mxu0 0
  %8414 = vmatprep.subr.bf16.mxu0 0
  %8415 = vmatpush1.bf16.msra.mxu0 0
  %8416 = vmatprep.subr.bf16.mxu0 0
  %8417 = vmatpush1.bf16.msra.mxu0 0
  %8418 = vmatprep.subr.bf16.mxu0 0
  %8419 = vmatpush1.bf16.msra.mxu0 0
  %8420 = vmatprep.subr.bf16.mxu0 0
  %8421 = vmatpush1.bf16.msra.mxu0 0
  %8422 = vmatprep.subr.bf16.mxu0 0
  %8423 = vmatpush1.bf16.msra.mxu0 0
  %8424 = vmatprep.subr.bf16.mxu0 0
  %8425 = vmatpush1.bf16.msra.mxu0 0
  %8426 = vmatprep.subr.bf16.mxu0 0
  %8427 = vmatpush1.bf16.msra.mxu0 0
  %8428 = vmatprep.subr.bf16.mxu0 0
  %8429 = vmatpush1.bf16.msra.mxu0 0
  %8430 = vmatprep.subr.bf16.mxu0 0
  %8431 = vmatpush1.bf16.msra.mxu0 0
  %8432 = vmatprep.mubr.bf16.mxu0 0
  %8433 = vmatmul.mubr.bf16.gmra.mrb[0].mxu0 %v8398
  %v8434 = vpop.f32.mrb[0].mxu0
  %v8435 = vadd.f32 0.0, %v8434
  %v8436 = vpop.f32.mrb[0].mxu0
  %v8437 = vpop.f32.mrb[0].mxu0
  %v8438 = vadd.f32 0.0, %v8437
  %v8439 = vpop.f32.mrb[0].mxu0
  %8440 = vdwg.mxu0
  %v8441 = vsel %vm162, %v5411, 0.0
  %v8442 = vsel %vm162, %v6179, 0.0
  %v8443 = vadd.f32 %v8441, %v8442
  %v8444 = vsel %vm162, %v6947, 0.0
  %v8445 = vadd.f32 %v8443, %v8444
  %v8446 = vsel %vm162, %v7715, 0.0
  %v8447 = vadd.f32 %v8445, %v8446
  %v8448 = vsel %vm162, %v5414, 0.0
  %v8449 = vsel %vm162, %v6182, 0.0
  %v8450 = vadd.f32 %v8448, %v8449
  %v8451 = vsel %vm162, %v6950, 0.0
  %v8452 = vadd.f32 %v8450, %v8451
  %v8453 = vsel %vm162, %v7718, 0.0
  %v8454 = vadd.f32 %v8452, %v8453
  %v8455 = vsel %vm162, %v5459, 0.0
  %v8456 = vsel %vm162, %v6227, 0.0
  %v8457 = vadd.f32 %v8455, %v8456
  %v8458 = vsel %vm162, %v6995, 0.0
  %v8459 = vadd.f32 %v8457, %v8458
  %v8460 = vsel %vm162, %v7763, 0.0
  %v8461 = vadd.f32 %v8459, %v8460
  %v8462 = vsel %vm162, %v5462, 0.0
  %v8463 = vsel %vm162, %v6230, 0.0
  %v8464 = vadd.f32 %v8462, %v8463
  %v8465 = vsel %vm162, %v6998, 0.0
  %v8466 = vadd.f32 %v8464, %v8465
  %v8467 = vsel %vm162, %v7766, 0.0
  %v8468 = vadd.f32 %v8466, %v8467
  %v8469 = vsel %vm162, %v5507, 0.0
  %v8470 = vsel %vm162, %v6275, 0.0
  %v8471 = vadd.f32 %v8469, %v8470
  %v8472 = vsel %vm162, %v7043, 0.0
  %v8473 = vadd.f32 %v8471, %v8472
  %v8474 = vsel %vm162, %v7811, 0.0
  %v8475 = vadd.f32 %v8473, %v8474
  %v8476 = vsel %vm162, %v5510, 0.0
  %v8477 = vsel %vm162, %v6278, 0.0
  %v8478 = vadd.f32 %v8476, %v8477
  %v8479 = vsel %vm162, %v7046, 0.0
  %v8480 = vadd.f32 %v8478, %v8479
  %v8481 = vsel %vm162, %v7814, 0.0
  %v8482 = vadd.f32 %v8480, %v8481
  %v8483 = vsel %vm162, %v5555, 0.0
  %v8484 = vsel %vm162, %v6323, 0.0
  %v8485 = vadd.f32 %v8483, %v8484
  %v8486 = vsel %vm162, %v7091, 0.0
  %v8487 = vadd.f32 %v8485, %v8486
  %v8488 = vsel %vm162, %v7859, 0.0
  %v8489 = vadd.f32 %v8487, %v8488
  %v8490 = vsel %vm162, %v5558, 0.0
  %v8491 = vsel %vm162, %v6326, 0.0
  %v8492 = vadd.f32 %v8490, %v8491
  %v8493 = vsel %vm162, %v7094, 0.0
  %v8494 = vadd.f32 %v8492, %v8493
  %v8495 = vsel %vm162, %v7862, 0.0
  %v8496 = vadd.f32 %v8494, %v8495
  %v8497 = vsel %vm162, %v5603, 0.0
  %v8498 = vsel %vm162, %v6371, 0.0
  %v8499 = vadd.f32 %v8497, %v8498
  %v8500 = vsel %vm162, %v7139, 0.0
  %v8501 = vadd.f32 %v8499, %v8500
  %v8502 = vsel %vm162, %v7907, 0.0
  %v8503 = vadd.f32 %v8501, %v8502
  %v8504 = vsel %vm162, %v5606, 0.0
  %v8505 = vsel %vm162, %v6374, 0.0
  %v8506 = vadd.f32 %v8504, %v8505
  %v8507 = vsel %vm162, %v7142, 0.0
  %v8508 = vadd.f32 %v8506, %v8507
  %v8509 = vsel %vm162, %v7910, 0.0
  %v8510 = vadd.f32 %v8508, %v8509
  %v8511 = vsel %vm162, %v5651, 0.0
  %v8512 = vsel %vm162, %v6419, 0.0
  %v8513 = vadd.f32 %v8511, %v8512
  %v8514 = vsel %vm162, %v7187, 0.0
  %v8515 = vadd.f32 %v8513, %v8514
  %v8516 = vsel %vm162, %v7955, 0.0
  %v8517 = vadd.f32 %v8515, %v8516
  %v8518 = vsel %vm162, %v5654, 0.0
  %v8519 = vsel %vm162, %v6422, 0.0
  %v8520 = vadd.f32 %v8518, %v8519
  %v8521 = vsel %vm162, %v7190, 0.0
  %v8522 = vadd.f32 %v8520, %v8521
  %v8523 = vsel %vm162, %v7958, 0.0
  %v8524 = vadd.f32 %v8522, %v8523
  %v8525 = vsel %vm162, %v5699, 0.0
  %v8526 = vsel %vm162, %v6467, 0.0
  %v8527 = vadd.f32 %v8525, %v8526
  %v8528 = vsel %vm162, %v7235, 0.0
  %v8529 = vadd.f32 %v8527, %v8528
  %v8530 = vsel %vm162, %v8003, 0.0
  %v8531 = vadd.f32 %v8529, %v8530
  %v8532 = vsel %vm162, %v5702, 0.0
  %v8533 = vsel %vm162, %v6470, 0.0
  %v8534 = vadd.f32 %v8532, %v8533
  %v8535 = vsel %vm162, %v7238, 0.0
  %v8536 = vadd.f32 %v8534, %v8535
  %v8537 = vsel %vm162, %v8006, 0.0
  %v8538 = vadd.f32 %v8536, %v8537
  %v8539 = vsel %vm162, %v5747, 0.0
  %v8540 = vsel %vm162, %v6515, 0.0
  %v8541 = vadd.f32 %v8539, %v8540
  %v8542 = vsel %vm162, %v7283, 0.0
  %v8543 = vadd.f32 %v8541, %v8542
  %v8544 = vsel %vm162, %v8051, 0.0
  %v8545 = vadd.f32 %v8543, %v8544
  %v8546 = vsel %vm162, %v5750, 0.0
  %v8547 = vsel %vm162, %v6518, 0.0
  %v8548 = vadd.f32 %v8546, %v8547
  %v8549 = vsel %vm162, %v7286, 0.0
  %v8550 = vadd.f32 %v8548, %v8549
  %v8551 = vsel %vm162, %v8054, 0.0
  %v8552 = vadd.f32 %v8550, %v8551
  %v8553 = vsel %vm162, %v5795, 0.0
  %v8554 = vsel %vm162, %v6563, 0.0
  %v8555 = vadd.f32 %v8553, %v8554
  %v8556 = vsel %vm162, %v7331, 0.0
  %v8557 = vadd.f32 %v8555, %v8556
  %v8558 = vsel %vm162, %v8099, 0.0
  %v8559 = vadd.f32 %v8557, %v8558
  %v8560 = vsel %vm162, %v5798, 0.0
  %v8561 = vsel %vm162, %v6566, 0.0
  %v8562 = vadd.f32 %v8560, %v8561
  %v8563 = vsel %vm162, %v7334, 0.0
  %v8564 = vadd.f32 %v8562, %v8563
  %v8565 = vsel %vm162, %v8102, 0.0
  %v8566 = vadd.f32 %v8564, %v8565
  %v8567 = vsel %vm162, %v5843, 0.0
  %v8568 = vsel %vm162, %v6611, 0.0
  %v8569 = vadd.f32 %v8567, %v8568
  %v8570 = vsel %vm162, %v7379, 0.0
  %v8571 = vadd.f32 %v8569, %v8570
  %v8572 = vsel %vm162, %v8147, 0.0
  %v8573 = vadd.f32 %v8571, %v8572
  %v8574 = vsel %vm162, %v5846, 0.0
  %v8575 = vsel %vm162, %v6614, 0.0
  %v8576 = vadd.f32 %v8574, %v8575
  %v8577 = vsel %vm162, %v7382, 0.0
  %v8578 = vadd.f32 %v8576, %v8577
  %v8579 = vsel %vm162, %v8150, 0.0
  %v8580 = vadd.f32 %v8578, %v8579
  %v8581 = vsel %vm162, %v5891, 0.0
  %v8582 = vsel %vm162, %v6659, 0.0
  %v8583 = vadd.f32 %v8581, %v8582
  %v8584 = vsel %vm162, %v7427, 0.0
  %v8585 = vadd.f32 %v8583, %v8584
  %v8586 = vsel %vm162, %v8195, 0.0
  %v8587 = vadd.f32 %v8585, %v8586
  %v8588 = vsel %vm162, %v5894, 0.0
  %v8589 = vsel %vm162, %v6662, 0.0
  %v8590 = vadd.f32 %v8588, %v8589
  %v8591 = vsel %vm162, %v7430, 0.0
  %v8592 = vadd.f32 %v8590, %v8591
  %v8593 = vsel %vm162, %v8198, 0.0
  %v8594 = vadd.f32 %v8592, %v8593
  %v8595 = vsel %vm162, %v5939, 0.0
  %v8596 = vsel %vm162, %v6707, 0.0
  %v8597 = vadd.f32 %v8595, %v8596
  %v8598 = vsel %vm162, %v7475, 0.0
  %v8599 = vadd.f32 %v8597, %v8598
  %v8600 = vsel %vm162, %v8243, 0.0
  %v8601 = vadd.f32 %v8599, %v8600
  %v8602 = vsel %vm162, %v5942, 0.0
  %v8603 = vsel %vm162, %v6710, 0.0
  %v8604 = vadd.f32 %v8602, %v8603
  %v8605 = vsel %vm162, %v7478, 0.0
  %v8606 = vadd.f32 %v8604, %v8605
  %v8607 = vsel %vm162, %v8246, 0.0
  %v8608 = vadd.f32 %v8606, %v8607
  %v8609 = vsel %vm162, %v5987, 0.0
  %v8610 = vsel %vm162, %v6755, 0.0
  %v8611 = vadd.f32 %v8609, %v8610
  %v8612 = vsel %vm162, %v7523, 0.0
  %v8613 = vadd.f32 %v8611, %v8612
  %v8614 = vsel %vm162, %v8291, 0.0
  %v8615 = vadd.f32 %v8613, %v8614
  %v8616 = vsel %vm162, %v5990, 0.0
  %v8617 = vsel %vm162, %v6758, 0.0
  %v8618 = vadd.f32 %v8616, %v8617
  %v8619 = vsel %vm162, %v7526, 0.0
  %v8620 = vadd.f32 %v8618, %v8619
  %v8621 = vsel %vm162, %v8294, 0.0
  %v8622 = vadd.f32 %v8620, %v8621
  %v8623 = vsel %vm162, %v6035, 0.0
  %v8624 = vsel %vm162, %v6803, 0.0
  %v8625 = vadd.f32 %v8623, %v8624
  %v8626 = vsel %vm162, %v7571, 0.0
  %v8627 = vadd.f32 %v8625, %v8626
  %v8628 = vsel %vm162, %v8339, 0.0
  %v8629 = vadd.f32 %v8627, %v8628
  %v8630 = vsel %vm162, %v6038, 0.0
  %v8631 = vsel %vm162, %v6806, 0.0
  %v8632 = vadd.f32 %v8630, %v8631
  %v8633 = vsel %vm162, %v7574, 0.0
  %v8634 = vadd.f32 %v8632, %v8633
  %v8635 = vsel %vm162, %v8342, 0.0
  %v8636 = vadd.f32 %v8634, %v8635
  %v8637 = vsel %vm162, %v6083, 0.0
  %v8638 = vsel %vm162, %v6851, 0.0
  %v8639 = vadd.f32 %v8637, %v8638
  %v8640 = vsel %vm162, %v7619, 0.0
  %v8641 = vadd.f32 %v8639, %v8640
  %v8642 = vsel %vm162, %v8387, 0.0
  %v8643 = vadd.f32 %v8641, %v8642
  %v8644 = vsel %vm162, %v6086, 0.0
  %v8645 = vsel %vm162, %v6854, 0.0
  %v8646 = vadd.f32 %v8644, %v8645
  %v8647 = vsel %vm162, %v7622, 0.0
  %v8648 = vadd.f32 %v8646, %v8647
  %v8649 = vsel %vm162, %v8390, 0.0
  %v8650 = vadd.f32 %v8648, %v8649
  %v8651 = vsel %vm162, %v6131, 0.0
  %v8652 = vsel %vm162, %v6899, 0.0
  %v8653 = vadd.f32 %v8651, %v8652
  %v8654 = vsel %vm162, %v7667, 0.0
  %v8655 = vadd.f32 %v8653, %v8654
  %v8656 = vsel %vm162, %v8435, 0.0
  %v8657 = vadd.f32 %v8655, %v8656
  %v8658 = vsel %vm162, %v6134, 0.0
  %v8659 = vsel %vm162, %v6902, 0.0
  %v8660 = vadd.f32 %v8658, %v8659
  %v8661 = vsel %vm162, %v7670, 0.0
  %v8662 = vadd.f32 %v8660, %v8661
  %v8663 = vsel %vm162, %v8438, 0.0
  %v8664 = vadd.f32 %v8662, %v8663
  %v8665 = vpack.c.bf16 %v8454, %v8447
  %v8666 = vpack.c.bf16 %v8468, %v8461
  %v8667 = vpack.c.bf16 %v8482, %v8475
  %v8668 = vpack.c.bf16 %v8496, %v8489
  %v8669 = vpack.c.bf16 %v8510, %v8503
  %v8670 = vpack.c.bf16 %v8524, %v8517
  %v8671 = vpack.c.bf16 %v8538, %v8531
  %v8672 = vpack.c.bf16 %v8552, %v8545
  %v8673 = vpack.c.bf16 %v8566, %v8559
  %v8674 = vpack.c.bf16 %v8580, %v8573
  %v8675 = vpack.c.bf16 %v8594, %v8587
  %v8676 = vpack.c.bf16 %v8608, %v8601
  %v8677 = vpack.c.bf16 %v8622, %v8615
  %v8678 = vpack.c.bf16 %v8636, %v8629
  %v8679 = vpack.c.bf16 %v8650, %v8643
  %v8680 = vpack.c.bf16 %v8664, %v8657
  %v8681 = vld [vmem:[%s5] sm:$0xf]
  %v8682 = vld [vmem:[%s5 + $0x4] sm:$0xf]
  %v8683 = vld [vmem:[%s5 + $0x8] sm:$0xf]
  %v8684 = vld [vmem:[%s5 + $0xc] sm:$0xf]
  %v8685 = vld [vmem:[%s6] sm:$0x1]
  %v8687 = vlaneseq
  %v8688 = vshrl.u32 %v8687, 7
  %v8689 = vsub.s32 0, %v8688
  %v8690 = vrot.slane %v8685, %v8689
  %v8696 = vunpack.c.l.b16 %v8681
  %v8697 = vunpack.c.l.b16 %v8682
  %v8698 = vunpack.c.l.b16 %v8683
  %v8699 = vunpack.c.l.b16 %v8684
  %v8700 = vpack.c.b16 %v8697, %v8696
  %v8701 = vpack.c.b16 %v8699, %v8698
  %v8705 = vsel %vm162, %v8665, 0
  %v8708 = vsel %vm162, %v8666, 0
  %v8711 = vsel %vm162, %v8667, 0
  %v8714 = vsel %vm162, %v8668, 0
  %v8717 = vsel %vm162, %v8669, 0
  %v8720 = vsel %vm162, %v8670, 0
  %v8723 = vsel %vm162, %v8671, 0
  %v8726 = vsel %vm162, %v8672, 0
  %v8729 = vsel %vm162, %v8673, 0
  %v8732 = vsel %vm162, %v8674, 0
  %v8735 = vsel %vm162, %v8675, 0
  %v8738 = vsel %vm162, %v8676, 0
  %v8741 = vsel %vm162, %v8677, 0
  %v8744 = vsel %vm162, %v8678, 0
  %v8747 = vsel %vm162, %v8679, 0
  %v8750 = vsel %vm162, %v8680, 0
  %8752 = vmatprep.subr.bf16.mxu0 0
  %8753 = vmatpush1.bf16.msra.mxu0 %v8700
  %8754 = vmatprep.subr.bf16.mxu0 0
  %8755 = vmatpush1.bf16.msra.mxu0 %v8701
  %8756 = vmatprep.subr.bf16.mxu0 0
  %8757 = vmatpush1.bf16.msra.mxu0 0
  %8758 = vmatprep.subr.bf16.mxu0 0
  %8759 = vmatpush1.bf16.msra.mxu0 0
  %8760 = vmatprep.subr.bf16.mxu0 0
  %8761 = vmatpush1.bf16.msra.mxu0 0
  %8762 = vmatprep.subr.bf16.mxu0 0
  %8763 = vmatpush1.bf16.msra.mxu0 0
  %8764 = vmatprep.subr.bf16.mxu0 0
  %8765 = vmatpush1.bf16.msra.mxu0 0
  %8766 = vmatprep.subr.bf16.mxu0 0
  %8767 = vmatpush1.bf16.msra.mxu0 0
  %8768 = vmatprep.subr.bf16.mxu0 0
  %8769 = vmatpush1.bf16.msra.mxu0 0
  %8770 = vmatprep.subr.bf16.mxu0 0
  %8771 = vmatpush1.bf16.msra.mxu0 0
  %8772 = vmatprep.subr.bf16.mxu0 0
  %8773 = vmatpush1.bf16.msra.mxu0 0
  %8774 = vmatprep.subr.bf16.mxu0 0
  %8775 = vmatpush1.bf16.msra.mxu0 0
  %8776 = vmatprep.subr.bf16.mxu0 0
  %8777 = vmatpush1.bf16.msra.mxu0 0
  %8778 = vmatprep.subr.bf16.mxu0 0
  %8779 = vmatpush1.bf16.msra.mxu0 0
  %8780 = vmatprep.subr.bf16.mxu0 0
  %8781 = vmatpush1.bf16.msra.mxu0 0
  %8782 = vmatprep.subr.bf16.mxu0 0
  %8783 = vmatpush1.bf16.msra.mxu0 0
  %8784 = vmatprep.mubr.bf16.mxu0 0
  %8785 = vmatmul.mubr.bf16.gmra.mrb[0].mxu0 %v8705
  %v8786 = vpop.f32.mrb[0].mxu0
  %v8787 = vadd.f32 %v8690, %v8786
  %v8788 = vpop.f32.mrb[0].mxu0
  %v8789 = vpop.f32.mrb[0].mxu0
  %v8790 = vadd.f32 %v8690, %v8789
  %v8791 = vpop.f32.mrb[0].mxu0
  %8792 = vmatprep.mubr.bf16.mxu0 0
  %8793 = vmatmul.mubr.bf16.gmra.mrb[0].mxu0 %v8708
  %v8794 = vpop.f32.mrb[0].mxu0
  %v8795 = vadd.f32 %v8690, %v8794
  %v8796 = vpop.f32.mrb[0].mxu0
  %v8797 = vpop.f32.mrb[0].mxu0
  %v8798 = vadd.f32 %v8690, %v8797
  %v8799 = vpop.f32.mrb[0].mxu0
  %8800 = vmatprep.mubr.bf16.mxu0 0
  %8801 = vmatmul.mubr.bf16.gmra.mrb[0].mxu0 %v8711
  %v8802 = vpop.f32.mrb[0].mxu0
  %v8803 = vadd.f32 %v8690, %v8802
  %v8804 = vpop.f32.mrb[0].mxu0
  %v8805 = vpop.f32.mrb[0].mxu0
  %v8806 = vadd.f32 %v8690, %v8805
  %v8807 = vpop.f32.mrb[0].mxu0
  %8808 = vmatprep.mubr.bf16.mxu0 0
  %8809 = vmatmul.mubr.bf16.gmra.mrb[0].mxu0 %v8714
  %v8810 = vpop.f32.mrb[0].mxu0
  %v8811 = vadd.f32 %v8690, %v8810
  %v8812 = vpop.f32.mrb[0].mxu0
  %v8813 = vpop.f32.mrb[0].mxu0
  %v8814 = vadd.f32 %v8690, %v8813
  %v8815 = vpop.f32.mrb[0].mxu0
  %8816 = vmatprep.mubr.bf16.mxu0 0
  %8817 = vmatmul.mubr.bf16.gmra.mrb[0].mxu0 %v8717
  %v8818 = vpop.f32.mrb[0].mxu0
  %v8819 = vadd.f32 %v8690, %v8818
  %v8820 = vpop.f32.mrb[0].mxu0
  %v8821 = vpop.f32.mrb[0].mxu0
  %v8822 = vadd.f32 %v8690, %v8821
  %v8823 = vpop.f32.mrb[0].mxu0
  %8824 = vmatprep.mubr.bf16.mxu0 0
  %8825 = vmatmul.mubr.bf16.gmra.mrb[0].mxu0 %v8720
  %v8826 = vpop.f32.mrb[0].mxu0
  %v8827 = vadd.f32 %v8690, %v8826
  %v8828 = vpop.f32.mrb[0].mxu0
  %v8829 = vpop.f32.mrb[0].mxu0
  %v8830 = vadd.f32 %v8690, %v8829
  %v8831 = vpop.f32.mrb[0].mxu0
  %8832 = vmatprep.mubr.bf16.mxu0 0
  %8833 = vmatmul.mubr.bf16.gmra.mrb[0].mxu0 %v8723
  %v8834 = vpop.f32.mrb[0].mxu0
  %v8835 = vadd.f32 %v8690, %v8834
  %v8836 = vpop.f32.mrb[0].mxu0
  %v8837 = vpop.f32.mrb[0].mxu0
  %v8838 = vadd.f32 %v8690, %v8837
  %v8839 = vpop.f32.mrb[0].mxu0
  %8840 = vmatprep.mubr.bf16.mxu0 0
  %8841 = vmatmul.mubr.bf16.gmra.mrb[0].mxu0 %v8726
  %v8842 = vpop.f32.mrb[0].mxu0
  %v8843 = vadd.f32 %v8690, %v8842
  %v8844 = vpop.f32.mrb[0].mxu0
  %v8845 = vpop.f32.mrb[0].mxu0
  %v8846 = vadd.f32 %v8690, %v8845
  %v8847 = vpop.f32.mrb[0].mxu0
  %8848 = vmatprep.mubr.bf16.mxu0 0
  %8849 = vmatmul.mubr.bf16.gmra.mrb[0].mxu0 %v8729
  %v8850 = vpop.f32.mrb[0].mxu0
  %v8851 = vadd.f32 %v8690, %v8850
  %v8852 = vpop.f32.mrb[0].mxu0
  %v8853 = vpop.f32.mrb[0].mxu0
  %v8854 = vadd.f32 %v8690, %v8853
  %v8855 = vpop.f32.mrb[0].mxu0
  %8856 = vmatprep.mubr.bf16.mxu0 0
  %8857 = vmatmul.mubr.bf16.gmra.mrb[0].mxu0 %v8732
  %v8858 = vpop.f32.mrb[0].mxu0
  %v8859 = vadd.f32 %v8690, %v8858
  %v8860 = vpop.f32.mrb[0].mxu0
  %v8861 = vpop.f32.mrb[0].mxu0
  %v8862 = vadd.f32 %v8690, %v8861
  %v8863 = vpop.f32.mrb[0].mxu0
  %8864 = vmatprep.mubr.bf16.mxu0 0
  %8865 = vmatmul.mubr.bf16.gmra.mrb[0].mxu0 %v8735
  %v8866 = vpop.f32.mrb[0].mxu0
  %v8867 = vadd.f32 %v8690, %v8866
  %v8868 = vpop.f32.mrb[0].mxu0
  %v8869 = vpop.f32.mrb[0].mxu0
  %v8870 = vadd.f32 %v8690, %v8869
  %v8871 = vpop.f32.mrb[0].mxu0
  %8872 = vmatprep.mubr.bf16.mxu0 0
  %8873 = vmatmul.mubr.bf16.gmra.mrb[0].mxu0 %v8738
  %v8874 = vpop.f32.mrb[0].mxu0
  %v8875 = vadd.f32 %v8690, %v8874
  %v8876 = vpop.f32.mrb[0].mxu0
  %v8877 = vpop.f32.mrb[0].mxu0
  %v8878 = vadd.f32 %v8690, %v8877
  %v8879 = vpop.f32.mrb[0].mxu0
  %8880 = vmatprep.mubr.bf16.mxu0 0
  %8881 = vmatmul.mubr.bf16.gmra.mrb[0].mxu0 %v8741
  %v8882 = vpop.f32.mrb[0].mxu0
  %v8883 = vadd.f32 %v8690, %v8882
  %v8884 = vpop.f32.mrb[0].mxu0
  %v8885 = vpop.f32.mrb[0].mxu0
  %v8886 = vadd.f32 %v8690, %v8885
  %v8887 = vpop.f32.mrb[0].mxu0
  %8888 = vmatprep.mubr.bf16.mxu0 0
  %8889 = vmatmul.mubr.bf16.gmra.mrb[0].mxu0 %v8744
  %v8890 = vpop.f32.mrb[0].mxu0
  %v8891 = vadd.f32 %v8690, %v8890
  %v8892 = vpop.f32.mrb[0].mxu0
  %v8893 = vpop.f32.mrb[0].mxu0
  %v8894 = vadd.f32 %v8690, %v8893
  %v8895 = vpop.f32.mrb[0].mxu0
  %8896 = vmatprep.mubr.bf16.mxu0 0
  %8897 = vmatmul.mubr.bf16.gmra.mrb[0].mxu0 %v8747
  %v8898 = vpop.f32.mrb[0].mxu0
  %v8899 = vadd.f32 %v8690, %v8898
  %v8900 = vpop.f32.mrb[0].mxu0
  %v8901 = vpop.f32.mrb[0].mxu0
  %v8902 = vadd.f32 %v8690, %v8901
  %v8903 = vpop.f32.mrb[0].mxu0
  %8904 = vmatprep.mubr.bf16.mxu0 0
  %8905 = vmatmul.mubr.bf16.gmra.mrb[0].mxu0 %v8750
  %v8906 = vpop.f32.mrb[0].mxu0
  %v8907 = vadd.f32 %v8690, %v8906
  %v8908 = vpop.f32.mrb[0].mxu0
  %v8909 = vpop.f32.mrb[0].mxu0
  %v8910 = vadd.f32 %v8690, %v8909
  %v8911 = vpop.f32.mrb[0].mxu0
  %8912 = vdwg.mxu0
  %8913 = vst.msk [vmem:[%s7] sm:$0xff] %vm162, %v8787
  %8914 = vst.msk [vmem:[%s7 + $0x8] sm:$0xff] %vm162, %v8790
  %8915 = vst.msk [vmem:[%s7 + $0x10] sm:$0xff] %vm162, %v8795
  %8916 = vst.msk [vmem:[%s7 + $0x18] sm:$0xff] %vm162, %v8798
  %8917 = vst.msk [vmem:[%s7 + $0x20] sm:$0xff] %vm162, %v8803
  %8918 = vst.msk [vmem:[%s7 + $0x28] sm:$0xff] %vm162, %v8806
  %8919 = vst.msk [vmem:[%s7 + $0x30] sm:$0xff] %vm162, %v8811
  %8920 = vst.msk [vmem:[%s7 + $0x38] sm:$0xff] %vm162, %v8814
  %8921 = vst.msk [vmem:[%s7 + $0x40] sm:$0xff] %vm162, %v8819
  %8922 = vst.msk [vmem:[%s7 + $0x48] sm:$0xff] %vm162, %v8822
  %8923 = vst.msk [vmem:[%s7 + $0x50] sm:$0xff] %vm162, %v8827
  %8924 = vst.msk [vmem:[%s7 + $0x58] sm:$0xff] %vm162, %v8830
  %8925 = vst.msk [vmem:[%s7 + $0x60] sm:$0xff] %vm162, %v8835
  %8926 = vst.msk [vmem:[%s7 + $0x68] sm:$0xff] %vm162, %v8838
  %8927 = vst.msk [vmem:[%s7 + $0x70] sm:$0xff] %vm162, %v8843
  %8928 = vst.msk [vmem:[%s7 + $0x78] sm:$0xff] %vm162, %v8846
  %8929 = vst.msk [vmem:[%s7 + $0x80] sm:$0xff] %vm162, %v8851
  %8930 = vst.msk [vmem:[%s7 + $0x88] sm:$0xff] %vm162, %v8854
  %8931 = vst.msk [vmem:[%s7 + $0x90] sm:$0xff] %vm162, %v8859
  %8932 = vst.msk [vmem:[%s7 + $0x98] sm:$0xff] %vm162, %v8862
  %8933 = vst.msk [vmem:[%s7 + $0xa0] sm:$0xff] %vm162, %v8867
  %8934 = vst.msk [vmem:[%s7 + $0xa8] sm:$0xff] %vm162, %v8870
  %8935 = vst.msk [vmem:[%s7 + $0xb0] sm:$0xff] %vm162, %v8875
  %8936 = vst.msk [vmem:[%s7 + $0xb8] sm:$0xff] %vm162, %v8878
  %8937 = vst.msk [vmem:[%s7 + $0xc0] sm:$0xff] %vm162, %v8883
  %8938 = vst.msk [vmem:[%s7 + $0xc8] sm:$0xff] %vm162, %v8886
  %8939 = vst.msk [vmem:[%s7 + $0xd0] sm:$0xff] %vm162, %v8891
  %8940 = vst.msk [vmem:[%s7 + $0xd8] sm:$0xff] %vm162, %v8894
  %8941 = vst.msk [vmem:[%s7 + $0xe0] sm:$0xff] %vm162, %v8899
  %8942 = vst.msk [vmem:[%s7 + $0xe8] sm:$0xff] %vm162, %v8902
  %8943 = vst.msk [vmem:[%s7 + $0xf0] sm:$0xff] %vm162, %v8907
  %8944 = vst.msk [vmem:[%s7 + $0xf8] sm:$0xff] %vm162, %v8910
  // Predicated region
  $region30: #{tpu_custom_call.1} parent=0 // pred_check
    _
  $region31: #{tpu_custom_call.1} parent=0 // pred_check_branch
    %8946 = sbr.rel (0) target = $region33
  $region32: #{tpu_custom_call.1} parent=0 // pred_region
    _
  $region33: #{tpu_custom_call.1} parent=0 // pred_fallthru
    _
  // Predicated region
  $region34: #{tpu_custom_call.1} parent=0 // pred_check
    _
  $region35: #{tpu_custom_call.1} parent=0 // pred_check_branch
    %8948 = sbr.rel (0) target = $region37
  $region36: #{tpu_custom_call.1} parent=0 // pred_region
    _
  $region37: #{tpu_custom_call.1} parent=0 // pred_fallthru
    _

</llo_original>
